<compile_context>
chip_gen: v6e
topology: v6e:2x2x1
jax: 0.10.0
libtpu: 0.0.40
codegen_flags: <defaults>
</compile_context>

<pallas_src>
import functools

import jax
import jax.numpy as jnp
from jax.experimental import pallas as pl
from jax.experimental.pallas import tpu as pltpu

_EPS = 1e-5                      # PyTorch BatchNorm default eps.
_SPECTRAL_DTYPE = jnp.bfloat16   # HBM/MXU dtype of the spectral path.
_VMEM_LIMIT = 48 * 1024 * 1024   # safe on v5e/v6e (128 MiB VMEM) and v7x (64 MiB).
_MAX_LANE_BLOCK = 2048           # target lane tile for the lane-streamed kernels.


# --------------------------------------------------------------------------- #
# helpers
# --------------------------------------------------------------------------- #
def _compiler_params():
    return pltpu.CompilerParams(
        dimension_semantics=("parallel", "parallel"),
        vmem_limit_bytes=_VMEM_LIMIT,
    )


def _lane_block(s):
    """Largest multiple of 128 that divides s (capped), else the full extent."""
    best = 0
    cand = 128
    while cand <= min(s, _MAX_LANE_BLOCK):
        if s % cand == 0:
            best = cand
        cand += 128
    return best if best else s


# ----------------------------------------------------- DFT matrices (glue) ---
def _rdft_mats(w_len):                       # rfft along last dim, norm='ortho'
    wf = w_len // 2 + 1
    nn = jnp.arange(w_len, dtype=jnp.float32)[:, None]
    kk = jnp.arange(wf, dtype=jnp.float32)[None, :]
    ang = 2.0 * jnp.pi * nn * kk / w_len
    s = 1.0 / jnp.sqrt(jnp.float32(w_len))
    return jnp.cos(ang) * s, -jnp.sin(ang) * s                       # (W, Wf)


def _dft_mats(h_len):                        # full FFT (exp(-i)), norm='ortho'
    nn = jnp.arange(h_len, dtype=jnp.float32)[:, None]
    kk = jnp.arange(h_len, dtype=jnp.float32)[None, :]
    ang = 2.0 * jnp.pi * nn * kk / h_len
    s = 1.0 / jnp.sqrt(jnp.float32(h_len))
    return jnp.cos(ang) * s, -jnp.sin(ang) * s                       # (H, H)


def _idft_mats(h_len):                       # full iFFT (exp(+i)), norm='ortho'
    nn = jnp.arange(h_len, dtype=jnp.float32)[:, None]
    kk = jnp.arange(h_len, dtype=jnp.float32)[None, :]
    ang = 2.0 * jnp.pi * nn * kk / h_len
    s = 1.0 / jnp.sqrt(jnp.float32(h_len))
    return jnp.cos(ang) * s, jnp.sin(ang) * s                        # (H, H)


def _irdft_mats(w_len):                      # irfft (real out), norm='ortho'
    wf = w_len // 2 + 1
    k_idx = jnp.arange(wf)
    nyq = w_len // 2 if w_len % 2 == 0 else -1
    wgt = jnp.where((k_idx == 0) | (k_idx == nyq), 1.0, 2.0).astype(jnp.float32)[:, None]
    kk = k_idx.astype(jnp.float32)[:, None]
    nn = jnp.arange(w_len, dtype=jnp.float32)[None, :]
    ang = 2.0 * jnp.pi * kk * nn / w_len
    s = 1.0 / jnp.sqrt(jnp.float32(w_len))
    return wgt * jnp.cos(ang) * s, -wgt * jnp.sin(ang) * s           # (Wf, W)


# --------------------------------------------------------------------------- #
# Pallas kernels
# --------------------------------------------------------------------------- #
def _make_pconv_stats_kernel(group_sizes):
    """1x1x1 conv (channels on sublanes) + per-block BN partial statistics.

    refs = (x_0..x_{n-1}, w_0..w_{k-1}, z_ref, stats_ref).  Inputs within one
    group are summed before the matmul with that group's weight; the groups'
    results are added.  stats block = (C_out, 2) = [sum, sum of squares].
    """
    n_x = sum(group_sizes)
    n_w = len(group_sizes)

    def kernel(*refs):
        x_refs = refs[:n_x]
        w_refs = refs[n_x:n_x + n_w]
        z_ref = refs[n_x + n_w]
        st_ref = refs[n_x + n_w + 1]
        acc = None
        xi = 0
        for g, w_ref in zip(group_sizes, w_refs):
            w = w_ref[...]
            s = x_refs[xi][...]
            for j in range(1, g):
                s = s + x_refs[xi + j][...]
            xi += g
            term = jnp.dot(w, s.astype(w.dtype), preferred_element_type=jnp.float32)
            acc = term if acc is None else acc + term
        z_ref[...] = acc.astype(z_ref.dtype)
        st_ref[...] = jnp.concatenate(
            [jnp.sum(acc, axis=1, keepdims=True),
             jnp.sum(acc * acc, axis=1, keepdims=True)], axis=1)

    return kernel


def _affine_kernel(z_ref, sc_ref, sh_ref, o_ref, *, relu):
    # Per-channel BatchNorm affine (scale/shift precomputed in JAX) + opt. ReLU.
    y = z_ref[...] * sc_ref[...] + sh_ref[...]
    if relu:
        y = jnp.maximum(y, 0.0)
    o_ref[...] = y.astype(o_ref.dtype)


def _rfft2_kernel(x_ref, acat_ref, br_ref, bi_ref, o_ref):
    """Ortho rfft2 of C real (H, W) planes for one (n, d) slice.

    Output block (2C, H, Wf): channels [0:C] real, [C:2C] imag -- exactly the
    torch.cat([real, imag], dim=1) channel layout of FourierUnit.
    Per channel: 1 matmul for the W-axis rDFT (producing [yr | yi] on lanes),
    then 2 matmuls for the H-axis DFT applied to that lane-concatenated
    operand (instead of 4 separate real/imag matmuls).
    """
    c = x_ref.shape[0]
    wf = o_ref.shape[2]
    acat = acat_ref[...]                       # (W, 2Wf) = [cos | -sin]
    br = br_ref[...]                           # (H, H)   cos
    bi = bi_ref[...]                           # (H, H)  -sin
    x = x_ref[...].astype(acat.dtype)
    for cc in range(c):
        y = jnp.dot(x[cc], acat, preferred_element_type=jnp.float32)   # (H, 2Wf)
        y = y.astype(br.dtype)
        pr = jnp.dot(br, y, preferred_element_type=jnp.float32)        # [br yr | br yi]
        pi = jnp.dot(bi, y, preferred_element_type=jnp.float32)        # [bi yr | bi yi]
        o_ref[cc] = (pr[:, :wf] - pi[:, wf:]).astype(o_ref.dtype)      # real part
        o_ref[c + cc] = (pi[:, :wf] + pr[:, wf:]).astype(o_ref.dtype)  # imag part


def _bn_relu_irfft2_kernel(z_ref, sc_ref, sh_ref, dr_ref, di_ref, ccat_ref,
                           o_ref, *, tile_hw):
    """BN-normalize + ReLU the 2C spectral channels, then ortho irfft2 back to C
    real (H, W) planes (real output only).  If tile_hw, the result is replicated
    2x2 spatially (the LFU `repeat(1, 1, 1, 2, 2)`), so the expanded tensor is
    written straight from VMEM.

    Per channel: 2 matmuls for the H-axis iDFT on the lane-concatenated
    [yr | yi] operand and a single matmul for the W-axis irfft against the
    sublane-stacked [Cr ; Ci] matrix (3 matmuls instead of 6).
    """
    c = z_ref.shape[0] // 2
    wf = z_ref.shape[2]
    z = z_ref[...]
    dr = dr_ref[...]                           # (H, H)  cos
    di = di_ref[...]                           # (H, H)  sin
    ccat = ccat_ref[...]                       # (2Wf, W) = [Cr ; Ci]
    for cc in range(c):
        yr = jnp.maximum(z[cc].astype(jnp.float32) * sc_ref[cc] + sh_ref[cc], 0.0)
        yi = jnp.maximum(z[c + cc].astype(jnp.float32) * sc_ref[c + cc]
                         + sh_ref[c + cc], 0.0)
        y = jnp.concatenate([yr, yi], axis=1).astype(dr.dtype)          # (H, 2Wf)
        pr = jnp.dot(dr, y, preferred_element_type=jnp.float32)         # [dr yr | dr yi]
        pi = jnp.dot(di, y, preferred_element_type=jnp.float32)         # [di yr | di yi]
        gr = pr[:, :wf] - pi[:, wf:]
        gi = pi[:, :wf] + pr[:, wf:]
        g = jnp.concatenate([gr, gi], axis=1).astype(ccat.dtype)        # (H, 2Wf)
        x = jnp.dot(g, ccat, preferred_element_type=jnp.float32)        # (H, W) real
        if tile_hw:
            x = jnp.concatenate([x, x], axis=0)
            x = jnp.concatenate([x, x], axis=1)
        o_ref[cc] = x.astype(o_ref.dtype)


# --------------------------------------------------------------------------- #
# Pallas wrappers
# --------------------------------------------------------------------------- #
def pallas_pconv_stats(groups, out_dtype=jnp.float32):
    """groups: list of (weight (Co, Ci), [x (B, Ci, S), ...]).  Returns the
    pointwise-conv output (B, Co, S) plus per-block BN partial stats."""
    ws = [g[0] for g in groups]
    xs = [x for g in groups for x in g[1]]
    group_sizes = tuple(len(g[1]) for g in groups)
    b, _, s = xs[0].shape
    c_out = ws[0].shape[0]
    s_blk = _lane_block(s)
    t = s // s_blk

    in_specs = [pl.BlockSpec((None, x.shape[1], s_blk), lambda i, j: (i, 0, j))
                for x in xs]
    in_specs += [pl.BlockSpec(w.shape, lambda i, j: (0, 0)) for w in ws]

    z, st = pl.pallas_call(
        _make_pconv_stats_kernel(group_sizes),
        grid=(b, t),
        in_specs=in_specs,
        out_specs=(pl.BlockSpec((None, c_out, s_blk), lambda i, j: (i, 0, j)),
                   pl.BlockSpec((None, None, c_out, 2), lambda i, j: (i, j, 0, 0))),
        out_shape=(jax.ShapeDtypeStruct((b, c_out, s), out_dtype),
                   jax.ShapeDtypeStruct((b, t, c_out, 2), jnp.float32)),
        compiler_params=_compiler_params(),
    )(*xs, *ws)
    return z, st


def _finish_bn(stats, count, gamma, beta):
    # Global (batch x spatial) BatchNorm statistics from per-block partials.
    tot = jnp.sum(stats, axis=(0, 1))                       # (C, 2)
    mean = tot[:, 0] / count
    var = jnp.maximum(tot[:, 1] / count - mean * mean, 0.0)  # biased var (torch BN)
    scale = gamma * jax.lax.rsqrt(var + _EPS)
    shift = beta - mean * scale
    return scale, shift


def pallas_affine(z, scale, shift, relu):
    b, c, s = z.shape
    s_blk = _lane_block(s)
    t = s // s_blk
    return pl.pallas_call(
        functools.partial(_affine_kernel, relu=relu),
        grid=(b, t),
        in_specs=[pl.BlockSpec((None, c, s_blk), lambda i, j: (i, 0, j)),
                  pl.BlockSpec((c, 1), lambda i, j: (0, 0)),
                  pl.BlockSpec((c, 1), lambda i, j: (0, 0))],
        out_specs=pl.BlockSpec((None, c, s_blk), lambda i, j: (i, 0, j)),
        out_shape=jax.ShapeDtypeStruct((b, c, s), jnp.float32),
        compiler_params=_compiler_params(),
    )(z, scale.reshape(c, 1), shift.reshape(c, 1))


# ------------------------------------------------------------ FourierUnit ---
def fourier_unit(x, conv_w, gamma, beta, *, tile_hw=False):
    """FourierUnit forward.  x: (N, C, D, H, W) f32.  Returns (N, C, D, H, W)
    f32 (or the 2x2 spatially tiled result if tile_hw, for the LFU path)."""
    n, c, d, h, w = x.shape
    wf = w // 2 + 1
    cd = _SPECTRAL_DTYPE

    ar, ai = _rdft_mats(w)
    acat = jnp.concatenate([ar, ai], axis=1).astype(cd)              # (W, 2Wf)
    br, bi = _dft_mats(h)
    dr, di = _idft_mats(h)
    crm, cim = _irdft_mats(w)
    ccat = jnp.concatenate([crm, cim], axis=0).astype(cd)            # (2Wf, W)
    br, bi, dr, di = (m.astype(cd) for m in (br, bi, dr, di))

    # Forward 2-D ortho DFT, fused per (n, d) block of C planes (no HBM transposes).
    spec = pl.pallas_call(
        _rfft2_kernel,
        grid=(n, d),
        in_specs=[pl.BlockSpec((None, c, None, h, w), lambda i, j: (i, 0, j, 0, 0)),
                  pl.BlockSpec((w, 2 * wf), lambda i, j: (0, 0)),
                  pl.BlockSpec((h, h), lambda i, j: (0, 0)),
                  pl.BlockSpec((h, h), lambda i, j: (0, 0))],
        out_specs=pl.BlockSpec((None, None, 2 * c, h, wf),
                               lambda i, j: (i, j, 0, 0, 0)),
        out_shape=jax.ShapeDtypeStruct((n, d, 2 * c, h, wf), cd),
        compiler_params=_compiler_params(),
    )(x, acat, br, bi)

    # 1x1x1 conv over the 2C spectral channels + per-block BN partial stats.
    spec2 = spec.reshape(n * d, 2 * c, h * wf)                        # free reshape
    z, stats = pallas_pconv_stats([(conv_w.astype(cd), [spec2])], out_dtype=cd)
    scale, shift = _finish_bn(stats, float(n * d * h * wf), gamma, beta)

    # BN + ReLU + inverse 2-D ortho DFT (real output only), fused per (n, d).
    z5 = z.reshape(n, d, 2 * c, h, wf)                                # free reshape
    ho, wo = (2 * h, 2 * w) if tile_hw else (h, w)
    return pl.pallas_call(
        functools.partial(_bn_relu_irfft2_kernel, tile_hw=tile_hw),
        grid=(n, d),
        in_specs=[pl.BlockSpec((None, None, 2 * c, h, wf),
                               lambda i, j: (i, j, 0, 0, 0)),
                  pl.BlockSpec(memory_space=pltpu.MemorySpace.SMEM),
                  pl.BlockSpec(memory_space=pltpu.MemorySpace.SMEM),
                  pl.BlockSpec((h, h), lambda i, j: (0, 0)),
                  pl.BlockSpec((h, h), lambda i, j: (0, 0)),
                  pl.BlockSpec((2 * wf, w), lambda i, j: (0, 0))],
        out_specs=pl.BlockSpec((None, c, None, ho, wo),
                               lambda i, j: (i, 0, j, 0, 0)),
        out_shape=jax.ShapeDtypeStruct((n, c, d, ho, wo), jnp.float32),
        compiler_params=_compiler_params(),
    )(z5, scale, shift, dr, di, ccat)


# ------------------------------------------------------------- FFC_BN_ACT ---
def ffc_bn_act(x_l, x_g, params):
    """FFC_BN_ACT forward (tuple input).  Returns (y_l, y_g)."""
    n, c_l, d, h, w = x_l.shape
    c_g = x_g.shape[1]
    s = d * h * w
    xl3 = x_l.reshape(n, c_l, s)
    xg3 = x_g.reshape(n, c_g, s)

    # ------------- local output: y_l = bn_l(l2l(x_l) + g2l(x_g)), act=Identity
    z_l, st_l = pallas_pconv_stats([(params["l2l_w"], [xl3]),
                                    (params["g2l_w"], [xg3])])
    sc_l, sh_l = _finish_bn(st_l, float(n * s), params["bnl_g"], params["bnl_b"])
    y_l = pallas_affine(z_l, sc_l, sh_l, relu=False).reshape(n, -1, d, h, w)

    # ------------- global output: y_g = bn_g(SpectralTransformer(x_g) + l2g(x_l))
    # conv1 of the SpectralTransformer: 1x1x1 conv + BN + ReLU (two-pass BN).
    z1, st1 = pallas_pconv_stats([(params["conv1_w"], [xg3])])
    sc1, sh1 = _finish_bn(st1, float(n * s), params["bn1_g"], params["bn1_b"])
    x1 = pallas_affine(z1, sc1, sh1, relu=True)                   # (N, c_mid, S)
    c_mid = params["conv1_w"].shape[0]
    x1_5 = x1.reshape(n, c_mid, d, h, w)

    # Global Fourier unit.
    fu = fourier_unit(x1_5, params["fu_w"], params["fu_g"], params["fu_b"])

    # Local Fourier unit: split H and W halves onto channels, transform, and let
    # the inverse-FFT kernel emit the 2x2 spatially repeated result directly.
    c4 = c_mid // 4
    h2, w2 = h // 2, w // 2
    xa = x1_5[:, :c4]
    xs_in = jnp.concatenate([xa[:, :, :, :h2, :], xa[:, :, :, h2:, :]], axis=1)
    xs_in = jnp.concatenate([xs_in[..., :w2], xs_in[..., w2:]], axis=1)
    xs = fourier_unit(xs_in, params["lfu_w"], params["lfu_g"], params["lfu_b"],
                      tile_hw=True)                               # (N, c_mid, D, H, W)

    # conv2 on (x1 + fu + lfu) fused with l2g(x_l) and the bn_g partial stats.
    z_g, st_g = pallas_pconv_stats(
        [(params["conv2_w"], [x1, fu.reshape(n, c_mid, s), xs.reshape(n, c_mid, s)]),
         (params["l2g_w"], [xl3])])
    sc_g, sh_g = _finish_bn(st_g, float(n * s), params["bng_g"], params["bng_b"])
    y_g = pallas_affine(z_g, sc_g, sh_g, relu=False).reshape(n, -1, d, h, w)

    return y_l, y_g


# --------------------------------------------------------------- params ------
def init_params(key, in_channels, out_channels, ratio_gin=0.5, ratio_gout=0.5):
    in_cg = int(in_channels * ratio_gin)
    in_cl = in_channels - in_cg
    out_cg = int(out_channels * ratio_gout)
    out_cl = out_channels - out_cg
    c_mid = out_cg // 2
    keys = jax.random.split(key, 7)

    def u(k, shape, fan_in):
        bound = 1.0 / float(fan_in) ** 0.5
        return jax.random.uniform(k, shape, jnp.float32, -bound, bound)

    return {
        "l2l_w": u(keys[0], (out_cl, in_cl), in_cl),
        "g2l_w": u(keys[1], (out_cl, in_cg), in_cg),
        "l2g_w": u(keys[2], (out_cg, in_cl), in_cl),
        "conv1_w": u(keys[3], (c_mid, in_cg), in_cg),
        "bn1_g": jnp.ones((c_mid,), jnp.float32),
        "bn1_b": jnp.zeros((c_mid,), jnp.float32),
        "fu_w": u(keys[4], (2 * c_mid, 2 * c_mid), 2 * c_mid),
        "fu_g": jnp.ones((2 * c_mid,), jnp.float32),
        "fu_b": jnp.zeros((2 * c_mid,), jnp.float32),
        "lfu_w": u(keys[5], (2 * c_mid, 2 * c_mid), 2 * c_mid),
        "lfu_g": jnp.ones((2 * c_mid,), jnp.float32),
        "lfu_b": jnp.zeros((2 * c_mid,), jnp.float32),
        "conv2_w": u(keys[6], (out_cg, c_mid), c_mid),
        "bnl_g": jnp.ones((out_cl,), jnp.float32),
        "bnl_b": jnp.zeros((out_cl,), jnp.float32),
        "bng_g": jnp.ones((out_cg,), jnp.float32),
        "bng_b": jnp.zeros((out_cg,), jnp.float32),
    }


if __name__ == "__main__":
    key = jax.random.PRNGKey(0)
    k1, k2, kp = jax.random.split(key, 3)
    N, C_IN, C_OUT, D, H, W = 2, 8, 16, 4, 8, 8
    RATIO = 0.5
    in_cg = int(C_IN * RATIO)
    in_cl = C_IN - in_cg
    out_cg = int(C_OUT * RATIO)
    out_cl = C_OUT - out_cg

    x_l = jax.random.normal(k1, (N, in_cl, D, H, W), jnp.float32)
    x_g = jax.random.normal(k2, (N, in_cg, D, H, W), jnp.float32)
    params = init_params(kp, C_IN, C_OUT, RATIO, RATIO)

    fwd = jax.jit(ffc_bn_act)
    y_l, y_g = fwd(x_l, x_g, params)
    y_l, y_g = jax.block_until_ready((y_l, y_g))

    assert y_l.shape == (N, out_cl, D, H, W), y_l.shape
    assert y_g.shape == (N, out_cg, D, H, W), y_g.shape
    assert bool(jnp.all(jnp.isfinite(y_l)))
    assert bool(jnp.all(jnp.isfinite(y_g)))
    print("KERNEL_OK")
</pallas_src>

<mosaic_0001>
module attributes {stable_mosaic.version = 11 : i64} {
  func.func @kernel(%arg0: i32, %arg1: i32, %arg2: memref<1x4x256xf32, #tpu.memory_space<vmem>>, %arg3: memref<4x4xf32, #tpu.memory_space<vmem>>, %arg4: memref<1x4x256xf32, #tpu.memory_space<vmem>>, %arg5: memref<1x1x4x2xf32, #tpu.memory_space<vmem>>) attributes {dimension_semantics = [#tpu.dimension_semantics<parallel>, #tpu.dimension_semantics<parallel>], iteration_bounds = array<i64: 2, 1>, scalar_prefetch = 0 : i64, scratch_operands = 0 : i64, tpu.core_type = #tpu.core_type<tc>, window_params = [{transform_indices = @transform_0, window_bounds = array<i64: 1, 4, 256>}, {pipeline_mode = #tpu.pipeline_mode<synchronous>, transform_indices = @transform_1, window_bounds = array<i64: 4, 4>}, {transform_indices = @transform_2, window_bounds = array<i64: 1, 4, 256>}, {transform_indices = @transform_3, window_bounds = array<i64: 1, 1, 4, 2>}]} {
    %c0 = arith.constant 0 : index
    %c0_0 = arith.constant 0 : index
    %0 = vector.load %arg3[%c0, %c0_0] : memref<4x4xf32, #tpu.memory_space<vmem>>, vector<4x4xf32>
    %c0_1 = arith.constant 0 : index
    %c0_2 = arith.constant 0 : index
    %c0_3 = arith.constant 0 : index
    %1 = vector.load %arg2[%c0_1, %c0_2, %c0_3] : memref<1x4x256xf32, #tpu.memory_space<vmem>>, vector<1x4x256xf32>
    %2 = vector.shape_cast %1 : vector<1x4x256xf32> to vector<4x256xf32>
    %cst = arith.constant dense<0.000000e+00> : vector<4x256xf32>
    %3 = tpu.matmul %0, %2, %cst {dimension_numbers = #tpu.dot_dimension_numbers<[1], [0], [0], [1], [0, 0, 1, 1], [], []>} : vector<4x4xf32>, vector<4x256xf32>, vector<4x256xf32> -> vector<4x256xf32>
    %c0_4 = arith.constant 0 : index
    %c0_5 = arith.constant 0 : index
    %c0_6 = arith.constant 0 : index
    %4 = vector.load %arg4[%c0_4, %c0_5, %c0_6] : memref<1x4x256xf32, #tpu.memory_space<vmem>>, vector<1x4x256xf32>
    %5 = vector.shape_cast %4 : vector<1x4x256xf32> to vector<4x256xf32>
    %6 = vector.shape_cast %3 : vector<4x256xf32> to vector<1x4x256xf32>
    tpu.vector_store %arg4[%c0_4, %c0_5, %c0_6], %6 {strides = array<i32>} : memref<1x4x256xf32, #tpu.memory_space<vmem>>, vector<1x4x256xf32>,
    %cst_7 = arith.constant dense<0.000000e+00> : vector<4xf32>
    %7 = vector.multi_reduction <add>, %3, %cst_7 [1] : vector<4x256xf32> to vector<4xf32>
    %8 = vector.shape_cast %7 : vector<4xf32> to vector<4x1xf32>
    %9 = arith.mulf %3, %3 : vector<4x256xf32>
    %cst_8 = arith.constant dense<0.000000e+00> : vector<4xf32>
    %10 = vector.multi_reduction <add>, %9, %cst_8 [1] : vector<4x256xf32> to vector<4xf32>
    %11 = vector.shape_cast %10 : vector<4xf32> to vector<4x1xf32>
    %12 = tpu.concatenate %8, %11 in 1 : vector<4x1xf32>, vector<4x1xf32> -> vector<4x2xf32>
    %c0_9 = arith.constant 0 : index
    %c0_10 = arith.constant 0 : index
    %c0_11 = arith.constant 0 : index
    %c0_12 = arith.constant 0 : index
    %13 = vector.load %arg5[%c0_9, %c0_10, %c0_11, %c0_12] : memref<1x1x4x2xf32, #tpu.memory_space<vmem>>, vector<1x1x4x2xf32>
    %14 = vector.shape_cast %13 : vector<1x1x4x2xf32> to vector<4x2xf32>
    %15 = vector.shape_cast %12 : vector<4x2xf32> to vector<1x1x4x2xf32>
    tpu.vector_store %arg5[%c0_9, %c0_10, %c0_11, %c0_12], %15 {strides = array<i32>} : memref<1x1x4x2xf32, #tpu.memory_space<vmem>>, vector<1x1x4x2xf32>,
    return
  }
  func.func @transform_0(%arg0: i32, %arg1: i32) -> (i32, i32, i32) {
    %c0_i32 = arith.constant 0 : i32
    %c0_i32_0 = arith.constant 0 : i32
    return %arg0, %c0_i32, %arg1 : i32, i32, i32
  }
  func.func @transform_1(%arg0: i32, %arg1: i32) -> (i32, i32) {
    %c0_i32 = arith.constant 0 : i32
    %c0_i32_0 = arith.constant 0 : i32
    %c0_i32_1 = arith.constant 0 : i32
    return %c0_i32, %c0_i32_0 : i32, i32
  }
  func.func @transform_2(%arg0: i32, %arg1: i32) -> (i32, i32, i32) {
    %c0_i32 = arith.constant 0 : i32
    %c0_i32_0 = arith.constant 0 : i32
    return %arg0, %c0_i32, %arg1 : i32, i32, i32
  }
  func.func @transform_3(%arg0: i32, %arg1: i32) -> (i32, i32, i32, i32) {
    %c0_i32 = arith.constant 0 : i32
    %c0_i32_0 = arith.constant 0 : i32
    %c0_i32_1 = arith.constant 0 : i32
    return %arg0, %arg1, %c0_i32, %c0_i32_0 : i32, i32, i32, i32
  }
}

module attributes {stable_mosaic.version = 11 : i64} {
  func.func @_affine_kernel(%arg0: i32, %arg1: i32, %arg2: memref<1x4x256xf32, #tpu.memory_space<vmem>>, %arg3: memref<4x1xf32, #tpu.memory_space<vmem>>, %arg4: memref<4x1xf32, #tpu.memory_space<vmem>>, %arg5: memref<1x4x256xf32, #tpu.memory_space<vmem>>) attributes {dimension_semantics = [#tpu.dimension_semantics<parallel>, #tpu.dimension_semantics<parallel>], iteration_bounds = array<i64: 2, 1>, scalar_prefetch = 0 : i64, scratch_operands = 0 : i64, tpu.core_type = #tpu.core_type<tc>, window_params = [{transform_indices = @transform_0, window_bounds = array<i64: 1, 4, 256>}, {pipeline_mode = #tpu.pipeline_mode<synchronous>, transform_indices = @transform_1, window_bounds = array<i64: 4, 1>}, {pipeline_mode = #tpu.pipeline_mode<synchronous>, transform_indices = @transform_2, window_bounds = array<i64: 4, 1>}, {transform_indices = @transform_3, window_bounds = array<i64: 1, 4, 256>}]} {
    %c0 = arith.constant 0 : index
    %c0_0 = arith.constant 0 : index
    %c0_1 = arith.constant 0 : index
    %0 = vector.load %arg2[%c0, %c0_0, %c0_1] : memref<1x4x256xf32, #tpu.memory_space<vmem>>, vector<1x4x256xf32>
    %1 = vector.shape_cast %0 : vector<1x4x256xf32> to vector<4x256xf32>
    %c0_2 = arith.constant 0 : index
    %c0_3 = arith.constant 0 : index
    %2 = vector.load %arg3[%c0_2, %c0_3] : memref<4x1xf32, #tpu.memory_space<vmem>>, vector<4x1xf32>
    %3 = vector.broadcast %2 : vector<4x1xf32> to vector<4x256xf32>
    %4 = arith.mulf %1, %3 : vector<4x256xf32>
    %c0_4 = arith.constant 0 : index
    %c0_5 = arith.constant 0 : index
    %5 = vector.load %arg4[%c0_4, %c0_5] : memref<4x1xf32, #tpu.memory_space<vmem>>, vector<4x1xf32>
    %6 = vector.broadcast %5 : vector<4x1xf32> to vector<4x256xf32>
    %7 = arith.addf %4, %6 : vector<4x256xf32>
    %cst = arith.constant 0.000000e+00 : f32
    %8 = vector.broadcast %cst : f32 to vector<4x256xf32>
    %9 = arith.maximumf %7, %8 : vector<4x256xf32>
    %c0_6 = arith.constant 0 : index
    %c0_7 = arith.constant 0 : index
    %c0_8 = arith.constant 0 : index
    %10 = vector.load %arg5[%c0_6, %c0_7, %c0_8] : memref<1x4x256xf32, #tpu.memory_space<vmem>>, vector<1x4x256xf32>
    %11 = vector.shape_cast %10 : vector<1x4x256xf32> to vector<4x256xf32>
    %12 = vector.shape_cast %9 : vector<4x256xf32> to vector<1x4x256xf32>
    tpu.vector_store %arg5[%c0_6, %c0_7, %c0_8], %12 {strides = array<i32>} : memref<1x4x256xf32, #tpu.memory_space<vmem>>, vector<1x4x256xf32>,
    return
  }
  func.func @transform_0(%arg0: i32, %arg1: i32) -> (i32, i32, i32) {
    %c0_i32 = arith.constant 0 : i32
    %c0_i32_0 = arith.constant 0 : i32
    return %arg0, %c0_i32, %arg1 : i32, i32, i32
  }
  func.func @transform_1(%arg0: i32, %arg1: i32) -> (i32, i32) {
    %c0_i32 = arith.constant 0 : i32
    %c0_i32_0 = arith.constant 0 : i32
    %c0_i32_1 = arith.constant 0 : i32
    return %c0_i32, %c0_i32_0 : i32, i32
  }
  func.func @transform_2(%arg0: i32, %arg1: i32) -> (i32, i32) {
    %c0_i32 = arith.constant 0 : i32
    %c0_i32_0 = arith.constant 0 : i32
    %c0_i32_1 = arith.constant 0 : i32
    return %c0_i32, %c0_i32_0 : i32, i32
  }
  func.func @transform_3(%arg0: i32, %arg1: i32) -> (i32, i32, i32) {
    %c0_i32 = arith.constant 0 : i32
    %c0_i32_0 = arith.constant 0 : i32
    return %arg0, %c0_i32, %arg1 : i32, i32, i32
  }
}

module attributes {stable_mosaic.version = 11 : i64} {
  func.func @kernel(%arg0: i32, %arg1: i32, %arg2: memref<1x4x256xf32, #tpu.memory_space<vmem>>, %arg3: memref<1x4x256xf32, #tpu.memory_space<vmem>>, %arg4: memref<8x4xf32, #tpu.memory_space<vmem>>, %arg5: memref<8x4xf32, #tpu.memory_space<vmem>>, %arg6: memref<1x8x256xf32, #tpu.memory_space<vmem>>, %arg7: memref<1x1x8x2xf32, #tpu.memory_space<vmem>>) attributes {dimension_semantics = [#tpu.dimension_semantics<parallel>, #tpu.dimension_semantics<parallel>], iteration_bounds = array<i64: 2, 1>, scalar_prefetch = 0 : i64, scratch_operands = 0 : i64, tpu.core_type = #tpu.core_type<tc>, window_params = [{transform_indices = @transform_0, window_bounds = array<i64: 1, 4, 256>}, {transform_indices = @transform_1, window_bounds = array<i64: 1, 4, 256>}, {pipeline_mode = #tpu.pipeline_mode<synchronous>, transform_indices = @transform_2, window_bounds = array<i64: 8, 4>}, {pipeline_mode = #tpu.pipeline_mode<synchronous>, transform_indices = @transform_3, window_bounds = array<i64: 8, 4>}, {transform_indices = @transform_4, window_bounds = array<i64: 1, 8, 256>}, {transform_indices = @transform_5, window_bounds = array<i64: 1, 1, 8, 2>}]} {
    %c0 = arith.constant 0 : index
    %c0_0 = arith.constant 0 : index
    %0 = vector.load %arg4[%c0, %c0_0] : memref<8x4xf32, #tpu.memory_space<vmem>>, vector<8x4xf32>
    %c0_1 = arith.constant 0 : index
    %c0_2 = arith.constant 0 : index
    %c0_3 = arith.constant 0 : index
    %1 = vector.load %arg2[%c0_1, %c0_2, %c0_3] : memref<1x4x256xf32, #tpu.memory_space<vmem>>, vector<1x4x256xf32>
    %2 = vector.shape_cast %1 : vector<1x4x256xf32> to vector<4x256xf32>
    %cst = arith.constant dense<0.000000e+00> : vector<8x256xf32>
    %3 = tpu.matmul %0, %2, %cst {dimension_numbers = #tpu.dot_dimension_numbers<[1], [0], [0], [1], [0, 0, 1, 1], [], []>} : vector<8x4xf32>, vector<4x256xf32>, vector<8x256xf32> -> vector<8x256xf32>
    %c0_4 = arith.constant 0 : index
    %c0_5 = arith.constant 0 : index
    %4 = vector.load %arg5[%c0_4, %c0_5] : memref<8x4xf32, #tpu.memory_space<vmem>>, vector<8x4xf32>
    %c0_6 = arith.constant 0 : index
    %c0_7 = arith.constant 0 : index
    %c0_8 = arith.constant 0 : index
    %5 = vector.load %arg3[%c0_6, %c0_7, %c0_8] : memref<1x4x256xf32, #tpu.memory_space<vmem>>, vector<1x4x256xf32>
    %6 = vector.shape_cast %5 : vector<1x4x256xf32> to vector<4x256xf32>
    %cst_9 = arith.constant dense<0.000000e+00> : vector<8x256xf32>
    %7 = tpu.matmul %4, %6, %cst_9 {dimension_numbers = #tpu.dot_dimension_numbers<[1], [0], [0], [1], [0, 0, 1, 1], [], []>} : vector<8x4xf32>, vector<4x256xf32>, vector<8x256xf32> -> vector<8x256xf32>
    %8 = arith.addf %3, %7 : vector<8x256xf32>
    %c0_10 = arith.constant 0 : index
    %c0_11 = arith.constant 0 : index
    %c0_12 = arith.constant 0 : index
    %9 = vector.load %arg6[%c0_10, %c0_11, %c0_12] : memref<1x8x256xf32, #tpu.memory_space<vmem>>, vector<1x8x256xf32>
    %10 = vector.shape_cast %9 : vector<1x8x256xf32> to vector<8x256xf32>
    %11 = vector.shape_cast %8 : vector<8x256xf32> to vector<1x8x256xf32>
    tpu.vector_store %arg6[%c0_10, %c0_11, %c0_12], %11 {strides = array<i32>} : memref<1x8x256xf32, #tpu.memory_space<vmem>>, vector<1x8x256xf32>,
    %cst_13 = arith.constant dense<0.000000e+00> : vector<8xf32>
    %12 = vector.multi_reduction <add>, %8, %cst_13 [1] : vector<8x256xf32> to vector<8xf32>
    %13 = vector.shape_cast %12 : vector<8xf32> to vector<8x1xf32>
    %14 = arith.mulf %8, %8 : vector<8x256xf32>
    %cst_14 = arith.constant dense<0.000000e+00> : vector<8xf32>
    %15 = vector.multi_reduction <add>, %14, %cst_14 [1] : vector<8x256xf32> to vector<8xf32>
    %16 = vector.shape_cast %15 : vector<8xf32> to vector<8x1xf32>
    %17 = tpu.concatenate %13, %16 in 1 : vector<8x1xf32>, vector<8x1xf32> -> vector<8x2xf32>
    %c0_15 = arith.constant 0 : index
    %c0_16 = arith.constant 0 : index
    %c0_17 = arith.constant 0 : index
    %c0_18 = arith.constant 0 : index
    %18 = vector.load %arg7[%c0_15, %c0_16, %c0_17, %c0_18] : memref<1x1x8x2xf32, #tpu.memory_space<vmem>>, vector<1x1x8x2xf32>
    %19 = vector.shape_cast %18 : vector<1x1x8x2xf32> to vector<8x2xf32>
    %20 = vector.shape_cast %17 : vector<8x2xf32> to vector<1x1x8x2xf32>
    tpu.vector_store %arg7[%c0_15, %c0_16, %c0_17, %c0_18], %20 {strides = array<i32>} : memref<1x1x8x2xf32, #tpu.memory_space<vmem>>, vector<1x1x8x2xf32>,
    return
  }
  func.func @transform_0(%arg0: i32, %arg1: i32) -> (i32, i32, i32) {
    %c0_i32 = arith.constant 0 : i32
    %c0_i32_0 = arith.constant 0 : i32
    return %arg0, %c0_i32, %arg1 : i32, i32, i32
  }
  func.func @transform_1(%arg0: i32, %arg1: i32) -> (i32, i32, i32) {
    %c0_i32 = arith.constant 0 : i32
    %c0_i32_0 = arith.constant 0 : i32
    return %arg0, %c0_i32, %arg1 : i32, i32, i32
  }
  func.func @transform_2(%arg0: i32, %arg1: i32) -> (i32, i32) {
    %c0_i32 = arith.constant 0 : i32
    %c0_i32_0 = arith.constant 0 : i32
    %c0_i32_1 = arith.constant 0 : i32
    return %c0_i32, %c0_i32_0 : i32, i32
  }
  func.func @transform_3(%arg0: i32, %arg1: i32) -> (i32, i32) {
    %c0_i32 = arith.constant 0 : i32
    %c0_i32_0 = arith.constant 0 : i32
    %c0_i32_1 = arith.constant 0 : i32
    return %c0_i32, %c0_i32_0 : i32, i32
  }
  func.func @transform_4(%arg0: i32, %arg1: i32) -> (i32, i32, i32) {
    %c0_i32 = arith.constant 0 : i32
    %c0_i32_0 = arith.constant 0 : i32
    return %arg0, %c0_i32, %arg1 : i32, i32, i32
  }
  func.func @transform_5(%arg0: i32, %arg1: i32) -> (i32, i32, i32, i32) {
    %c0_i32 = arith.constant 0 : i32
    %c0_i32_0 = arith.constant 0 : i32
    %c0_i32_1 = arith.constant 0 : i32
    return %arg0, %arg1, %c0_i32, %c0_i32_0 : i32, i32, i32, i32
  }
}

module attributes {stable_mosaic.version = 11 : i64} {
  func.func @_affine_kernel(%arg0: i32, %arg1: i32, %arg2: memref<1x8x256xf32, #tpu.memory_space<vmem>>, %arg3: memref<8x1xf32, #tpu.memory_space<vmem>>, %arg4: memref<8x1xf32, #tpu.memory_space<vmem>>, %arg5: memref<1x8x256xf32, #tpu.memory_space<vmem>>) attributes {dimension_semantics = [#tpu.dimension_semantics<parallel>, #tpu.dimension_semantics<parallel>], iteration_bounds = array<i64: 2, 1>, scalar_prefetch = 0 : i64, scratch_operands = 0 : i64, tpu.core_type = #tpu.core_type<tc>, window_params = [{transform_indices = @transform_0, window_bounds = array<i64: 1, 8, 256>}, {pipeline_mode = #tpu.pipeline_mode<synchronous>, transform_indices = @transform_1, window_bounds = array<i64: 8, 1>}, {pipeline_mode = #tpu.pipeline_mode<synchronous>, transform_indices = @transform_2, window_bounds = array<i64: 8, 1>}, {transform_indices = @transform_3, window_bounds = array<i64: 1, 8, 256>}]} {
    %c0 = arith.constant 0 : index
    %c0_0 = arith.constant 0 : index
    %c0_1 = arith.constant 0 : index
    %0 = vector.load %arg2[%c0, %c0_0, %c0_1] : memref<1x8x256xf32, #tpu.memory_space<vmem>>, vector<1x8x256xf32>
    %1 = vector.shape_cast %0 : vector<1x8x256xf32> to vector<8x256xf32>
    %c0_2 = arith.constant 0 : index
    %c0_3 = arith.constant 0 : index
    %2 = vector.load %arg3[%c0_2, %c0_3] : memref<8x1xf32, #tpu.memory_space<vmem>>, vector<8x1xf32>
    %3 = vector.broadcast %2 : vector<8x1xf32> to vector<8x256xf32>
    %4 = arith.mulf %1, %3 : vector<8x256xf32>
    %c0_4 = arith.constant 0 : index
    %c0_5 = arith.constant 0 : index
    %5 = vector.load %arg4[%c0_4, %c0_5] : memref<8x1xf32, #tpu.memory_space<vmem>>, vector<8x1xf32>
    %6 = vector.broadcast %5 : vector<8x1xf32> to vector<8x256xf32>
    %7 = arith.addf %4, %6 : vector<8x256xf32>
    %c0_6 = arith.constant 0 : index
    %c0_7 = arith.constant 0 : index
    %c0_8 = arith.constant 0 : index
    %8 = vector.load %arg5[%c0_6, %c0_7, %c0_8] : memref<1x8x256xf32, #tpu.memory_space<vmem>>, vector<1x8x256xf32>
    %9 = vector.shape_cast %8 : vector<1x8x256xf32> to vector<8x256xf32>
    %10 = vector.shape_cast %7 : vector<8x256xf32> to vector<1x8x256xf32>
    tpu.vector_store %arg5[%c0_6, %c0_7, %c0_8], %10 {strides = array<i32>} : memref<1x8x256xf32, #tpu.memory_space<vmem>>, vector<1x8x256xf32>,
    return
  }
  func.func @transform_0(%arg0: i32, %arg1: i32) -> (i32, i32, i32) {
    %c0_i32 = arith.constant 0 : i32
    %c0_i32_0 = arith.constant 0 : i32
    return %arg0, %c0_i32, %arg1 : i32, i32, i32
  }
  func.func @transform_1(%arg0: i32, %arg1: i32) -> (i32, i32) {
    %c0_i32 = arith.constant 0 : i32
    %c0_i32_0 = arith.constant 0 : i32
    %c0_i32_1 = arith.constant 0 : i32
    return %c0_i32, %c0_i32_0 : i32, i32
  }
  func.func @transform_2(%arg0: i32, %arg1: i32) -> (i32, i32) {
    %c0_i32 = arith.constant 0 : i32
    %c0_i32_0 = arith.constant 0 : i32
    %c0_i32_1 = arith.constant 0 : i32
    return %c0_i32, %c0_i32_0 : i32, i32
  }
  func.func @transform_3(%arg0: i32, %arg1: i32) -> (i32, i32, i32) {
    %c0_i32 = arith.constant 0 : i32
    %c0_i32_0 = arith.constant 0 : i32
    return %arg0, %c0_i32, %arg1 : i32, i32, i32
  }
}

module attributes {stable_mosaic.version = 11 : i64} {
  func.func @kernel(%arg0: i32, %arg1: i32, %arg2: memref<1x8x40xbf16, #tpu.memory_space<vmem>>, %arg3: memref<8x8xbf16, #tpu.memory_space<vmem>>, %arg4: memref<1x8x40xbf16, #tpu.memory_space<vmem>>, %arg5: memref<1x1x8x2xf32, #tpu.memory_space<vmem>>) attributes {dimension_semantics = [#tpu.dimension_semantics<parallel>, #tpu.dimension_semantics<parallel>], iteration_bounds = array<i64: 8, 1>, scalar_prefetch = 0 : i64, scratch_operands = 0 : i64, tpu.core_type = #tpu.core_type<tc>, window_params = [{transform_indices = @transform_0, window_bounds = array<i64: 1, 8, 40>}, {pipeline_mode = #tpu.pipeline_mode<synchronous>, transform_indices = @transform_1, window_bounds = array<i64: 8, 8>}, {transform_indices = @transform_2, window_bounds = array<i64: 1, 8, 40>}, {transform_indices = @transform_3, window_bounds = array<i64: 1, 1, 8, 2>}]} {
    %c0 = arith.constant 0 : index
    %c0_0 = arith.constant 0 : index
    %0 = vector.load %arg3[%c0, %c0_0] : memref<8x8xbf16, #tpu.memory_space<vmem>>, vector<8x8xbf16>
    %c0_1 = arith.constant 0 : index
    %c0_2 = arith.constant 0 : index
    %c0_3 = arith.constant 0 : index
    %1 = vector.load %arg2[%c0_1, %c0_2, %c0_3] : memref<1x8x40xbf16, #tpu.memory_space<vmem>>, vector<1x8x40xbf16>
    %2 = vector.shape_cast %1 : vector<1x8x40xbf16> to vector<8x40xbf16>
    %cst = arith.constant dense<0.000000e+00> : vector<8x40xf32>
    %3 = tpu.matmul %0, %2, %cst {dimension_numbers = #tpu.dot_dimension_numbers<[1], [0], [0], [1], [0, 0, 1, 1], [], []>} : vector<8x8xbf16>, vector<8x40xbf16>, vector<8x40xf32> -> vector<8x40xf32>
    %4 = arith.truncf %3 : vector<8x40xf32> to vector<8x40xbf16>
    %c0_4 = arith.constant 0 : index
    %c0_5 = arith.constant 0 : index
    %c0_6 = arith.constant 0 : index
    %5 = vector.load %arg4[%c0_4, %c0_5, %c0_6] : memref<1x8x40xbf16, #tpu.memory_space<vmem>>, vector<1x8x40xbf16>
    %6 = vector.shape_cast %5 : vector<1x8x40xbf16> to vector<8x40xbf16>
    %7 = vector.shape_cast %4 : vector<8x40xbf16> to vector<1x8x40xbf16>
    tpu.vector_store %arg4[%c0_4, %c0_5, %c0_6], %7 {strides = array<i32>} : memref<1x8x40xbf16, #tpu.memory_space<vmem>>, vector<1x8x40xbf16>,
    %cst_7 = arith.constant dense<0.000000e+00> : vector<8xf32>
    %8 = vector.multi_reduction <add>, %3, %cst_7 [1] : vector<8x40xf32> to vector<8xf32>
    %9 = vector.shape_cast %8 : vector<8xf32> to vector<8x1xf32>
    %10 = arith.mulf %3, %3 : vector<8x40xf32>
    %cst_8 = arith.constant dense<0.000000e+00> : vector<8xf32>
    %11 = vector.multi_reduction <add>, %10, %cst_8 [1] : vector<8x40xf32> to vector<8xf32>
    %12 = vector.shape_cast %11 : vector<8xf32> to vector<8x1xf32>
    %13 = tpu.concatenate %9, %12 in 1 : vector<8x1xf32>, vector<8x1xf32> -> vector<8x2xf32>
    %c0_9 = arith.constant 0 : index
    %c0_10 = arith.constant 0 : index
    %c0_11 = arith.constant 0 : index
    %c0_12 = arith.constant 0 : index
    %14 = vector.load %arg5[%c0_9, %c0_10, %c0_11, %c0_12] : memref<1x1x8x2xf32, #tpu.memory_space<vmem>>, vector<1x1x8x2xf32>
    %15 = vector.shape_cast %14 : vector<1x1x8x2xf32> to vector<8x2xf32>
    %16 = vector.shape_cast %13 : vector<8x2xf32> to vector<1x1x8x2xf32>
    tpu.vector_store %arg5[%c0_9, %c0_10, %c0_11, %c0_12], %16 {strides = array<i32>} : memref<1x1x8x2xf32, #tpu.memory_space<vmem>>, vector<1x1x8x2xf32>,
    return
  }
  func.func @transform_0(%arg0: i32, %arg1: i32) -> (i32, i32, i32) {
    %c0_i32 = arith.constant 0 : i32
    %c0_i32_0 = arith.constant 0 : i32
    return %arg0, %c0_i32, %arg1 : i32, i32, i32
  }
  func.func @transform_1(%arg0: i32, %arg1: i32) -> (i32, i32) {
    %c0_i32 = arith.constant 0 : i32
    %c0_i32_0 = arith.constant 0 : i32
    %c0_i32_1 = arith.constant 0 : i32
    return %c0_i32, %c0_i32_0 : i32, i32
  }
  func.func @transform_2(%arg0: i32, %arg1: i32) -> (i32, i32, i32) {
    %c0_i32 = arith.constant 0 : i32
    %c0_i32_0 = arith.constant 0 : i32
    return %arg0, %c0_i32, %arg1 : i32, i32, i32
  }
  func.func @transform_3(%arg0: i32, %arg1: i32) -> (i32, i32, i32, i32) {
    %c0_i32 = arith.constant 0 : i32
    %c0_i32_0 = arith.constant 0 : i32
    %c0_i32_1 = arith.constant 0 : i32
    return %arg0, %arg1, %c0_i32, %c0_i32_0 : i32, i32, i32, i32
  }
}

module attributes {stable_mosaic.version = 11 : i64} {
  func.func @_rfft2_kernel(%arg0: i32, %arg1: i32, %arg2: memref<1x4x1x8x8xf32, #tpu.memory_space<vmem>>, %arg3: memref<8x10xbf16, #tpu.memory_space<vmem>>, %arg4: memref<8x8xbf16, #tpu.memory_space<vmem>>, %arg5: memref<8x8xbf16, #tpu.memory_space<vmem>>, %arg6: memref<1x1x8x8x5xbf16, #tpu.memory_space<vmem>>) attributes {dimension_semantics = [#tpu.dimension_semantics<parallel>, #tpu.dimension_semantics<parallel>], iteration_bounds = array<i64: 2, 4>, scalar_prefetch = 0 : i64, scratch_operands = 0 : i64, tpu.core_type = #tpu.core_type<tc>, window_params = [{transform_indices = @transform_0, window_bounds = array<i64: 1, 4, 1, 8, 8>}, {pipeline_mode = #tpu.pipeline_mode<synchronous>, transform_indices = @transform_1, window_bounds = array<i64: 8, 10>}, {pipeline_mode = #tpu.pipeline_mode<synchronous>, transform_indices = @transform_2, window_bounds = array<i64: 8, 8>}, {pipeline_mode = #tpu.pipeline_mode<synchronous>, transform_indices = @transform_3, window_bounds = array<i64: 8, 8>}, {transform_indices = @transform_4, window_bounds = array<i64: 1, 1, 8, 8, 5>}]} {
    %c0 = arith.constant 0 : index
    %c0_0 = arith.constant 0 : index
    %0 = vector.load %arg3[%c0, %c0_0] : memref<8x10xbf16, #tpu.memory_space<vmem>>, vector<8x10xbf16>
    %c0_1 = arith.constant 0 : index
    %c0_2 = arith.constant 0 : index
    %1 = vector.load %arg4[%c0_1, %c0_2] : memref<8x8xbf16, #tpu.memory_space<vmem>>, vector<8x8xbf16>
    %c0_3 = arith.constant 0 : index
    %c0_4 = arith.constant 0 : index
    %2 = vector.load %arg5[%c0_3, %c0_4] : memref<8x8xbf16, #tpu.memory_space<vmem>>, vector<8x8xbf16>
    %c0_5 = arith.constant 0 : index
    %c0_6 = arith.constant 0 : index
    %c0_7 = arith.constant 0 : index
    %c0_8 = arith.constant 0 : index
    %c0_9 = arith.constant 0 : index
    %3 = vector.load %arg2[%c0_5, %c0_6, %c0_7, %c0_8, %c0_9] : memref<1x4x1x8x8xf32, #tpu.memory_space<vmem>>, vector<1x4x1x8x8xf32>
    %4 = vector.shape_cast %3 : vector<1x4x1x8x8xf32> to vector<4x8x8xf32>
    %5 = arith.truncf %4 : vector<4x8x8xf32> to vector<4x8x8xbf16>
    %6 = vector.extract_strided_slice %5 {offsets = [0, 0, 0], sizes = [1, 8, 8], strides = [1, 1, 1]} : vector<4x8x8xbf16> to vector<1x8x8xbf16>
    %7 = vector.shape_cast %6 : vector<1x8x8xbf16> to vector<8x8xbf16>
    %cst = arith.constant dense<0.000000e+00> : vector<8x10xf32>
    %8 = tpu.matmul %7, %0, %cst {dimension_numbers = #tpu.dot_dimension_numbers<[1], [0], [0], [1], [0, 0, 1, 1], [], []>} : vector<8x8xbf16>, vector<8x10xbf16>, vector<8x10xf32> -> vector<8x10xf32>
    %9 = arith.truncf %8 : vector<8x10xf32> to vector<8x10xbf16>
    %cst_10 = arith.constant dense<0.000000e+00> : vector<8x10xf32>
    %10 = tpu.matmul %1, %9, %cst_10 {dimension_numbers = #tpu.dot_dimension_numbers<[1], [0], [0], [1], [0, 0, 1, 1], [], []>} : vector<8x8xbf16>, vector<8x10xbf16>, vector<8x10xf32> -> vector<8x10xf32>
    %cst_11 = arith.constant dense<0.000000e+00> : vector<8x10xf32>
    %11 = tpu.matmul %2, %9, %cst_11 {dimension_numbers = #tpu.dot_dimension_numbers<[1], [0], [0], [1], [0, 0, 1, 1], [], []>} : vector<8x8xbf16>, vector<8x10xbf16>, vector<8x10xf32> -> vector<8x10xf32>
    %12 = vector.extract_strided_slice %10 {offsets = [0, 0], sizes = [8, 5], strides = [1, 1]} : vector<8x10xf32> to vector<8x5xf32>
    %13 = vector.extract_strided_slice %11 {offsets = [0, 5], sizes = [8, 5], strides = [1, 1]} : vector<8x10xf32> to vector<8x5xf32>
    %14 = arith.subf %12, %13 : vector<8x5xf32>
    %15 = arith.truncf %14 : vector<8x5xf32> to vector<8x5xbf16>
    %c0_12 = arith.constant 0 : index
    %c0_13 = arith.constant 0 : index
    %c0_14 = arith.constant 0 : index
    %c0_15 = arith.constant 0 : index
    %c0_16 = arith.constant 0 : index
    %16 = vector.load %arg6[%c0_12, %c0_13, %c0_14, %c0_15, %c0_16] : memref<1x1x8x8x5xbf16, #tpu.memory_space<vmem>>, vector<1x1x1x8x5xbf16>
    %17 = vector.shape_cast %16 : vector<1x1x1x8x5xbf16> to vector<8x5xbf16>
    %18 = vector.shape_cast %15 : vector<8x5xbf16> to vector<1x1x1x8x5xbf16>
    tpu.vector_store %arg6[%c0_12, %c0_13, %c0_14, %c0_15, %c0_16], %18 {strides = array<i32>} : memref<1x1x8x8x5xbf16, #tpu.memory_space<vmem>>, vector<1x1x1x8x5xbf16>,
    %19 = vector.extract_strided_slice %11 {offsets = [0, 0], sizes = [8, 5], strides = [1, 1]} : vector<8x10xf32> to vector<8x5xf32>
    %20 = vector.extract_strided_slice %10 {offsets = [0, 5], sizes = [8, 5], strides = [1, 1]} : vector<8x10xf32> to vector<8x5xf32>
    %21 = arith.addf %19, %20 : vector<8x5xf32>
    %22 = arith.truncf %21 : vector<8x5xf32> to vector<8x5xbf16>
    %c0_17 = arith.constant 0 : index
    %c0_18 = arith.constant 0 : index
    %c4 = arith.constant 4 : index
    %c0_19 = arith.constant 0 : index
    %c0_20 = arith.constant 0 : index
    %23 = vector.load %arg6[%c0_17, %c0_18, %c4, %c0_19, %c0_20] : memref<1x1x8x8x5xbf16, #tpu.memory_space<vmem>>, vector<1x1x1x8x5xbf16>
    %24 = vector.shape_cast %23 : vector<1x1x1x8x5xbf16> to vector<8x5xbf16>
    %25 = vector.shape_cast %22 : vector<8x5xbf16> to vector<1x1x1x8x5xbf16>
    tpu.vector_store %arg6[%c0_17, %c0_18, %c4, %c0_19, %c0_20], %25 {strides = array<i32>} : memref<1x1x8x8x5xbf16, #tpu.memory_space<vmem>>, vector<1x1x1x8x5xbf16>,
    %26 = vector.extract_strided_slice %5 {offsets = [1, 0, 0], sizes = [1, 8, 8], strides = [1, 1, 1]} : vector<4x8x8xbf16> to vector<1x8x8xbf16>
    %27 = vector.shape_cast %26 : vector<1x8x8xbf16> to vector<8x8xbf16>
    %cst_21 = arith.constant dense<0.000000e+00> : vector<8x10xf32>
    %28 = tpu.matmul %27, %0, %cst_21 {dimension_numbers = #tpu.dot_dimension_numbers<[1], [0], [0], [1], [0, 0, 1, 1], [], []>} : vector<8x8xbf16>, vector<8x10xbf16>, vector<8x10xf32> -> vector<8x10xf32>
    %29 = arith.truncf %28 : vector<8x10xf32> to vector<8x10xbf16>
    %cst_22 = arith.constant dense<0.000000e+00> : vector<8x10xf32>
    %30 = tpu.matmul %1, %29, %cst_22 {dimension_numbers = #tpu.dot_dimension_numbers<[1], [0], [0], [1], [0, 0, 1, 1], [], []>} : vector<8x8xbf16>, vector<8x10xbf16>, vector<8x10xf32> -> vector<8x10xf32>
    %cst_23 = arith.constant dense<0.000000e+00> : vector<8x10xf32>
    %31 = tpu.matmul %2, %29, %cst_23 {dimension_numbers = #tpu.dot_dimension_numbers<[1], [0], [0], [1], [0, 0, 1, 1], [], []>} : vector<8x8xbf16>, vector<8x10xbf16>, vector<8x10xf32> -> vector<8x10xf32>
    %32 = vector.extract_strided_slice %30 {offsets = [0, 0], sizes = [8, 5], strides = [1, 1]} : vector<8x10xf32> to vector<8x5xf32>
    %33 = vector.extract_strided_slice %31 {offsets = [0, 5], sizes = [8, 5], strides = [1, 1]} : vector<8x10xf32> to vector<8x5xf32>
    %34 = arith.subf %32, %33 : vector<8x5xf32>
    %35 = arith.truncf %34 : vector<8x5xf32> to vector<8x5xbf16>
    %c0_24 = arith.constant 0 : index
    %c0_25 = arith.constant 0 : index
    %c1 = arith.constant 1 : index
    %c0_26 = arith.constant 0 : index
    %c0_27 = arith.constant 0 : index
    %36 = vector.load %arg6[%c0_24, %c0_25, %c1, %c0_26, %c0_27] : memref<1x1x8x8x5xbf16, #tpu.memory_space<vmem>>, vector<1x1x1x8x5xbf16>
    %37 = vector.shape_cast %36 : vector<1x1x1x8x5xbf16> to vector<8x5xbf16>
    %38 = vector.shape_cast %35 : vector<8x5xbf16> to vector<1x1x1x8x5xbf16>
    tpu.vector_store %arg6[%c0_24, %c0_25, %c1, %c0_26, %c0_27], %38 {strides = array<i32>} : memref<1x1x8x8x5xbf16, #tpu.memory_space<vmem>>, vector<1x1x1x8x5xbf16>,
    %39 = vector.extract_strided_slice %31 {offsets = [0, 0], sizes = [8, 5], strides = [1, 1]} : vector<8x10xf32> to vector<8x5xf32>
    %40 = vector.extract_strided_slice %30 {offsets = [0, 5], sizes = [8, 5], strides = [1, 1]} : vector<8x10xf32> to vector<8x5xf32>
    %41 = arith.addf %39, %40 : vector<8x5xf32>
    %42 = arith.truncf %41 : vector<8x5xf32> to vector<8x5xbf16>
    %c0_28 = arith.constant 0 : index
    %c0_29 = arith.constant 0 : index
    %c5 = arith.constant 5 : index
    %c0_30 = arith.constant 0 : index
    %c0_31 = arith.constant 0 : index
    %43 = vector.load %arg6[%c0_28, %c0_29, %c5, %c0_30, %c0_31] : memref<1x1x8x8x5xbf16, #tpu.memory_space<vmem>>, vector<1x1x1x8x5xbf16>
    %44 = vector.shape_cast %43 : vector<1x1x1x8x5xbf16> to vector<8x5xbf16>
    %45 = vector.shape_cast %42 : vector<8x5xbf16> to vector<1x1x1x8x5xbf16>
    tpu.vector_store %arg6[%c0_28, %c0_29, %c5, %c0_30, %c0_31], %45 {strides = array<i32>} : memref<1x1x8x8x5xbf16, #tpu.memory_space<vmem>>, vector<1x1x1x8x5xbf16>,
    %46 = vector.extract_strided_slice %5 {offsets = [2, 0, 0], sizes = [1, 8, 8], strides = [1, 1, 1]} : vector<4x8x8xbf16> to vector<1x8x8xbf16>
    %47 = vector.shape_cast %46 : vector<1x8x8xbf16> to vector<8x8xbf16>
    %cst_32 = arith.constant dense<0.000000e+00> : vector<8x10xf32>
    %48 = tpu.matmul %47, %0, %cst_32 {dimension_numbers = #tpu.dot_dimension_numbers<[1], [0], [0], [1], [0, 0, 1, 1], [], []>} : vector<8x8xbf16>, vector<8x10xbf16>, vector<8x10xf32> -> vector<8x10xf32>
    %49 = arith.truncf %48 : vector<8x10xf32> to vector<8x10xbf16>
    %cst_33 = arith.constant dense<0.000000e+00> : vector<8x10xf32>
    %50 = tpu.matmul %1, %49, %cst_33 {dimension_numbers = #tpu.dot_dimension_numbers<[1], [0], [0], [1], [0, 0, 1, 1], [], []>} : vector<8x8xbf16>, vector<8x10xbf16>, vector<8x10xf32> -> vector<8x10xf32>
    %cst_34 = arith.constant dense<0.000000e+00> : vector<8x10xf32>
    %51 = tpu.matmul %2, %49, %cst_34 {dimension_numbers = #tpu.dot_dimension_numbers<[1], [0], [0], [1], [0, 0, 1, 1], [], []>} : vector<8x8xbf16>, vector<8x10xbf16>, vector<8x10xf32> -> vector<8x10xf32>
    %52 = vector.extract_strided_slice %50 {offsets = [0, 0], sizes = [8, 5], strides = [1, 1]} : vector<8x10xf32> to vector<8x5xf32>
    %53 = vector.extract_strided_slice %51 {offsets = [0, 5], sizes = [8, 5], strides = [1, 1]} : vector<8x10xf32> to vector<8x5xf32>
    %54 = arith.subf %52, %53 : vector<8x5xf32>
    %55 = arith.truncf %54 : vector<8x5xf32> to vector<8x5xbf16>
    %c0_35 = arith.constant 0 : index
    %c0_36 = arith.constant 0 : index
    %c2 = arith.constant 2 : index
    %c0_37 = arith.constant 0 : index
    %c0_38 = arith.constant 0 : index
    %56 = vector.load %arg6[%c0_35, %c0_36, %c2, %c0_37, %c0_38] : memref<1x1x8x8x5xbf16, #tpu.memory_space<vmem>>, vector<1x1x1x8x5xbf16>
    %57 = vector.shape_cast %56 : vector<1x1x1x8x5xbf16> to vector<8x5xbf16>
    %58 = vector.shape_cast %55 : vector<8x5xbf16> to vector<1x1x1x8x5xbf16>
    tpu.vector_store %arg6[%c0_35, %c0_36, %c2, %c0_37, %c0_38], %58 {strides = array<i32>} : memref<1x1x8x8x5xbf16, #tpu.memory_space<vmem>>, vector<1x1x1x8x5xbf16>,
    %59 = vector.extract_strided_slice %51 {offsets = [0, 0], sizes = [8, 5], strides = [1, 1]} : vector<8x10xf32> to vector<8x5xf32>
    %60 = vector.extract_strided_slice %50 {offsets = [0, 5], sizes = [8, 5], strides = [1, 1]} : vector<8x10xf32> to vector<8x5xf32>
    %61 = arith.addf %59, %60 : vector<8x5xf32>
    %62 = arith.truncf %61 : vector<8x5xf32> to vector<8x5xbf16>
    %c0_39 = arith.constant 0 : index
    %c0_40 = arith.constant 0 : index
    %c6 = arith.constant 6 : index
    %c0_41 = arith.constant 0 : index
    %c0_42 = arith.constant 0 : index
    %63 = vector.load %arg6[%c0_39, %c0_40, %c6, %c0_41, %c0_42] : memref<1x1x8x8x5xbf16, #tpu.memory_space<vmem>>, vector<1x1x1x8x5xbf16>
    %64 = vector.shape_cast %63 : vector<1x1x1x8x5xbf16> to vector<8x5xbf16>
    %65 = vector.shape_cast %62 : vector<8x5xbf16> to vector<1x1x1x8x5xbf16>
    tpu.vector_store %arg6[%c0_39, %c0_40, %c6, %c0_41, %c0_42], %65 {strides = array<i32>} : memref<1x1x8x8x5xbf16, #tpu.memory_space<vmem>>, vector<1x1x1x8x5xbf16>,
    %66 = vector.extract_strided_slice %5 {offsets = [3, 0, 0], sizes = [1, 8, 8], strides = [1, 1, 1]} : vector<4x8x8xbf16> to vector<1x8x8xbf16>
    %67 = vector.shape_cast %66 : vector<1x8x8xbf16> to vector<8x8xbf16>
    %cst_43 = arith.constant dense<0.000000e+00> : vector<8x10xf32>
    %68 = tpu.matmul %67, %0, %cst_43 {dimension_numbers = #tpu.dot_dimension_numbers<[1], [0], [0], [1], [0, 0, 1, 1], [], []>} : vector<8x8xbf16>, vector<8x10xbf16>, vector<8x10xf32> -> vector<8x10xf32>
    %69 = arith.truncf %68 : vector<8x10xf32> to vector<8x10xbf16>
    %cst_44 = arith.constant dense<0.000000e+00> : vector<8x10xf32>
    %70 = tpu.matmul %1, %69, %cst_44 {dimension_numbers = #tpu.dot_dimension_numbers<[1], [0], [0], [1], [0, 0, 1, 1], [], []>} : vector<8x8xbf16>, vector<8x10xbf16>, vector<8x10xf32> -> vector<8x10xf32>
    %cst_45 = arith.constant dense<0.000000e+00> : vector<8x10xf32>
    %71 = tpu.matmul %2, %69, %cst_45 {dimension_numbers = #tpu.dot_dimension_numbers<[1], [0], [0], [1], [0, 0, 1, 1], [], []>} : vector<8x8xbf16>, vector<8x10xbf16>, vector<8x10xf32> -> vector<8x10xf32>
    %72 = vector.extract_strided_slice %70 {offsets = [0, 0], sizes = [8, 5], strides = [1, 1]} : vector<8x10xf32> to vector<8x5xf32>
    %73 = vector.extract_strided_slice %71 {offsets = [0, 5], sizes = [8, 5], strides = [1, 1]} : vector<8x10xf32> to vector<8x5xf32>
    %74 = arith.subf %72, %73 : vector<8x5xf32>
    %75 = arith.truncf %74 : vector<8x5xf32> to vector<8x5xbf16>
    %c0_46 = arith.constant 0 : index
    %c0_47 = arith.constant 0 : index
    %c3 = arith.constant 3 : index
    %c0_48 = arith.constant 0 : index
    %c0_49 = arith.constant 0 : index
    %76 = vector.load %arg6[%c0_46, %c0_47, %c3, %c0_48, %c0_49] : memref<1x1x8x8x5xbf16, #tpu.memory_space<vmem>>, vector<1x1x1x8x5xbf16>
    %77 = vector.shape_cast %76 : vector<1x1x1x8x5xbf16> to vector<8x5xbf16>
    %78 = vector.shape_cast %75 : vector<8x5xbf16> to vector<1x1x1x8x5xbf16>
    tpu.vector_store %arg6[%c0_46, %c0_47, %c3, %c0_48, %c0_49], %78 {strides = array<i32>} : memref<1x1x8x8x5xbf16, #tpu.memory_space<vmem>>, vector<1x1x1x8x5xbf16>,
    %79 = vector.extract_strided_slice %71 {offsets = [0, 0], sizes = [8, 5], strides = [1, 1]} : vector<8x10xf32> to vector<8x5xf32>
    %80 = vector.extract_strided_slice %70 {offsets = [0, 5], sizes = [8, 5], strides = [1, 1]} : vector<8x10xf32> to vector<8x5xf32>
    %81 = arith.addf %79, %80 : vector<8x5xf32>
    %82 = arith.truncf %81 : vector<8x5xf32> to vector<8x5xbf16>
    %c0_50 = arith.constant 0 : index
    %c0_51 = arith.constant 0 : index
    %c7 = arith.constant 7 : index
    %c0_52 = arith.constant 0 : index
    %c0_53 = arith.constant 0 : index
    %83 = vector.load %arg6[%c0_50, %c0_51, %c7, %c0_52, %c0_53] : memref<1x1x8x8x5xbf16, #tpu.memory_space<vmem>>, vector<1x1x1x8x5xbf16>
    %84 = vector.shape_cast %83 : vector<1x1x1x8x5xbf16> to vector<8x5xbf16>
    %85 = vector.shape_cast %82 : vector<8x5xbf16> to vector<1x1x1x8x5xbf16>
    tpu.vector_store %arg6[%c0_50, %c0_51, %c7, %c0_52, %c0_53], %85 {strides = array<i32>} : memref<1x1x8x8x5xbf16, #tpu.memory_space<vmem>>, vector<1x1x1x8x5xbf16>,
    return
  }
  func.func @transform_0(%arg0: i32, %arg1: i32) -> (i32, i32, i32, i32, i32) {
    %c0_i32 = arith.constant 0 : i32
    %c0_i32_0 = arith.constant 0 : i32
    %c0_i32_1 = arith.constant 0 : i32
    %c0_i32_2 = arith.constant 0 : i32
    return %arg0, %c0_i32, %arg1, %c0_i32_0, %c0_i32_1 : i32, i32, i32, i32, i32
  }
  func.func @transform_1(%arg0: i32, %arg1: i32) -> (i32, i32) {
    %c0_i32 = arith.constant 0 : i32
    %c0_i32_0 = arith.constant 0 : i32
    %c0_i32_1 = arith.constant 0 : i32
    return %c0_i32, %c0_i32_0 : i32, i32
  }
  func.func @transform_2(%arg0: i32, %arg1: i32) -> (i32, i32) {
    %c0_i32 = arith.constant 0 : i32
    %c0_i32_0 = arith.constant 0 : i32
    %c0_i32_1 = arith.constant 0 : i32
    return %c0_i32, %c0_i32_0 : i32, i32
  }
  func.func @transform_3(%arg0: i32, %arg1: i32) -> (i32, i32) {
    %c0_i32 = arith.constant 0 : i32
    %c0_i32_0 = arith.constant 0 : i32
    %c0_i32_1 = arith.constant 0 : i32
    return %c0_i32, %c0_i32_0 : i32, i32
  }
  func.func @transform_4(%arg0: i32, %arg1: i32) -> (i32, i32, i32, i32, i32) {
    %c0_i32 = arith.constant 0 : i32
    %c0_i32_0 = arith.constant 0 : i32
    %c0_i32_1 = arith.constant 0 : i32
    %c0_i32_2 = arith.constant 0 : i32
    return %arg0, %arg1, %c0_i32, %c0_i32_0, %c0_i32_1 : i32, i32, i32, i32, i32
  }
}

module attributes {stable_mosaic.version = 11 : i64} {
  func.func @_rfft2_kernel(%arg0: i32, %arg1: i32, %arg2: memref<1x4x1x4x4xf32, #tpu.memory_space<vmem>>, %arg3: memref<4x6xbf16, #tpu.memory_space<vmem>>, %arg4: memref<4x4xbf16, #tpu.memory_space<vmem>>, %arg5: memref<4x4xbf16, #tpu.memory_space<vmem>>, %arg6: memref<1x1x8x4x3xbf16, #tpu.memory_space<vmem>>) attributes {dimension_semantics = [#tpu.dimension_semantics<parallel>, #tpu.dimension_semantics<parallel>], iteration_bounds = array<i64: 2, 4>, scalar_prefetch = 0 : i64, scratch_operands = 0 : i64, tpu.core_type = #tpu.core_type<tc>, window_params = [{transform_indices = @transform_0, window_bounds = array<i64: 1, 4, 1, 4, 4>}, {pipeline_mode = #tpu.pipeline_mode<synchronous>, transform_indices = @transform_1, window_bounds = array<i64: 4, 6>}, {pipeline_mode = #tpu.pipeline_mode<synchronous>, transform_indices = @transform_2, window_bounds = array<i64: 4, 4>}, {pipeline_mode = #tpu.pipeline_mode<synchronous>, transform_indices = @transform_3, window_bounds = array<i64: 4, 4>}, {transform_indices = @transform_4, window_bounds = array<i64: 1, 1, 8, 4, 3>}]} {
    %c0 = arith.constant 0 : index
    %c0_0 = arith.constant 0 : index
    %0 = vector.load %arg3[%c0, %c0_0] : memref<4x6xbf16, #tpu.memory_space<vmem>>, vector<4x6xbf16>
    %c0_1 = arith.constant 0 : index
    %c0_2 = arith.constant 0 : index
    %1 = vector.load %arg4[%c0_1, %c0_2] : memref<4x4xbf16, #tpu.memory_space<vmem>>, vector<4x4xbf16>
    %c0_3 = arith.constant 0 : index
    %c0_4 = arith.constant 0 : index
    %2 = vector.load %arg5[%c0_3, %c0_4] : memref<4x4xbf16, #tpu.memory_space<vmem>>, vector<4x4xbf16>
    %c0_5 = arith.constant 0 : index
    %c0_6 = arith.constant 0 : index
    %c0_7 = arith.constant 0 : index
    %c0_8 = arith.constant 0 : index
    %c0_9 = arith.constant 0 : index
    %3 = vector.load %arg2[%c0_5, %c0_6, %c0_7, %c0_8, %c0_9] : memref<1x4x1x4x4xf32, #tpu.memory_space<vmem>>, vector<1x4x1x4x4xf32>
    %4 = vector.shape_cast %3 : vector<1x4x1x4x4xf32> to vector<4x4x4xf32>
    %5 = arith.truncf %4 : vector<4x4x4xf32> to vector<4x4x4xbf16>
    %6 = vector.extract_strided_slice %5 {offsets = [0, 0, 0], sizes = [1, 4, 4], strides = [1, 1, 1]} : vector<4x4x4xbf16> to vector<1x4x4xbf16>
    %7 = vector.shape_cast %6 : vector<1x4x4xbf16> to vector<4x4xbf16>
    %cst = arith.constant dense<0.000000e+00> : vector<4x6xf32>
    %8 = tpu.matmul %7, %0, %cst {dimension_numbers = #tpu.dot_dimension_numbers<[1], [0], [0], [1], [0, 0, 1, 1], [], []>} : vector<4x4xbf16>, vector<4x6xbf16>, vector<4x6xf32> -> vector<4x6xf32>
    %9 = arith.truncf %8 : vector<4x6xf32> to vector<4x6xbf16>
    %cst_10 = arith.constant dense<0.000000e+00> : vector<4x6xf32>
    %10 = tpu.matmul %1, %9, %cst_10 {dimension_numbers = #tpu.dot_dimension_numbers<[1], [0], [0], [1], [0, 0, 1, 1], [], []>} : vector<4x4xbf16>, vector<4x6xbf16>, vector<4x6xf32> -> vector<4x6xf32>
    %cst_11 = arith.constant dense<0.000000e+00> : vector<4x6xf32>
    %11 = tpu.matmul %2, %9, %cst_11 {dimension_numbers = #tpu.dot_dimension_numbers<[1], [0], [0], [1], [0, 0, 1, 1], [], []>} : vector<4x4xbf16>, vector<4x6xbf16>, vector<4x6xf32> -> vector<4x6xf32>
    %12 = vector.extract_strided_slice %10 {offsets = [0, 0], sizes = [4, 3], strides = [1, 1]} : vector<4x6xf32> to vector<4x3xf32>
    %13 = vector.extract_strided_slice %11 {offsets = [0, 3], sizes = [4, 3], strides = [1, 1]} : vector<4x6xf32> to vector<4x3xf32>
    %14 = arith.subf %12, %13 : vector<4x3xf32>
    %15 = arith.truncf %14 : vector<4x3xf32> to vector<4x3xbf16>
    %c0_12 = arith.constant 0 : index
    %c0_13 = arith.constant 0 : index
    %c0_14 = arith.constant 0 : index
    %c0_15 = arith.constant 0 : index
    %c0_16 = arith.constant 0 : index
    %16 = vector.load %arg6[%c0_12, %c0_13, %c0_14, %c0_15, %c0_16] : memref<1x1x8x4x3xbf16, #tpu.memory_space<vmem>>, vector<1x1x1x4x3xbf16>
    %17 = vector.shape_cast %16 : vector<1x1x1x4x3xbf16> to vector<4x3xbf16>
    %18 = vector.shape_cast %15 : vector<4x3xbf16> to vector<1x1x1x4x3xbf16>
    tpu.vector_store %arg6[%c0_12, %c0_13, %c0_14, %c0_15, %c0_16], %18 {strides = array<i32>} : memref<1x1x8x4x3xbf16, #tpu.memory_space<vmem>>, vector<1x1x1x4x3xbf16>,
    %19 = vector.extract_strided_slice %11 {offsets = [0, 0], sizes = [4, 3], strides = [1, 1]} : vector<4x6xf32> to vector<4x3xf32>
    %20 = vector.extract_strided_slice %10 {offsets = [0, 3], sizes = [4, 3], strides = [1, 1]} : vector<4x6xf32> to vector<4x3xf32>
    %21 = arith.addf %19, %20 : vector<4x3xf32>
    %22 = arith.truncf %21 : vector<4x3xf32> to vector<4x3xbf16>
    %c0_17 = arith.constant 0 : index
    %c0_18 = arith.constant 0 : index
    %c4 = arith.constant 4 : index
    %c0_19 = arith.constant 0 : index
    %c0_20 = arith.constant 0 : index
    %23 = vector.load %arg6[%c0_17, %c0_18, %c4, %c0_19, %c0_20] : memref<1x1x8x4x3xbf16, #tpu.memory_space<vmem>>, vector<1x1x1x4x3xbf16>
    %24 = vector.shape_cast %23 : vector<1x1x1x4x3xbf16> to vector<4x3xbf16>
    %25 = vector.shape_cast %22 : vector<4x3xbf16> to vector<1x1x1x4x3xbf16>
    tpu.vector_store %arg6[%c0_17, %c0_18, %c4, %c0_19, %c0_20], %25 {strides = array<i32>} : memref<1x1x8x4x3xbf16, #tpu.memory_space<vmem>>, vector<1x1x1x4x3xbf16>,
    %26 = vector.extract_strided_slice %5 {offsets = [1, 0, 0], sizes = [1, 4, 4], strides = [1, 1, 1]} : vector<4x4x4xbf16> to vector<1x4x4xbf16>
    %27 = vector.shape_cast %26 : vector<1x4x4xbf16> to vector<4x4xbf16>
    %cst_21 = arith.constant dense<0.000000e+00> : vector<4x6xf32>
    %28 = tpu.matmul %27, %0, %cst_21 {dimension_numbers = #tpu.dot_dimension_numbers<[1], [0], [0], [1], [0, 0, 1, 1], [], []>} : vector<4x4xbf16>, vector<4x6xbf16>, vector<4x6xf32> -> vector<4x6xf32>
    %29 = arith.truncf %28 : vector<4x6xf32> to vector<4x6xbf16>
    %cst_22 = arith.constant dense<0.000000e+00> : vector<4x6xf32>
    %30 = tpu.matmul %1, %29, %cst_22 {dimension_numbers = #tpu.dot_dimension_numbers<[1], [0], [0], [1], [0, 0, 1, 1], [], []>} : vector<4x4xbf16>, vector<4x6xbf16>, vector<4x6xf32> -> vector<4x6xf32>
    %cst_23 = arith.constant dense<0.000000e+00> : vector<4x6xf32>
    %31 = tpu.matmul %2, %29, %cst_23 {dimension_numbers = #tpu.dot_dimension_numbers<[1], [0], [0], [1], [0, 0, 1, 1], [], []>} : vector<4x4xbf16>, vector<4x6xbf16>, vector<4x6xf32> -> vector<4x6xf32>
    %32 = vector.extract_strided_slice %30 {offsets = [0, 0], sizes = [4, 3], strides = [1, 1]} : vector<4x6xf32> to vector<4x3xf32>
    %33 = vector.extract_strided_slice %31 {offsets = [0, 3], sizes = [4, 3], strides = [1, 1]} : vector<4x6xf32> to vector<4x3xf32>
    %34 = arith.subf %32, %33 : vector<4x3xf32>
    %35 = arith.truncf %34 : vector<4x3xf32> to vector<4x3xbf16>
    %c0_24 = arith.constant 0 : index
    %c0_25 = arith.constant 0 : index
    %c1 = arith.constant 1 : index
    %c0_26 = arith.constant 0 : index
    %c0_27 = arith.constant 0 : index
    %36 = vector.load %arg6[%c0_24, %c0_25, %c1, %c0_26, %c0_27] : memref<1x1x8x4x3xbf16, #tpu.memory_space<vmem>>, vector<1x1x1x4x3xbf16>
    %37 = vector.shape_cast %36 : vector<1x1x1x4x3xbf16> to vector<4x3xbf16>
    %38 = vector.shape_cast %35 : vector<4x3xbf16> to vector<1x1x1x4x3xbf16>
    tpu.vector_store %arg6[%c0_24, %c0_25, %c1, %c0_26, %c0_27], %38 {strides = array<i32>} : memref<1x1x8x4x3xbf16, #tpu.memory_space<vmem>>, vector<1x1x1x4x3xbf16>,
    %39 = vector.extract_strided_slice %31 {offsets = [0, 0], sizes = [4, 3], strides = [1, 1]} : vector<4x6xf32> to vector<4x3xf32>
    %40 = vector.extract_strided_slice %30 {offsets = [0, 3], sizes = [4, 3], strides = [1, 1]} : vector<4x6xf32> to vector<4x3xf32>
    %41 = arith.addf %39, %40 : vector<4x3xf32>
    %42 = arith.truncf %41 : vector<4x3xf32> to vector<4x3xbf16>
    %c0_28 = arith.constant 0 : index
    %c0_29 = arith.constant 0 : index
    %c5 = arith.constant 5 : index
    %c0_30 = arith.constant 0 : index
    %c0_31 = arith.constant 0 : index
    %43 = vector.load %arg6[%c0_28, %c0_29, %c5, %c0_30, %c0_31] : memref<1x1x8x4x3xbf16, #tpu.memory_space<vmem>>, vector<1x1x1x4x3xbf16>
    %44 = vector.shape_cast %43 : vector<1x1x1x4x3xbf16> to vector<4x3xbf16>
    %45 = vector.shape_cast %42 : vector<4x3xbf16> to vector<1x1x1x4x3xbf16>
    tpu.vector_store %arg6[%c0_28, %c0_29, %c5, %c0_30, %c0_31], %45 {strides = array<i32>} : memref<1x1x8x4x3xbf16, #tpu.memory_space<vmem>>, vector<1x1x1x4x3xbf16>,
    %46 = vector.extract_strided_slice %5 {offsets = [2, 0, 0], sizes = [1, 4, 4], strides = [1, 1, 1]} : vector<4x4x4xbf16> to vector<1x4x4xbf16>
    %47 = vector.shape_cast %46 : vector<1x4x4xbf16> to vector<4x4xbf16>
    %cst_32 = arith.constant dense<0.000000e+00> : vector<4x6xf32>
    %48 = tpu.matmul %47, %0, %cst_32 {dimension_numbers = #tpu.dot_dimension_numbers<[1], [0], [0], [1], [0, 0, 1, 1], [], []>} : vector<4x4xbf16>, vector<4x6xbf16>, vector<4x6xf32> -> vector<4x6xf32>
    %49 = arith.truncf %48 : vector<4x6xf32> to vector<4x6xbf16>
    %cst_33 = arith.constant dense<0.000000e+00> : vector<4x6xf32>
    %50 = tpu.matmul %1, %49, %cst_33 {dimension_numbers = #tpu.dot_dimension_numbers<[1], [0], [0], [1], [0, 0, 1, 1], [], []>} : vector<4x4xbf16>, vector<4x6xbf16>, vector<4x6xf32> -> vector<4x6xf32>
    %cst_34 = arith.constant dense<0.000000e+00> : vector<4x6xf32>
    %51 = tpu.matmul %2, %49, %cst_34 {dimension_numbers = #tpu.dot_dimension_numbers<[1], [0], [0], [1], [0, 0, 1, 1], [], []>} : vector<4x4xbf16>, vector<4x6xbf16>, vector<4x6xf32> -> vector<4x6xf32>
    %52 = vector.extract_strided_slice %50 {offsets = [0, 0], sizes = [4, 3], strides = [1, 1]} : vector<4x6xf32> to vector<4x3xf32>
    %53 = vector.extract_strided_slice %51 {offsets = [0, 3], sizes = [4, 3], strides = [1, 1]} : vector<4x6xf32> to vector<4x3xf32>
    %54 = arith.subf %52, %53 : vector<4x3xf32>
    %55 = arith.truncf %54 : vector<4x3xf32> to vector<4x3xbf16>
    %c0_35 = arith.constant 0 : index
    %c0_36 = arith.constant 0 : index
    %c2 = arith.constant 2 : index
    %c0_37 = arith.constant 0 : index
    %c0_38 = arith.constant 0 : index
    %56 = vector.load %arg6[%c0_35, %c0_36, %c2, %c0_37, %c0_38] : memref<1x1x8x4x3xbf16, #tpu.memory_space<vmem>>, vector<1x1x1x4x3xbf16>
    %57 = vector.shape_cast %56 : vector<1x1x1x4x3xbf16> to vector<4x3xbf16>
    %58 = vector.shape_cast %55 : vector<4x3xbf16> to vector<1x1x1x4x3xbf16>
    tpu.vector_store %arg6[%c0_35, %c0_36, %c2, %c0_37, %c0_38], %58 {strides = array<i32>} : memref<1x1x8x4x3xbf16, #tpu.memory_space<vmem>>, vector<1x1x1x4x3xbf16>,
    %59 = vector.extract_strided_slice %51 {offsets = [0, 0], sizes = [4, 3], strides = [1, 1]} : vector<4x6xf32> to vector<4x3xf32>
    %60 = vector.extract_strided_slice %50 {offsets = [0, 3], sizes = [4, 3], strides = [1, 1]} : vector<4x6xf32> to vector<4x3xf32>
    %61 = arith.addf %59, %60 : vector<4x3xf32>
    %62 = arith.truncf %61 : vector<4x3xf32> to vector<4x3xbf16>
    %c0_39 = arith.constant 0 : index
    %c0_40 = arith.constant 0 : index
    %c6 = arith.constant 6 : index
    %c0_41 = arith.constant 0 : index
    %c0_42 = arith.constant 0 : index
    %63 = vector.load %arg6[%c0_39, %c0_40, %c6, %c0_41, %c0_42] : memref<1x1x8x4x3xbf16, #tpu.memory_space<vmem>>, vector<1x1x1x4x3xbf16>
    %64 = vector.shape_cast %63 : vector<1x1x1x4x3xbf16> to vector<4x3xbf16>
    %65 = vector.shape_cast %62 : vector<4x3xbf16> to vector<1x1x1x4x3xbf16>
    tpu.vector_store %arg6[%c0_39, %c0_40, %c6, %c0_41, %c0_42], %65 {strides = array<i32>} : memref<1x1x8x4x3xbf16, #tpu.memory_space<vmem>>, vector<1x1x1x4x3xbf16>,
    %66 = vector.extract_strided_slice %5 {offsets = [3, 0, 0], sizes = [1, 4, 4], strides = [1, 1, 1]} : vector<4x4x4xbf16> to vector<1x4x4xbf16>
    %67 = vector.shape_cast %66 : vector<1x4x4xbf16> to vector<4x4xbf16>
    %cst_43 = arith.constant dense<0.000000e+00> : vector<4x6xf32>
    %68 = tpu.matmul %67, %0, %cst_43 {dimension_numbers = #tpu.dot_dimension_numbers<[1], [0], [0], [1], [0, 0, 1, 1], [], []>} : vector<4x4xbf16>, vector<4x6xbf16>, vector<4x6xf32> -> vector<4x6xf32>
    %69 = arith.truncf %68 : vector<4x6xf32> to vector<4x6xbf16>
    %cst_44 = arith.constant dense<0.000000e+00> : vector<4x6xf32>
    %70 = tpu.matmul %1, %69, %cst_44 {dimension_numbers = #tpu.dot_dimension_numbers<[1], [0], [0], [1], [0, 0, 1, 1], [], []>} : vector<4x4xbf16>, vector<4x6xbf16>, vector<4x6xf32> -> vector<4x6xf32>
    %cst_45 = arith.constant dense<0.000000e+00> : vector<4x6xf32>
    %71 = tpu.matmul %2, %69, %cst_45 {dimension_numbers = #tpu.dot_dimension_numbers<[1], [0], [0], [1], [0, 0, 1, 1], [], []>} : vector<4x4xbf16>, vector<4x6xbf16>, vector<4x6xf32> -> vector<4x6xf32>
    %72 = vector.extract_strided_slice %70 {offsets = [0, 0], sizes = [4, 3], strides = [1, 1]} : vector<4x6xf32> to vector<4x3xf32>
    %73 = vector.extract_strided_slice %71 {offsets = [0, 3], sizes = [4, 3], strides = [1, 1]} : vector<4x6xf32> to vector<4x3xf32>
    %74 = arith.subf %72, %73 : vector<4x3xf32>
    %75 = arith.truncf %74 : vector<4x3xf32> to vector<4x3xbf16>
    %c0_46 = arith.constant 0 : index
    %c0_47 = arith.constant 0 : index
    %c3 = arith.constant 3 : index
    %c0_48 = arith.constant 0 : index
    %c0_49 = arith.constant 0 : index
    %76 = vector.load %arg6[%c0_46, %c0_47, %c3, %c0_48, %c0_49] : memref<1x1x8x4x3xbf16, #tpu.memory_space<vmem>>, vector<1x1x1x4x3xbf16>
    %77 = vector.shape_cast %76 : vector<1x1x1x4x3xbf16> to vector<4x3xbf16>
    %78 = vector.shape_cast %75 : vector<4x3xbf16> to vector<1x1x1x4x3xbf16>
    tpu.vector_store %arg6[%c0_46, %c0_47, %c3, %c0_48, %c0_49], %78 {strides = array<i32>} : memref<1x1x8x4x3xbf16, #tpu.memory_space<vmem>>, vector<1x1x1x4x3xbf16>,
    %79 = vector.extract_strided_slice %71 {offsets = [0, 0], sizes = [4, 3], strides = [1, 1]} : vector<4x6xf32> to vector<4x3xf32>
    %80 = vector.extract_strided_slice %70 {offsets = [0, 3], sizes = [4, 3], strides = [1, 1]} : vector<4x6xf32> to vector<4x3xf32>
    %81 = arith.addf %79, %80 : vector<4x3xf32>
    %82 = arith.truncf %81 : vector<4x3xf32> to vector<4x3xbf16>
    %c0_50 = arith.constant 0 : index
    %c0_51 = arith.constant 0 : index
    %c7 = arith.constant 7 : index
    %c0_52 = arith.constant 0 : index
    %c0_53 = arith.constant 0 : index
    %83 = vector.load %arg6[%c0_50, %c0_51, %c7, %c0_52, %c0_53] : memref<1x1x8x4x3xbf16, #tpu.memory_space<vmem>>, vector<1x1x1x4x3xbf16>
    %84 = vector.shape_cast %83 : vector<1x1x1x4x3xbf16> to vector<4x3xbf16>
    %85 = vector.shape_cast %82 : vector<4x3xbf16> to vector<1x1x1x4x3xbf16>
    tpu.vector_store %arg6[%c0_50, %c0_51, %c7, %c0_52, %c0_53], %85 {strides = array<i32>} : memref<1x1x8x4x3xbf16, #tpu.memory_space<vmem>>, vector<1x1x1x4x3xbf16>,
    return
  }
  func.func @transform_0(%arg0: i32, %arg1: i32) -> (i32, i32, i32, i32, i32) {
    %c0_i32 = arith.constant 0 : i32
    %c0_i32_0 = arith.constant 0 : i32
    %c0_i32_1 = arith.constant 0 : i32
    %c0_i32_2 = arith.constant 0 : i32
    return %arg0, %c0_i32, %arg1, %c0_i32_0, %c0_i32_1 : i32, i32, i32, i32, i32
  }
  func.func @transform_1(%arg0: i32, %arg1: i32) -> (i32, i32) {
    %c0_i32 = arith.constant 0 : i32
    %c0_i32_0 = arith.constant 0 : i32
    %c0_i32_1 = arith.constant 0 : i32
    return %c0_i32, %c0_i32_0 : i32, i32
  }
  func.func @transform_2(%arg0: i32, %arg1: i32) -> (i32, i32) {
    %c0_i32 = arith.constant 0 : i32
    %c0_i32_0 = arith.constant 0 : i32
    %c0_i32_1 = arith.constant 0 : i32
    return %c0_i32, %c0_i32_0 : i32, i32
  }
  func.func @transform_3(%arg0: i32, %arg1: i32) -> (i32, i32) {
    %c0_i32 = arith.constant 0 : i32
    %c0_i32_0 = arith.constant 0 : i32
    %c0_i32_1 = arith.constant 0 : i32
    return %c0_i32, %c0_i32_0 : i32, i32
  }
  func.func @transform_4(%arg0: i32, %arg1: i32) -> (i32, i32, i32, i32, i32) {
    %c0_i32 = arith.constant 0 : i32
    %c0_i32_0 = arith.constant 0 : i32
    %c0_i32_1 = arith.constant 0 : i32
    %c0_i32_2 = arith.constant 0 : i32
    return %arg0, %arg1, %c0_i32, %c0_i32_0, %c0_i32_1 : i32, i32, i32, i32, i32
  }
}

module attributes {stable_mosaic.version = 11 : i64} {
  func.func @kernel(%arg0: i32, %arg1: i32, %arg2: memref<1x8x12xbf16, #tpu.memory_space<vmem>>, %arg3: memref<8x8xbf16, #tpu.memory_space<vmem>>, %arg4: memref<1x8x12xbf16, #tpu.memory_space<vmem>>, %arg5: memref<1x1x8x2xf32, #tpu.memory_space<vmem>>) attributes {dimension_semantics = [#tpu.dimension_semantics<parallel>, #tpu.dimension_semantics<parallel>], iteration_bounds = array<i64: 8, 1>, scalar_prefetch = 0 : i64, scratch_operands = 0 : i64, tpu.core_type = #tpu.core_type<tc>, window_params = [{transform_indices = @transform_0, window_bounds = array<i64: 1, 8, 12>}, {pipeline_mode = #tpu.pipeline_mode<synchronous>, transform_indices = @transform_1, window_bounds = array<i64: 8, 8>}, {transform_indices = @transform_2, window_bounds = array<i64: 1, 8, 12>}, {transform_indices = @transform_3, window_bounds = array<i64: 1, 1, 8, 2>}]} {
    %c0 = arith.constant 0 : index
    %c0_0 = arith.constant 0 : index
    %0 = vector.load %arg3[%c0, %c0_0] : memref<8x8xbf16, #tpu.memory_space<vmem>>, vector<8x8xbf16>
    %c0_1 = arith.constant 0 : index
    %c0_2 = arith.constant 0 : index
    %c0_3 = arith.constant 0 : index
    %1 = vector.load %arg2[%c0_1, %c0_2, %c0_3] : memref<1x8x12xbf16, #tpu.memory_space<vmem>>, vector<1x8x12xbf16>
    %2 = vector.shape_cast %1 : vector<1x8x12xbf16> to vector<8x12xbf16>
    %cst = arith.constant dense<0.000000e+00> : vector<8x12xf32>
    %3 = tpu.matmul %0, %2, %cst {dimension_numbers = #tpu.dot_dimension_numbers<[1], [0], [0], [1], [0, 0, 1, 1], [], []>} : vector<8x8xbf16>, vector<8x12xbf16>, vector<8x12xf32> -> vector<8x12xf32>
    %4 = arith.truncf %3 : vector<8x12xf32> to vector<8x12xbf16>
    %c0_4 = arith.constant 0 : index
    %c0_5 = arith.constant 0 : index
    %c0_6 = arith.constant 0 : index
    %5 = vector.load %arg4[%c0_4, %c0_5, %c0_6] : memref<1x8x12xbf16, #tpu.memory_space<vmem>>, vector<1x8x12xbf16>
    %6 = vector.shape_cast %5 : vector<1x8x12xbf16> to vector<8x12xbf16>
    %7 = vector.shape_cast %4 : vector<8x12xbf16> to vector<1x8x12xbf16>
    tpu.vector_store %arg4[%c0_4, %c0_5, %c0_6], %7 {strides = array<i32>} : memref<1x8x12xbf16, #tpu.memory_space<vmem>>, vector<1x8x12xbf16>,
    %cst_7 = arith.constant dense<0.000000e+00> : vector<8xf32>
    %8 = vector.multi_reduction <add>, %3, %cst_7 [1] : vector<8x12xf32> to vector<8xf32>
    %9 = vector.shape_cast %8 : vector<8xf32> to vector<8x1xf32>
    %10 = arith.mulf %3, %3 : vector<8x12xf32>
    %cst_8 = arith.constant dense<0.000000e+00> : vector<8xf32>
    %11 = vector.multi_reduction <add>, %10, %cst_8 [1] : vector<8x12xf32> to vector<8xf32>
    %12 = vector.shape_cast %11 : vector<8xf32> to vector<8x1xf32>
    %13 = tpu.concatenate %9, %12 in 1 : vector<8x1xf32>, vector<8x1xf32> -> vector<8x2xf32>
    %c0_9 = arith.constant 0 : index
    %c0_10 = arith.constant 0 : index
    %c0_11 = arith.constant 0 : index
    %c0_12 = arith.constant 0 : index
    %14 = vector.load %arg5[%c0_9, %c0_10, %c0_11, %c0_12] : memref<1x1x8x2xf32, #tpu.memory_space<vmem>>, vector<1x1x8x2xf32>
    %15 = vector.shape_cast %14 : vector<1x1x8x2xf32> to vector<8x2xf32>
    %16 = vector.shape_cast %13 : vector<8x2xf32> to vector<1x1x8x2xf32>
    tpu.vector_store %arg5[%c0_9, %c0_10, %c0_11, %c0_12], %16 {strides = array<i32>} : memref<1x1x8x2xf32, #tpu.memory_space<vmem>>, vector<1x1x8x2xf32>,
    return
  }
  func.func @transform_0(%arg0: i32, %arg1: i32) -> (i32, i32, i32) {
    %c0_i32 = arith.constant 0 : i32
    %c0_i32_0 = arith.constant 0 : i32
    return %arg0, %c0_i32, %arg1 : i32, i32, i32
  }
  func.func @transform_1(%arg0: i32, %arg1: i32) -> (i32, i32) {
    %c0_i32 = arith.constant 0 : i32
    %c0_i32_0 = arith.constant 0 : i32
    %c0_i32_1 = arith.constant 0 : i32
    return %c0_i32, %c0_i32_0 : i32, i32
  }
  func.func @transform_2(%arg0: i32, %arg1: i32) -> (i32, i32, i32) {
    %c0_i32 = arith.constant 0 : i32
    %c0_i32_0 = arith.constant 0 : i32
    return %arg0, %c0_i32, %arg1 : i32, i32, i32
  }
  func.func @transform_3(%arg0: i32, %arg1: i32) -> (i32, i32, i32, i32) {
    %c0_i32 = arith.constant 0 : i32
    %c0_i32_0 = arith.constant 0 : i32
    %c0_i32_1 = arith.constant 0 : i32
    return %arg0, %arg1, %c0_i32, %c0_i32_0 : i32, i32, i32, i32
  }
}

module attributes {stable_mosaic.version = 11 : i64} {
  func.func @_bn_relu_irfft2_kernel(%arg0: i32, %arg1: i32, %arg2: memref<1x1x8x4x3xbf16, #tpu.memory_space<vmem>>, %arg3: memref<8xf32, #tpu.memory_space<smem>>, %arg4: memref<8xf32, #tpu.memory_space<smem>>, %arg5: memref<4x4xbf16, #tpu.memory_space<vmem>>, %arg6: memref<4x4xbf16, #tpu.memory_space<vmem>>, %arg7: memref<6x4xbf16, #tpu.memory_space<vmem>>, %arg8: memref<1x4x1x8x8xf32, #tpu.memory_space<vmem>>) attributes {dimension_semantics = [#tpu.dimension_semantics<parallel>, #tpu.dimension_semantics<parallel>], iteration_bounds = array<i64: 2, 4>, scalar_prefetch = 0 : i64, scratch_operands = 0 : i64, tpu.core_type = #tpu.core_type<tc>, window_params = [{transform_indices = @transform_0, window_bounds = array<i64: 1, 1, 8, 4, 3>}, {transform_indices = @transform_1, window_bounds = array<i64: 8>}, {transform_indices = @transform_2, window_bounds = array<i64: 8>}, {pipeline_mode = #tpu.pipeline_mode<synchronous>, transform_indices = @transform_3, window_bounds = array<i64: 4, 4>}, {pipeline_mode = #tpu.pipeline_mode<synchronous>, transform_indices = @transform_4, window_bounds = array<i64: 4, 4>}, {pipeline_mode = #tpu.pipeline_mode<synchronous>, transform_indices = @transform_5, window_bounds = array<i64: 6, 4>}, {transform_indices = @transform_6, window_bounds = array<i64: 1, 4, 1, 8, 8>}]} {
    %c0 = arith.constant 0 : index
    %c0_0 = arith.constant 0 : index
    %c0_1 = arith.constant 0 : index
    %c0_2 = arith.constant 0 : index
    %c0_3 = arith.constant 0 : index
    %0 = vector.load %arg2[%c0, %c0_0, %c0_1, %c0_2, %c0_3] : memref<1x1x8x4x3xbf16, #tpu.memory_space<vmem>>, vector<1x1x8x4x3xbf16>
    %1 = vector.shape_cast %0 : vector<1x1x8x4x3xbf16> to vector<8x4x3xbf16>
    %c0_4 = arith.constant 0 : index
    %c0_5 = arith.constant 0 : index
    %2 = vector.load %arg5[%c0_4, %c0_5] : memref<4x4xbf16, #tpu.memory_space<vmem>>, vector<4x4xbf16>
    %c0_6 = arith.constant 0 : index
    %c0_7 = arith.constant 0 : index
    %3 = vector.load %arg6[%c0_6, %c0_7] : memref<4x4xbf16, #tpu.memory_space<vmem>>, vector<4x4xbf16>
    %c0_8 = arith.constant 0 : index
    %c0_9 = arith.constant 0 : index
    %4 = vector.load %arg7[%c0_8, %c0_9] : memref<6x4xbf16, #tpu.memory_space<vmem>>, vector<6x4xbf16>
    %5 = vector.extract_strided_slice %1 {offsets = [0, 0, 0], sizes = [1, 4, 3], strides = [1, 1, 1]} : vector<8x4x3xbf16> to vector<1x4x3xbf16>
    %6 = vector.shape_cast %5 : vector<1x4x3xbf16> to vector<4x3xbf16>
    %7 = arith.extf %6 : vector<4x3xbf16> to vector<4x3xf32>
    %c0_10 = arith.constant 0 : index
    %8 = memref.load %arg3[%c0_10] : memref<8xf32, #tpu.memory_space<smem>>
    %9 = vector.broadcast %8 : f32 to vector<4x3xf32>
    %10 = arith.mulf %7, %9 : vector<4x3xf32>
    %c0_11 = arith.constant 0 : index
    %11 = memref.load %arg4[%c0_11] : memref<8xf32, #tpu.memory_space<smem>>
    %12 = vector.broadcast %11 : f32 to vector<4x3xf32>
    %13 = arith.addf %10, %12 : vector<4x3xf32>
    %cst = arith.constant 0.000000e+00 : f32
    %14 = vector.broadcast %cst : f32 to vector<4x3xf32>
    %15 = arith.maximumf %13, %14 : vector<4x3xf32>
    %16 = vector.extract_strided_slice %1 {offsets = [4, 0, 0], sizes = [1, 4, 3], strides = [1, 1, 1]} : vector<8x4x3xbf16> to vector<1x4x3xbf16>
    %17 = vector.shape_cast %16 : vector<1x4x3xbf16> to vector<4x3xbf16>
    %18 = arith.extf %17 : vector<4x3xbf16> to vector<4x3xf32>
    %c4 = arith.constant 4 : index
    %19 = memref.load %arg3[%c4] : memref<8xf32, #tpu.memory_space<smem>>
    %20 = vector.broadcast %19 : f32 to vector<4x3xf32>
    %21 = arith.mulf %18, %20 : vector<4x3xf32>
    %c4_12 = arith.constant 4 : index
    %22 = memref.load %arg4[%c4_12] : memref<8xf32, #tpu.memory_space<smem>>
    %23 = vector.broadcast %22 : f32 to vector<4x3xf32>
    %24 = arith.addf %21, %23 : vector<4x3xf32>
    %cst_13 = arith.constant 0.000000e+00 : f32
    %25 = vector.broadcast %cst_13 : f32 to vector<4x3xf32>
    %26 = arith.maximumf %24, %25 : vector<4x3xf32>
    %27 = tpu.concatenate %15, %26 in 1 : vector<4x3xf32>, vector<4x3xf32> -> vector<4x6xf32>
    %28 = arith.truncf %27 : vector<4x6xf32> to vector<4x6xbf16>
    %cst_14 = arith.constant dense<0.000000e+00> : vector<4x6xf32>
    %29 = tpu.matmul %2, %28, %cst_14 {dimension_numbers = #tpu.dot_dimension_numbers<[1], [0], [0], [1], [0, 0, 1, 1], [], []>} : vector<4x4xbf16>, vector<4x6xbf16>, vector<4x6xf32> -> vector<4x6xf32>
    %cst_15 = arith.constant dense<0.000000e+00> : vector<4x6xf32>
    %30 = tpu.matmul %3, %28, %cst_15 {dimension_numbers = #tpu.dot_dimension_numbers<[1], [0], [0], [1], [0, 0, 1, 1], [], []>} : vector<4x4xbf16>, vector<4x6xbf16>, vector<4x6xf32> -> vector<4x6xf32>
    %31 = vector.extract_strided_slice %29 {offsets = [0, 0], sizes = [4, 3], strides = [1, 1]} : vector<4x6xf32> to vector<4x3xf32>
    %32 = vector.extract_strided_slice %30 {offsets = [0, 3], sizes = [4, 3], strides = [1, 1]} : vector<4x6xf32> to vector<4x3xf32>
    %33 = arith.subf %31, %32 : vector<4x3xf32>
    %34 = vector.extract_strided_slice %30 {offsets = [0, 0], sizes = [4, 3], strides = [1, 1]} : vector<4x6xf32> to vector<4x3xf32>
    %35 = vector.extract_strided_slice %29 {offsets = [0, 3], sizes = [4, 3], strides = [1, 1]} : vector<4x6xf32> to vector<4x3xf32>
    %36 = arith.addf %34, %35 : vector<4x3xf32>
    %37 = tpu.concatenate %33, %36 in 1 : vector<4x3xf32>, vector<4x3xf32> -> vector<4x6xf32>
    %38 = arith.truncf %37 : vector<4x6xf32> to vector<4x6xbf16>
    %cst_16 = arith.constant dense<0.000000e+00> : vector<4x4xf32>
    %39 = tpu.matmul %38, %4, %cst_16 {dimension_numbers = #tpu.dot_dimension_numbers<[1], [0], [0], [1], [0, 0, 1, 1], [], []>} : vector<4x6xbf16>, vector<6x4xbf16>, vector<4x4xf32> -> vector<4x4xf32>
    %40 = tpu.concatenate %39, %39 in 0 : vector<4x4xf32>, vector<4x4xf32> -> vector<8x4xf32>
    %41 = tpu.concatenate %40, %40 in 1 : vector<8x4xf32>, vector<8x4xf32> -> vector<8x8xf32>
    %c0_17 = arith.constant 0 : index
    %c0_18 = arith.constant 0 : index
    %c0_19 = arith.constant 0 : index
    %c0_20 = arith.constant 0 : index
    %c0_21 = arith.constant 0 : index
    %42 = vector.load %arg8[%c0_17, %c0_18, %c0_19, %c0_20, %c0_21] : memref<1x4x1x8x8xf32, #tpu.memory_space<vmem>>, vector<1x1x1x8x8xf32>
    %43 = vector.shape_cast %42 : vector<1x1x1x8x8xf32> to vector<8x8xf32>
    %44 = vector.shape_cast %41 : vector<8x8xf32> to vector<1x1x1x8x8xf32>
    tpu.vector_store %arg8[%c0_17, %c0_18, %c0_19, %c0_20, %c0_21], %44 {strides = array<i32>} : memref<1x4x1x8x8xf32, #tpu.memory_space<vmem>>, vector<1x1x1x8x8xf32>,
    %45 = vector.extract_strided_slice %1 {offsets = [1, 0, 0], sizes = [1, 4, 3], strides = [1, 1, 1]} : vector<8x4x3xbf16> to vector<1x4x3xbf16>
    %46 = vector.shape_cast %45 : vector<1x4x3xbf16> to vector<4x3xbf16>
    %47 = arith.extf %46 : vector<4x3xbf16> to vector<4x3xf32>
    %c1 = arith.constant 1 : index
    %48 = memref.load %arg3[%c1] : memref<8xf32, #tpu.memory_space<smem>>
    %49 = vector.broadcast %48 : f32 to vector<4x3xf32>
    %50 = arith.mulf %47, %49 : vector<4x3xf32>
    %c1_22 = arith.constant 1 : index
    %51 = memref.load %arg4[%c1_22] : memref<8xf32, #tpu.memory_space<smem>>
    %52 = vector.broadcast %51 : f32 to vector<4x3xf32>
    %53 = arith.addf %50, %52 : vector<4x3xf32>
    %cst_23 = arith.constant 0.000000e+00 : f32
    %54 = vector.broadcast %cst_23 : f32 to vector<4x3xf32>
    %55 = arith.maximumf %53, %54 : vector<4x3xf32>
    %56 = vector.extract_strided_slice %1 {offsets = [5, 0, 0], sizes = [1, 4, 3], strides = [1, 1, 1]} : vector<8x4x3xbf16> to vector<1x4x3xbf16>
    %57 = vector.shape_cast %56 : vector<1x4x3xbf16> to vector<4x3xbf16>
    %58 = arith.extf %57 : vector<4x3xbf16> to vector<4x3xf32>
    %c5 = arith.constant 5 : index
    %59 = memref.load %arg3[%c5] : memref<8xf32, #tpu.memory_space<smem>>
    %60 = vector.broadcast %59 : f32 to vector<4x3xf32>
    %61 = arith.mulf %58, %60 : vector<4x3xf32>
    %c5_24 = arith.constant 5 : index
    %62 = memref.load %arg4[%c5_24] : memref<8xf32, #tpu.memory_space<smem>>
    %63 = vector.broadcast %62 : f32 to vector<4x3xf32>
    %64 = arith.addf %61, %63 : vector<4x3xf32>
    %cst_25 = arith.constant 0.000000e+00 : f32
    %65 = vector.broadcast %cst_25 : f32 to vector<4x3xf32>
    %66 = arith.maximumf %64, %65 : vector<4x3xf32>
    %67 = tpu.concatenate %55, %66 in 1 : vector<4x3xf32>, vector<4x3xf32> -> vector<4x6xf32>
    %68 = arith.truncf %67 : vector<4x6xf32> to vector<4x6xbf16>
    %cst_26 = arith.constant dense<0.000000e+00> : vector<4x6xf32>
    %69 = tpu.matmul %2, %68, %cst_26 {dimension_numbers = #tpu.dot_dimension_numbers<[1], [0], [0], [1], [0, 0, 1, 1], [], []>} : vector<4x4xbf16>, vector<4x6xbf16>, vector<4x6xf32> -> vector<4x6xf32>
    %cst_27 = arith.constant dense<0.000000e+00> : vector<4x6xf32>
    %70 = tpu.matmul %3, %68, %cst_27 {dimension_numbers = #tpu.dot_dimension_numbers<[1], [0], [0], [1], [0, 0, 1, 1], [], []>} : vector<4x4xbf16>, vector<4x6xbf16>, vector<4x6xf32> -> vector<4x6xf32>
    %71 = vector.extract_strided_slice %69 {offsets = [0, 0], sizes = [4, 3], strides = [1, 1]} : vector<4x6xf32> to vector<4x3xf32>
    %72 = vector.extract_strided_slice %70 {offsets = [0, 3], sizes = [4, 3], strides = [1, 1]} : vector<4x6xf32> to vector<4x3xf32>
    %73 = arith.subf %71, %72 : vector<4x3xf32>
    %74 = vector.extract_strided_slice %70 {offsets = [0, 0], sizes = [4, 3], strides = [1, 1]} : vector<4x6xf32> to vector<4x3xf32>
    %75 = vector.extract_strided_slice %69 {offsets = [0, 3], sizes = [4, 3], strides = [1, 1]} : vector<4x6xf32> to vector<4x3xf32>
    %76 = arith.addf %74, %75 : vector<4x3xf32>
    %77 = tpu.concatenate %73, %76 in 1 : vector<4x3xf32>, vector<4x3xf32> -> vector<4x6xf32>
    %78 = arith.truncf %77 : vector<4x6xf32> to vector<4x6xbf16>
    %cst_28 = arith.constant dense<0.000000e+00> : vector<4x4xf32>
    %79 = tpu.matmul %78, %4, %cst_28 {dimension_numbers = #tpu.dot_dimension_numbers<[1], [0], [0], [1], [0, 0, 1, 1], [], []>} : vector<4x6xbf16>, vector<6x4xbf16>, vector<4x4xf32> -> vector<4x4xf32>
    %80 = tpu.concatenate %79, %79 in 0 : vector<4x4xf32>, vector<4x4xf32> -> vector<8x4xf32>
    %81 = tpu.concatenate %80, %80 in 1 : vector<8x4xf32>, vector<8x4xf32> -> vector<8x8xf32>
    %c0_29 = arith.constant 0 : index
    %c1_30 = arith.constant 1 : index
    %c0_31 = arith.constant 0 : index
    %c0_32 = arith.constant 0 : index
    %c0_33 = arith.constant 0 : index
    %82 = vector.load %arg8[%c0_29, %c1_30, %c0_31, %c0_32, %c0_33] : memref<1x4x1x8x8xf32, #tpu.memory_space<vmem>>, vector<1x1x1x8x8xf32>
    %83 = vector.shape_cast %82 : vector<1x1x1x8x8xf32> to vector<8x8xf32>
    %84 = vector.shape_cast %81 : vector<8x8xf32> to vector<1x1x1x8x8xf32>
    tpu.vector_store %arg8[%c0_29, %c1_30, %c0_31, %c0_32, %c0_33], %84 {strides = array<i32>} : memref<1x4x1x8x8xf32, #tpu.memory_space<vmem>>, vector<1x1x1x8x8xf32>,
    %85 = vector.extract_strided_slice %1 {offsets = [2, 0, 0], sizes = [1, 4, 3], strides = [1, 1, 1]} : vector<8x4x3xbf16> to vector<1x4x3xbf16>
    %86 = vector.shape_cast %85 : vector<1x4x3xbf16> to vector<4x3xbf16>
    %87 = arith.extf %86 : vector<4x3xbf16> to vector<4x3xf32>
    %c2 = arith.constant 2 : index
    %88 = memref.load %arg3[%c2] : memref<8xf32, #tpu.memory_space<smem>>
    %89 = vector.broadcast %88 : f32 to vector<4x3xf32>
    %90 = arith.mulf %87, %89 : vector<4x3xf32>
    %c2_34 = arith.constant 2 : index
    %91 = memref.load %arg4[%c2_34] : memref<8xf32, #tpu.memory_space<smem>>
    %92 = vector.broadcast %91 : f32 to vector<4x3xf32>
    %93 = arith.addf %90, %92 : vector<4x3xf32>
    %cst_35 = arith.constant 0.000000e+00 : f32
    %94 = vector.broadcast %cst_35 : f32 to vector<4x3xf32>
    %95 = arith.maximumf %93, %94 : vector<4x3xf32>
    %96 = vector.extract_strided_slice %1 {offsets = [6, 0, 0], sizes = [1, 4, 3], strides = [1, 1, 1]} : vector<8x4x3xbf16> to vector<1x4x3xbf16>
    %97 = vector.shape_cast %96 : vector<1x4x3xbf16> to vector<4x3xbf16>
    %98 = arith.extf %97 : vector<4x3xbf16> to vector<4x3xf32>
    %c6 = arith.constant 6 : index
    %99 = memref.load %arg3[%c6] : memref<8xf32, #tpu.memory_space<smem>>
    %100 = vector.broadcast %99 : f32 to vector<4x3xf32>
    %101 = arith.mulf %98, %100 : vector<4x3xf32>
    %c6_36 = arith.constant 6 : index
    %102 = memref.load %arg4[%c6_36] : memref<8xf32, #tpu.memory_space<smem>>
    %103 = vector.broadcast %102 : f32 to vector<4x3xf32>
    %104 = arith.addf %101, %103 : vector<4x3xf32>
    %cst_37 = arith.constant 0.000000e+00 : f32
    %105 = vector.broadcast %cst_37 : f32 to vector<4x3xf32>
    %106 = arith.maximumf %104, %105 : vector<4x3xf32>
    %107 = tpu.concatenate %95, %106 in 1 : vector<4x3xf32>, vector<4x3xf32> -> vector<4x6xf32>
    %108 = arith.truncf %107 : vector<4x6xf32> to vector<4x6xbf16>
    %cst_38 = arith.constant dense<0.000000e+00> : vector<4x6xf32>
    %109 = tpu.matmul %2, %108, %cst_38 {dimension_numbers = #tpu.dot_dimension_numbers<[1], [0], [0], [1], [0, 0, 1, 1], [], []>} : vector<4x4xbf16>, vector<4x6xbf16>, vector<4x6xf32> -> vector<4x6xf32>
    %cst_39 = arith.constant dense<0.000000e+00> : vector<4x6xf32>
    %110 = tpu.matmul %3, %108, %cst_39 {dimension_numbers = #tpu.dot_dimension_numbers<[1], [0], [0], [1], [0, 0, 1, 1], [], []>} : vector<4x4xbf16>, vector<4x6xbf16>, vector<4x6xf32> -> vector<4x6xf32>
    %111 = vector.extract_strided_slice %109 {offsets = [0, 0], sizes = [4, 3], strides = [1, 1]} : vector<4x6xf32> to vector<4x3xf32>
    %112 = vector.extract_strided_slice %110 {offsets = [0, 3], sizes = [4, 3], strides = [1, 1]} : vector<4x6xf32> to vector<4x3xf32>
    %113 = arith.subf %111, %112 : vector<4x3xf32>
    %114 = vector.extract_strided_slice %110 {offsets = [0, 0], sizes = [4, 3], strides = [1, 1]} : vector<4x6xf32> to vector<4x3xf32>
    %115 = vector.extract_strided_slice %109 {offsets = [0, 3], sizes = [4, 3], strides = [1, 1]} : vector<4x6xf32> to vector<4x3xf32>
    %116 = arith.addf %114, %115 : vector<4x3xf32>
    %117 = tpu.concatenate %113, %116 in 1 : vector<4x3xf32>, vector<4x3xf32> -> vector<4x6xf32>
    %118 = arith.truncf %117 : vector<4x6xf32> to vector<4x6xbf16>
    %cst_40 = arith.constant dense<0.000000e+00> : vector<4x4xf32>
    %119 = tpu.matmul %118, %4, %cst_40 {dimension_numbers = #tpu.dot_dimension_numbers<[1], [0], [0], [1], [0, 0, 1, 1], [], []>} : vector<4x6xbf16>, vector<6x4xbf16>, vector<4x4xf32> -> vector<4x4xf32>
    %120 = tpu.concatenate %119, %119 in 0 : vector<4x4xf32>, vector<4x4xf32> -> vector<8x4xf32>
    %121 = tpu.concatenate %120, %120 in 1 : vector<8x4xf32>, vector<8x4xf32> -> vector<8x8xf32>
    %c0_41 = arith.constant 0 : index
    %c2_42 = arith.constant 2 : index
    %c0_43 = arith.constant 0 : index
    %c0_44 = arith.constant 0 : index
    %c0_45 = arith.constant 0 : index
    %122 = vector.load %arg8[%c0_41, %c2_42, %c0_43, %c0_44, %c0_45] : memref<1x4x1x8x8xf32, #tpu.memory_space<vmem>>, vector<1x1x1x8x8xf32>
    %123 = vector.shape_cast %122 : vector<1x1x1x8x8xf32> to vector<8x8xf32>
    %124 = vector.shape_cast %121 : vector<8x8xf32> to vector<1x1x1x8x8xf32>
    tpu.vector_store %arg8[%c0_41, %c2_42, %c0_43, %c0_44, %c0_45], %124 {strides = array<i32>} : memref<1x4x1x8x8xf32, #tpu.memory_space<vmem>>, vector<1x1x1x8x8xf32>,
    %125 = vector.extract_strided_slice %1 {offsets = [3, 0, 0], sizes = [1, 4, 3], strides = [1, 1, 1]} : vector<8x4x3xbf16> to vector<1x4x3xbf16>
    %126 = vector.shape_cast %125 : vector<1x4x3xbf16> to vector<4x3xbf16>
    %127 = arith.extf %126 : vector<4x3xbf16> to vector<4x3xf32>
    %c3 = arith.constant 3 : index
    %128 = memref.load %arg3[%c3] : memref<8xf32, #tpu.memory_space<smem>>
    %129 = vector.broadcast %128 : f32 to vector<4x3xf32>
    %130 = arith.mulf %127, %129 : vector<4x3xf32>
    %c3_46 = arith.constant 3 : index
    %131 = memref.load %arg4[%c3_46] : memref<8xf32, #tpu.memory_space<smem>>
    %132 = vector.broadcast %131 : f32 to vector<4x3xf32>
    %133 = arith.addf %130, %132 : vector<4x3xf32>
    %cst_47 = arith.constant 0.000000e+00 : f32
    %134 = vector.broadcast %cst_47 : f32 to vector<4x3xf32>
    %135 = arith.maximumf %133, %134 : vector<4x3xf32>
    %136 = vector.extract_strided_slice %1 {offsets = [7, 0, 0], sizes = [1, 4, 3], strides = [1, 1, 1]} : vector<8x4x3xbf16> to vector<1x4x3xbf16>
    %137 = vector.shape_cast %136 : vector<1x4x3xbf16> to vector<4x3xbf16>
    %138 = arith.extf %137 : vector<4x3xbf16> to vector<4x3xf32>
    %c7 = arith.constant 7 : index
    %139 = memref.load %arg3[%c7] : memref<8xf32, #tpu.memory_space<smem>>
    %140 = vector.broadcast %139 : f32 to vector<4x3xf32>
    %141 = arith.mulf %138, %140 : vector<4x3xf32>
    %c7_48 = arith.constant 7 : index
    %142 = memref.load %arg4[%c7_48] : memref<8xf32, #tpu.memory_space<smem>>
    %143 = vector.broadcast %142 : f32 to vector<4x3xf32>
    %144 = arith.addf %141, %143 : vector<4x3xf32>
    %cst_49 = arith.constant 0.000000e+00 : f32
    %145 = vector.broadcast %cst_49 : f32 to vector<4x3xf32>
    %146 = arith.maximumf %144, %145 : vector<4x3xf32>
    %147 = tpu.concatenate %135, %146 in 1 : vector<4x3xf32>, vector<4x3xf32> -> vector<4x6xf32>
    %148 = arith.truncf %147 : vector<4x6xf32> to vector<4x6xbf16>
    %cst_50 = arith.constant dense<0.000000e+00> : vector<4x6xf32>
    %149 = tpu.matmul %2, %148, %cst_50 {dimension_numbers = #tpu.dot_dimension_numbers<[1], [0], [0], [1], [0, 0, 1, 1], [], []>} : vector<4x4xbf16>, vector<4x6xbf16>, vector<4x6xf32> -> vector<4x6xf32>
    %cst_51 = arith.constant dense<0.000000e+00> : vector<4x6xf32>
    %150 = tpu.matmul %3, %148, %cst_51 {dimension_numbers = #tpu.dot_dimension_numbers<[1], [0], [0], [1], [0, 0, 1, 1], [], []>} : vector<4x4xbf16>, vector<4x6xbf16>, vector<4x6xf32> -> vector<4x6xf32>
    %151 = vector.extract_strided_slice %149 {offsets = [0, 0], sizes = [4, 3], strides = [1, 1]} : vector<4x6xf32> to vector<4x3xf32>
    %152 = vector.extract_strided_slice %150 {offsets = [0, 3], sizes = [4, 3], strides = [1, 1]} : vector<4x6xf32> to vector<4x3xf32>
    %153 = arith.subf %151, %152 : vector<4x3xf32>
    %154 = vector.extract_strided_slice %150 {offsets = [0, 0], sizes = [4, 3], strides = [1, 1]} : vector<4x6xf32> to vector<4x3xf32>
    %155 = vector.extract_strided_slice %149 {offsets = [0, 3], sizes = [4, 3], strides = [1, 1]} : vector<4x6xf32> to vector<4x3xf32>
    %156 = arith.addf %154, %155 : vector<4x3xf32>
    %157 = tpu.concatenate %153, %156 in 1 : vector<4x3xf32>, vector<4x3xf32> -> vector<4x6xf32>
    %158 = arith.truncf %157 : vector<4x6xf32> to vector<4x6xbf16>
    %cst_52 = arith.constant dense<0.000000e+00> : vector<4x4xf32>
    %159 = tpu.matmul %158, %4, %cst_52 {dimension_numbers = #tpu.dot_dimension_numbers<[1], [0], [0], [1], [0, 0, 1, 1], [], []>} : vector<4x6xbf16>, vector<6x4xbf16>, vector<4x4xf32> -> vector<4x4xf32>
    %160 = tpu.concatenate %159, %159 in 0 : vector<4x4xf32>, vector<4x4xf32> -> vector<8x4xf32>
    %161 = tpu.concatenate %160, %160 in 1 : vector<8x4xf32>, vector<8x4xf32> -> vector<8x8xf32>
    %c0_53 = arith.constant 0 : index
    %c3_54 = arith.constant 3 : index
    %c0_55 = arith.constant 0 : index
    %c0_56 = arith.constant 0 : index
    %c0_57 = arith.constant 0 : index
    %162 = vector.load %arg8[%c0_53, %c3_54, %c0_55, %c0_56, %c0_57] : memref<1x4x1x8x8xf32, #tpu.memory_space<vmem>>, vector<1x1x1x8x8xf32>
    %163 = vector.shape_cast %162 : vector<1x1x1x8x8xf32> to vector<8x8xf32>
    %164 = vector.shape_cast %161 : vector<8x8xf32> to vector<1x1x1x8x8xf32>
    tpu.vector_store %arg8[%c0_53, %c3_54, %c0_55, %c0_56, %c0_57], %164 {strides = array<i32>} : memref<1x4x1x8x8xf32, #tpu.memory_space<vmem>>, vector<1x1x1x8x8xf32>,
    return
  }
  func.func @transform_0(%arg0: i32, %arg1: i32) -> (i32, i32, i32, i32, i32) {
    %c0_i32 = arith.constant 0 : i32
    %c0_i32_0 = arith.constant 0 : i32
    %c0_i32_1 = arith.constant 0 : i32
    %c0_i32_2 = arith.constant 0 : i32
    return %arg0, %arg1, %c0_i32, %c0_i32_0, %c0_i32_1 : i32, i32, i32, i32, i32
  }
  func.func @transform_1(%arg0: i32, %arg1: i32) -> i32 {
    %c0_i32 = arith.constant 0 : i32
    %c0_i32_0 = arith.constant 0 : i32
    return %c0_i32 : i32
  }
  func.func @transform_2(%arg0: i32, %arg1: i32) -> i32 {
    %c0_i32 = arith.constant 0 : i32
    %c0_i32_0 = arith.constant 0 : i32
    return %c0_i32 : i32
  }
  func.func @transform_3(%arg0: i32, %arg1: i32) -> (i32, i32) {
    %c0_i32 = arith.constant 0 : i32
    %c0_i32_0 = arith.constant 0 : i32
    %c0_i32_1 = arith.constant 0 : i32
    return %c0_i32, %c0_i32_0 : i32, i32
  }
  func.func @transform_4(%arg0: i32, %arg1: i32) -> (i32, i32) {
    %c0_i32 = arith.constant 0 : i32
    %c0_i32_0 = arith.constant 0 : i32
    %c0_i32_1 = arith.constant 0 : i32
    return %c0_i32, %c0_i32_0 : i32, i32
  }
  func.func @transform_5(%arg0: i32, %arg1: i32) -> (i32, i32) {
    %c0_i32 = arith.constant 0 : i32
    %c0_i32_0 = arith.constant 0 : i32
    %c0_i32_1 = arith.constant 0 : i32
    return %c0_i32, %c0_i32_0 : i32, i32
  }
  func.func @transform_6(%arg0: i32, %arg1: i32) -> (i32, i32, i32, i32, i32) {
    %c0_i32 = arith.constant 0 : i32
    %c0_i32_0 = arith.constant 0 : i32
    %c0_i32_1 = arith.constant 0 : i32
    %c0_i32_2 = arith.constant 0 : i32
    return %arg0, %c0_i32, %arg1, %c0_i32_0, %c0_i32_1 : i32, i32, i32, i32, i32
  }
}

module attributes {stable_mosaic.version = 11 : i64} {
  func.func @_bn_relu_irfft2_kernel(%arg0: i32, %arg1: i32, %arg2: memref<1x1x8x8x5xbf16, #tpu.memory_space<vmem>>, %arg3: memref<8xf32, #tpu.memory_space<smem>>, %arg4: memref<8xf32, #tpu.memory_space<smem>>, %arg5: memref<8x8xbf16, #tpu.memory_space<vmem>>, %arg6: memref<8x8xbf16, #tpu.memory_space<vmem>>, %arg7: memref<10x8xbf16, #tpu.memory_space<vmem>>, %arg8: memref<1x4x1x8x8xf32, #tpu.memory_space<vmem>>) attributes {dimension_semantics = [#tpu.dimension_semantics<parallel>, #tpu.dimension_semantics<parallel>], iteration_bounds = array<i64: 2, 4>, scalar_prefetch = 0 : i64, scratch_operands = 0 : i64, tpu.core_type = #tpu.core_type<tc>, window_params = [{transform_indices = @transform_0, window_bounds = array<i64: 1, 1, 8, 8, 5>}, {transform_indices = @transform_1, window_bounds = array<i64: 8>}, {transform_indices = @transform_2, window_bounds = array<i64: 8>}, {pipeline_mode = #tpu.pipeline_mode<synchronous>, transform_indices = @transform_3, window_bounds = array<i64: 8, 8>}, {pipeline_mode = #tpu.pipeline_mode<synchronous>, transform_indices = @transform_4, window_bounds = array<i64: 8, 8>}, {pipeline_mode = #tpu.pipeline_mode<synchronous>, transform_indices = @transform_5, window_bounds = array<i64: 10, 8>}, {transform_indices = @transform_6, window_bounds = array<i64: 1, 4, 1, 8, 8>}]} {
    %c0 = arith.constant 0 : index
    %c0_0 = arith.constant 0 : index
    %c0_1 = arith.constant 0 : index
    %c0_2 = arith.constant 0 : index
    %c0_3 = arith.constant 0 : index
    %0 = vector.load %arg2[%c0, %c0_0, %c0_1, %c0_2, %c0_3] : memref<1x1x8x8x5xbf16, #tpu.memory_space<vmem>>, vector<1x1x8x8x5xbf16>
    %1 = vector.shape_cast %0 : vector<1x1x8x8x5xbf16> to vector<8x8x5xbf16>
    %c0_4 = arith.constant 0 : index
    %c0_5 = arith.constant 0 : index
    %2 = vector.load %arg5[%c0_4, %c0_5] : memref<8x8xbf16, #tpu.memory_space<vmem>>, vector<8x8xbf16>
    %c0_6 = arith.constant 0 : index
    %c0_7 = arith.constant 0 : index
    %3 = vector.load %arg6[%c0_6, %c0_7] : memref<8x8xbf16, #tpu.memory_space<vmem>>, vector<8x8xbf16>
    %c0_8 = arith.constant 0 : index
    %c0_9 = arith.constant 0 : index
    %4 = vector.load %arg7[%c0_8, %c0_9] : memref<10x8xbf16, #tpu.memory_space<vmem>>, vector<10x8xbf16>
    %5 = vector.extract_strided_slice %1 {offsets = [0, 0, 0], sizes = [1, 8, 5], strides = [1, 1, 1]} : vector<8x8x5xbf16> to vector<1x8x5xbf16>
    %6 = vector.shape_cast %5 : vector<1x8x5xbf16> to vector<8x5xbf16>
    %7 = arith.extf %6 : vector<8x5xbf16> to vector<8x5xf32>
    %c0_10 = arith.constant 0 : index
    %8 = memref.load %arg3[%c0_10] : memref<8xf32, #tpu.memory_space<smem>>
    %9 = vector.broadcast %8 : f32 to vector<8x5xf32>
    %10 = arith.mulf %7, %9 : vector<8x5xf32>
    %c0_11 = arith.constant 0 : index
    %11 = memref.load %arg4[%c0_11] : memref<8xf32, #tpu.memory_space<smem>>
    %12 = vector.broadcast %11 : f32 to vector<8x5xf32>
    %13 = arith.addf %10, %12 : vector<8x5xf32>
    %cst = arith.constant 0.000000e+00 : f32
    %14 = vector.broadcast %cst : f32 to vector<8x5xf32>
    %15 = arith.maximumf %13, %14 : vector<8x5xf32>
    %16 = vector.extract_strided_slice %1 {offsets = [4, 0, 0], sizes = [1, 8, 5], strides = [1, 1, 1]} : vector<8x8x5xbf16> to vector<1x8x5xbf16>
    %17 = vector.shape_cast %16 : vector<1x8x5xbf16> to vector<8x5xbf16>
    %18 = arith.extf %17 : vector<8x5xbf16> to vector<8x5xf32>
    %c4 = arith.constant 4 : index
    %19 = memref.load %arg3[%c4] : memref<8xf32, #tpu.memory_space<smem>>
    %20 = vector.broadcast %19 : f32 to vector<8x5xf32>
    %21 = arith.mulf %18, %20 : vector<8x5xf32>
    %c4_12 = arith.constant 4 : index
    %22 = memref.load %arg4[%c4_12] : memref<8xf32, #tpu.memory_space<smem>>
    %23 = vector.broadcast %22 : f32 to vector<8x5xf32>
    %24 = arith.addf %21, %23 : vector<8x5xf32>
    %cst_13 = arith.constant 0.000000e+00 : f32
    %25 = vector.broadcast %cst_13 : f32 to vector<8x5xf32>
    %26 = arith.maximumf %24, %25 : vector<8x5xf32>
    %27 = tpu.concatenate %15, %26 in 1 : vector<8x5xf32>, vector<8x5xf32> -> vector<8x10xf32>
    %28 = arith.truncf %27 : vector<8x10xf32> to vector<8x10xbf16>
    %cst_14 = arith.constant dense<0.000000e+00> : vector<8x10xf32>
    %29 = tpu.matmul %2, %28, %cst_14 {dimension_numbers = #tpu.dot_dimension_numbers<[1], [0], [0], [1], [0, 0, 1, 1], [], []>} : vector<8x8xbf16>, vector<8x10xbf16>, vector<8x10xf32> -> vector<8x10xf32>
    %cst_15 = arith.constant dense<0.000000e+00> : vector<8x10xf32>
    %30 = tpu.matmul %3, %28, %cst_15 {dimension_numbers = #tpu.dot_dimension_numbers<[1], [0], [0], [1], [0, 0, 1, 1], [], []>} : vector<8x8xbf16>, vector<8x10xbf16>, vector<8x10xf32> -> vector<8x10xf32>
    %31 = vector.extract_strided_slice %29 {offsets = [0, 0], sizes = [8, 5], strides = [1, 1]} : vector<8x10xf32> to vector<8x5xf32>
    %32 = vector.extract_strided_slice %30 {offsets = [0, 5], sizes = [8, 5], strides = [1, 1]} : vector<8x10xf32> to vector<8x5xf32>
    %33 = arith.subf %31, %32 : vector<8x5xf32>
    %34 = vector.extract_strided_slice %30 {offsets = [0, 0], sizes = [8, 5], strides = [1, 1]} : vector<8x10xf32> to vector<8x5xf32>
    %35 = vector.extract_strided_slice %29 {offsets = [0, 5], sizes = [8, 5], strides = [1, 1]} : vector<8x10xf32> to vector<8x5xf32>
    %36 = arith.addf %34, %35 : vector<8x5xf32>
    %37 = tpu.concatenate %33, %36 in 1 : vector<8x5xf32>, vector<8x5xf32> -> vector<8x10xf32>
    %38 = arith.truncf %37 : vector<8x10xf32> to vector<8x10xbf16>
    %cst_16 = arith.constant dense<0.000000e+00> : vector<8x8xf32>
    %39 = tpu.matmul %38, %4, %cst_16 {dimension_numbers = #tpu.dot_dimension_numbers<[1], [0], [0], [1], [0, 0, 1, 1], [], []>} : vector<8x10xbf16>, vector<10x8xbf16>, vector<8x8xf32> -> vector<8x8xf32>
    %c0_17 = arith.constant 0 : index
    %c0_18 = arith.constant 0 : index
    %c0_19 = arith.constant 0 : index
    %c0_20 = arith.constant 0 : index
    %c0_21 = arith.constant 0 : index
    %40 = vector.load %arg8[%c0_17, %c0_18, %c0_19, %c0_20, %c0_21] : memref<1x4x1x8x8xf32, #tpu.memory_space<vmem>>, vector<1x1x1x8x8xf32>
    %41 = vector.shape_cast %40 : vector<1x1x1x8x8xf32> to vector<8x8xf32>
    %42 = vector.shape_cast %39 : vector<8x8xf32> to vector<1x1x1x8x8xf32>
    tpu.vector_store %arg8[%c0_17, %c0_18, %c0_19, %c0_20, %c0_21], %42 {strides = array<i32>} : memref<1x4x1x8x8xf32, #tpu.memory_space<vmem>>, vector<1x1x1x8x8xf32>,
    %43 = vector.extract_strided_slice %1 {offsets = [1, 0, 0], sizes = [1, 8, 5], strides = [1, 1, 1]} : vector<8x8x5xbf16> to vector<1x8x5xbf16>
    %44 = vector.shape_cast %43 : vector<1x8x5xbf16> to vector<8x5xbf16>
    %45 = arith.extf %44 : vector<8x5xbf16> to vector<8x5xf32>
    %c1 = arith.constant 1 : index
    %46 = memref.load %arg3[%c1] : memref<8xf32, #tpu.memory_space<smem>>
    %47 = vector.broadcast %46 : f32 to vector<8x5xf32>
    %48 = arith.mulf %45, %47 : vector<8x5xf32>
    %c1_22 = arith.constant 1 : index
    %49 = memref.load %arg4[%c1_22] : memref<8xf32, #tpu.memory_space<smem>>
    %50 = vector.broadcast %49 : f32 to vector<8x5xf32>
    %51 = arith.addf %48, %50 : vector<8x5xf32>
    %cst_23 = arith.constant 0.000000e+00 : f32
    %52 = vector.broadcast %cst_23 : f32 to vector<8x5xf32>
    %53 = arith.maximumf %51, %52 : vector<8x5xf32>
    %54 = vector.extract_strided_slice %1 {offsets = [5, 0, 0], sizes = [1, 8, 5], strides = [1, 1, 1]} : vector<8x8x5xbf16> to vector<1x8x5xbf16>
    %55 = vector.shape_cast %54 : vector<1x8x5xbf16> to vector<8x5xbf16>
    %56 = arith.extf %55 : vector<8x5xbf16> to vector<8x5xf32>
    %c5 = arith.constant 5 : index
    %57 = memref.load %arg3[%c5] : memref<8xf32, #tpu.memory_space<smem>>
    %58 = vector.broadcast %57 : f32 to vector<8x5xf32>
    %59 = arith.mulf %56, %58 : vector<8x5xf32>
    %c5_24 = arith.constant 5 : index
    %60 = memref.load %arg4[%c5_24] : memref<8xf32, #tpu.memory_space<smem>>
    %61 = vector.broadcast %60 : f32 to vector<8x5xf32>
    %62 = arith.addf %59, %61 : vector<8x5xf32>
    %cst_25 = arith.constant 0.000000e+00 : f32
    %63 = vector.broadcast %cst_25 : f32 to vector<8x5xf32>
    %64 = arith.maximumf %62, %63 : vector<8x5xf32>
    %65 = tpu.concatenate %53, %64 in 1 : vector<8x5xf32>, vector<8x5xf32> -> vector<8x10xf32>
    %66 = arith.truncf %65 : vector<8x10xf32> to vector<8x10xbf16>
    %cst_26 = arith.constant dense<0.000000e+00> : vector<8x10xf32>
    %67 = tpu.matmul %2, %66, %cst_26 {dimension_numbers = #tpu.dot_dimension_numbers<[1], [0], [0], [1], [0, 0, 1, 1], [], []>} : vector<8x8xbf16>, vector<8x10xbf16>, vector<8x10xf32> -> vector<8x10xf32>
    %cst_27 = arith.constant dense<0.000000e+00> : vector<8x10xf32>
    %68 = tpu.matmul %3, %66, %cst_27 {dimension_numbers = #tpu.dot_dimension_numbers<[1], [0], [0], [1], [0, 0, 1, 1], [], []>} : vector<8x8xbf16>, vector<8x10xbf16>, vector<8x10xf32> -> vector<8x10xf32>
    %69 = vector.extract_strided_slice %67 {offsets = [0, 0], sizes = [8, 5], strides = [1, 1]} : vector<8x10xf32> to vector<8x5xf32>
    %70 = vector.extract_strided_slice %68 {offsets = [0, 5], sizes = [8, 5], strides = [1, 1]} : vector<8x10xf32> to vector<8x5xf32>
    %71 = arith.subf %69, %70 : vector<8x5xf32>
    %72 = vector.extract_strided_slice %68 {offsets = [0, 0], sizes = [8, 5], strides = [1, 1]} : vector<8x10xf32> to vector<8x5xf32>
    %73 = vector.extract_strided_slice %67 {offsets = [0, 5], sizes = [8, 5], strides = [1, 1]} : vector<8x10xf32> to vector<8x5xf32>
    %74 = arith.addf %72, %73 : vector<8x5xf32>
    %75 = tpu.concatenate %71, %74 in 1 : vector<8x5xf32>, vector<8x5xf32> -> vector<8x10xf32>
    %76 = arith.truncf %75 : vector<8x10xf32> to vector<8x10xbf16>
    %cst_28 = arith.constant dense<0.000000e+00> : vector<8x8xf32>
    %77 = tpu.matmul %76, %4, %cst_28 {dimension_numbers = #tpu.dot_dimension_numbers<[1], [0], [0], [1], [0, 0, 1, 1], [], []>} : vector<8x10xbf16>, vector<10x8xbf16>, vector<8x8xf32> -> vector<8x8xf32>
    %c0_29 = arith.constant 0 : index
    %c1_30 = arith.constant 1 : index
    %c0_31 = arith.constant 0 : index
    %c0_32 = arith.constant 0 : index
    %c0_33 = arith.constant 0 : index
    %78 = vector.load %arg8[%c0_29, %c1_30, %c0_31, %c0_32, %c0_33] : memref<1x4x1x8x8xf32, #tpu.memory_space<vmem>>, vector<1x1x1x8x8xf32>
    %79 = vector.shape_cast %78 : vector<1x1x1x8x8xf32> to vector<8x8xf32>
    %80 = vector.shape_cast %77 : vector<8x8xf32> to vector<1x1x1x8x8xf32>
    tpu.vector_store %arg8[%c0_29, %c1_30, %c0_31, %c0_32, %c0_33], %80 {strides = array<i32>} : memref<1x4x1x8x8xf32, #tpu.memory_space<vmem>>, vector<1x1x1x8x8xf32>,
    %81 = vector.extract_strided_slice %1 {offsets = [2, 0, 0], sizes = [1, 8, 5], strides = [1, 1, 1]} : vector<8x8x5xbf16> to vector<1x8x5xbf16>
    %82 = vector.shape_cast %81 : vector<1x8x5xbf16> to vector<8x5xbf16>
    %83 = arith.extf %82 : vector<8x5xbf16> to vector<8x5xf32>
    %c2 = arith.constant 2 : index
    %84 = memref.load %arg3[%c2] : memref<8xf32, #tpu.memory_space<smem>>
    %85 = vector.broadcast %84 : f32 to vector<8x5xf32>
    %86 = arith.mulf %83, %85 : vector<8x5xf32>
    %c2_34 = arith.constant 2 : index
    %87 = memref.load %arg4[%c2_34] : memref<8xf32, #tpu.memory_space<smem>>
    %88 = vector.broadcast %87 : f32 to vector<8x5xf32>
    %89 = arith.addf %86, %88 : vector<8x5xf32>
    %cst_35 = arith.constant 0.000000e+00 : f32
    %90 = vector.broadcast %cst_35 : f32 to vector<8x5xf32>
    %91 = arith.maximumf %89, %90 : vector<8x5xf32>
    %92 = vector.extract_strided_slice %1 {offsets = [6, 0, 0], sizes = [1, 8, 5], strides = [1, 1, 1]} : vector<8x8x5xbf16> to vector<1x8x5xbf16>
    %93 = vector.shape_cast %92 : vector<1x8x5xbf16> to vector<8x5xbf16>
    %94 = arith.extf %93 : vector<8x5xbf16> to vector<8x5xf32>
    %c6 = arith.constant 6 : index
    %95 = memref.load %arg3[%c6] : memref<8xf32, #tpu.memory_space<smem>>
    %96 = vector.broadcast %95 : f32 to vector<8x5xf32>
    %97 = arith.mulf %94, %96 : vector<8x5xf32>
    %c6_36 = arith.constant 6 : index
    %98 = memref.load %arg4[%c6_36] : memref<8xf32, #tpu.memory_space<smem>>
    %99 = vector.broadcast %98 : f32 to vector<8x5xf32>
    %100 = arith.addf %97, %99 : vector<8x5xf32>
    %cst_37 = arith.constant 0.000000e+00 : f32
    %101 = vector.broadcast %cst_37 : f32 to vector<8x5xf32>
    %102 = arith.maximumf %100, %101 : vector<8x5xf32>
    %103 = tpu.concatenate %91, %102 in 1 : vector<8x5xf32>, vector<8x5xf32> -> vector<8x10xf32>
    %104 = arith.truncf %103 : vector<8x10xf32> to vector<8x10xbf16>
    %cst_38 = arith.constant dense<0.000000e+00> : vector<8x10xf32>
    %105 = tpu.matmul %2, %104, %cst_38 {dimension_numbers = #tpu.dot_dimension_numbers<[1], [0], [0], [1], [0, 0, 1, 1], [], []>} : vector<8x8xbf16>, vector<8x10xbf16>, vector<8x10xf32> -> vector<8x10xf32>
    %cst_39 = arith.constant dense<0.000000e+00> : vector<8x10xf32>
    %106 = tpu.matmul %3, %104, %cst_39 {dimension_numbers = #tpu.dot_dimension_numbers<[1], [0], [0], [1], [0, 0, 1, 1], [], []>} : vector<8x8xbf16>, vector<8x10xbf16>, vector<8x10xf32> -> vector<8x10xf32>
    %107 = vector.extract_strided_slice %105 {offsets = [0, 0], sizes = [8, 5], strides = [1, 1]} : vector<8x10xf32> to vector<8x5xf32>
    %108 = vector.extract_strided_slice %106 {offsets = [0, 5], sizes = [8, 5], strides = [1, 1]} : vector<8x10xf32> to vector<8x5xf32>
    %109 = arith.subf %107, %108 : vector<8x5xf32>
    %110 = vector.extract_strided_slice %106 {offsets = [0, 0], sizes = [8, 5], strides = [1, 1]} : vector<8x10xf32> to vector<8x5xf32>
    %111 = vector.extract_strided_slice %105 {offsets = [0, 5], sizes = [8, 5], strides = [1, 1]} : vector<8x10xf32> to vector<8x5xf32>
    %112 = arith.addf %110, %111 : vector<8x5xf32>
    %113 = tpu.concatenate %109, %112 in 1 : vector<8x5xf32>, vector<8x5xf32> -> vector<8x10xf32>
    %114 = arith.truncf %113 : vector<8x10xf32> to vector<8x10xbf16>
    %cst_40 = arith.constant dense<0.000000e+00> : vector<8x8xf32>
    %115 = tpu.matmul %114, %4, %cst_40 {dimension_numbers = #tpu.dot_dimension_numbers<[1], [0], [0], [1], [0, 0, 1, 1], [], []>} : vector<8x10xbf16>, vector<10x8xbf16>, vector<8x8xf32> -> vector<8x8xf32>
    %c0_41 = arith.constant 0 : index
    %c2_42 = arith.constant 2 : index
    %c0_43 = arith.constant 0 : index
    %c0_44 = arith.constant 0 : index
    %c0_45 = arith.constant 0 : index
    %116 = vector.load %arg8[%c0_41, %c2_42, %c0_43, %c0_44, %c0_45] : memref<1x4x1x8x8xf32, #tpu.memory_space<vmem>>, vector<1x1x1x8x8xf32>
    %117 = vector.shape_cast %116 : vector<1x1x1x8x8xf32> to vector<8x8xf32>
    %118 = vector.shape_cast %115 : vector<8x8xf32> to vector<1x1x1x8x8xf32>
    tpu.vector_store %arg8[%c0_41, %c2_42, %c0_43, %c0_44, %c0_45], %118 {strides = array<i32>} : memref<1x4x1x8x8xf32, #tpu.memory_space<vmem>>, vector<1x1x1x8x8xf32>,
    %119 = vector.extract_strided_slice %1 {offsets = [3, 0, 0], sizes = [1, 8, 5], strides = [1, 1, 1]} : vector<8x8x5xbf16> to vector<1x8x5xbf16>
    %120 = vector.shape_cast %119 : vector<1x8x5xbf16> to vector<8x5xbf16>
    %121 = arith.extf %120 : vector<8x5xbf16> to vector<8x5xf32>
    %c3 = arith.constant 3 : index
    %122 = memref.load %arg3[%c3] : memref<8xf32, #tpu.memory_space<smem>>
    %123 = vector.broadcast %122 : f32 to vector<8x5xf32>
    %124 = arith.mulf %121, %123 : vector<8x5xf32>
    %c3_46 = arith.constant 3 : index
    %125 = memref.load %arg4[%c3_46] : memref<8xf32, #tpu.memory_space<smem>>
    %126 = vector.broadcast %125 : f32 to vector<8x5xf32>
    %127 = arith.addf %124, %126 : vector<8x5xf32>
    %cst_47 = arith.constant 0.000000e+00 : f32
    %128 = vector.broadcast %cst_47 : f32 to vector<8x5xf32>
    %129 = arith.maximumf %127, %128 : vector<8x5xf32>
    %130 = vector.extract_strided_slice %1 {offsets = [7, 0, 0], sizes = [1, 8, 5], strides = [1, 1, 1]} : vector<8x8x5xbf16> to vector<1x8x5xbf16>
    %131 = vector.shape_cast %130 : vector<1x8x5xbf16> to vector<8x5xbf16>
    %132 = arith.extf %131 : vector<8x5xbf16> to vector<8x5xf32>
    %c7 = arith.constant 7 : index
    %133 = memref.load %arg3[%c7] : memref<8xf32, #tpu.memory_space<smem>>
    %134 = vector.broadcast %133 : f32 to vector<8x5xf32>
    %135 = arith.mulf %132, %134 : vector<8x5xf32>
    %c7_48 = arith.constant 7 : index
    %136 = memref.load %arg4[%c7_48] : memref<8xf32, #tpu.memory_space<smem>>
    %137 = vector.broadcast %136 : f32 to vector<8x5xf32>
    %138 = arith.addf %135, %137 : vector<8x5xf32>
    %cst_49 = arith.constant 0.000000e+00 : f32
    %139 = vector.broadcast %cst_49 : f32 to vector<8x5xf32>
    %140 = arith.maximumf %138, %139 : vector<8x5xf32>
    %141 = tpu.concatenate %129, %140 in 1 : vector<8x5xf32>, vector<8x5xf32> -> vector<8x10xf32>
    %142 = arith.truncf %141 : vector<8x10xf32> to vector<8x10xbf16>
    %cst_50 = arith.constant dense<0.000000e+00> : vector<8x10xf32>
    %143 = tpu.matmul %2, %142, %cst_50 {dimension_numbers = #tpu.dot_dimension_numbers<[1], [0], [0], [1], [0, 0, 1, 1], [], []>} : vector<8x8xbf16>, vector<8x10xbf16>, vector<8x10xf32> -> vector<8x10xf32>
    %cst_51 = arith.constant dense<0.000000e+00> : vector<8x10xf32>
    %144 = tpu.matmul %3, %142, %cst_51 {dimension_numbers = #tpu.dot_dimension_numbers<[1], [0], [0], [1], [0, 0, 1, 1], [], []>} : vector<8x8xbf16>, vector<8x10xbf16>, vector<8x10xf32> -> vector<8x10xf32>
    %145 = vector.extract_strided_slice %143 {offsets = [0, 0], sizes = [8, 5], strides = [1, 1]} : vector<8x10xf32> to vector<8x5xf32>
    %146 = vector.extract_strided_slice %144 {offsets = [0, 5], sizes = [8, 5], strides = [1, 1]} : vector<8x10xf32> to vector<8x5xf32>
    %147 = arith.subf %145, %146 : vector<8x5xf32>
    %148 = vector.extract_strided_slice %144 {offsets = [0, 0], sizes = [8, 5], strides = [1, 1]} : vector<8x10xf32> to vector<8x5xf32>
    %149 = vector.extract_strided_slice %143 {offsets = [0, 5], sizes = [8, 5], strides = [1, 1]} : vector<8x10xf32> to vector<8x5xf32>
    %150 = arith.addf %148, %149 : vector<8x5xf32>
    %151 = tpu.concatenate %147, %150 in 1 : vector<8x5xf32>, vector<8x5xf32> -> vector<8x10xf32>
    %152 = arith.truncf %151 : vector<8x10xf32> to vector<8x10xbf16>
    %cst_52 = arith.constant dense<0.000000e+00> : vector<8x8xf32>
    %153 = tpu.matmul %152, %4, %cst_52 {dimension_numbers = #tpu.dot_dimension_numbers<[1], [0], [0], [1], [0, 0, 1, 1], [], []>} : vector<8x10xbf16>, vector<10x8xbf16>, vector<8x8xf32> -> vector<8x8xf32>
    %c0_53 = arith.constant 0 : index
    %c3_54 = arith.constant 3 : index
    %c0_55 = arith.constant 0 : index
    %c0_56 = arith.constant 0 : index
    %c0_57 = arith.constant 0 : index
    %154 = vector.load %arg8[%c0_53, %c3_54, %c0_55, %c0_56, %c0_57] : memref<1x4x1x8x8xf32, #tpu.memory_space<vmem>>, vector<1x1x1x8x8xf32>
    %155 = vector.shape_cast %154 : vector<1x1x1x8x8xf32> to vector<8x8xf32>
    %156 = vector.shape_cast %153 : vector<8x8xf32> to vector<1x1x1x8x8xf32>
    tpu.vector_store %arg8[%c0_53, %c3_54, %c0_55, %c0_56, %c0_57], %156 {strides = array<i32>} : memref<1x4x1x8x8xf32, #tpu.memory_space<vmem>>, vector<1x1x1x8x8xf32>,
    return
  }
  func.func @transform_0(%arg0: i32, %arg1: i32) -> (i32, i32, i32, i32, i32) {
    %c0_i32 = arith.constant 0 : i32
    %c0_i32_0 = arith.constant 0 : i32
    %c0_i32_1 = arith.constant 0 : i32
    %c0_i32_2 = arith.constant 0 : i32
    return %arg0, %arg1, %c0_i32, %c0_i32_0, %c0_i32_1 : i32, i32, i32, i32, i32
  }
  func.func @transform_1(%arg0: i32, %arg1: i32) -> i32 {
    %c0_i32 = arith.constant 0 : i32
    %c0_i32_0 = arith.constant 0 : i32
    return %c0_i32 : i32
  }
  func.func @transform_2(%arg0: i32, %arg1: i32) -> i32 {
    %c0_i32 = arith.constant 0 : i32
    %c0_i32_0 = arith.constant 0 : i32
    return %c0_i32 : i32
  }
  func.func @transform_3(%arg0: i32, %arg1: i32) -> (i32, i32) {
    %c0_i32 = arith.constant 0 : i32
    %c0_i32_0 = arith.constant 0 : i32
    %c0_i32_1 = arith.constant 0 : i32
    return %c0_i32, %c0_i32_0 : i32, i32
  }
  func.func @transform_4(%arg0: i32, %arg1: i32) -> (i32, i32) {
    %c0_i32 = arith.constant 0 : i32
    %c0_i32_0 = arith.constant 0 : i32
    %c0_i32_1 = arith.constant 0 : i32
    return %c0_i32, %c0_i32_0 : i32, i32
  }
  func.func @transform_5(%arg0: i32, %arg1: i32) -> (i32, i32) {
    %c0_i32 = arith.constant 0 : i32
    %c0_i32_0 = arith.constant 0 : i32
    %c0_i32_1 = arith.constant 0 : i32
    return %c0_i32, %c0_i32_0 : i32, i32
  }
  func.func @transform_6(%arg0: i32, %arg1: i32) -> (i32, i32, i32, i32, i32) {
    %c0_i32 = arith.constant 0 : i32
    %c0_i32_0 = arith.constant 0 : i32
    %c0_i32_1 = arith.constant 0 : i32
    %c0_i32_2 = arith.constant 0 : i32
    return %arg0, %c0_i32, %arg1, %c0_i32_0, %c0_i32_1 : i32, i32, i32, i32, i32
  }
}

module attributes {stable_mosaic.version = 11 : i64} {
  func.func @kernel(%arg0: i32, %arg1: i32, %arg2: memref<1x4x256xf32, #tpu.memory_space<vmem>>, %arg3: memref<1x4x256xf32, #tpu.memory_space<vmem>>, %arg4: memref<1x4x256xf32, #tpu.memory_space<vmem>>, %arg5: memref<1x4x256xf32, #tpu.memory_space<vmem>>, %arg6: memref<8x4xf32, #tpu.memory_space<vmem>>, %arg7: memref<8x4xf32, #tpu.memory_space<vmem>>, %arg8: memref<1x8x256xf32, #tpu.memory_space<vmem>>, %arg9: memref<1x1x8x2xf32, #tpu.memory_space<vmem>>) attributes {dimension_semantics = [#tpu.dimension_semantics<parallel>, #tpu.dimension_semantics<parallel>], iteration_bounds = array<i64: 2, 1>, scalar_prefetch = 0 : i64, scratch_operands = 0 : i64, tpu.core_type = #tpu.core_type<tc>, window_params = [{transform_indices = @transform_0, window_bounds = array<i64: 1, 4, 256>}, {transform_indices = @transform_1, window_bounds = array<i64: 1, 4, 256>}, {transform_indices = @transform_2, window_bounds = array<i64: 1, 4, 256>}, {transform_indices = @transform_3, window_bounds = array<i64: 1, 4, 256>}, {pipeline_mode = #tpu.pipeline_mode<synchronous>, transform_indices = @transform_4, window_bounds = array<i64: 8, 4>}, {pipeline_mode = #tpu.pipeline_mode<synchronous>, transform_indices = @transform_5, window_bounds = array<i64: 8, 4>}, {transform_indices = @transform_6, window_bounds = array<i64: 1, 8, 256>}, {transform_indices = @transform_7, window_bounds = array<i64: 1, 1, 8, 2>}]} {
    %c0 = arith.constant 0 : index
    %c0_0 = arith.constant 0 : index
    %0 = vector.load %arg6[%c0, %c0_0] : memref<8x4xf32, #tpu.memory_space<vmem>>, vector<8x4xf32>
    %c0_1 = arith.constant 0 : index
    %c0_2 = arith.constant 0 : index
    %c0_3 = arith.constant 0 : index
    %1 = vector.load %arg2[%c0_1, %c0_2, %c0_3] : memref<1x4x256xf32, #tpu.memory_space<vmem>>, vector<1x4x256xf32>
    %2 = vector.shape_cast %1 : vector<1x4x256xf32> to vector<4x256xf32>
    %c0_4 = arith.constant 0 : index
    %c0_5 = arith.constant 0 : index
    %c0_6 = arith.constant 0 : index
    %3 = vector.load %arg3[%c0_4, %c0_5, %c0_6] : memref<1x4x256xf32, #tpu.memory_space<vmem>>, vector<1x4x256xf32>
    %4 = vector.shape_cast %3 : vector<1x4x256xf32> to vector<4x256xf32>
    %5 = arith.addf %2, %4 : vector<4x256xf32>
    %c0_7 = arith.constant 0 : index
    %c0_8 = arith.constant 0 : index
    %c0_9 = arith.constant 0 : index
    %6 = vector.load %arg4[%c0_7, %c0_8, %c0_9] : memref<1x4x256xf32, #tpu.memory_space<vmem>>, vector<1x4x256xf32>
    %7 = vector.shape_cast %6 : vector<1x4x256xf32> to vector<4x256xf32>
    %8 = arith.addf %5, %7 : vector<4x256xf32>
    %cst = arith.constant dense<0.000000e+00> : vector<8x256xf32>
    %9 = tpu.matmul %0, %8, %cst {dimension_numbers = #tpu.dot_dimension_numbers<[1], [0], [0], [1], [0, 0, 1, 1], [], []>} : vector<8x4xf32>, vector<4x256xf32>, vector<8x256xf32> -> vector<8x256xf32>
    %c0_10 = arith.constant 0 : index
    %c0_11 = arith.constant 0 : index
    %10 = vector.load %arg7[%c0_10, %c0_11] : memref<8x4xf32, #tpu.memory_space<vmem>>, vector<8x4xf32>
    %c0_12 = arith.constant 0 : index
    %c0_13 = arith.constant 0 : index
    %c0_14 = arith.constant 0 : index
    %11 = vector.load %arg5[%c0_12, %c0_13, %c0_14] : memref<1x4x256xf32, #tpu.memory_space<vmem>>, vector<1x4x256xf32>
    %12 = vector.shape_cast %11 : vector<1x4x256xf32> to vector<4x256xf32>
    %cst_15 = arith.constant dense<0.000000e+00> : vector<8x256xf32>
    %13 = tpu.matmul %10, %12, %cst_15 {dimension_numbers = #tpu.dot_dimension_numbers<[1], [0], [0], [1], [0, 0, 1, 1], [], []>} : vector<8x4xf32>, vector<4x256xf32>, vector<8x256xf32> -> vector<8x256xf32>
    %14 = arith.addf %9, %13 : vector<8x256xf32>
    %c0_16 = arith.constant 0 : index
    %c0_17 = arith.constant 0 : index
    %c0_18 = arith.constant 0 : index
    %15 = vector.load %arg8[%c0_16, %c0_17, %c0_18] : memref<1x8x256xf32, #tpu.memory_space<vmem>>, vector<1x8x256xf32>
    %16 = vector.shape_cast %15 : vector<1x8x256xf32> to vector<8x256xf32>
    %17 = vector.shape_cast %14 : vector<8x256xf32> to vector<1x8x256xf32>
    tpu.vector_store %arg8[%c0_16, %c0_17, %c0_18], %17 {strides = array<i32>} : memref<1x8x256xf32, #tpu.memory_space<vmem>>, vector<1x8x256xf32>,
    %cst_19 = arith.constant dense<0.000000e+00> : vector<8xf32>
    %18 = vector.multi_reduction <add>, %14, %cst_19 [1] : vector<8x256xf32> to vector<8xf32>
    %19 = vector.shape_cast %18 : vector<8xf32> to vector<8x1xf32>
    %20 = arith.mulf %14, %14 : vector<8x256xf32>
    %cst_20 = arith.constant dense<0.000000e+00> : vector<8xf32>
    %21 = vector.multi_reduction <add>, %20, %cst_20 [1] : vector<8x256xf32> to vector<8xf32>
    %22 = vector.shape_cast %21 : vector<8xf32> to vector<8x1xf32>
    %23 = tpu.concatenate %19, %22 in 1 : vector<8x1xf32>, vector<8x1xf32> -> vector<8x2xf32>
    %c0_21 = arith.constant 0 : index
    %c0_22 = arith.constant 0 : index
    %c0_23 = arith.constant 0 : index
    %c0_24 = arith.constant 0 : index
    %24 = vector.load %arg9[%c0_21, %c0_22, %c0_23, %c0_24] : memref<1x1x8x2xf32, #tpu.memory_space<vmem>>, vector<1x1x8x2xf32>
    %25 = vector.shape_cast %24 : vector<1x1x8x2xf32> to vector<8x2xf32>
    %26 = vector.shape_cast %23 : vector<8x2xf32> to vector<1x1x8x2xf32>
    tpu.vector_store %arg9[%c0_21, %c0_22, %c0_23, %c0_24], %26 {strides = array<i32>} : memref<1x1x8x2xf32, #tpu.memory_space<vmem>>, vector<1x1x8x2xf32>,
    return
  }
  func.func @transform_0(%arg0: i32, %arg1: i32) -> (i32, i32, i32) {
    %c0_i32 = arith.constant 0 : i32
    %c0_i32_0 = arith.constant 0 : i32
    return %arg0, %c0_i32, %arg1 : i32, i32, i32
  }
  func.func @transform_1(%arg0: i32, %arg1: i32) -> (i32, i32, i32) {
    %c0_i32 = arith.constant 0 : i32
    %c0_i32_0 = arith.constant 0 : i32
    return %arg0, %c0_i32, %arg1 : i32, i32, i32
  }
  func.func @transform_2(%arg0: i32, %arg1: i32) -> (i32, i32, i32) {
    %c0_i32 = arith.constant 0 : i32
    %c0_i32_0 = arith.constant 0 : i32
    return %arg0, %c0_i32, %arg1 : i32, i32, i32
  }
  func.func @transform_3(%arg0: i32, %arg1: i32) -> (i32, i32, i32) {
    %c0_i32 = arith.constant 0 : i32
    %c0_i32_0 = arith.constant 0 : i32
    return %arg0, %c0_i32, %arg1 : i32, i32, i32
  }
  func.func @transform_4(%arg0: i32, %arg1: i32) -> (i32, i32) {
    %c0_i32 = arith.constant 0 : i32
    %c0_i32_0 = arith.constant 0 : i32
    %c0_i32_1 = arith.constant 0 : i32
    return %c0_i32, %c0_i32_0 : i32, i32
  }
  func.func @transform_5(%arg0: i32, %arg1: i32) -> (i32, i32) {
    %c0_i32 = arith.constant 0 : i32
    %c0_i32_0 = arith.constant 0 : i32
    %c0_i32_1 = arith.constant 0 : i32
    return %c0_i32, %c0_i32_0 : i32, i32
  }
  func.func @transform_6(%arg0: i32, %arg1: i32) -> (i32, i32, i32) {
    %c0_i32 = arith.constant 0 : i32
    %c0_i32_0 = arith.constant 0 : i32
    return %arg0, %c0_i32, %arg1 : i32, i32, i32
  }
  func.func @transform_7(%arg0: i32, %arg1: i32) -> (i32, i32, i32, i32) {
    %c0_i32 = arith.constant 0 : i32
    %c0_i32_0 = arith.constant 0 : i32
    %c0_i32_1 = arith.constant 0 : i32
    return %arg0, %arg1, %c0_i32, %c0_i32_0 : i32, i32, i32, i32
  }
}

</mosaic_0001>

<llo_original>
// kernel: ffc_bn_act.15
$region0: #{ffc_bn_act.15}
  #allocation0 [shape = 'u32[]', space=smem, size = 0x4, offset = 0x4, fixed_abs, tag = 'smem constant byte address 0x4 - core index']
  #allocation1 [shape = 'u32[144,128]{1,0:T(1,128)}', space=vmem, size = 0x12000, scoped, tag = 'internal scratch']
  %s0 = inlined_call_operand.vmem [shape: f32[2,4,256], index: 0, kind: input, shape index: {}]
  %s1 = inlined_call_operand.vmem [shape: f32[4,1], index: 1, kind: input, shape index: {}]
  %s2 = inlined_call_operand.vmem [shape: f32[4,1], index: 2, kind: input, shape index: {}]
  %s3 = inlined_call_operand.vmem [shape: f32[2,4,256], index: 3, kind: output, shape index: {}]
  %s4 = sld [smem:[#allocation0]]
  $region45: #{ffc_bn_act.15} parent=0
    _
  %s6 = ssub.s32 1, %s4
  %s7 = scalar_select 0, %s6, %s4
  loop: start=0, step=1, limit=4
  $region2: #{ffc_bn_act.15} parent=0 // loop_pre_header
    _
  $region3: #{ffc_bn_act.15} parent=0 // loop_header
    %s9 = sphi 0, %s13
    %p10 = scmp.ge.s32.totalorder %s9, 4
    %s16 = sphi 0, %s28
    %s17 = sphi 0, %s24
    %s18 = sphi 0, %s16
    %s19 = sphi 0, %s17
    %s20 = sphi 0, %s18
    %s21 = sphi 0, %s19
    %s33 = sphi 0, %s35
    %s36 = sphi 0, %s33
    %s37 = sphi 0, %s36
    %s53 = sphi 0, %s37
    %s57 = sphi 0, %s57
    %s59 = sphi 0, %s57
    %s60 = sphi 0, %s59
    %s74 = sphi 0, %s60
    %s78 = sphi 0, %s78
    %s80 = sphi 0, %s78
    %s81 = sphi 0, %s80
    %s95 = sphi 0, %s81
    %s103 = sphi 0, %s105
    %s106 = sphi 0, %s103
    %s107 = sphi 0, %s106
    %s123 = sphi 0, %s107
  $region4: #{ffc_bn_act.15} parent=0 // loop_header_branch
    %12 = sbr.rel (%p10) target = $region8
  $region5: #{ffc_bn_act.15} parent=0 // loop_body
    %s14 = ssub.s32 %s9, 1
    %s15 = ssub.s32 %s9, 2
    %s22 = sadd.s32 1, %s17
    %p23 = scmp.ge.s32.totalorder %s22, 1
    %s24 = scalar_select %p23, 0, %s22
    %s25 = sadd.s32 1, %s16
    %s26 = scalar_select %p23, %s25, %s16
    %p27 = scmp.ge.s32.totalorder %s26, 2
    %s28 = scalar_select %p27, 0, %s26
    %s29 = ssub.s32 %s16, %s28
    %s30 = ssub.s32 %s17, %s24
    %s31 = sor.u32 %s29, %s30
    %p32 = scmp.eq.s32.totalorder %s31, 0
    %s34 = sadd.s32 %s33, 1
    %s35 = scalar_select %p32, %s33, %s34
    %p38 = pneg %p32
    %p39 = scmp.eq.s32.totalorder %s9, 1
    %p40 = por %p38, %p39
    %p41 = scmp.ne.s32.totalorder %s33, %s36
    %p42 = scmp.eq.s32.totalorder %s9, 0
    %p43 = por %p41, %p42
    %p44 = scmp.ne.s32.totalorder %s33, %s36
    %p45 = scmp.eq.s32.totalorder %s14, 1
    %p46 = por %p44, %p45
    %p47 = scmp.ne.s32.totalorder %s36, %s37
    %p48 = scmp.eq.s32.totalorder %s14, 0
    %p49 = por %p47, %p48
    %p50 = scmp.ne.s32.totalorder %s36, %s37
    %p51 = scmp.eq.s32.totalorder %s15, 1
    %p52 = por %p50, %p51
    %p54 = scmp.ne.s32.totalorder %s37, %s53
    %p55 = scmp.eq.s32.totalorder %s15, 0
    %p56 = por %p54, %p55
    %s58 = sadd.s32 %s57, 1
    %p61 = scmp.eq.s32.totalorder %s9, 1
    %p62 = scmp.ne.s32.totalorder %s57, %s59
    %p63 = scmp.eq.s32.totalorder %s9, 0
    %p64 = por %p62, %p63
    %p65 = scmp.ne.s32.totalorder %s57, %s59
    %p66 = scmp.eq.s32.totalorder %s14, 1
    %p67 = por %p65, %p66
    %p68 = scmp.ne.s32.totalorder %s59, %s60
    %p69 = scmp.eq.s32.totalorder %s14, 0
    %p70 = por %p68, %p69
    %p71 = scmp.ne.s32.totalorder %s59, %s60
    %p72 = scmp.eq.s32.totalorder %s15, 1
    %p73 = por %p71, %p72
    %p75 = scmp.ne.s32.totalorder %s60, %s74
    %p76 = scmp.eq.s32.totalorder %s15, 0
    %p77 = por %p75, %p76
    %s79 = sadd.s32 %s78, 1
    %p82 = scmp.eq.s32.totalorder %s9, 1
    %p83 = scmp.ne.s32.totalorder %s78, %s80
    %p84 = scmp.eq.s32.totalorder %s9, 0
    %p85 = por %p83, %p84
    %p86 = scmp.ne.s32.totalorder %s78, %s80
    %p87 = scmp.eq.s32.totalorder %s14, 1
    %p88 = por %p86, %p87
    %p89 = scmp.ne.s32.totalorder %s80, %s81
    %p90 = scmp.eq.s32.totalorder %s14, 0
    %p91 = por %p89, %p90
    %p92 = scmp.ne.s32.totalorder %s80, %s81
    %p93 = scmp.eq.s32.totalorder %s15, 1
    %p94 = por %p92, %p93
    %p96 = scmp.ne.s32.totalorder %s81, %s95
    %p97 = scmp.eq.s32.totalorder %s15, 0
    %p98 = por %p96, %p97
    %s99 = ssub.s32 %s16, %s28
    %s100 = ssub.s32 %s17, %s24
    %s101 = sor.u32 %s99, %s100
    %p102 = scmp.eq.s32.totalorder %s101, 0
    %s104 = sadd.s32 %s103, 1
    %s105 = scalar_select %p102, %s103, %s104
    %p108 = pneg %p102
    %p109 = scmp.eq.s32.totalorder %s9, 1
    %p110 = por %p108, %p109
    %p111 = scmp.ne.s32.totalorder %s103, %s106
    %p112 = scmp.eq.s32.totalorder %s9, 0
    %p113 = por %p111, %p112
    %p114 = scmp.ne.s32.totalorder %s103, %s106
    %p115 = scmp.eq.s32.totalorder %s14, 1
    %p116 = por %p114, %p115
    %p117 = scmp.ne.s32.totalorder %s106, %s107
    %p118 = scmp.eq.s32.totalorder %s14, 0
    %p119 = por %p117, %p118
    %p120 = scmp.ne.s32.totalorder %s106, %s107
    %p121 = scmp.eq.s32.totalorder %s15, 1
    %p122 = por %p120, %p121
    %p124 = scmp.ne.s32.totalorder %s107, %s123
    %p125 = scmp.eq.s32.totalorder %s15, 0
    %p126 = por %p124, %p125
    %p127 = scmp.le.s32.totalorder 1, %s9
    %p128 = scmp.lt.s32.totalorder %s9, 3
    %p129 = pnand %p127, %p128
    %p130 = pneg %p129
    // Predicated region
    $region9: #{ffc_bn_act.15} parent=5 // pred_check
      _
    $region10: #{ffc_bn_act.15} parent=5 // pred_check_branch
      %132 = sbr.rel (%p129) target = $region12
    $region11: #{ffc_bn_act.15} parent=5 // pred_region
      %s133 = ssub.s32 %s9, 1
      // Predicated region
      $region13: #{ffc_bn_act.15} parent=11 // pred_check
        %p134 = pneg %p70
      $region14: #{ffc_bn_act.15} parent=11 // pred_check_branch
        %136 = sbr.rel (%p134) target = $region16
      $region15: #{ffc_bn_act.15} parent=11 // pred_region
        _
      $region16: #{ffc_bn_act.15} parent=11 // pred_fallthru
        _
      // Predicated region
      $region17: #{ffc_bn_act.15} parent=11 // pred_check
        %p137 = pneg %p91
      $region18: #{ffc_bn_act.15} parent=11 // pred_check_branch
        %139 = sbr.rel (%p137) target = $region20
      $region19: #{ffc_bn_act.15} parent=11 // pred_region
        _
      $region20: #{ffc_bn_act.15} parent=11 // pred_fallthru
        _
    $region12: #{ffc_bn_act.15} parent=5 // pred_fallthru
      _
    %p140 = scmp.lt.s32.totalorder %s9, 2
    // Predicated region
    $region21: #{ffc_bn_act.15} parent=5 // pred_check
      %p141 = pneg %p140
    $region22: #{ffc_bn_act.15} parent=5 // pred_check_branch
      %143 = sbr.rel (%p141) target = $region24
    $region23: #{ffc_bn_act.15} parent=5 // pred_region
      // Predicated region
      $region25: #{ffc_bn_act.15} parent=23 // pred_check
        %p144 = pneg %p43
      $region26: #{ffc_bn_act.15} parent=23 // pred_check_branch
        %146 = sbr.rel (%p144) target = $region28
      $region27: #{ffc_bn_act.15} parent=23 // pred_region
        %s147 = smul.u32 2, %s17
        %p148 = scmp.lt.s32.totalorder %s16, 1
        %s149 = scalar_select %p148, %s16, 1
        %p150 = scmp.lt.s32.totalorder %s147, 1
        %s151 = scalar_select %p150, %s147, 1
        %s152 = smul.addr %s149, 2
        %s153 = sadd.s32 %s151, %s152
        %s154 = smul.addr %s153, 4
        %s155 = scalar_lea.vmem %s0, %s154
        %s156 = smul.u32 2, %s17
      $region28: #{ffc_bn_act.15} parent=23 // pred_fallthru
        _
    $region24: #{ffc_bn_act.15} parent=5 // pred_fallthru
      _
    %p157 = scmp.le.s32.totalorder 1, %s9
    %p158 = scmp.lt.s32.totalorder %s9, 3
    %p159 = pnand %p157, %p158
    %p160 = pneg %p159
    // Predicated region
    $region29: #{ffc_bn_act.15} parent=5 // pred_check
      _
    $region30: #{ffc_bn_act.15} parent=5 // pred_check_branch
      %162 = sbr.rel (%p159) target = $region32
    $region31: #{ffc_bn_act.15} parent=5 // pred_region
      %s163 = ssub.s32 %s9, 1
      %s164 = smul.u32 2, %s19
      %p165 = scmp.lt.s32.totalorder %s18, 1
      %s166 = scalar_select %p165, %s18, 1
      %p167 = scmp.lt.s32.totalorder %s164, 1
      %s168 = scalar_select %p167, %s164, 1
      %s169 = smul.addr %s166, 2
      %s170 = sadd.s32 %s168, %s169
      %s171 = smul.addr %s170, 4
      %s172 = scalar_lea.vmem %s0, %s171
      %p173 = pneg %p49
      %p174 = pneg %p46
      %p175 = pneg %p70
      %p176 = pneg %p67
      %p177 = pneg %p91
      %p178 = pneg %p88
      %p179 = pneg %p119
      %p180 = pneg %p116
      %s181 = smul.u32 2, %s19
      %p182 = scmp.lt.s32.totalorder %s18, 1
      %s183 = scalar_select %p182, %s18, 1
      %p184 = scmp.lt.s32.totalorder %s181, 1
      %s185 = scalar_select %p184, %s181, 1
      %s186 = smul.addr %s183, 2
      %s187 = sadd.s32 %s185, %s186
      %s188 = smul.addr %s187, 4
      %s189 = scalar_lea.vmem %s3, %s188
      %s190 = smul.u32 2, %s19
      %p191 = scmp.lt.s32.totalorder %s18, 1
      %s192 = scalar_select %p191, %s18, 1
      %p193 = scmp.lt.s32.totalorder %s190, 1
      %s194 = scalar_select %p193, %s190, 1
      %s195 = smul.addr %s192, 2
      %s196 = sadd.s32 %s194, %s195
      %s197 = smul.addr %s196, 4
      %s198 = scalar_lea.vmem %s0, %s197
      %s199 = smul.u32 2, %s19
      %s200 = smul.u32 2, %s19
      %p201 = scmp.lt.s32.totalorder %s18, 1
      %s202 = scalar_select %p201, %s18, 1
      %p203 = scmp.lt.s32.totalorder %s200, 1
      %s204 = scalar_select %p203, %s200, 1
      %s205 = smul.addr %s202, 2
      %s206 = sadd.s32 %s204, %s205
      %s207 = smul.addr %s206, 4
      %s208 = scalar_lea.vmem %s3, %s207
      %s209 = smul.u32 2, %s19
      %v210 = vld [vmem:[%s198] sm:$0xff]
      %v211 = vld [vmem:[%s1] sm:$0xf]
      %213 = vset.pattern.permute.xlu0 0
      %214 = vperm.xlu0 %213, %v211
      %v215 = vpop.permute.xlu0 %214
      %v217 = vunpack.c.l.s4 839922192
      %v218 = vunpack.c.0.s8 %v217
      %v219 = vlaneseq
      %v220 = vshrl.u32 %v219, 7
      %v221 = vsub.s32 %v218, %v220
      %v222 = vrot.slane %v215, %v221
      %v224 = vmul.f32 %v210, %v222
      %v225 = vld [vmem:[%s2] sm:$0xf]
      %227 = vset.pattern.permute.xlu0 0
      %228 = vperm.xlu0 %227, %v225
      %v229 = vpop.permute.xlu0 %228
      %v231 = vunpack.c.l.s4 839922192
      %v232 = vunpack.c.0.s8 %v231
      %v233 = vlaneseq
      %v234 = vshrl.u32 %v233, 7
      %v235 = vsub.s32 %v232, %v234
      %v236 = vrot.slane %v229, %v235
      %v238 = vadd.f32 %v224, %v236
      %v239 = vmax.f32 %v238, 0.0
      %240 = vst [vmem:[%s208] sm:$0xff] %v239
      %s241 = smul.u32 2, %s19
      %p242 = scmp.lt.s32.totalorder %s18, 1
      %s243 = scalar_select %p242, %s18, 1
      %p244 = scmp.lt.s32.totalorder %s241, 1
      %s245 = scalar_select %p244, %s241, 1
      %s246 = smul.addr %s243, 2
      %s247 = sadd.s32 %s245, %s246
      %s248 = smul.addr %s247, 4
      %s249 = scalar_lea.vmem %s3, %s248
      // Predicated region
      $region33: #{ffc_bn_act.15} parent=31 // pred_check
        %p250 = pneg %p116
      $region34: #{ffc_bn_act.15} parent=31 // pred_check_branch
        %252 = sbr.rel (%p250) target = $region36
      $region35: #{ffc_bn_act.15} parent=31 // pred_region
        %s253 = smul.u32 2, %s19
      $region36: #{ffc_bn_act.15} parent=31 // pred_fallthru
        _
    $region32: #{ffc_bn_act.15} parent=5 // pred_fallthru
      _
    %p254 = scmp.le.s32.totalorder 2, %s9
    // Predicated region
    $region37: #{ffc_bn_act.15} parent=5 // pred_check
      %p255 = pneg %p254
    $region38: #{ffc_bn_act.15} parent=5 // pred_check_branch
      %257 = sbr.rel (%p255) target = $region40
    $region39: #{ffc_bn_act.15} parent=5 // pred_region
      %s258 = ssub.s32 %s9, 2
      // Predicated region
      $region41: #{ffc_bn_act.15} parent=39 // pred_check
        %p259 = pneg %p122
      $region42: #{ffc_bn_act.15} parent=39 // pred_check_branch
        %261 = sbr.rel (%p259) target = $region44
      $region43: #{ffc_bn_act.15} parent=39 // pred_region
        %s262 = smul.u32 2, %s21
        %p263 = scmp.lt.s32.totalorder %s20, 1
        %s264 = scalar_select %p263, %s20, 1
        %p265 = scmp.lt.s32.totalorder %s262, 1
        %s266 = scalar_select %p265, %s262, 1
        %s267 = smul.addr %s264, 2
        %s268 = sadd.s32 %s266, %s267
        %s269 = smul.addr %s268, 4
        %s270 = scalar_lea.vmem %s3, %s269
      $region44: #{ffc_bn_act.15} parent=39 // pred_fallthru
        _
    $region40: #{ffc_bn_act.15} parent=5 // pred_fallthru
      _
  $region6: #{ffc_bn_act.15} parent=0 // loop_footer
    %s13 = sadd.s32 1, %s9
  $region7: #{ffc_bn_act.15} parent=0 // loop_footer_branch
    %8 = sbr.rel target = $region3
  $region8: #{ffc_bn_act.15} parent=0 // loop_exit
    _

// kernel: ffc_bn_act.14
$region0: #{ffc_bn_act.14}
  #allocation0 [shape = 'u32[]', space=smem, size = 0x4, offset = 0x4, fixed_abs, tag = 'smem constant byte address 0x4 - core index']
  #allocation1 [shape = 'u32[144,128]{1,0:T(1,128)}', space=vmem, size = 0x12000, scoped, tag = 'internal scratch']
  %s0 = inlined_call_operand.vmem [shape: f32[2,4,256], index: 0, kind: input, shape index: {}]
  %s1 = inlined_call_operand.vmem [shape: f32[4,4], index: 1, kind: input, shape index: {}]
  %s2 = inlined_call_operand.vmem [shape: f32[2,4,256], index: 2, kind: output, shape index: {0}]
  %s3 = inlined_call_operand.vmem [shape: f32[2,1,4,2], index: 3, kind: output, shape index: {1}]
  %4 = xla_tuple %s2, %s3
  %s5 = sld [smem:[#allocation0]]
  $region49: #{ffc_bn_act.14} parent=0
    _
  %s7 = ssub.s32 1, %s5
  %s8 = scalar_select 0, %s7, %s5
  loop: start=0, step=1, limit=4
  $region2: #{ffc_bn_act.14} parent=0 // loop_pre_header
    _
  $region3: #{ffc_bn_act.14} parent=0 // loop_header
    %s10 = sphi 0, %s14
    %p11 = scmp.ge.s32.totalorder %s10, 4
    %s17 = sphi 0, %s29
    %s18 = sphi 0, %s25
    %s19 = sphi 0, %s17
    %s20 = sphi 0, %s18
    %s21 = sphi 0, %s19
    %s22 = sphi 0, %s20
    %s34 = sphi 0, %s36
    %s37 = sphi 0, %s34
    %s38 = sphi 0, %s37
    %s54 = sphi 0, %s38
    %s58 = sphi 0, %s58
    %s60 = sphi 0, %s58
    %s61 = sphi 0, %s60
    %s75 = sphi 0, %s61
    %s83 = sphi 0, %s85
    %s86 = sphi 0, %s83
    %s87 = sphi 0, %s86
    %s103 = sphi 0, %s87
    %s111 = sphi 0, %s113
    %s114 = sphi 0, %s111
    %s115 = sphi 0, %s114
    %s131 = sphi 0, %s115
  $region4: #{ffc_bn_act.14} parent=0 // loop_header_branch
    %13 = sbr.rel (%p11) target = $region8
  $region5: #{ffc_bn_act.14} parent=0 // loop_body
    %s15 = ssub.s32 %s10, 1
    %s16 = ssub.s32 %s10, 2
    %s23 = sadd.s32 1, %s18
    %p24 = scmp.ge.s32.totalorder %s23, 1
    %s25 = scalar_select %p24, 0, %s23
    %s26 = sadd.s32 1, %s17
    %s27 = scalar_select %p24, %s26, %s17
    %p28 = scmp.ge.s32.totalorder %s27, 2
    %s29 = scalar_select %p28, 0, %s27
    %s30 = ssub.s32 %s17, %s29
    %s31 = ssub.s32 %s18, %s25
    %s32 = sor.u32 %s30, %s31
    %p33 = scmp.eq.s32.totalorder %s32, 0
    %s35 = sadd.s32 %s34, 1
    %s36 = scalar_select %p33, %s34, %s35
    %p39 = pneg %p33
    %p40 = scmp.eq.s32.totalorder %s10, 1
    %p41 = por %p39, %p40
    %p42 = scmp.ne.s32.totalorder %s34, %s37
    %p43 = scmp.eq.s32.totalorder %s10, 0
    %p44 = por %p42, %p43
    %p45 = scmp.ne.s32.totalorder %s34, %s37
    %p46 = scmp.eq.s32.totalorder %s15, 1
    %p47 = por %p45, %p46
    %p48 = scmp.ne.s32.totalorder %s37, %s38
    %p49 = scmp.eq.s32.totalorder %s15, 0
    %p50 = por %p48, %p49
    %p51 = scmp.ne.s32.totalorder %s37, %s38
    %p52 = scmp.eq.s32.totalorder %s16, 1
    %p53 = por %p51, %p52
    %p55 = scmp.ne.s32.totalorder %s38, %s54
    %p56 = scmp.eq.s32.totalorder %s16, 0
    %p57 = por %p55, %p56
    %s59 = sadd.s32 %s58, 1
    %p62 = scmp.eq.s32.totalorder %s10, 1
    %p63 = scmp.ne.s32.totalorder %s58, %s60
    %p64 = scmp.eq.s32.totalorder %s10, 0
    %p65 = por %p63, %p64
    %p66 = scmp.ne.s32.totalorder %s58, %s60
    %p67 = scmp.eq.s32.totalorder %s15, 1
    %p68 = por %p66, %p67
    %p69 = scmp.ne.s32.totalorder %s60, %s61
    %p70 = scmp.eq.s32.totalorder %s15, 0
    %p71 = por %p69, %p70
    %p72 = scmp.ne.s32.totalorder %s60, %s61
    %p73 = scmp.eq.s32.totalorder %s16, 1
    %p74 = por %p72, %p73
    %p76 = scmp.ne.s32.totalorder %s61, %s75
    %p77 = scmp.eq.s32.totalorder %s16, 0
    %p78 = por %p76, %p77
    %s79 = ssub.s32 %s17, %s29
    %s80 = ssub.s32 %s18, %s25
    %s81 = sor.u32 %s79, %s80
    %p82 = scmp.eq.s32.totalorder %s81, 0
    %s84 = sadd.s32 %s83, 1
    %s85 = scalar_select %p82, %s83, %s84
    %p88 = pneg %p82
    %p89 = scmp.eq.s32.totalorder %s10, 1
    %p90 = por %p88, %p89
    %p91 = scmp.ne.s32.totalorder %s83, %s86
    %p92 = scmp.eq.s32.totalorder %s10, 0
    %p93 = por %p91, %p92
    %p94 = scmp.ne.s32.totalorder %s83, %s86
    %p95 = scmp.eq.s32.totalorder %s15, 1
    %p96 = por %p94, %p95
    %p97 = scmp.ne.s32.totalorder %s86, %s87
    %p98 = scmp.eq.s32.totalorder %s15, 0
    %p99 = por %p97, %p98
    %p100 = scmp.ne.s32.totalorder %s86, %s87
    %p101 = scmp.eq.s32.totalorder %s16, 1
    %p102 = por %p100, %p101
    %p104 = scmp.ne.s32.totalorder %s87, %s103
    %p105 = scmp.eq.s32.totalorder %s16, 0
    %p106 = por %p104, %p105
    %s107 = ssub.s32 %s17, %s29
    %s108 = ssub.s32 %s18, %s25
    %s109 = sor.u32 %s107, %s108
    %p110 = scmp.eq.s32.totalorder %s109, 0
    %s112 = sadd.s32 %s111, 1
    %s113 = scalar_select %p110, %s111, %s112
    %p116 = pneg %p110
    %p117 = scmp.eq.s32.totalorder %s10, 1
    %p118 = por %p116, %p117
    %p119 = scmp.ne.s32.totalorder %s111, %s114
    %p120 = scmp.eq.s32.totalorder %s10, 0
    %p121 = por %p119, %p120
    %p122 = scmp.ne.s32.totalorder %s111, %s114
    %p123 = scmp.eq.s32.totalorder %s15, 1
    %p124 = por %p122, %p123
    %p125 = scmp.ne.s32.totalorder %s114, %s115
    %p126 = scmp.eq.s32.totalorder %s15, 0
    %p127 = por %p125, %p126
    %p128 = scmp.ne.s32.totalorder %s114, %s115
    %p129 = scmp.eq.s32.totalorder %s16, 1
    %p130 = por %p128, %p129
    %p132 = scmp.ne.s32.totalorder %s115, %s131
    %p133 = scmp.eq.s32.totalorder %s16, 0
    %p134 = por %p132, %p133
    %p135 = scmp.le.s32.totalorder 1, %s10
    %p136 = scmp.lt.s32.totalorder %s10, 3
    %p137 = pnand %p135, %p136
    %p138 = pneg %p137
    // Predicated region
    $region9: #{ffc_bn_act.14} parent=5 // pred_check
      _
    $region10: #{ffc_bn_act.14} parent=5 // pred_check_branch
      %140 = sbr.rel (%p137) target = $region12
    $region11: #{ffc_bn_act.14} parent=5 // pred_region
      %s141 = ssub.s32 %s10, 1
      // Predicated region
      $region13: #{ffc_bn_act.14} parent=11 // pred_check
        %p142 = pneg %p71
      $region14: #{ffc_bn_act.14} parent=11 // pred_check_branch
        %144 = sbr.rel (%p142) target = $region16
      $region15: #{ffc_bn_act.14} parent=11 // pred_region
        _
      $region16: #{ffc_bn_act.14} parent=11 // pred_fallthru
        _
    $region12: #{ffc_bn_act.14} parent=5 // pred_fallthru
      _
    %p145 = scmp.lt.s32.totalorder %s10, 2
    // Predicated region
    $region17: #{ffc_bn_act.14} parent=5 // pred_check
      %p146 = pneg %p145
    $region18: #{ffc_bn_act.14} parent=5 // pred_check_branch
      %148 = sbr.rel (%p146) target = $region20
    $region19: #{ffc_bn_act.14} parent=5 // pred_region
      // Predicated region
      $region21: #{ffc_bn_act.14} parent=19 // pred_check
        %p149 = pneg %p44
      $region22: #{ffc_bn_act.14} parent=19 // pred_check_branch
        %151 = sbr.rel (%p149) target = $region24
      $region23: #{ffc_bn_act.14} parent=19 // pred_region
        %s152 = smul.u32 2, %s18
        %p153 = scmp.lt.s32.totalorder %s17, 1
        %s154 = scalar_select %p153, %s17, 1
        %p155 = scmp.lt.s32.totalorder %s152, 1
        %s156 = scalar_select %p155, %s152, 1
        %s157 = smul.addr %s154, 2
        %s158 = sadd.s32 %s156, %s157
        %s159 = smul.addr %s158, 4
        %s160 = scalar_lea.vmem %s0, %s159
        %s161 = smul.u32 2, %s18
      $region24: #{ffc_bn_act.14} parent=19 // pred_fallthru
        _
    $region20: #{ffc_bn_act.14} parent=5 // pred_fallthru
      _
    %p162 = scmp.le.s32.totalorder 1, %s10
    %p163 = scmp.lt.s32.totalorder %s10, 3
    %p164 = pnand %p162, %p163
    %p165 = pneg %p164
    // Predicated region
    $region25: #{ffc_bn_act.14} parent=5 // pred_check
      _
    $region26: #{ffc_bn_act.14} parent=5 // pred_check_branch
      %167 = sbr.rel (%p164) target = $region28
    $region27: #{ffc_bn_act.14} parent=5 // pred_region
      %s168 = ssub.s32 %s10, 1
      %s169 = smul.u32 2, %s20
      %p170 = scmp.lt.s32.totalorder %s19, 1
      %s171 = scalar_select %p170, %s19, 1
      %p172 = scmp.lt.s32.totalorder %s169, 1
      %s173 = scalar_select %p172, %s169, 1
      %s174 = smul.addr %s171, 2
      %s175 = sadd.s32 %s173, %s174
      %s176 = smul.addr %s175, 4
      %s177 = scalar_lea.vmem %s0, %s176
      %p178 = pneg %p50
      %p179 = pneg %p47
      %p180 = pneg %p71
      %p181 = pneg %p68
      %p182 = pneg %p99
      %p183 = pneg %p96
      %s184 = smul.u32 2, %s20
      %p185 = scmp.lt.s32.totalorder %s19, 1
      %s186 = scalar_select %p185, %s19, 1
      %p187 = scmp.lt.s32.totalorder %s184, 1
      %s188 = scalar_select %p187, %s184, 1
      %s189 = smul.addr %s186, 2
      %s190 = sadd.s32 %s188, %s189
      %s191 = smul.addr %s190, 4
      %s192 = scalar_lea.vmem %s2, %s191
      %p193 = pneg %p127
      %p194 = pneg %p124
      %p195 = scmp.lt.s32.totalorder %s19, 1
      %s196 = scalar_select %p195, %s19, 1
      %p197 = scmp.lt.s32.totalorder %s20, 0
      %s198 = scalar_select %p197, %s20, 0
      %s199 = sadd.s32 %s198, %s196
      %s200 = smul.addr %s199, 4
      %s201 = scalar_lea.vmem %s3, %s200
      %s202 = smul.u32 2, %s20
      %p203 = scmp.lt.s32.totalorder %s19, 1
      %s204 = scalar_select %p203, %s19, 1
      %p205 = scmp.lt.s32.totalorder %s202, 1
      %s206 = scalar_select %p205, %s202, 1
      %s207 = smul.addr %s204, 2
      %s208 = sadd.s32 %s206, %s207
      %s209 = smul.addr %s208, 4
      %s210 = scalar_lea.vmem %s0, %s209
      %s211 = smul.u32 2, %s20
      %s212 = smul.u32 2, %s20
      %p213 = scmp.lt.s32.totalorder %s19, 1
      %s214 = scalar_select %p213, %s19, 1
      %p215 = scmp.lt.s32.totalorder %s212, 1
      %s216 = scalar_select %p215, %s212, 1
      %s217 = smul.addr %s214, 2
      %s218 = sadd.s32 %s216, %s217
      %s219 = smul.addr %s218, 4
      %s220 = scalar_lea.vmem %s2, %s219
      %s221 = smul.u32 2, %s20
      %p222 = scmp.lt.s32.totalorder %s19, 1
      %s223 = scalar_select %p222, %s19, 1
      %p224 = scmp.lt.s32.totalorder %s20, 0
      %s225 = scalar_select %p224, %s20, 0
      %s226 = sadd.s32 %s225, %s223
      %s227 = smul.addr %s226, 4
      %s228 = scalar_lea.vmem %s3, %s227
      %v229 = vld [vmem:[%s1] sm:$0xf]
      %v230 = vld [vmem:[%s210] sm:$0xff]
      %v232 = vcombine.high %v230, %v230
      %vm233 = vcmask 31744
      %v235 = vsel %vm233, %v229, 0
      %vm237 = vcmask 1043456
      %v238 = vsel %vm237, %v230, 0
      %v240 = vsel %vm237, %v232, 0
      %242 = vmatprep.subr.mxu0 0.0
      %243 = vmatpush1.msra.mxu0 0.0
      %244 = vmatprep.subr.mxu0 0.0
      %245 = vmatpush1.msra.mxu0 0.0
      %246 = vmatprep.subr.mxu0 0.0
      %247 = vmatpush1.msra.mxu0 0.0
      %248 = vmatprep.subr.mxu0 0.0
      %249 = vmatpush1.msra.mxu0 0.0
      %250 = vmatprep.subr.mxu0 0.0
      %251 = vmatpush1.msra.mxu0 0.0
      %252 = vmatprep.subr.mxu0 0.0
      %253 = vmatpush1.msra.mxu0 0.0
      %254 = vmatprep.subr.mxu0 0.0
      %255 = vmatpush1.msra.mxu0 0.0
      %256 = vmatprep.subr.mxu0 0.0
      %257 = vmatpush1.msra.mxu0 0.0
      %258 = vmatprep.subr.mxu0 0.0
      %259 = vmatpush1.msra.mxu0 0.0
      %260 = vmatprep.subr.mxu0 0.0
      %261 = vmatpush1.msra.mxu0 0.0
      %262 = vmatprep.subr.mxu0 0.0
      %263 = vmatpush1.msra.mxu0 0.0
      %264 = vmatprep.subr.mxu0 0.0
      %265 = vmatpush1.msra.mxu0 0.0
      %266 = vmatprep.subr.mxu0 0.0
      %267 = vmatpush1.msra.mxu0 0.0
      %268 = vmatprep.subr.mxu0 0.0
      %269 = vmatpush1.msra.mxu0 0.0
      %270 = vmatprep.subr.mxu0 0.0
      %271 = vmatpush1.msra.mxu0 0.0
      %272 = vmatprep.subr.mxu0 %v240
      %273 = vmatpush1.msra.mxu0 %v238
      %274 = vmatprep.subr.mxu0 0.0
      %275 = vmatpush2.msra.mxu0 0.0
      %276 = vmatprep.subr.mxu0 0.0
      %277 = vmatpush2.msra.mxu0 0.0
      %278 = vmatprep.subr.mxu0 0.0
      %279 = vmatpush2.msra.mxu0 0.0
      %280 = vmatprep.subr.mxu0 0.0
      %281 = vmatpush2.msra.mxu0 0.0
      %282 = vmatprep.subr.mxu0 0.0
      %283 = vmatpush2.msra.mxu0 0.0
      %284 = vmatprep.subr.mxu0 0.0
      %285 = vmatpush2.msra.mxu0 0.0
      %286 = vmatprep.subr.mxu0 0.0
      %287 = vmatpush2.msra.mxu0 0.0
      %288 = vmatprep.subr.mxu0 0.0
      %289 = vmatpush2.msra.mxu0 0.0
      %290 = vmatprep.subr.mxu0 0.0
      %291 = vmatpush2.msra.mxu0 0.0
      %292 = vmatprep.subr.mxu0 0.0
      %293 = vmatpush2.msra.mxu0 0.0
      %294 = vmatprep.subr.mxu0 0.0
      %295 = vmatpush2.msra.mxu0 0.0
      %296 = vmatprep.subr.mxu0 0.0
      %297 = vmatpush2.msra.mxu0 0.0
      %298 = vmatprep.subr.mxu0 0.0
      %299 = vmatpush2.msra.mxu0 0.0
      %300 = vmatprep.subr.mxu0 0.0
      %301 = vmatpush2.msra.mxu0 0.0
      %302 = vmatprep.subr.mxu0 0.0
      %303 = vmatpush2.msra.mxu0 0.0
      %304 = vmatprep.subr.mxu0 0.0
      %305 = vmatpush2.msra.mxu0 0.0
      %306 = vmatprep.mubr.f32.mxu0 0.0
      %307 = vmatmul.mubr.f32.gmra.mxu0 %v235
      %v308 = vpop.f32.mrf.mxu0
      %v309 = vadd.f32 0.0, %v308
      %v310 = vpop.f32.mrf.mxu0
      %v311 = vadd.f32 0.0, %v310
      %312 = vdwg.mxu0
      %v315 = vcombine.low %v309, %v311
      %317 = vst [vmem:[%s220] sm:$0xff] %v315
      %v318 = vsel %vm237, %v309, 0.0
      %v319 = vsel %vm237, %v311, 0.0
      %v320 = vadd.f32 %v318, %v319
      %321 = vadd.xlane.f32.xlu0 %v320
      %v322 = vpop.xlane.xlu0 %321
      %v323 = vmul.f32 %v309, %v309
      %v324 = vmul.f32 %v311, %v311
      %v325 = vsel %vm237, %v323, 0.0
      %v326 = vsel %vm237, %v324, 0.0
      %v327 = vadd.f32 %v325, %v326
      %328 = vadd.xlane.f32.xlu0 %v327
      %v329 = vpop.xlane.xlu0 %328
      %vm330 = vcmask 7168
      %v331 = vsel %vm330, %v322, %v329
      %vm332 = vcmask 11264
      %333 = vst.msk [vmem:[%s228] sm:$0xf] %vm332, %v331
      %s334 = smul.u32 2, %s20
      %p335 = scmp.lt.s32.totalorder %s19, 1
      %s336 = scalar_select %p335, %s19, 1
      %p337 = scmp.lt.s32.totalorder %s334, 1
      %s338 = scalar_select %p337, %s334, 1
      %s339 = smul.addr %s336, 2
      %s340 = sadd.s32 %s338, %s339
      %s341 = smul.addr %s340, 4
      %s342 = scalar_lea.vmem %s2, %s341
      %p343 = scmp.lt.s32.totalorder %s19, 1
      %s344 = scalar_select %p343, %s19, 1
      %p345 = scmp.lt.s32.totalorder %s20, 0
      %s346 = scalar_select %p345, %s20, 0
      %s347 = sadd.s32 %s346, %s344
      %s348 = smul.addr %s347, 4
      %s349 = scalar_lea.vmem %s3, %s348
      // Predicated region
      $region29: #{ffc_bn_act.14} parent=27 // pred_check
        %p350 = pneg %p96
      $region30: #{ffc_bn_act.14} parent=27 // pred_check_branch
        %352 = sbr.rel (%p350) target = $region32
      $region31: #{ffc_bn_act.14} parent=27 // pred_region
        %s353 = smul.u32 2, %s20
      $region32: #{ffc_bn_act.14} parent=27 // pred_fallthru
        _
      // Predicated region
      $region33: #{ffc_bn_act.14} parent=27 // pred_check
        %p354 = pneg %p124
      $region34: #{ffc_bn_act.14} parent=27 // pred_check_branch
        %356 = sbr.rel (%p354) target = $region36
      $region35: #{ffc_bn_act.14} parent=27 // pred_region
        _
      $region36: #{ffc_bn_act.14} parent=27 // pred_fallthru
        _
    $region28: #{ffc_bn_act.14} parent=5 // pred_fallthru
      _
    %p357 = scmp.le.s32.totalorder 2, %s10
    // Predicated region
    $region37: #{ffc_bn_act.14} parent=5 // pred_check
      %p358 = pneg %p357
    $region38: #{ffc_bn_act.14} parent=5 // pred_check_branch
      %360 = sbr.rel (%p358) target = $region40
    $region39: #{ffc_bn_act.14} parent=5 // pred_region
      %s361 = ssub.s32 %s10, 2
      // Predicated region
      $region41: #{ffc_bn_act.14} parent=39 // pred_check
        %p362 = pneg %p102
      $region42: #{ffc_bn_act.14} parent=39 // pred_check_branch
        %364 = sbr.rel (%p362) target = $region44
      $region43: #{ffc_bn_act.14} parent=39 // pred_region
        %s365 = smul.u32 2, %s22
        %p366 = scmp.lt.s32.totalorder %s21, 1
        %s367 = scalar_select %p366, %s21, 1
        %p368 = scmp.lt.s32.totalorder %s365, 1
        %s369 = scalar_select %p368, %s365, 1
        %s370 = smul.addr %s367, 2
        %s371 = sadd.s32 %s369, %s370
        %s372 = smul.addr %s371, 4
        %s373 = scalar_lea.vmem %s2, %s372
      $region44: #{ffc_bn_act.14} parent=39 // pred_fallthru
        _
      // Predicated region
      $region45: #{ffc_bn_act.14} parent=39 // pred_check
        %p374 = pneg %p130
      $region46: #{ffc_bn_act.14} parent=39 // pred_check_branch
        %376 = sbr.rel (%p374) target = $region48
      $region47: #{ffc_bn_act.14} parent=39 // pred_region
        %p377 = scmp.lt.s32.totalorder %s21, 1
        %s378 = scalar_select %p377, %s21, 1
        %p379 = scmp.lt.s32.totalorder %s22, 0
        %s380 = scalar_select %p379, %s22, 0
        %s381 = sadd.s32 %s380, %s378
        %s382 = smul.addr %s381, 4
        %s383 = scalar_lea.vmem %s3, %s382
      $region48: #{ffc_bn_act.14} parent=39 // pred_fallthru
        _
    $region40: #{ffc_bn_act.14} parent=5 // pred_fallthru
      _
  $region6: #{ffc_bn_act.14} parent=0 // loop_footer
    %s14 = sadd.s32 1, %s10
  $region7: #{ffc_bn_act.14} parent=0 // loop_footer_branch
    %9 = sbr.rel target = $region3
  $region8: #{ffc_bn_act.14} parent=0 // loop_exit
    _

// kernel: ffc_bn_act.13
$region0: #{ffc_bn_act.13}
  #allocation0 [shape = 'u32[]', space=smem, size = 0x4, offset = 0x4, fixed_abs, tag = 'smem constant byte address 0x4 - core index']
  #allocation1 [shape = 'u32[144,128]{1,0:T(1,128)}', space=vmem, size = 0x12000, scoped, tag = 'internal scratch']
  %s0 = inlined_call_operand.vmem [shape: f32[2,8,256], index: 0, kind: input, shape index: {}]
  %s1 = inlined_call_operand.vmem [shape: f32[8,1], index: 1, kind: input, shape index: {}]
  %s2 = inlined_call_operand.vmem [shape: f32[8,1], index: 2, kind: input, shape index: {}]
  %s3 = inlined_call_operand.vmem [shape: f32[2,8,256], index: 3, kind: output, shape index: {}]
  %s4 = sld [smem:[#allocation0]]
  $region45: #{ffc_bn_act.13} parent=0
    _
  %s6 = ssub.s32 1, %s4
  %s7 = scalar_select 0, %s6, %s4
  loop: start=0, step=1, limit=4
  $region2: #{ffc_bn_act.13} parent=0 // loop_pre_header
    _
  $region3: #{ffc_bn_act.13} parent=0 // loop_header
    %s9 = sphi 0, %s13
    %p10 = scmp.ge.s32.totalorder %s9, 4
    %s16 = sphi 0, %s28
    %s17 = sphi 0, %s24
    %s18 = sphi 0, %s16
    %s19 = sphi 0, %s17
    %s20 = sphi 0, %s18
    %s21 = sphi 0, %s19
    %s33 = sphi 0, %s35
    %s36 = sphi 0, %s33
    %s37 = sphi 0, %s36
    %s53 = sphi 0, %s37
    %s57 = sphi 0, %s57
    %s59 = sphi 0, %s57
    %s60 = sphi 0, %s59
    %s74 = sphi 0, %s60
    %s78 = sphi 0, %s78
    %s80 = sphi 0, %s78
    %s81 = sphi 0, %s80
    %s95 = sphi 0, %s81
    %s103 = sphi 0, %s105
    %s106 = sphi 0, %s103
    %s107 = sphi 0, %s106
    %s123 = sphi 0, %s107
  $region4: #{ffc_bn_act.13} parent=0 // loop_header_branch
    %12 = sbr.rel (%p10) target = $region8
  $region5: #{ffc_bn_act.13} parent=0 // loop_body
    %s14 = ssub.s32 %s9, 1
    %s15 = ssub.s32 %s9, 2
    %s22 = sadd.s32 1, %s17
    %p23 = scmp.ge.s32.totalorder %s22, 1
    %s24 = scalar_select %p23, 0, %s22
    %s25 = sadd.s32 1, %s16
    %s26 = scalar_select %p23, %s25, %s16
    %p27 = scmp.ge.s32.totalorder %s26, 2
    %s28 = scalar_select %p27, 0, %s26
    %s29 = ssub.s32 %s16, %s28
    %s30 = ssub.s32 %s17, %s24
    %s31 = sor.u32 %s29, %s30
    %p32 = scmp.eq.s32.totalorder %s31, 0
    %s34 = sadd.s32 %s33, 1
    %s35 = scalar_select %p32, %s33, %s34
    %p38 = pneg %p32
    %p39 = scmp.eq.s32.totalorder %s9, 1
    %p40 = por %p38, %p39
    %p41 = scmp.ne.s32.totalorder %s33, %s36
    %p42 = scmp.eq.s32.totalorder %s9, 0
    %p43 = por %p41, %p42
    %p44 = scmp.ne.s32.totalorder %s33, %s36
    %p45 = scmp.eq.s32.totalorder %s14, 1
    %p46 = por %p44, %p45
    %p47 = scmp.ne.s32.totalorder %s36, %s37
    %p48 = scmp.eq.s32.totalorder %s14, 0
    %p49 = por %p47, %p48
    %p50 = scmp.ne.s32.totalorder %s36, %s37
    %p51 = scmp.eq.s32.totalorder %s15, 1
    %p52 = por %p50, %p51
    %p54 = scmp.ne.s32.totalorder %s37, %s53
    %p55 = scmp.eq.s32.totalorder %s15, 0
    %p56 = por %p54, %p55
    %s58 = sadd.s32 %s57, 1
    %p61 = scmp.eq.s32.totalorder %s9, 1
    %p62 = scmp.ne.s32.totalorder %s57, %s59
    %p63 = scmp.eq.s32.totalorder %s9, 0
    %p64 = por %p62, %p63
    %p65 = scmp.ne.s32.totalorder %s57, %s59
    %p66 = scmp.eq.s32.totalorder %s14, 1
    %p67 = por %p65, %p66
    %p68 = scmp.ne.s32.totalorder %s59, %s60
    %p69 = scmp.eq.s32.totalorder %s14, 0
    %p70 = por %p68, %p69
    %p71 = scmp.ne.s32.totalorder %s59, %s60
    %p72 = scmp.eq.s32.totalorder %s15, 1
    %p73 = por %p71, %p72
    %p75 = scmp.ne.s32.totalorder %s60, %s74
    %p76 = scmp.eq.s32.totalorder %s15, 0
    %p77 = por %p75, %p76
    %s79 = sadd.s32 %s78, 1
    %p82 = scmp.eq.s32.totalorder %s9, 1
    %p83 = scmp.ne.s32.totalorder %s78, %s80
    %p84 = scmp.eq.s32.totalorder %s9, 0
    %p85 = por %p83, %p84
    %p86 = scmp.ne.s32.totalorder %s78, %s80
    %p87 = scmp.eq.s32.totalorder %s14, 1
    %p88 = por %p86, %p87
    %p89 = scmp.ne.s32.totalorder %s80, %s81
    %p90 = scmp.eq.s32.totalorder %s14, 0
    %p91 = por %p89, %p90
    %p92 = scmp.ne.s32.totalorder %s80, %s81
    %p93 = scmp.eq.s32.totalorder %s15, 1
    %p94 = por %p92, %p93
    %p96 = scmp.ne.s32.totalorder %s81, %s95
    %p97 = scmp.eq.s32.totalorder %s15, 0
    %p98 = por %p96, %p97
    %s99 = ssub.s32 %s16, %s28
    %s100 = ssub.s32 %s17, %s24
    %s101 = sor.u32 %s99, %s100
    %p102 = scmp.eq.s32.totalorder %s101, 0
    %s104 = sadd.s32 %s103, 1
    %s105 = scalar_select %p102, %s103, %s104
    %p108 = pneg %p102
    %p109 = scmp.eq.s32.totalorder %s9, 1
    %p110 = por %p108, %p109
    %p111 = scmp.ne.s32.totalorder %s103, %s106
    %p112 = scmp.eq.s32.totalorder %s9, 0
    %p113 = por %p111, %p112
    %p114 = scmp.ne.s32.totalorder %s103, %s106
    %p115 = scmp.eq.s32.totalorder %s14, 1
    %p116 = por %p114, %p115
    %p117 = scmp.ne.s32.totalorder %s106, %s107
    %p118 = scmp.eq.s32.totalorder %s14, 0
    %p119 = por %p117, %p118
    %p120 = scmp.ne.s32.totalorder %s106, %s107
    %p121 = scmp.eq.s32.totalorder %s15, 1
    %p122 = por %p120, %p121
    %p124 = scmp.ne.s32.totalorder %s107, %s123
    %p125 = scmp.eq.s32.totalorder %s15, 0
    %p126 = por %p124, %p125
    %p127 = scmp.le.s32.totalorder 1, %s9
    %p128 = scmp.lt.s32.totalorder %s9, 3
    %p129 = pnand %p127, %p128
    %p130 = pneg %p129
    // Predicated region
    $region9: #{ffc_bn_act.13} parent=5 // pred_check
      _
    $region10: #{ffc_bn_act.13} parent=5 // pred_check_branch
      %132 = sbr.rel (%p129) target = $region12
    $region11: #{ffc_bn_act.13} parent=5 // pred_region
      %s133 = ssub.s32 %s9, 1
      // Predicated region
      $region13: #{ffc_bn_act.13} parent=11 // pred_check
        %p134 = pneg %p70
      $region14: #{ffc_bn_act.13} parent=11 // pred_check_branch
        %136 = sbr.rel (%p134) target = $region16
      $region15: #{ffc_bn_act.13} parent=11 // pred_region
        _
      $region16: #{ffc_bn_act.13} parent=11 // pred_fallthru
        _
      // Predicated region
      $region17: #{ffc_bn_act.13} parent=11 // pred_check
        %p137 = pneg %p91
      $region18: #{ffc_bn_act.13} parent=11 // pred_check_branch
        %139 = sbr.rel (%p137) target = $region20
      $region19: #{ffc_bn_act.13} parent=11 // pred_region
        _
      $region20: #{ffc_bn_act.13} parent=11 // pred_fallthru
        _
    $region12: #{ffc_bn_act.13} parent=5 // pred_fallthru
      _
    %p140 = scmp.lt.s32.totalorder %s9, 2
    // Predicated region
    $region21: #{ffc_bn_act.13} parent=5 // pred_check
      %p141 = pneg %p140
    $region22: #{ffc_bn_act.13} parent=5 // pred_check_branch
      %143 = sbr.rel (%p141) target = $region24
    $region23: #{ffc_bn_act.13} parent=5 // pred_region
      // Predicated region
      $region25: #{ffc_bn_act.13} parent=23 // pred_check
        %p144 = pneg %p43
      $region26: #{ffc_bn_act.13} parent=23 // pred_check_branch
        %146 = sbr.rel (%p144) target = $region28
      $region27: #{ffc_bn_act.13} parent=23 // pred_region
        %s147 = smul.u32 2, %s17
        %p148 = scmp.lt.s32.totalorder %s16, 1
        %s149 = scalar_select %p148, %s16, 1
        %p150 = scmp.lt.s32.totalorder %s147, 1
        %s151 = scalar_select %p150, %s147, 1
        %s152 = smul.addr %s149, 2
        %s153 = sadd.s32 %s151, %s152
        %s154 = smul.addr %s153, 8
        %s155 = scalar_lea.vmem %s0, %s154
        %s156 = smul.u32 2, %s17
      $region28: #{ffc_bn_act.13} parent=23 // pred_fallthru
        _
    $region24: #{ffc_bn_act.13} parent=5 // pred_fallthru
      _
    %p157 = scmp.le.s32.totalorder 1, %s9
    %p158 = scmp.lt.s32.totalorder %s9, 3
    %p159 = pnand %p157, %p158
    %p160 = pneg %p159
    // Predicated region
    $region29: #{ffc_bn_act.13} parent=5 // pred_check
      _
    $region30: #{ffc_bn_act.13} parent=5 // pred_check_branch
      %162 = sbr.rel (%p159) target = $region32
    $region31: #{ffc_bn_act.13} parent=5 // pred_region
      %s163 = ssub.s32 %s9, 1
      %s164 = smul.u32 2, %s19
      %p165 = scmp.lt.s32.totalorder %s18, 1
      %s166 = scalar_select %p165, %s18, 1
      %p167 = scmp.lt.s32.totalorder %s164, 1
      %s168 = scalar_select %p167, %s164, 1
      %s169 = smul.addr %s166, 2
      %s170 = sadd.s32 %s168, %s169
      %s171 = smul.addr %s170, 8
      %s172 = scalar_lea.vmem %s0, %s171
      %p173 = pneg %p49
      %p174 = pneg %p46
      %p175 = pneg %p70
      %p176 = pneg %p67
      %p177 = pneg %p91
      %p178 = pneg %p88
      %p179 = pneg %p119
      %p180 = pneg %p116
      %s181 = smul.u32 2, %s19
      %p182 = scmp.lt.s32.totalorder %s18, 1
      %s183 = scalar_select %p182, %s18, 1
      %p184 = scmp.lt.s32.totalorder %s181, 1
      %s185 = scalar_select %p184, %s181, 1
      %s186 = smul.addr %s183, 2
      %s187 = sadd.s32 %s185, %s186
      %s188 = smul.addr %s187, 8
      %s189 = scalar_lea.vmem %s3, %s188
      %s190 = smul.u32 2, %s19
      %p191 = scmp.lt.s32.totalorder %s18, 1
      %s192 = scalar_select %p191, %s18, 1
      %p193 = scmp.lt.s32.totalorder %s190, 1
      %s194 = scalar_select %p193, %s190, 1
      %s195 = smul.addr %s192, 2
      %s196 = sadd.s32 %s194, %s195
      %s197 = smul.addr %s196, 8
      %s198 = scalar_lea.vmem %s0, %s197
      %s199 = smul.u32 2, %s19
      %s200 = smul.u32 2, %s19
      %p201 = scmp.lt.s32.totalorder %s18, 1
      %s202 = scalar_select %p201, %s18, 1
      %p203 = scmp.lt.s32.totalorder %s200, 1
      %s204 = scalar_select %p203, %s200, 1
      %s205 = smul.addr %s202, 2
      %s206 = sadd.s32 %s204, %s205
      %s207 = smul.addr %s206, 8
      %s208 = scalar_lea.vmem %s3, %s207
      %s209 = smul.u32 2, %s19
      %v210 = vld [vmem:[%s198] sm:$0xff]
      %v211 = vld [vmem:[%s198 + $0x8] sm:$0xff]
      %v212 = vld [vmem:[%s1] sm:$0xff]
      %214 = vset.pattern.permute.xlu0 0
      %215 = vperm.xlu0 %214, %v212
      %v216 = vpop.permute.xlu0 %215
      %v218 = vmul.f32 %v210, %v216
      %v219 = vmul.f32 %v211, %v216
      %v220 = vld [vmem:[%s2] sm:$0xff]
      %222 = vset.pattern.permute.xlu0 0
      %223 = vperm.xlu0 %222, %v220
      %v224 = vpop.permute.xlu0 %223
      %v226 = vadd.f32 %v218, %v224
      %v227 = vadd.f32 %v219, %v224
      %228 = vst [vmem:[%s208] sm:$0xff] %v226
      %229 = vst [vmem:[%s208 + $0x8] sm:$0xff] %v227
      %s230 = smul.u32 2, %s19
      %p231 = scmp.lt.s32.totalorder %s18, 1
      %s232 = scalar_select %p231, %s18, 1
      %p233 = scmp.lt.s32.totalorder %s230, 1
      %s234 = scalar_select %p233, %s230, 1
      %s235 = smul.addr %s232, 2
      %s236 = sadd.s32 %s234, %s235
      %s237 = smul.addr %s236, 8
      %s238 = scalar_lea.vmem %s3, %s237
      // Predicated region
      $region33: #{ffc_bn_act.13} parent=31 // pred_check
        %p239 = pneg %p116
      $region34: #{ffc_bn_act.13} parent=31 // pred_check_branch
        %241 = sbr.rel (%p239) target = $region36
      $region35: #{ffc_bn_act.13} parent=31 // pred_region
        %s242 = smul.u32 2, %s19
      $region36: #{ffc_bn_act.13} parent=31 // pred_fallthru
        _
    $region32: #{ffc_bn_act.13} parent=5 // pred_fallthru
      _
    %p243 = scmp.le.s32.totalorder 2, %s9
    // Predicated region
    $region37: #{ffc_bn_act.13} parent=5 // pred_check
      %p244 = pneg %p243
    $region38: #{ffc_bn_act.13} parent=5 // pred_check_branch
      %246 = sbr.rel (%p244) target = $region40
    $region39: #{ffc_bn_act.13} parent=5 // pred_region
      %s247 = ssub.s32 %s9, 2
      // Predicated region
      $region41: #{ffc_bn_act.13} parent=39 // pred_check
        %p248 = pneg %p122
      $region42: #{ffc_bn_act.13} parent=39 // pred_check_branch
        %250 = sbr.rel (%p248) target = $region44
      $region43: #{ffc_bn_act.13} parent=39 // pred_region
        %s251 = smul.u32 2, %s21
        %p252 = scmp.lt.s32.totalorder %s20, 1
        %s253 = scalar_select %p252, %s20, 1
        %p254 = scmp.lt.s32.totalorder %s251, 1
        %s255 = scalar_select %p254, %s251, 1
        %s256 = smul.addr %s253, 2
        %s257 = sadd.s32 %s255, %s256
        %s258 = smul.addr %s257, 8
        %s259 = scalar_lea.vmem %s3, %s258
      $region44: #{ffc_bn_act.13} parent=39 // pred_fallthru
        _
    $region40: #{ffc_bn_act.13} parent=5 // pred_fallthru
      _
  $region6: #{ffc_bn_act.13} parent=0 // loop_footer
    %s13 = sadd.s32 1, %s9
  $region7: #{ffc_bn_act.13} parent=0 // loop_footer_branch
    %8 = sbr.rel target = $region3
  $region8: #{ffc_bn_act.13} parent=0 // loop_exit
    _

// kernel: ffc_bn_act.12
$region0: #{ffc_bn_act.12}
  #allocation0 [shape = 'u32[]', space=smem, size = 0x4, offset = 0x4, fixed_abs, tag = 'smem constant byte address 0x4 - core index']
  #allocation1 [shape = 'u32[144,128]{1,0:T(1,128)}', space=vmem, size = 0x12000, scoped, tag = 'internal scratch']
  %s0 = inlined_call_operand.vmem [shape: f32[2,4,256], index: 0, kind: input, shape index: {}]
  %s1 = inlined_call_operand.vmem [shape: f32[2,4,256], index: 1, kind: input, shape index: {}]
  %s2 = inlined_call_operand.vmem [shape: f32[8,4], index: 2, kind: input, shape index: {}]
  %s3 = inlined_call_operand.vmem [shape: f32[8,4], index: 3, kind: input, shape index: {}]
  %s4 = inlined_call_operand.vmem [shape: f32[2,8,256], index: 4, kind: output, shape index: {0}]
  %s5 = inlined_call_operand.vmem [shape: f32[2,1,8,2], index: 5, kind: output, shape index: {1}]
  %6 = xla_tuple %s4, %s5
  %s7 = sld [smem:[#allocation0]]
  $region57: #{ffc_bn_act.12} parent=0
    _
  %s9 = ssub.s32 1, %s7
  %s10 = scalar_select 0, %s9, %s7
  loop: start=0, step=1, limit=4
  $region2: #{ffc_bn_act.12} parent=0 // loop_pre_header
    _
  $region3: #{ffc_bn_act.12} parent=0 // loop_header
    %s12 = sphi 0, %s16
    %p13 = scmp.ge.s32.totalorder %s12, 4
    %s19 = sphi 0, %s31
    %s20 = sphi 0, %s27
    %s21 = sphi 0, %s19
    %s22 = sphi 0, %s20
    %s23 = sphi 0, %s21
    %s24 = sphi 0, %s22
    %s36 = sphi 0, %s38
    %s39 = sphi 0, %s36
    %s40 = sphi 0, %s39
    %s56 = sphi 0, %s40
    %s64 = sphi 0, %s66
    %s67 = sphi 0, %s64
    %s68 = sphi 0, %s67
    %s84 = sphi 0, %s68
    %s88 = sphi 0, %s88
    %s90 = sphi 0, %s88
    %s91 = sphi 0, %s90
    %s105 = sphi 0, %s91
    %s109 = sphi 0, %s109
    %s111 = sphi 0, %s109
    %s112 = sphi 0, %s111
    %s126 = sphi 0, %s112
    %s134 = sphi 0, %s136
    %s137 = sphi 0, %s134
    %s138 = sphi 0, %s137
    %s154 = sphi 0, %s138
    %s162 = sphi 0, %s164
    %s165 = sphi 0, %s162
    %s166 = sphi 0, %s165
    %s182 = sphi 0, %s166
  $region4: #{ffc_bn_act.12} parent=0 // loop_header_branch
    %15 = sbr.rel (%p13) target = $region8
  $region5: #{ffc_bn_act.12} parent=0 // loop_body
    %s17 = ssub.s32 %s12, 1
    %s18 = ssub.s32 %s12, 2
    %s25 = sadd.s32 1, %s20
    %p26 = scmp.ge.s32.totalorder %s25, 1
    %s27 = scalar_select %p26, 0, %s25
    %s28 = sadd.s32 1, %s19
    %s29 = scalar_select %p26, %s28, %s19
    %p30 = scmp.ge.s32.totalorder %s29, 2
    %s31 = scalar_select %p30, 0, %s29
    %s32 = ssub.s32 %s19, %s31
    %s33 = ssub.s32 %s20, %s27
    %s34 = sor.u32 %s32, %s33
    %p35 = scmp.eq.s32.totalorder %s34, 0
    %s37 = sadd.s32 %s36, 1
    %s38 = scalar_select %p35, %s36, %s37
    %p41 = pneg %p35
    %p42 = scmp.eq.s32.totalorder %s12, 1
    %p43 = por %p41, %p42
    %p44 = scmp.ne.s32.totalorder %s36, %s39
    %p45 = scmp.eq.s32.totalorder %s12, 0
    %p46 = por %p44, %p45
    %p47 = scmp.ne.s32.totalorder %s36, %s39
    %p48 = scmp.eq.s32.totalorder %s17, 1
    %p49 = por %p47, %p48
    %p50 = scmp.ne.s32.totalorder %s39, %s40
    %p51 = scmp.eq.s32.totalorder %s17, 0
    %p52 = por %p50, %p51
    %p53 = scmp.ne.s32.totalorder %s39, %s40
    %p54 = scmp.eq.s32.totalorder %s18, 1
    %p55 = por %p53, %p54
    %p57 = scmp.ne.s32.totalorder %s40, %s56
    %p58 = scmp.eq.s32.totalorder %s18, 0
    %p59 = por %p57, %p58
    %s60 = ssub.s32 %s19, %s31
    %s61 = ssub.s32 %s20, %s27
    %s62 = sor.u32 %s60, %s61
    %p63 = scmp.eq.s32.totalorder %s62, 0
    %s65 = sadd.s32 %s64, 1
    %s66 = scalar_select %p63, %s64, %s65
    %p69 = pneg %p63
    %p70 = scmp.eq.s32.totalorder %s12, 1
    %p71 = por %p69, %p70
    %p72 = scmp.ne.s32.totalorder %s64, %s67
    %p73 = scmp.eq.s32.totalorder %s12, 0
    %p74 = por %p72, %p73
    %p75 = scmp.ne.s32.totalorder %s64, %s67
    %p76 = scmp.eq.s32.totalorder %s17, 1
    %p77 = por %p75, %p76
    %p78 = scmp.ne.s32.totalorder %s67, %s68
    %p79 = scmp.eq.s32.totalorder %s17, 0
    %p80 = por %p78, %p79
    %p81 = scmp.ne.s32.totalorder %s67, %s68
    %p82 = scmp.eq.s32.totalorder %s18, 1
    %p83 = por %p81, %p82
    %p85 = scmp.ne.s32.totalorder %s68, %s84
    %p86 = scmp.eq.s32.totalorder %s18, 0
    %p87 = por %p85, %p86
    %s89 = sadd.s32 %s88, 1
    %p92 = scmp.eq.s32.totalorder %s12, 1
    %p93 = scmp.ne.s32.totalorder %s88, %s90
    %p94 = scmp.eq.s32.totalorder %s12, 0
    %p95 = por %p93, %p94
    %p96 = scmp.ne.s32.totalorder %s88, %s90
    %p97 = scmp.eq.s32.totalorder %s17, 1
    %p98 = por %p96, %p97
    %p99 = scmp.ne.s32.totalorder %s90, %s91
    %p100 = scmp.eq.s32.totalorder %s17, 0
    %p101 = por %p99, %p100
    %p102 = scmp.ne.s32.totalorder %s90, %s91
    %p103 = scmp.eq.s32.totalorder %s18, 1
    %p104 = por %p102, %p103
    %p106 = scmp.ne.s32.totalorder %s91, %s105
    %p107 = scmp.eq.s32.totalorder %s18, 0
    %p108 = por %p106, %p107
    %s110 = sadd.s32 %s109, 1
    %p113 = scmp.eq.s32.totalorder %s12, 1
    %p114 = scmp.ne.s32.totalorder %s109, %s111
    %p115 = scmp.eq.s32.totalorder %s12, 0
    %p116 = por %p114, %p115
    %p117 = scmp.ne.s32.totalorder %s109, %s111
    %p118 = scmp.eq.s32.totalorder %s17, 1
    %p119 = por %p117, %p118
    %p120 = scmp.ne.s32.totalorder %s111, %s112
    %p121 = scmp.eq.s32.totalorder %s17, 0
    %p122 = por %p120, %p121
    %p123 = scmp.ne.s32.totalorder %s111, %s112
    %p124 = scmp.eq.s32.totalorder %s18, 1
    %p125 = por %p123, %p124
    %p127 = scmp.ne.s32.totalorder %s112, %s126
    %p128 = scmp.eq.s32.totalorder %s18, 0
    %p129 = por %p127, %p128
    %s130 = ssub.s32 %s19, %s31
    %s131 = ssub.s32 %s20, %s27
    %s132 = sor.u32 %s130, %s131
    %p133 = scmp.eq.s32.totalorder %s132, 0
    %s135 = sadd.s32 %s134, 1
    %s136 = scalar_select %p133, %s134, %s135
    %p139 = pneg %p133
    %p140 = scmp.eq.s32.totalorder %s12, 1
    %p141 = por %p139, %p140
    %p142 = scmp.ne.s32.totalorder %s134, %s137
    %p143 = scmp.eq.s32.totalorder %s12, 0
    %p144 = por %p142, %p143
    %p145 = scmp.ne.s32.totalorder %s134, %s137
    %p146 = scmp.eq.s32.totalorder %s17, 1
    %p147 = por %p145, %p146
    %p148 = scmp.ne.s32.totalorder %s137, %s138
    %p149 = scmp.eq.s32.totalorder %s17, 0
    %p150 = por %p148, %p149
    %p151 = scmp.ne.s32.totalorder %s137, %s138
    %p152 = scmp.eq.s32.totalorder %s18, 1
    %p153 = por %p151, %p152
    %p155 = scmp.ne.s32.totalorder %s138, %s154
    %p156 = scmp.eq.s32.totalorder %s18, 0
    %p157 = por %p155, %p156
    %s158 = ssub.s32 %s19, %s31
    %s159 = ssub.s32 %s20, %s27
    %s160 = sor.u32 %s158, %s159
    %p161 = scmp.eq.s32.totalorder %s160, 0
    %s163 = sadd.s32 %s162, 1
    %s164 = scalar_select %p161, %s162, %s163
    %p167 = pneg %p161
    %p168 = scmp.eq.s32.totalorder %s12, 1
    %p169 = por %p167, %p168
    %p170 = scmp.ne.s32.totalorder %s162, %s165
    %p171 = scmp.eq.s32.totalorder %s12, 0
    %p172 = por %p170, %p171
    %p173 = scmp.ne.s32.totalorder %s162, %s165
    %p174 = scmp.eq.s32.totalorder %s17, 1
    %p175 = por %p173, %p174
    %p176 = scmp.ne.s32.totalorder %s165, %s166
    %p177 = scmp.eq.s32.totalorder %s17, 0
    %p178 = por %p176, %p177
    %p179 = scmp.ne.s32.totalorder %s165, %s166
    %p180 = scmp.eq.s32.totalorder %s18, 1
    %p181 = por %p179, %p180
    %p183 = scmp.ne.s32.totalorder %s166, %s182
    %p184 = scmp.eq.s32.totalorder %s18, 0
    %p185 = por %p183, %p184
    %p186 = scmp.le.s32.totalorder 1, %s12
    %p187 = scmp.lt.s32.totalorder %s12, 3
    %p188 = pnand %p186, %p187
    %p189 = pneg %p188
    // Predicated region
    $region9: #{ffc_bn_act.12} parent=5 // pred_check
      _
    $region10: #{ffc_bn_act.12} parent=5 // pred_check_branch
      %191 = sbr.rel (%p188) target = $region12
    $region11: #{ffc_bn_act.12} parent=5 // pred_region
      %s192 = ssub.s32 %s12, 1
      // Predicated region
      $region13: #{ffc_bn_act.12} parent=11 // pred_check
        %p193 = pneg %p101
      $region14: #{ffc_bn_act.12} parent=11 // pred_check_branch
        %195 = sbr.rel (%p193) target = $region16
      $region15: #{ffc_bn_act.12} parent=11 // pred_region
        _
      $region16: #{ffc_bn_act.12} parent=11 // pred_fallthru
        _
      // Predicated region
      $region17: #{ffc_bn_act.12} parent=11 // pred_check
        %p196 = pneg %p122
      $region18: #{ffc_bn_act.12} parent=11 // pred_check_branch
        %198 = sbr.rel (%p196) target = $region20
      $region19: #{ffc_bn_act.12} parent=11 // pred_region
        _
      $region20: #{ffc_bn_act.12} parent=11 // pred_fallthru
        _
    $region12: #{ffc_bn_act.12} parent=5 // pred_fallthru
      _
    %p199 = scmp.lt.s32.totalorder %s12, 2
    // Predicated region
    $region21: #{ffc_bn_act.12} parent=5 // pred_check
      %p200 = pneg %p199
    $region22: #{ffc_bn_act.12} parent=5 // pred_check_branch
      %202 = sbr.rel (%p200) target = $region24
    $region23: #{ffc_bn_act.12} parent=5 // pred_region
      // Predicated region
      $region25: #{ffc_bn_act.12} parent=23 // pred_check
        %p203 = pneg %p46
      $region26: #{ffc_bn_act.12} parent=23 // pred_check_branch
        %205 = sbr.rel (%p203) target = $region28
      $region27: #{ffc_bn_act.12} parent=23 // pred_region
        %s206 = smul.u32 2, %s20
        %p207 = scmp.lt.s32.totalorder %s19, 1
        %s208 = scalar_select %p207, %s19, 1
        %p209 = scmp.lt.s32.totalorder %s206, 1
        %s210 = scalar_select %p209, %s206, 1
        %s211 = smul.addr %s208, 2
        %s212 = sadd.s32 %s210, %s211
        %s213 = smul.addr %s212, 4
        %s214 = scalar_lea.vmem %s0, %s213
        %s215 = smul.u32 2, %s20
      $region28: #{ffc_bn_act.12} parent=23 // pred_fallthru
        _
      // Predicated region
      $region29: #{ffc_bn_act.12} parent=23 // pred_check
        %p216 = pneg %p74
      $region30: #{ffc_bn_act.12} parent=23 // pred_check_branch
        %218 = sbr.rel (%p216) target = $region32
      $region31: #{ffc_bn_act.12} parent=23 // pred_region
        %s219 = smul.u32 2, %s20
        %p220 = scmp.lt.s32.totalorder %s19, 1
        %s221 = scalar_select %p220, %s19, 1
        %p222 = scmp.lt.s32.totalorder %s219, 1
        %s223 = scalar_select %p222, %s219, 1
        %s224 = smul.addr %s221, 2
        %s225 = sadd.s32 %s223, %s224
        %s226 = smul.addr %s225, 4
        %s227 = scalar_lea.vmem %s1, %s226
        %s228 = smul.u32 2, %s20
      $region32: #{ffc_bn_act.12} parent=23 // pred_fallthru
        _
    $region24: #{ffc_bn_act.12} parent=5 // pred_fallthru
      _
    %p229 = scmp.le.s32.totalorder 1, %s12
    %p230 = scmp.lt.s32.totalorder %s12, 3
    %p231 = pnand %p229, %p230
    %p232 = pneg %p231
    // Predicated region
    $region33: #{ffc_bn_act.12} parent=5 // pred_check
      _
    $region34: #{ffc_bn_act.12} parent=5 // pred_check_branch
      %234 = sbr.rel (%p231) target = $region36
    $region35: #{ffc_bn_act.12} parent=5 // pred_region
      %s235 = ssub.s32 %s12, 1
      %s236 = smul.u32 2, %s22
      %p237 = scmp.lt.s32.totalorder %s21, 1
      %s238 = scalar_select %p237, %s21, 1
      %p239 = scmp.lt.s32.totalorder %s236, 1
      %s240 = scalar_select %p239, %s236, 1
      %s241 = smul.addr %s238, 2
      %s242 = sadd.s32 %s240, %s241
      %s243 = smul.addr %s242, 4
      %s244 = scalar_lea.vmem %s0, %s243
      %p245 = pneg %p52
      %p246 = pneg %p49
      %s247 = smul.u32 2, %s22
      %p248 = scmp.lt.s32.totalorder %s21, 1
      %s249 = scalar_select %p248, %s21, 1
      %p250 = scmp.lt.s32.totalorder %s247, 1
      %s251 = scalar_select %p250, %s247, 1
      %s252 = smul.addr %s249, 2
      %s253 = sadd.s32 %s251, %s252
      %s254 = smul.addr %s253, 4
      %s255 = scalar_lea.vmem %s1, %s254
      %p256 = pneg %p80
      %p257 = pneg %p77
      %p258 = pneg %p101
      %p259 = pneg %p98
      %p260 = pneg %p122
      %p261 = pneg %p119
      %p262 = pneg %p150
      %p263 = pneg %p147
      %s264 = smul.u32 2, %s22
      %p265 = scmp.lt.s32.totalorder %s21, 1
      %s266 = scalar_select %p265, %s21, 1
      %p267 = scmp.lt.s32.totalorder %s264, 1
      %s268 = scalar_select %p267, %s264, 1
      %s269 = smul.addr %s266, 2
      %s270 = sadd.s32 %s268, %s269
      %s271 = smul.addr %s270, 8
      %s272 = scalar_lea.vmem %s4, %s271
      %p273 = pneg %p178
      %p274 = pneg %p175
      %p275 = scmp.lt.s32.totalorder %s21, 1
      %s276 = scalar_select %p275, %s21, 1
      %p277 = scmp.lt.s32.totalorder %s22, 0
      %s278 = scalar_select %p277, %s22, 0
      %s279 = sadd.s32 %s278, %s276
      %s280 = smul.addr %s279, 8
      %s281 = scalar_lea.vmem %s5, %s280
      %s282 = smul.u32 2, %s22
      %p283 = scmp.lt.s32.totalorder %s21, 1
      %s284 = scalar_select %p283, %s21, 1
      %p285 = scmp.lt.s32.totalorder %s282, 1
      %s286 = scalar_select %p285, %s282, 1
      %s287 = smul.addr %s284, 2
      %s288 = sadd.s32 %s286, %s287
      %s289 = smul.addr %s288, 4
      %s290 = scalar_lea.vmem %s0, %s289
      %s291 = smul.u32 2, %s22
      %s292 = smul.u32 2, %s22
      %p293 = scmp.lt.s32.totalorder %s21, 1
      %s294 = scalar_select %p293, %s21, 1
      %p295 = scmp.lt.s32.totalorder %s292, 1
      %s296 = scalar_select %p295, %s292, 1
      %s297 = smul.addr %s294, 2
      %s298 = sadd.s32 %s296, %s297
      %s299 = smul.addr %s298, 4
      %s300 = scalar_lea.vmem %s1, %s299
      %s301 = smul.u32 2, %s22
      %s302 = smul.u32 2, %s22
      %p303 = scmp.lt.s32.totalorder %s21, 1
      %s304 = scalar_select %p303, %s21, 1
      %p305 = scmp.lt.s32.totalorder %s302, 1
      %s306 = scalar_select %p305, %s302, 1
      %s307 = smul.addr %s304, 2
      %s308 = sadd.s32 %s306, %s307
      %s309 = smul.addr %s308, 8
      %s310 = scalar_lea.vmem %s4, %s309
      %s311 = smul.u32 2, %s22
      %p312 = scmp.lt.s32.totalorder %s21, 1
      %s313 = scalar_select %p312, %s21, 1
      %p314 = scmp.lt.s32.totalorder %s22, 0
      %s315 = scalar_select %p314, %s22, 0
      %s316 = sadd.s32 %s315, %s313
      %s317 = smul.addr %s316, 8
      %s318 = scalar_lea.vmem %s5, %s317
      %v319 = vld [vmem:[%s2] sm:$0xff]
      %v320 = vld [vmem:[%s290] sm:$0xff]
      %v321 = vld [vmem:[%s3] sm:$0xff]
      %v322 = vld [vmem:[%s300] sm:$0xff]
      %v324 = vcombine.high %v322, %v322
      %vm325 = vcmask 31744
      %v327 = vsel %vm325, %v321, 0
      %vm329 = vcmask 1043456
      %v330 = vsel %vm329, %v322, 0
      %v332 = vsel %vm329, %v324, 0
      %334 = vmatprep.subr.mxu0 0.0
      %335 = vmatpush1.msra.mxu0 0.0
      %336 = vmatprep.subr.mxu0 0.0
      %337 = vmatpush1.msra.mxu0 0.0
      %338 = vmatprep.subr.mxu0 0.0
      %339 = vmatpush1.msra.mxu0 0.0
      %340 = vmatprep.subr.mxu0 0.0
      %341 = vmatpush1.msra.mxu0 0.0
      %342 = vmatprep.subr.mxu0 0.0
      %343 = vmatpush1.msra.mxu0 0.0
      %344 = vmatprep.subr.mxu0 0.0
      %345 = vmatpush1.msra.mxu0 0.0
      %346 = vmatprep.subr.mxu0 0.0
      %347 = vmatpush1.msra.mxu0 0.0
      %348 = vmatprep.subr.mxu0 0.0
      %349 = vmatpush1.msra.mxu0 0.0
      %350 = vmatprep.subr.mxu0 0.0
      %351 = vmatpush1.msra.mxu0 0.0
      %352 = vmatprep.subr.mxu0 0.0
      %353 = vmatpush1.msra.mxu0 0.0
      %354 = vmatprep.subr.mxu0 0.0
      %355 = vmatpush1.msra.mxu0 0.0
      %356 = vmatprep.subr.mxu0 0.0
      %357 = vmatpush1.msra.mxu0 0.0
      %358 = vmatprep.subr.mxu0 0.0
      %359 = vmatpush1.msra.mxu0 0.0
      %360 = vmatprep.subr.mxu0 0.0
      %361 = vmatpush1.msra.mxu0 0.0
      %362 = vmatprep.subr.mxu0 0.0
      %363 = vmatpush1.msra.mxu0 0.0
      %364 = vmatprep.subr.mxu0 %v332
      %365 = vmatpush1.msra.mxu0 %v330
      %366 = vmatprep.subr.mxu0 0.0
      %367 = vmatpush2.msra.mxu0 0.0
      %368 = vmatprep.subr.mxu0 0.0
      %369 = vmatpush2.msra.mxu0 0.0
      %370 = vmatprep.subr.mxu0 0.0
      %371 = vmatpush2.msra.mxu0 0.0
      %372 = vmatprep.subr.mxu0 0.0
      %373 = vmatpush2.msra.mxu0 0.0
      %374 = vmatprep.subr.mxu0 0.0
      %375 = vmatpush2.msra.mxu0 0.0
      %376 = vmatprep.subr.mxu0 0.0
      %377 = vmatpush2.msra.mxu0 0.0
      %378 = vmatprep.subr.mxu0 0.0
      %379 = vmatpush2.msra.mxu0 0.0
      %380 = vmatprep.subr.mxu0 0.0
      %381 = vmatpush2.msra.mxu0 0.0
      %382 = vmatprep.subr.mxu0 0.0
      %383 = vmatpush2.msra.mxu0 0.0
      %384 = vmatprep.subr.mxu0 0.0
      %385 = vmatpush2.msra.mxu0 0.0
      %386 = vmatprep.subr.mxu0 0.0
      %387 = vmatpush2.msra.mxu0 0.0
      %388 = vmatprep.subr.mxu0 0.0
      %389 = vmatpush2.msra.mxu0 0.0
      %390 = vmatprep.subr.mxu0 0.0
      %391 = vmatpush2.msra.mxu0 0.0
      %392 = vmatprep.subr.mxu0 0.0
      %393 = vmatpush2.msra.mxu0 0.0
      %394 = vmatprep.subr.mxu0 0.0
      %395 = vmatpush2.msra.mxu0 0.0
      %396 = vmatprep.subr.mxu0 0.0
      %397 = vmatpush2.msra.mxu0 0.0
      %398 = vmatprep.mubr.f32.mxu0 0.0
      %399 = vmatmul.mubr.f32.gmra.mxu0 %v327
      %v400 = vpop.f32.mrf.mxu0
      %v401 = vadd.f32 0.0, %v400
      %v402 = vpop.f32.mrf.mxu0
      %v403 = vadd.f32 0.0, %v402
      %404 = vdwg.mxu0
      %v406 = vcombine.high %v320, %v320
      %v408 = vsel %vm325, %v319, 0
      %v410 = vsel %vm329, %v320, 0
      %v412 = vsel %vm329, %v406, 0
      %414 = vmatprep.subr.mxu0 0.0
      %415 = vmatpush1.msra.mxu0 0.0
      %416 = vmatprep.subr.mxu0 0.0
      %417 = vmatpush1.msra.mxu0 0.0
      %418 = vmatprep.subr.mxu0 0.0
      %419 = vmatpush1.msra.mxu0 0.0
      %420 = vmatprep.subr.mxu0 0.0
      %421 = vmatpush1.msra.mxu0 0.0
      %422 = vmatprep.subr.mxu0 0.0
      %423 = vmatpush1.msra.mxu0 0.0
      %424 = vmatprep.subr.mxu0 0.0
      %425 = vmatpush1.msra.mxu0 0.0
      %426 = vmatprep.subr.mxu0 0.0
      %427 = vmatpush1.msra.mxu0 0.0
      %428 = vmatprep.subr.mxu0 0.0
      %429 = vmatpush1.msra.mxu0 0.0
      %430 = vmatprep.subr.mxu0 0.0
      %431 = vmatpush1.msra.mxu0 0.0
      %432 = vmatprep.subr.mxu0 0.0
      %433 = vmatpush1.msra.mxu0 0.0
      %434 = vmatprep.subr.mxu0 0.0
      %435 = vmatpush1.msra.mxu0 0.0
      %436 = vmatprep.subr.mxu0 0.0
      %437 = vmatpush1.msra.mxu0 0.0
      %438 = vmatprep.subr.mxu0 0.0
      %439 = vmatpush1.msra.mxu0 0.0
      %440 = vmatprep.subr.mxu0 0.0
      %441 = vmatpush1.msra.mxu0 0.0
      %442 = vmatprep.subr.mxu0 0.0
      %443 = vmatpush1.msra.mxu0 0.0
      %444 = vmatprep.subr.mxu0 %v412
      %445 = vmatpush1.msra.mxu0 %v410
      %446 = vmatprep.subr.mxu0 0.0
      %447 = vmatpush2.msra.mxu0 0.0
      %448 = vmatprep.subr.mxu0 0.0
      %449 = vmatpush2.msra.mxu0 0.0
      %450 = vmatprep.subr.mxu0 0.0
      %451 = vmatpush2.msra.mxu0 0.0
      %452 = vmatprep.subr.mxu0 0.0
      %453 = vmatpush2.msra.mxu0 0.0
      %454 = vmatprep.subr.mxu0 0.0
      %455 = vmatpush2.msra.mxu0 0.0
      %456 = vmatprep.subr.mxu0 0.0
      %457 = vmatpush2.msra.mxu0 0.0
      %458 = vmatprep.subr.mxu0 0.0
      %459 = vmatpush2.msra.mxu0 0.0
      %460 = vmatprep.subr.mxu0 0.0
      %461 = vmatpush2.msra.mxu0 0.0
      %462 = vmatprep.subr.mxu0 0.0
      %463 = vmatpush2.msra.mxu0 0.0
      %464 = vmatprep.subr.mxu0 0.0
      %465 = vmatpush2.msra.mxu0 0.0
      %466 = vmatprep.subr.mxu0 0.0
      %467 = vmatpush2.msra.mxu0 0.0
      %468 = vmatprep.subr.mxu0 0.0
      %469 = vmatpush2.msra.mxu0 0.0
      %470 = vmatprep.subr.mxu0 0.0
      %471 = vmatpush2.msra.mxu0 0.0
      %472 = vmatprep.subr.mxu0 0.0
      %473 = vmatpush2.msra.mxu0 0.0
      %474 = vmatprep.subr.mxu0 0.0
      %475 = vmatpush2.msra.mxu0 0.0
      %476 = vmatprep.subr.mxu0 0.0
      %477 = vmatpush2.msra.mxu0 0.0
      %478 = vmatprep.mubr.f32.mxu0 0.0
      %479 = vmatmul.mubr.f32.gmra.mxu0 %v408
      %v480 = vpop.f32.mrf.mxu0
      %v481 = vadd.f32 %v401, %v480
      %v482 = vpop.f32.mrf.mxu0
      %v483 = vadd.f32 %v403, %v482
      %484 = vdwg.mxu0
      %485 = vst [vmem:[%s310] sm:$0xff] %v481
      %486 = vst [vmem:[%s310 + $0x8] sm:$0xff] %v483
      %v487 = vadd.f32 %v481, %v483
      %488 = vadd.xlane.f32.xlu0 %v487
      %v489 = vpop.xlane.xlu0 %488
      %v490 = vmul.f32 %v481, %v481
      %v491 = vmul.f32 %v483, %v483
      %v492 = vadd.f32 %v490, %v491
      %493 = vadd.xlane.f32.xlu0 %v492
      %v494 = vpop.xlane.xlu0 %493
      %vm495 = vcmask 7168
      %v496 = vsel %vm495, %v489, %v494
      %vm497 = vcmask 15360
      %498 = vst.msk [vmem:[%s318] sm:$0xff] %vm497, %v496
      %s499 = smul.u32 2, %s22
      %p500 = scmp.lt.s32.totalorder %s21, 1
      %s501 = scalar_select %p500, %s21, 1
      %p502 = scmp.lt.s32.totalorder %s499, 1
      %s503 = scalar_select %p502, %s499, 1
      %s504 = smul.addr %s501, 2
      %s505 = sadd.s32 %s503, %s504
      %s506 = smul.addr %s505, 8
      %s507 = scalar_lea.vmem %s4, %s506
      %p508 = scmp.lt.s32.totalorder %s21, 1
      %s509 = scalar_select %p508, %s21, 1
      %p510 = scmp.lt.s32.totalorder %s22, 0
      %s511 = scalar_select %p510, %s22, 0
      %s512 = sadd.s32 %s511, %s509
      %s513 = smul.addr %s512, 8
      %s514 = scalar_lea.vmem %s5, %s513
      // Predicated region
      $region37: #{ffc_bn_act.12} parent=35 // pred_check
        %p515 = pneg %p147
      $region38: #{ffc_bn_act.12} parent=35 // pred_check_branch
        %517 = sbr.rel (%p515) target = $region40
      $region39: #{ffc_bn_act.12} parent=35 // pred_region
        %s518 = smul.u32 2, %s22
      $region40: #{ffc_bn_act.12} parent=35 // pred_fallthru
        _
      // Predicated region
      $region41: #{ffc_bn_act.12} parent=35 // pred_check
        %p519 = pneg %p175
      $region42: #{ffc_bn_act.12} parent=35 // pred_check_branch
        %521 = sbr.rel (%p519) target = $region44
      $region43: #{ffc_bn_act.12} parent=35 // pred_region
        _
      $region44: #{ffc_bn_act.12} parent=35 // pred_fallthru
        _
    $region36: #{ffc_bn_act.12} parent=5 // pred_fallthru
      _
    %p522 = scmp.le.s32.totalorder 2, %s12
    // Predicated region
    $region45: #{ffc_bn_act.12} parent=5 // pred_check
      %p523 = pneg %p522
    $region46: #{ffc_bn_act.12} parent=5 // pred_check_branch
      %525 = sbr.rel (%p523) target = $region48
    $region47: #{ffc_bn_act.12} parent=5 // pred_region
      %s526 = ssub.s32 %s12, 2
      // Predicated region
      $region49: #{ffc_bn_act.12} parent=47 // pred_check
        %p527 = pneg %p153
      $region50: #{ffc_bn_act.12} parent=47 // pred_check_branch
        %529 = sbr.rel (%p527) target = $region52
      $region51: #{ffc_bn_act.12} parent=47 // pred_region
        %s530 = smul.u32 2, %s24
        %p531 = scmp.lt.s32.totalorder %s23, 1
        %s532 = scalar_select %p531, %s23, 1
        %p533 = scmp.lt.s32.totalorder %s530, 1
        %s534 = scalar_select %p533, %s530, 1
        %s535 = smul.addr %s532, 2
        %s536 = sadd.s32 %s534, %s535
        %s537 = smul.addr %s536, 8
        %s538 = scalar_lea.vmem %s4, %s537
      $region52: #{ffc_bn_act.12} parent=47 // pred_fallthru
        _
      // Predicated region
      $region53: #{ffc_bn_act.12} parent=47 // pred_check
        %p539 = pneg %p181
      $region54: #{ffc_bn_act.12} parent=47 // pred_check_branch
        %541 = sbr.rel (%p539) target = $region56
      $region55: #{ffc_bn_act.12} parent=47 // pred_region
        %p542 = scmp.lt.s32.totalorder %s23, 1
        %s543 = scalar_select %p542, %s23, 1
        %p544 = scmp.lt.s32.totalorder %s24, 0
        %s545 = scalar_select %p544, %s24, 0
        %s546 = sadd.s32 %s545, %s543
        %s547 = smul.addr %s546, 8
        %s548 = scalar_lea.vmem %s5, %s547
      $region56: #{ffc_bn_act.12} parent=47 // pred_fallthru
        _
    $region48: #{ffc_bn_act.12} parent=5 // pred_fallthru
      _
  $region6: #{ffc_bn_act.12} parent=0 // loop_footer
    %s16 = sadd.s32 1, %s12
  $region7: #{ffc_bn_act.12} parent=0 // loop_footer_branch
    %11 = sbr.rel target = $region3
  $region8: #{ffc_bn_act.12} parent=0 // loop_exit
    _

// kernel: ffc_bn_act.17
$region0: #{ffc_bn_act.17}
  #allocation0 [shape = 'u32[]', space=smem, size = 0x4, offset = 0x4, fixed_abs, tag = 'smem constant byte address 0x4 - core index']
  #allocation1 [shape = 'u32[144,128]{1,0:T(1,128)}', space=vmem, size = 0x12000, scoped, tag = 'internal scratch']
  %s0 = inlined_call_operand.vmem [shape: bf16[8,8,40], index: 0, kind: input, shape index: {}]
  %s1 = inlined_call_operand.vmem [shape: bf16[8,8], index: 1, kind: input, shape index: {}]
  %s2 = inlined_call_operand.vmem [shape: bf16[8,8,40], index: 2, kind: output, shape index: {0}]
  %s3 = inlined_call_operand.vmem [shape: f32[8,1,8,2], index: 3, kind: output, shape index: {1}]
  %4 = xla_tuple %s2, %s3
  %s5 = sld [smem:[#allocation0]]
  $region49: #{ffc_bn_act.17} parent=0
    _
  %s7 = ssub.s32 1, %s5
  %s8 = scalar_select 0, %s7, %s5
  loop: start=0, step=1, limit=10
  $region2: #{ffc_bn_act.17} parent=0 // loop_pre_header
    _
  $region3: #{ffc_bn_act.17} parent=0 // loop_header
    %s10 = sphi 0, %s14
    %p11 = scmp.ge.s32.totalorder %s10, 10
    %s17 = sphi 0, %s29
    %s18 = sphi 0, %s25
    %s19 = sphi 0, %s17
    %s20 = sphi 0, %s18
    %s21 = sphi 0, %s19
    %s22 = sphi 0, %s20
    %s34 = sphi 0, %s36
    %s37 = sphi 0, %s34
    %s38 = sphi 0, %s37
    %s54 = sphi 0, %s38
    %s58 = sphi 0, %s58
    %s60 = sphi 0, %s58
    %s61 = sphi 0, %s60
    %s75 = sphi 0, %s61
    %s83 = sphi 0, %s85
    %s86 = sphi 0, %s83
    %s87 = sphi 0, %s86
    %s103 = sphi 0, %s87
    %s111 = sphi 0, %s113
    %s114 = sphi 0, %s111
    %s115 = sphi 0, %s114
    %s131 = sphi 0, %s115
  $region4: #{ffc_bn_act.17} parent=0 // loop_header_branch
    %13 = sbr.rel (%p11) target = $region8
  $region5: #{ffc_bn_act.17} parent=0 // loop_body
    %s15 = ssub.s32 %s10, 1
    %s16 = ssub.s32 %s10, 2
    %s23 = sadd.s32 1, %s18
    %p24 = scmp.ge.s32.totalorder %s23, 1
    %s25 = scalar_select %p24, 0, %s23
    %s26 = sadd.s32 1, %s17
    %s27 = scalar_select %p24, %s26, %s17
    %p28 = scmp.ge.s32.totalorder %s27, 8
    %s29 = scalar_select %p28, 0, %s27
    %s30 = ssub.s32 %s17, %s29
    %s31 = ssub.s32 %s18, %s25
    %s32 = sor.u32 %s30, %s31
    %p33 = scmp.eq.s32.totalorder %s32, 0
    %s35 = sadd.s32 %s34, 1
    %s36 = scalar_select %p33, %s34, %s35
    %p39 = pneg %p33
    %p40 = scmp.eq.s32.totalorder %s10, 7
    %p41 = por %p39, %p40
    %p42 = scmp.ne.s32.totalorder %s34, %s37
    %p43 = scmp.eq.s32.totalorder %s10, 0
    %p44 = por %p42, %p43
    %p45 = scmp.ne.s32.totalorder %s34, %s37
    %p46 = scmp.eq.s32.totalorder %s15, 7
    %p47 = por %p45, %p46
    %p48 = scmp.ne.s32.totalorder %s37, %s38
    %p49 = scmp.eq.s32.totalorder %s15, 0
    %p50 = por %p48, %p49
    %p51 = scmp.ne.s32.totalorder %s37, %s38
    %p52 = scmp.eq.s32.totalorder %s16, 7
    %p53 = por %p51, %p52
    %p55 = scmp.ne.s32.totalorder %s38, %s54
    %p56 = scmp.eq.s32.totalorder %s16, 0
    %p57 = por %p55, %p56
    %s59 = sadd.s32 %s58, 1
    %p62 = scmp.eq.s32.totalorder %s10, 7
    %p63 = scmp.ne.s32.totalorder %s58, %s60
    %p64 = scmp.eq.s32.totalorder %s10, 0
    %p65 = por %p63, %p64
    %p66 = scmp.ne.s32.totalorder %s58, %s60
    %p67 = scmp.eq.s32.totalorder %s15, 7
    %p68 = por %p66, %p67
    %p69 = scmp.ne.s32.totalorder %s60, %s61
    %p70 = scmp.eq.s32.totalorder %s15, 0
    %p71 = por %p69, %p70
    %p72 = scmp.ne.s32.totalorder %s60, %s61
    %p73 = scmp.eq.s32.totalorder %s16, 7
    %p74 = por %p72, %p73
    %p76 = scmp.ne.s32.totalorder %s61, %s75
    %p77 = scmp.eq.s32.totalorder %s16, 0
    %p78 = por %p76, %p77
    %s79 = ssub.s32 %s17, %s29
    %s80 = ssub.s32 %s18, %s25
    %s81 = sor.u32 %s79, %s80
    %p82 = scmp.eq.s32.totalorder %s81, 0
    %s84 = sadd.s32 %s83, 1
    %s85 = scalar_select %p82, %s83, %s84
    %p88 = pneg %p82
    %p89 = scmp.eq.s32.totalorder %s10, 7
    %p90 = por %p88, %p89
    %p91 = scmp.ne.s32.totalorder %s83, %s86
    %p92 = scmp.eq.s32.totalorder %s10, 0
    %p93 = por %p91, %p92
    %p94 = scmp.ne.s32.totalorder %s83, %s86
    %p95 = scmp.eq.s32.totalorder %s15, 7
    %p96 = por %p94, %p95
    %p97 = scmp.ne.s32.totalorder %s86, %s87
    %p98 = scmp.eq.s32.totalorder %s15, 0
    %p99 = por %p97, %p98
    %p100 = scmp.ne.s32.totalorder %s86, %s87
    %p101 = scmp.eq.s32.totalorder %s16, 7
    %p102 = por %p100, %p101
    %p104 = scmp.ne.s32.totalorder %s87, %s103
    %p105 = scmp.eq.s32.totalorder %s16, 0
    %p106 = por %p104, %p105
    %s107 = ssub.s32 %s17, %s29
    %s108 = ssub.s32 %s18, %s25
    %s109 = sor.u32 %s107, %s108
    %p110 = scmp.eq.s32.totalorder %s109, 0
    %s112 = sadd.s32 %s111, 1
    %s113 = scalar_select %p110, %s111, %s112
    %p116 = pneg %p110
    %p117 = scmp.eq.s32.totalorder %s10, 7
    %p118 = por %p116, %p117
    %p119 = scmp.ne.s32.totalorder %s111, %s114
    %p120 = scmp.eq.s32.totalorder %s10, 0
    %p121 = por %p119, %p120
    %p122 = scmp.ne.s32.totalorder %s111, %s114
    %p123 = scmp.eq.s32.totalorder %s15, 7
    %p124 = por %p122, %p123
    %p125 = scmp.ne.s32.totalorder %s114, %s115
    %p126 = scmp.eq.s32.totalorder %s15, 0
    %p127 = por %p125, %p126
    %p128 = scmp.ne.s32.totalorder %s114, %s115
    %p129 = scmp.eq.s32.totalorder %s16, 7
    %p130 = por %p128, %p129
    %p132 = scmp.ne.s32.totalorder %s115, %s131
    %p133 = scmp.eq.s32.totalorder %s16, 0
    %p134 = por %p132, %p133
    %p135 = scmp.le.s32.totalorder 1, %s10
    %p136 = scmp.lt.s32.totalorder %s10, 9
    %p137 = pnand %p135, %p136
    %p138 = pneg %p137
    // Predicated region
    $region9: #{ffc_bn_act.17} parent=5 // pred_check
      _
    $region10: #{ffc_bn_act.17} parent=5 // pred_check_branch
      %140 = sbr.rel (%p137) target = $region12
    $region11: #{ffc_bn_act.17} parent=5 // pred_region
      %s141 = ssub.s32 %s10, 1
      // Predicated region
      $region13: #{ffc_bn_act.17} parent=11 // pred_check
        %p142 = pneg %p71
      $region14: #{ffc_bn_act.17} parent=11 // pred_check_branch
        %144 = sbr.rel (%p142) target = $region16
      $region15: #{ffc_bn_act.17} parent=11 // pred_region
        _
      $region16: #{ffc_bn_act.17} parent=11 // pred_fallthru
        _
    $region12: #{ffc_bn_act.17} parent=5 // pred_fallthru
      _
    %p145 = scmp.lt.s32.totalorder %s10, 8
    // Predicated region
    $region17: #{ffc_bn_act.17} parent=5 // pred_check
      %p146 = pneg %p145
    $region18: #{ffc_bn_act.17} parent=5 // pred_check_branch
      %148 = sbr.rel (%p146) target = $region20
    $region19: #{ffc_bn_act.17} parent=5 // pred_region
      // Predicated region
      $region21: #{ffc_bn_act.17} parent=19 // pred_check
        %p149 = pneg %p44
      $region22: #{ffc_bn_act.17} parent=19 // pred_check_branch
        %151 = sbr.rel (%p149) target = $region24
      $region23: #{ffc_bn_act.17} parent=19 // pred_region
        %p152 = scmp.lt.s32.totalorder %s17, 7
        %s153 = scalar_select %p152, %s17, 7
        %p154 = scmp.lt.s32.totalorder %s18, 0
        %s155 = scalar_select %p154, %s18, 0
        %s156 = sadd.s32 %s155, %s153
        %s157 = smul.addr %s156, 4
        %s158 = scalar_lea.vmem %s0, %s157
      $region24: #{ffc_bn_act.17} parent=19 // pred_fallthru
        _
    $region20: #{ffc_bn_act.17} parent=5 // pred_fallthru
      _
    %p159 = scmp.le.s32.totalorder 1, %s10
    %p160 = scmp.lt.s32.totalorder %s10, 9
    %p161 = pnand %p159, %p160
    %p162 = pneg %p161
    // Predicated region
    $region25: #{ffc_bn_act.17} parent=5 // pred_check
      _
    $region26: #{ffc_bn_act.17} parent=5 // pred_check_branch
      %164 = sbr.rel (%p161) target = $region28
    $region27: #{ffc_bn_act.17} parent=5 // pred_region
      %s165 = ssub.s32 %s10, 1
      %p166 = scmp.lt.s32.totalorder %s19, 7
      %s167 = scalar_select %p166, %s19, 7
      %p168 = scmp.lt.s32.totalorder %s20, 0
      %s169 = scalar_select %p168, %s20, 0
      %s170 = sadd.s32 %s169, %s167
      %s171 = smul.addr %s170, 4
      %s172 = scalar_lea.vmem %s0, %s171
      %p173 = pneg %p50
      %p174 = pneg %p47
      %p175 = pneg %p71
      %p176 = pneg %p68
      %p177 = pneg %p99
      %p178 = pneg %p96
      %p179 = scmp.lt.s32.totalorder %s19, 7
      %s180 = scalar_select %p179, %s19, 7
      %p181 = scmp.lt.s32.totalorder %s20, 0
      %s182 = scalar_select %p181, %s20, 0
      %s183 = sadd.s32 %s182, %s180
      %s184 = smul.addr %s183, 4
      %s185 = scalar_lea.vmem %s2, %s184
      %p186 = pneg %p127
      %p187 = pneg %p124
      %p188 = scmp.lt.s32.totalorder %s19, 7
      %s189 = scalar_select %p188, %s19, 7
      %p190 = scmp.lt.s32.totalorder %s20, 0
      %s191 = scalar_select %p190, %s20, 0
      %s192 = sadd.s32 %s191, %s189
      %s193 = smul.addr %s192, 8
      %s194 = scalar_lea.vmem %s3, %s193
      %p195 = scmp.lt.s32.totalorder %s19, 7
      %s196 = scalar_select %p195, %s19, 7
      %p197 = scmp.lt.s32.totalorder %s20, 0
      %s198 = scalar_select %p197, %s20, 0
      %s199 = sadd.s32 %s198, %s196
      %s200 = smul.addr %s199, 4
      %s201 = scalar_lea.vmem %s0, %s200
      %p202 = scmp.lt.s32.totalorder %s19, 7
      %s203 = scalar_select %p202, %s19, 7
      %p204 = scmp.lt.s32.totalorder %s20, 0
      %s205 = scalar_select %p204, %s20, 0
      %s206 = sadd.s32 %s205, %s203
      %s207 = smul.addr %s206, 4
      %s208 = scalar_lea.vmem %s2, %s207
      %p209 = scmp.lt.s32.totalorder %s19, 7
      %s210 = scalar_select %p209, %s19, 7
      %p211 = scmp.lt.s32.totalorder %s20, 0
      %s212 = scalar_select %p211, %s20, 0
      %s213 = sadd.s32 %s212, %s210
      %s214 = smul.addr %s213, 8
      %s215 = scalar_lea.vmem %s3, %s214
      %v217 = vld [vmem:[%s1] sm:$0xf]
      %v218 = vld [vmem:[%s201] sm:$0xf]
      %vm219 = vcmask 64512
      %v221 = vsel %vm219, %v217, 0
      %vm223 = vcmask 1043456
      %v225 = vsel %vm223, %v218, 0
      %227 = vmatprep.subr.bf16.mxu0 0
      %228 = vmatpush1.bf16.msra.mxu0 0
      %229 = vmatprep.subr.bf16.mxu0 0
      %230 = vmatpush1.bf16.msra.mxu0 0
      %231 = vmatprep.subr.bf16.mxu0 0
      %232 = vmatpush1.bf16.msra.mxu0 0
      %233 = vmatprep.subr.bf16.mxu0 0
      %234 = vmatpush1.bf16.msra.mxu0 0
      %235 = vmatprep.subr.bf16.mxu0 0
      %236 = vmatpush1.bf16.msra.mxu0 0
      %237 = vmatprep.subr.bf16.mxu0 0
      %238 = vmatpush1.bf16.msra.mxu0 0
      %239 = vmatprep.subr.bf16.mxu0 0
      %240 = vmatpush1.bf16.msra.mxu0 0
      %241 = vmatprep.subr.bf16.mxu0 0
      %242 = vmatpush1.bf16.msra.mxu0 %v225
      %243 = vmatprep.subr.bf16.mxu0 0
      %244 = vmatpush2.bf16.msra.mxu0 0
      %245 = vmatprep.subr.bf16.mxu0 0
      %246 = vmatpush2.bf16.msra.mxu0 0
      %247 = vmatprep.subr.bf16.mxu0 0
      %248 = vmatpush2.bf16.msra.mxu0 0
      %249 = vmatprep.subr.bf16.mxu0 0
      %250 = vmatpush2.bf16.msra.mxu0 0
      %251 = vmatprep.subr.bf16.mxu0 0
      %252 = vmatpush2.bf16.msra.mxu0 0
      %253 = vmatprep.subr.bf16.mxu0 0
      %254 = vmatpush2.bf16.msra.mxu0 0
      %255 = vmatprep.subr.bf16.mxu0 0
      %256 = vmatpush2.bf16.msra.mxu0 0
      %257 = vmatprep.subr.bf16.mxu0 0
      %258 = vmatpush2.bf16.msra.mxu0 0
      %259 = vmatprep.mubr.bf16.mxu0 0
      %260 = vmatmul.mubr.bf16.gmra.mxu0 %v221
      %v261 = vpop.f32.mrf.mxu0
      %v262 = vadd.f32 0.0, %v261
      %v263 = vpop.f32.mrf.mxu0
      %v264 = vpop.f32.mrf.mxu0
      %v265 = vpop.f32.mrf.mxu0
      %266 = vdwg.mxu0
      %v267 = vpack.c.bf16 %v262, %v262
      %vm268 = vcmask 322560
      %269 = vst.msk [vmem:[%s208] sm:$0xf] %vm268, %v267
      %vm270 = vcmask 326656
      %v271 = vsel %vm270, %v262, 0.0
      %272 = vadd.xlane.f32.xlu0 %v271
      %v273 = vpop.xlane.xlu0 %272
      %v274 = vmul.f32 %v262, %v262
      %v275 = vsel %vm270, %v274, 0.0
      %276 = vadd.xlane.f32.xlu0 %v275
      %v277 = vpop.xlane.xlu0 %276
      %vm278 = vcmask 7168
      %v279 = vsel %vm278, %v273, %v277
      %vm280 = vcmask 15360
      %281 = vst.msk [vmem:[%s215] sm:$0xff] %vm280, %v279
      %p282 = scmp.lt.s32.totalorder %s19, 7
      %s283 = scalar_select %p282, %s19, 7
      %p284 = scmp.lt.s32.totalorder %s20, 0
      %s285 = scalar_select %p284, %s20, 0
      %s286 = sadd.s32 %s285, %s283
      %s287 = smul.addr %s286, 4
      %s288 = scalar_lea.vmem %s2, %s287
      %p289 = scmp.lt.s32.totalorder %s19, 7
      %s290 = scalar_select %p289, %s19, 7
      %p291 = scmp.lt.s32.totalorder %s20, 0
      %s292 = scalar_select %p291, %s20, 0
      %s293 = sadd.s32 %s292, %s290
      %s294 = smul.addr %s293, 8
      %s295 = scalar_lea.vmem %s3, %s294
      // Predicated region
      $region29: #{ffc_bn_act.17} parent=27 // pred_check
        %p296 = pneg %p96
      $region30: #{ffc_bn_act.17} parent=27 // pred_check_branch
        %298 = sbr.rel (%p296) target = $region32
      $region31: #{ffc_bn_act.17} parent=27 // pred_region
        _
      $region32: #{ffc_bn_act.17} parent=27 // pred_fallthru
        _
      // Predicated region
      $region33: #{ffc_bn_act.17} parent=27 // pred_check
        %p299 = pneg %p124
      $region34: #{ffc_bn_act.17} parent=27 // pred_check_branch
        %301 = sbr.rel (%p299) target = $region36
      $region35: #{ffc_bn_act.17} parent=27 // pred_region
        _
      $region36: #{ffc_bn_act.17} parent=27 // pred_fallthru
        _
    $region28: #{ffc_bn_act.17} parent=5 // pred_fallthru
      _
    %p302 = scmp.le.s32.totalorder 2, %s10
    // Predicated region
    $region37: #{ffc_bn_act.17} parent=5 // pred_check
      %p303 = pneg %p302
    $region38: #{ffc_bn_act.17} parent=5 // pred_check_branch
      %305 = sbr.rel (%p303) target = $region40
    $region39: #{ffc_bn_act.17} parent=5 // pred_region
      %s306 = ssub.s32 %s10, 2
      // Predicated region
      $region41: #{ffc_bn_act.17} parent=39 // pred_check
        %p307 = pneg %p102
      $region42: #{ffc_bn_act.17} parent=39 // pred_check_branch
        %309 = sbr.rel (%p307) target = $region44
      $region43: #{ffc_bn_act.17} parent=39 // pred_region
        %p310 = scmp.lt.s32.totalorder %s21, 7
        %s311 = scalar_select %p310, %s21, 7
        %p312 = scmp.lt.s32.totalorder %s22, 0
        %s313 = scalar_select %p312, %s22, 0
        %s314 = sadd.s32 %s313, %s311
        %s315 = smul.addr %s314, 4
        %s316 = scalar_lea.vmem %s2, %s315
      $region44: #{ffc_bn_act.17} parent=39 // pred_fallthru
        _
      // Predicated region
      $region45: #{ffc_bn_act.17} parent=39 // pred_check
        %p317 = pneg %p130
      $region46: #{ffc_bn_act.17} parent=39 // pred_check_branch
        %319 = sbr.rel (%p317) target = $region48
      $region47: #{ffc_bn_act.17} parent=39 // pred_region
        %p320 = scmp.lt.s32.totalorder %s21, 7
        %s321 = scalar_select %p320, %s21, 7
        %p322 = scmp.lt.s32.totalorder %s22, 0
        %s323 = scalar_select %p322, %s22, 0
        %s324 = sadd.s32 %s323, %s321
        %s325 = smul.addr %s324, 8
        %s326 = scalar_lea.vmem %s3, %s325
      $region48: #{ffc_bn_act.17} parent=39 // pred_fallthru
        _
    $region40: #{ffc_bn_act.17} parent=5 // pred_fallthru
      _
  $region6: #{ffc_bn_act.17} parent=0 // loop_footer
    %s14 = sadd.s32 1, %s10
  $region7: #{ffc_bn_act.17} parent=0 // loop_footer_branch
    %9 = sbr.rel target = $region3
  $region8: #{ffc_bn_act.17} parent=0 // loop_exit
    _

// kernel: ffc_bn_act.16
$region0: #{ffc_bn_act.16}
  #allocation0 [shape = 'u32[]', space=smem, size = 0x4, offset = 0x4, fixed_abs, tag = 'smem constant byte address 0x4 - core index']
  #allocation1 [shape = 'u32[144,128]{1,0:T(1,128)}', space=vmem, size = 0x12000, scoped, tag = 'internal scratch']
  %s0 = inlined_call_operand.vmem [shape: f32[2,4,4,8,8], index: 0, kind: input, shape index: {}]
  %s1 = inlined_call_operand.vmem [shape: bf16[8,10], index: 1, kind: input, shape index: {}]
  %s2 = inlined_call_operand.vmem [shape: bf16[8,8], index: 2, kind: input, shape index: {}]
  %s3 = inlined_call_operand.vmem [shape: bf16[8,8], index: 3, kind: input, shape index: {}]
  %s4 = inlined_call_operand.vmem [shape: bf16[2,4,8,8,5], index: 4, kind: output, shape index: {}]
  %s5 = sld [smem:[#allocation0]]
  $region87: #{ffc_bn_act.16} parent=0
    _
  %s7 = ssub.s32 1, %s5
  %s8 = scalar_select 0, %s7, %s5
  $region1: #{ffc_bn_act.16} parent=0
    #allocation2 [shape = 'u8[32768]{0}', space=vmem, size = 0x8000, scoped, tag = 'input window, operand 0']
    loop: start=0, step=1, limit=10
    $region2: #{ffc_bn_act.16} parent=1 // loop_pre_header
      _
    $region3: #{ffc_bn_act.16} parent=1 // loop_header
      %s10 = sphi 0, %s14
      %p11 = scmp.ge.s32.totalorder %s10, 10
      %s17 = sphi 0, %s29
      %s18 = sphi 0, %s25
      %s19 = sphi 0, %s17
      %s20 = sphi 0, %s18
      %s21 = sphi 0, %s19
      %s22 = sphi 0, %s20
      %s34 = sphi 0, %s36
      %s37 = sphi 0, %s34
      %s38 = sphi 0, %s37
      %s54 = sphi 0, %s38
      %s58 = sphi 0, %s58
      %s60 = sphi 0, %s58
      %s61 = sphi 0, %s60
      %s75 = sphi 0, %s61
      %s79 = sphi 0, %s79
      %s81 = sphi 0, %s79
      %s82 = sphi 0, %s81
      %s96 = sphi 0, %s82
      %s100 = sphi 0, %s100
      %s102 = sphi 0, %s100
      %s103 = sphi 0, %s102
      %s117 = sphi 0, %s103
      %s125 = sphi 0, %s127
      %s128 = sphi 0, %s125
      %s129 = sphi 0, %s128
      %s145 = sphi 0, %s129
    $region4: #{ffc_bn_act.16} parent=1 // loop_header_branch
      %13 = sbr.rel (%p11) target = $region8
    $region5: #{ffc_bn_act.16} parent=1 // loop_body
      %s15 = ssub.s32 %s10, 1
      %s16 = ssub.s32 %s10, 2
      %s23 = sadd.s32 1, %s18
      %p24 = scmp.ge.s32.totalorder %s23, 4
      %s25 = scalar_select %p24, 0, %s23
      %s26 = sadd.s32 1, %s17
      %s27 = scalar_select %p24, %s26, %s17
      %p28 = scmp.ge.s32.totalorder %s27, 2
      %s29 = scalar_select %p28, 0, %s27
      %s30 = ssub.s32 %s17, %s29
      %s31 = ssub.s32 %s18, %s25
      %s32 = sor.u32 %s30, %s31
      %p33 = scmp.eq.s32.totalorder %s32, 0
      %s35 = sadd.s32 %s34, 1
      %s36 = scalar_select %p33, %s34, %s35
      %p39 = pneg %p33
      %p40 = scmp.eq.s32.totalorder %s10, 7
      %p41 = por %p39, %p40
      %p42 = scmp.ne.s32.totalorder %s34, %s37
      %p43 = scmp.eq.s32.totalorder %s10, 0
      %p44 = por %p42, %p43
      %p45 = scmp.ne.s32.totalorder %s34, %s37
      %p46 = scmp.eq.s32.totalorder %s15, 7
      %p47 = por %p45, %p46
      %p48 = scmp.ne.s32.totalorder %s37, %s38
      %p49 = scmp.eq.s32.totalorder %s15, 0
      %p50 = por %p48, %p49
      %p51 = scmp.ne.s32.totalorder %s37, %s38
      %p52 = scmp.eq.s32.totalorder %s16, 7
      %p53 = por %p51, %p52
      %p55 = scmp.ne.s32.totalorder %s38, %s54
      %p56 = scmp.eq.s32.totalorder %s16, 0
      %p57 = por %p55, %p56
      %s59 = sadd.s32 %s58, 1
      %p62 = scmp.eq.s32.totalorder %s10, 7
      %p63 = scmp.ne.s32.totalorder %s58, %s60
      %p64 = scmp.eq.s32.totalorder %s10, 0
      %p65 = por %p63, %p64
      %p66 = scmp.ne.s32.totalorder %s58, %s60
      %p67 = scmp.eq.s32.totalorder %s15, 7
      %p68 = por %p66, %p67
      %p69 = scmp.ne.s32.totalorder %s60, %s61
      %p70 = scmp.eq.s32.totalorder %s15, 0
      %p71 = por %p69, %p70
      %p72 = scmp.ne.s32.totalorder %s60, %s61
      %p73 = scmp.eq.s32.totalorder %s16, 7
      %p74 = por %p72, %p73
      %p76 = scmp.ne.s32.totalorder %s61, %s75
      %p77 = scmp.eq.s32.totalorder %s16, 0
      %p78 = por %p76, %p77
      %s80 = sadd.s32 %s79, 1
      %p83 = scmp.eq.s32.totalorder %s10, 7
      %p84 = scmp.ne.s32.totalorder %s79, %s81
      %p85 = scmp.eq.s32.totalorder %s10, 0
      %p86 = por %p84, %p85
      %p87 = scmp.ne.s32.totalorder %s79, %s81
      %p88 = scmp.eq.s32.totalorder %s15, 7
      %p89 = por %p87, %p88
      %p90 = scmp.ne.s32.totalorder %s81, %s82
      %p91 = scmp.eq.s32.totalorder %s15, 0
      %p92 = por %p90, %p91
      %p93 = scmp.ne.s32.totalorder %s81, %s82
      %p94 = scmp.eq.s32.totalorder %s16, 7
      %p95 = por %p93, %p94
      %p97 = scmp.ne.s32.totalorder %s82, %s96
      %p98 = scmp.eq.s32.totalorder %s16, 0
      %p99 = por %p97, %p98
      %s101 = sadd.s32 %s100, 1
      %p104 = scmp.eq.s32.totalorder %s10, 7
      %p105 = scmp.ne.s32.totalorder %s100, %s102
      %p106 = scmp.eq.s32.totalorder %s10, 0
      %p107 = por %p105, %p106
      %p108 = scmp.ne.s32.totalorder %s100, %s102
      %p109 = scmp.eq.s32.totalorder %s15, 7
      %p110 = por %p108, %p109
      %p111 = scmp.ne.s32.totalorder %s102, %s103
      %p112 = scmp.eq.s32.totalorder %s15, 0
      %p113 = por %p111, %p112
      %p114 = scmp.ne.s32.totalorder %s102, %s103
      %p115 = scmp.eq.s32.totalorder %s16, 7
      %p116 = por %p114, %p115
      %p118 = scmp.ne.s32.totalorder %s103, %s117
      %p119 = scmp.eq.s32.totalorder %s16, 0
      %p120 = por %p118, %p119
      %s121 = ssub.s32 %s17, %s29
      %s122 = ssub.s32 %s18, %s25
      %s123 = sor.u32 %s121, %s122
      %p124 = scmp.eq.s32.totalorder %s123, 0
      %s126 = sadd.s32 %s125, 1
      %s127 = scalar_select %p124, %s125, %s126
      %p130 = pneg %p124
      %p131 = scmp.eq.s32.totalorder %s10, 7
      %p132 = por %p130, %p131
      %p133 = scmp.ne.s32.totalorder %s125, %s128
      %p134 = scmp.eq.s32.totalorder %s10, 0
      %p135 = por %p133, %p134
      %p136 = scmp.ne.s32.totalorder %s125, %s128
      %p137 = scmp.eq.s32.totalorder %s15, 7
      %p138 = por %p136, %p137
      %p139 = scmp.ne.s32.totalorder %s128, %s129
      %p140 = scmp.eq.s32.totalorder %s15, 0
      %p141 = por %p139, %p140
      %p142 = scmp.ne.s32.totalorder %s128, %s129
      %p143 = scmp.eq.s32.totalorder %s16, 7
      %p144 = por %p142, %p143
      %p146 = scmp.ne.s32.totalorder %s129, %s145
      %p147 = scmp.eq.s32.totalorder %s16, 0
      %p148 = por %p146, %p147
      %p149 = scmp.le.s32.totalorder 1, %s10
      %p150 = scmp.lt.s32.totalorder %s10, 9
      %p151 = pnand %p149, %p150
      %p152 = pneg %p151
      // Predicated region
      $region9: #{ffc_bn_act.16} parent=5 // pred_check
        _
      $region10: #{ffc_bn_act.16} parent=5 // pred_check_branch
        %154 = sbr.rel (%p151) target = $region12
      $region11: #{ffc_bn_act.16} parent=5 // pred_region
        %s155 = ssub.s32 %s10, 1
        // Predicated region
        $region13: #{ffc_bn_act.16} parent=11 // pred_check
          %p156 = pneg %p71
        $region14: #{ffc_bn_act.16} parent=11 // pred_check_branch
          %158 = sbr.rel (%p156) target = $region16
        $region15: #{ffc_bn_act.16} parent=11 // pred_region
          _
        $region16: #{ffc_bn_act.16} parent=11 // pred_fallthru
          _
        // Predicated region
        $region17: #{ffc_bn_act.16} parent=11 // pred_check
          %p159 = pneg %p92
        $region18: #{ffc_bn_act.16} parent=11 // pred_check_branch
          %161 = sbr.rel (%p159) target = $region20
        $region19: #{ffc_bn_act.16} parent=11 // pred_region
          _
        $region20: #{ffc_bn_act.16} parent=11 // pred_fallthru
          _
        // Predicated region
        $region21: #{ffc_bn_act.16} parent=11 // pred_check
          %p162 = pneg %p113
        $region22: #{ffc_bn_act.16} parent=11 // pred_check_branch
          %164 = sbr.rel (%p162) target = $region24
        $region23: #{ffc_bn_act.16} parent=11 // pred_region
          _
        $region24: #{ffc_bn_act.16} parent=11 // pred_fallthru
          _
      $region12: #{ffc_bn_act.16} parent=5 // pred_fallthru
        _
      %p165 = scmp.lt.s32.totalorder %s10, 8
      // Predicated region
      $region25: #{ffc_bn_act.16} parent=5 // pred_check
        %p166 = pneg %p165
      $region26: #{ffc_bn_act.16} parent=5 // pred_check_branch
        %168 = sbr.rel (%p166) target = $region28
      $region27: #{ffc_bn_act.16} parent=5 // pred_region
        // Predicated region
        $region29: #{ffc_bn_act.16} parent=27 // pred_check
          %p169 = pneg %p44
        $region30: #{ffc_bn_act.16} parent=27 // pred_check_branch
          %171 = sbr.rel (%p169) target = $region32
        $region31: #{ffc_bn_act.16} parent=27 // pred_region
          %s172 = sand.u32 %s34, 1
          %s173 = sand.u32 %s34, 1
          %s174 = smul.addr %s173, 32
          %s175 = scalar_lea.vmem [#allocation2], %s174
          %s176 = smul.addr %s17, 16
          %s177 = sadd.s32 %s18, %s176
          %s178 = smul.addr %s177, 8
          %s179 = scalar_lea.vmem %s0, %s178
          // Predicated region
          $region33: #{ffc_bn_act.16} parent=31 // pred_check
            _
          $region34: #{ffc_bn_act.16} parent=31 // pred_check_branch
            %181 = sbr.rel (0) target = $region36
          $region35: #{ffc_bn_act.16} parent=31 // pred_region
            // Predicated region
            $region37: #{ffc_bn_act.16} parent=35 // pred_check
              _
            $region38: #{ffc_bn_act.16} parent=35 // pred_check_branch
              %183 = sbr.rel (0) target = $region40
            $region39: #{ffc_bn_act.16} parent=35 // pred_region
              // Predicated region
              $region52: #{ffc_bn_act.16} parent=39 // pred_check
                _
              $region53: #{ffc_bn_act.16} parent=39 // pred_check_branch
                %205 = sbr.rel (0) target = $region55
              $region54: #{ffc_bn_act.16} parent=39 // pred_region
                loop: start=0, step=1, limit=1
                $region56: #{ffc_bn_act.16} parent=54 // loop_pre_header
                  _
                $region57: #{ffc_bn_act.16} parent=54 // loop_header
                  %s207 = sphi 0, %s211
                  %p208 = scmp.ge.s32.totalorder %s207, 1
                  %s212 = sphi %s179, %s179
                  %s213 = sphi %s175, %s175
                $region58: #{ffc_bn_act.16} parent=54 // loop_header_branch
                  %210 = sbr.rel (%p208) target = $region62
                $region59: #{ffc_bn_act.16} parent=54 // loop_body
                  %v214 = vld [vmem:[%s212] sm:$0xff]
                  %215 = vst [vmem:[%s213] sm:$0xff] %v214
                  %v216 = vld [vmem:[%s212 + $0x20] sm:$0xff]
                  %217 = vst [vmem:[%s213 + $0x8] sm:$0xff] %v216
                  %v218 = vld [vmem:[%s212 + $0x40] sm:$0xff]
                  %219 = vst [vmem:[%s213 + $0x10] sm:$0xff] %v218
                  %v220 = vld [vmem:[%s212 + $0x60] sm:$0xff]
                  %221 = vst [vmem:[%s213 + $0x18] sm:$0xff] %v220
                $region60: #{ffc_bn_act.16} parent=54 // loop_footer
                  %s211 = sadd.s32 1, %s207
                $region61: #{ffc_bn_act.16} parent=54 // loop_footer_branch
                  %206 = sbr.rel target = $region57
                $region62: #{ffc_bn_act.16} parent=54 // loop_exit
                  _
              $region55: #{ffc_bn_act.16} parent=39 // pred_fallthru
                _
              // Predicated region
              $region63: #{ffc_bn_act.16} parent=39 // pred_check
                _
              $region64: #{ffc_bn_act.16} parent=39 // pred_check_branch
                %223 = sbr.rel target = $region66
              $region65: #{ffc_bn_act.16} parent=39 // pred_region
                _
              $region66: #{ffc_bn_act.16} parent=39 // pred_fallthru
                _
            $region40: #{ffc_bn_act.16} parent=35 // pred_fallthru
              _
            // Predicated region
            $region41: #{ffc_bn_act.16} parent=35 // pred_check
              _
            $region42: #{ffc_bn_act.16} parent=35 // pred_check_branch
              %185 = sbr.rel target = $region44
            $region43: #{ffc_bn_act.16} parent=35 // pred_region
              %s187 = ssub.s32 256, 1
              loop: start=0, step=1, limit=1
              $region45: #{ffc_bn_act.16} parent=43 // loop_pre_header
                _
              $region46: #{ffc_bn_act.16} parent=43 // loop_header
                %s189 = sphi 0, %s193
                %p190 = scmp.ge.s32.totalorder %s189, 1
                %s194 = sphi %s179, %s179
                %s195 = sphi %s175, %s175
              $region47: #{ffc_bn_act.16} parent=43 // loop_header_branch
                %192 = sbr.rel (%p190) target = $region51
              $region48: #{ffc_bn_act.16} parent=43 // loop_body
                %v196 = vld [vmem:[%s194] sm:%s187]
                %197 = vst [vmem:[%s195] sm:%s187] %v196
                %v198 = vld [vmem:[%s194 + $0x20] sm:%s187]
                %199 = vst [vmem:[%s195 + $0x8] sm:%s187] %v198
                %v200 = vld [vmem:[%s194 + $0x40] sm:%s187]
                %201 = vst [vmem:[%s195 + $0x10] sm:%s187] %v200
                %v202 = vld [vmem:[%s194 + $0x60] sm:%s187]
                %203 = vst [vmem:[%s195 + $0x18] sm:%s187] %v202
              $region49: #{ffc_bn_act.16} parent=43 // loop_footer
                %s193 = sadd.s32 1, %s189
              $region50: #{ffc_bn_act.16} parent=43 // loop_footer_branch
                %188 = sbr.rel target = $region46
              $region51: #{ffc_bn_act.16} parent=43 // loop_exit
                _
            $region44: #{ffc_bn_act.16} parent=35 // pred_fallthru
              _
          $region36: #{ffc_bn_act.16} parent=31 // pred_fallthru
            _
          %224 = vnop
        $region32: #{ffc_bn_act.16} parent=27 // pred_fallthru
          _
      $region28: #{ffc_bn_act.16} parent=5 // pred_fallthru
        _
      %p225 = scmp.le.s32.totalorder 1, %s10
      %p226 = scmp.lt.s32.totalorder %s10, 9
      %p227 = pnand %p225, %p226
      %p228 = pneg %p227
      // Predicated region
      $region67: #{ffc_bn_act.16} parent=5 // pred_check
        _
      $region68: #{ffc_bn_act.16} parent=5 // pred_check_branch
        %230 = sbr.rel (%p227) target = $region70
      $region69: #{ffc_bn_act.16} parent=5 // pred_region
        %s231 = ssub.s32 %s10, 1
        %s232 = sand.u32 %s37, 1
        %s233 = sand.u32 %s37, 1
        %s234 = smul.addr %s233, 32
        %s235 = scalar_lea.vmem [#allocation2], %s234
        // Predicated region
        $region71: #{ffc_bn_act.16} parent=69 // pred_check
          %p236 = pneg %p50
        $region72: #{ffc_bn_act.16} parent=69 // pred_check_branch
          %238 = sbr.rel (%p236) target = $region74
        $region73: #{ffc_bn_act.16} parent=69 // pred_region
          _
        $region74: #{ffc_bn_act.16} parent=69 // pred_fallthru
          _
        %s239 = sand.u32 %s37, 1
        %s240 = sand.u32 %s37, 1
        %s241 = smul.addr %s240, 32
        %s242 = scalar_lea.vmem [#allocation2], %s241
        %p243 = pneg %p50
        %p244 = pneg %p47
        %p245 = pneg %p71
        %p246 = pneg %p68
        %p247 = pneg %p92
        %p248 = pneg %p89
        %p249 = pneg %p113
        %p250 = pneg %p110
        %p251 = pneg %p141
        %p252 = pneg %p138
        %p253 = scmp.lt.s32.totalorder %s19, 1
        %s254 = scalar_select %p253, %s19, 1
        %p255 = scmp.lt.s32.totalorder %s20, 3
        %s256 = scalar_select %p255, %s20, 3
        %s257 = smul.addr %s256, 8
        %s258 = smul.addr %s254, 32
        %s259 = sadd.s32 %s257, %s258
        %s260 = smul.addr %s259, 4
        %s261 = scalar_lea.vmem %s4, %s260
        %p262 = scmp.lt.s32.totalorder %s19, 1
        %s263 = scalar_select %p262, %s19, 1
        %p264 = scmp.lt.s32.totalorder %s20, 3
        %s265 = scalar_select %p264, %s20, 3
        %s266 = smul.addr %s265, 8
        %s267 = smul.addr %s263, 32
        %s268 = sadd.s32 %s266, %s267
        %s269 = smul.addr %s268, 4
        %s270 = scalar_lea.vmem %s4, %s269
        %v272 = vld [vmem:[%s1] sm:$0xf]
        %v273 = vld [vmem:[%s2] sm:$0xf]
        %v274 = vld [vmem:[%s3] sm:$0xf]
        %v275 = vld [vmem:[%s235] sm:$0xff]
        %v276 = vld [vmem:[%s235 + $0x8] sm:$0xff]
        %v277 = vld [vmem:[%s235 + $0x10] sm:$0xff]
        %v278 = vld [vmem:[%s235 + $0x18] sm:$0xff]
        %v279 = vpack.c.bf16 %v275, %v275
        %v280 = vpack.c.bf16 %v276, %v276
        %v281 = vpack.c.bf16 %v277, %v277
        %v282 = vpack.c.bf16 %v278, %v278
        %vm283 = vcmask 64512
        %v285 = vsel %vm283, %v279, 0
        %vm287 = vcmask 1043456
        %v289 = vsel %vm287, %v272, 0
        %291 = vmatprep.subr.bf16.mxu0 0
        %292 = vmatpush1.bf16.msra.mxu0 0
        %293 = vmatprep.subr.bf16.mxu0 0
        %294 = vmatpush1.bf16.msra.mxu0 0
        %295 = vmatprep.subr.bf16.mxu0 0
        %296 = vmatpush1.bf16.msra.mxu0 0
        %297 = vmatprep.subr.bf16.mxu0 0
        %298 = vmatpush1.bf16.msra.mxu0 0
        %299 = vmatprep.subr.bf16.mxu0 0
        %300 = vmatpush1.bf16.msra.mxu0 0
        %301 = vmatprep.subr.bf16.mxu0 0
        %302 = vmatpush1.bf16.msra.mxu0 0
        %303 = vmatprep.subr.bf16.mxu0 0
        %304 = vmatpush1.bf16.msra.mxu0 0
        %305 = vmatprep.subr.bf16.mxu0 0
        %306 = vmatpush1.bf16.msra.mxu0 %v289
        %307 = vmatprep.subr.bf16.mxu0 0
        %308 = vmatpush2.bf16.msra.mxu0 0
        %309 = vmatprep.subr.bf16.mxu0 0
        %310 = vmatpush2.bf16.msra.mxu0 0
        %311 = vmatprep.subr.bf16.mxu0 0
        %312 = vmatpush2.bf16.msra.mxu0 0
        %313 = vmatprep.subr.bf16.mxu0 0
        %314 = vmatpush2.bf16.msra.mxu0 0
        %315 = vmatprep.subr.bf16.mxu0 0
        %316 = vmatpush2.bf16.msra.mxu0 0
        %317 = vmatprep.subr.bf16.mxu0 0
        %318 = vmatpush2.bf16.msra.mxu0 0
        %319 = vmatprep.subr.bf16.mxu0 0
        %320 = vmatpush2.bf16.msra.mxu0 0
        %321 = vmatprep.subr.bf16.mxu0 0
        %322 = vmatpush2.bf16.msra.mxu0 0
        %323 = vmatprep.mubr.bf16.mxu0 0
        %324 = vmatmul.mubr.bf16.gmra.mxu0 %v285
        %v325 = vpop.f32.mrf.mxu0
        %v326 = vadd.f32 0.0, %v325
        %v327 = vpop.f32.mrf.mxu0
        %v328 = vpop.f32.mrf.mxu0
        %v329 = vpop.f32.mrf.mxu0
        %330 = vdwg.mxu0
        %v331 = vpack.c.bf16 %v326, %v326
        %v333 = vsel %vm283, %v273, 0
        %v336 = vsel %vm287, %v331, 0
        %338 = vmatprep.subr.bf16.mxu0 0
        %339 = vmatpush1.bf16.msra.mxu0 0
        %340 = vmatprep.subr.bf16.mxu0 0
        %341 = vmatpush1.bf16.msra.mxu0 0
        %342 = vmatprep.subr.bf16.mxu0 0
        %343 = vmatpush1.bf16.msra.mxu0 0
        %344 = vmatprep.subr.bf16.mxu0 0
        %345 = vmatpush1.bf16.msra.mxu0 0
        %346 = vmatprep.subr.bf16.mxu0 0
        %347 = vmatpush1.bf16.msra.mxu0 0
        %348 = vmatprep.subr.bf16.mxu0 0
        %349 = vmatpush1.bf16.msra.mxu0 0
        %350 = vmatprep.subr.bf16.mxu0 0
        %351 = vmatpush1.bf16.msra.mxu0 0
        %352 = vmatprep.subr.bf16.mxu0 0
        %353 = vmatpush1.bf16.msra.mxu0 %v336
        %354 = vmatprep.subr.bf16.mxu0 0
        %355 = vmatpush2.bf16.msra.mxu0 0
        %356 = vmatprep.subr.bf16.mxu0 0
        %357 = vmatpush2.bf16.msra.mxu0 0
        %358 = vmatprep.subr.bf16.mxu0 0
        %359 = vmatpush2.bf16.msra.mxu0 0
        %360 = vmatprep.subr.bf16.mxu0 0
        %361 = vmatpush2.bf16.msra.mxu0 0
        %362 = vmatprep.subr.bf16.mxu0 0
        %363 = vmatpush2.bf16.msra.mxu0 0
        %364 = vmatprep.subr.bf16.mxu0 0
        %365 = vmatpush2.bf16.msra.mxu0 0
        %366 = vmatprep.subr.bf16.mxu0 0
        %367 = vmatpush2.bf16.msra.mxu0 0
        %368 = vmatprep.subr.bf16.mxu0 0
        %369 = vmatpush2.bf16.msra.mxu0 0
        %370 = vmatprep.mubr.bf16.mxu0 0
        %371 = vmatmul.mubr.bf16.gmra.mxu0 %v333
        %v372 = vpop.f32.mrf.mxu0
        %v373 = vadd.f32 0.0, %v372
        %v374 = vpop.f32.mrf.mxu0
        %v375 = vpop.f32.mrf.mxu0
        %v376 = vpop.f32.mrf.mxu0
        %377 = vdwg.mxu0
        %v379 = vsel %vm283, %v274, 0
        %381 = vmatprep.subr.bf16.mxu0 0
        %382 = vmatpush1.bf16.msra.mxu0 0
        %383 = vmatprep.subr.bf16.mxu0 0
        %384 = vmatpush1.bf16.msra.mxu0 0
        %385 = vmatprep.subr.bf16.mxu0 0
        %386 = vmatpush1.bf16.msra.mxu0 0
        %387 = vmatprep.subr.bf16.mxu0 0
        %388 = vmatpush1.bf16.msra.mxu0 0
        %389 = vmatprep.subr.bf16.mxu0 0
        %390 = vmatpush1.bf16.msra.mxu0 0
        %391 = vmatprep.subr.bf16.mxu0 0
        %392 = vmatpush1.bf16.msra.mxu0 0
        %393 = vmatprep.subr.bf16.mxu0 0
        %394 = vmatpush1.bf16.msra.mxu0 0
        %395 = vmatprep.subr.bf16.mxu0 0
        %396 = vmatpush1.bf16.msra.mxu0 %v336
        %397 = vmatprep.subr.bf16.mxu0 0
        %398 = vmatpush2.bf16.msra.mxu0 0
        %399 = vmatprep.subr.bf16.mxu0 0
        %400 = vmatpush2.bf16.msra.mxu0 0
        %401 = vmatprep.subr.bf16.mxu0 0
        %402 = vmatpush2.bf16.msra.mxu0 0
        %403 = vmatprep.subr.bf16.mxu0 0
        %404 = vmatpush2.bf16.msra.mxu0 0
        %405 = vmatprep.subr.bf16.mxu0 0
        %406 = vmatpush2.bf16.msra.mxu0 0
        %407 = vmatprep.subr.bf16.mxu0 0
        %408 = vmatpush2.bf16.msra.mxu0 0
        %409 = vmatprep.subr.bf16.mxu0 0
        %410 = vmatpush2.bf16.msra.mxu0 0
        %411 = vmatprep.subr.bf16.mxu0 0
        %412 = vmatpush2.bf16.msra.mxu0 0
        %413 = vmatprep.mubr.bf16.mxu0 0
        %414 = vmatmul.mubr.bf16.gmra.mxu0 %v379
        %v415 = vpop.f32.mrf.mxu0
        %v416 = vadd.f32 0.0, %v415
        %v417 = vpop.f32.mrf.mxu0
        %v418 = vpop.f32.mrf.mxu0
        %v419 = vpop.f32.mrf.mxu0
        %420 = vdwg.mxu0
        %422 = vrot.lane.b32.xlu0 %v416, 123
        %v423 = vpop.permute.xlu0 %422
        %v425 = vsub.f32 %v373, %v423
        %v426 = vpack.c.bf16 %v425, %v425
        %vm427 = vcmask 35840
        %428 = vst.msk [vmem:[%s270] sm:$0xf] %vm427, %v426
        %430 = vrot.lane.b32.xlu0 %v373, 123
        %v431 = vpop.permute.xlu0 %430
        %v433 = vadd.f32 %v416, %v431
        %v434 = vpack.c.bf16 %v433, %v433
        %s435 = scalar_lea.vmem %s270, 16
        %436 = vst.msk [vmem:[%s435] sm:$0xf] %vm427, %v434
        %v438 = vsel %vm283, %v280, 0
        %440 = vmatprep.subr.bf16.mxu0 0
        %441 = vmatpush1.bf16.msra.mxu0 0
        %442 = vmatprep.subr.bf16.mxu0 0
        %443 = vmatpush1.bf16.msra.mxu0 0
        %444 = vmatprep.subr.bf16.mxu0 0
        %445 = vmatpush1.bf16.msra.mxu0 0
        %446 = vmatprep.subr.bf16.mxu0 0
        %447 = vmatpush1.bf16.msra.mxu0 0
        %448 = vmatprep.subr.bf16.mxu0 0
        %449 = vmatpush1.bf16.msra.mxu0 0
        %450 = vmatprep.subr.bf16.mxu0 0
        %451 = vmatpush1.bf16.msra.mxu0 0
        %452 = vmatprep.subr.bf16.mxu0 0
        %453 = vmatpush1.bf16.msra.mxu0 0
        %454 = vmatprep.subr.bf16.mxu0 0
        %455 = vmatpush1.bf16.msra.mxu0 %v289
        %456 = vmatprep.subr.bf16.mxu0 0
        %457 = vmatpush2.bf16.msra.mxu0 0
        %458 = vmatprep.subr.bf16.mxu0 0
        %459 = vmatpush2.bf16.msra.mxu0 0
        %460 = vmatprep.subr.bf16.mxu0 0
        %461 = vmatpush2.bf16.msra.mxu0 0
        %462 = vmatprep.subr.bf16.mxu0 0
        %463 = vmatpush2.bf16.msra.mxu0 0
        %464 = vmatprep.subr.bf16.mxu0 0
        %465 = vmatpush2.bf16.msra.mxu0 0
        %466 = vmatprep.subr.bf16.mxu0 0
        %467 = vmatpush2.bf16.msra.mxu0 0
        %468 = vmatprep.subr.bf16.mxu0 0
        %469 = vmatpush2.bf16.msra.mxu0 0
        %470 = vmatprep.subr.bf16.mxu0 0
        %471 = vmatpush2.bf16.msra.mxu0 0
        %472 = vmatprep.mubr.bf16.mxu0 0
        %473 = vmatmul.mubr.bf16.gmra.mxu0 %v438
        %v474 = vpop.f32.mrf.mxu0
        %v475 = vadd.f32 0.0, %v474
        %v476 = vpop.f32.mrf.mxu0
        %v477 = vpop.f32.mrf.mxu0
        %v478 = vpop.f32.mrf.mxu0
        %479 = vdwg.mxu0
        %v480 = vpack.c.bf16 %v475, %v475
        %v482 = vsel %vm287, %v480, 0
        %484 = vmatprep.subr.bf16.mxu0 0
        %485 = vmatpush1.bf16.msra.mxu0 0
        %486 = vmatprep.subr.bf16.mxu0 0
        %487 = vmatpush1.bf16.msra.mxu0 0
        %488 = vmatprep.subr.bf16.mxu0 0
        %489 = vmatpush1.bf16.msra.mxu0 0
        %490 = vmatprep.subr.bf16.mxu0 0
        %491 = vmatpush1.bf16.msra.mxu0 0
        %492 = vmatprep.subr.bf16.mxu0 0
        %493 = vmatpush1.bf16.msra.mxu0 0
        %494 = vmatprep.subr.bf16.mxu0 0
        %495 = vmatpush1.bf16.msra.mxu0 0
        %496 = vmatprep.subr.bf16.mxu0 0
        %497 = vmatpush1.bf16.msra.mxu0 0
        %498 = vmatprep.subr.bf16.mxu0 0
        %499 = vmatpush1.bf16.msra.mxu0 %v482
        %500 = vmatprep.subr.bf16.mxu0 0
        %501 = vmatpush2.bf16.msra.mxu0 0
        %502 = vmatprep.subr.bf16.mxu0 0
        %503 = vmatpush2.bf16.msra.mxu0 0
        %504 = vmatprep.subr.bf16.mxu0 0
        %505 = vmatpush2.bf16.msra.mxu0 0
        %506 = vmatprep.subr.bf16.mxu0 0
        %507 = vmatpush2.bf16.msra.mxu0 0
        %508 = vmatprep.subr.bf16.mxu0 0
        %509 = vmatpush2.bf16.msra.mxu0 0
        %510 = vmatprep.subr.bf16.mxu0 0
        %511 = vmatpush2.bf16.msra.mxu0 0
        %512 = vmatprep.subr.bf16.mxu0 0
        %513 = vmatpush2.bf16.msra.mxu0 0
        %514 = vmatprep.subr.bf16.mxu0 0
        %515 = vmatpush2.bf16.msra.mxu0 0
        %516 = vmatprep.mubr.bf16.mxu0 0
        %517 = vmatmul.mubr.bf16.gmra.mxu0 %v333
        %v518 = vpop.f32.mrf.mxu0
        %v519 = vadd.f32 0.0, %v518
        %v520 = vpop.f32.mrf.mxu0
        %v521 = vpop.f32.mrf.mxu0
        %v522 = vpop.f32.mrf.mxu0
        %523 = vdwg.mxu0
        %524 = vmatprep.subr.bf16.mxu0 0
        %525 = vmatpush1.bf16.msra.mxu0 0
        %526 = vmatprep.subr.bf16.mxu0 0
        %527 = vmatpush1.bf16.msra.mxu0 0
        %528 = vmatprep.subr.bf16.mxu0 0
        %529 = vmatpush1.bf16.msra.mxu0 0
        %530 = vmatprep.subr.bf16.mxu0 0
        %531 = vmatpush1.bf16.msra.mxu0 0
        %532 = vmatprep.subr.bf16.mxu0 0
        %533 = vmatpush1.bf16.msra.mxu0 0
        %534 = vmatprep.subr.bf16.mxu0 0
        %535 = vmatpush1.bf16.msra.mxu0 0
        %536 = vmatprep.subr.bf16.mxu0 0
        %537 = vmatpush1.bf16.msra.mxu0 0
        %538 = vmatprep.subr.bf16.mxu0 0
        %539 = vmatpush1.bf16.msra.mxu0 %v482
        %540 = vmatprep.subr.bf16.mxu0 0
        %541 = vmatpush2.bf16.msra.mxu0 0
        %542 = vmatprep.subr.bf16.mxu0 0
        %543 = vmatpush2.bf16.msra.mxu0 0
        %544 = vmatprep.subr.bf16.mxu0 0
        %545 = vmatpush2.bf16.msra.mxu0 0
        %546 = vmatprep.subr.bf16.mxu0 0
        %547 = vmatpush2.bf16.msra.mxu0 0
        %548 = vmatprep.subr.bf16.mxu0 0
        %549 = vmatpush2.bf16.msra.mxu0 0
        %550 = vmatprep.subr.bf16.mxu0 0
        %551 = vmatpush2.bf16.msra.mxu0 0
        %552 = vmatprep.subr.bf16.mxu0 0
        %553 = vmatpush2.bf16.msra.mxu0 0
        %554 = vmatprep.subr.bf16.mxu0 0
        %555 = vmatpush2.bf16.msra.mxu0 0
        %556 = vmatprep.mubr.bf16.mxu0 0
        %557 = vmatmul.mubr.bf16.gmra.mxu0 %v379
        %v558 = vpop.f32.mrf.mxu0
        %v559 = vadd.f32 0.0, %v558
        %v560 = vpop.f32.mrf.mxu0
        %v561 = vpop.f32.mrf.mxu0
        %v562 = vpop.f32.mrf.mxu0
        %563 = vdwg.mxu0
        %565 = vrot.lane.b32.xlu0 %v559, 123
        %v566 = vpop.permute.xlu0 %565
        %v568 = vsub.f32 %v519, %v566
        %v569 = vpack.c.bf16 %v568, %v568
        %s570 = scalar_lea.vmem %s270, 4
        %571 = vst.msk [vmem:[%s570] sm:$0xf] %vm427, %v569
        %573 = vrot.lane.b32.xlu0 %v519, 123
        %v574 = vpop.permute.xlu0 %573
        %v576 = vadd.f32 %v559, %v574
        %v577 = vpack.c.bf16 %v576, %v576
        %s578 = scalar_lea.vmem %s270, 20
        %579 = vst.msk [vmem:[%s578] sm:$0xf] %vm427, %v577
        %v581 = vsel %vm283, %v281, 0
        %583 = vmatprep.subr.bf16.mxu0 0
        %584 = vmatpush1.bf16.msra.mxu0 0
        %585 = vmatprep.subr.bf16.mxu0 0
        %586 = vmatpush1.bf16.msra.mxu0 0
        %587 = vmatprep.subr.bf16.mxu0 0
        %588 = vmatpush1.bf16.msra.mxu0 0
        %589 = vmatprep.subr.bf16.mxu0 0
        %590 = vmatpush1.bf16.msra.mxu0 0
        %591 = vmatprep.subr.bf16.mxu0 0
        %592 = vmatpush1.bf16.msra.mxu0 0
        %593 = vmatprep.subr.bf16.mxu0 0
        %594 = vmatpush1.bf16.msra.mxu0 0
        %595 = vmatprep.subr.bf16.mxu0 0
        %596 = vmatpush1.bf16.msra.mxu0 0
        %597 = vmatprep.subr.bf16.mxu0 0
        %598 = vmatpush1.bf16.msra.mxu0 %v289
        %599 = vmatprep.subr.bf16.mxu0 0
        %600 = vmatpush2.bf16.msra.mxu0 0
        %601 = vmatprep.subr.bf16.mxu0 0
        %602 = vmatpush2.bf16.msra.mxu0 0
        %603 = vmatprep.subr.bf16.mxu0 0
        %604 = vmatpush2.bf16.msra.mxu0 0
        %605 = vmatprep.subr.bf16.mxu0 0
        %606 = vmatpush2.bf16.msra.mxu0 0
        %607 = vmatprep.subr.bf16.mxu0 0
        %608 = vmatpush2.bf16.msra.mxu0 0
        %609 = vmatprep.subr.bf16.mxu0 0
        %610 = vmatpush2.bf16.msra.mxu0 0
        %611 = vmatprep.subr.bf16.mxu0 0
        %612 = vmatpush2.bf16.msra.mxu0 0
        %613 = vmatprep.subr.bf16.mxu0 0
        %614 = vmatpush2.bf16.msra.mxu0 0
        %615 = vmatprep.mubr.bf16.mxu0 0
        %616 = vmatmul.mubr.bf16.gmra.mxu0 %v581
        %v617 = vpop.f32.mrf.mxu0
        %v618 = vadd.f32 0.0, %v617
        %v619 = vpop.f32.mrf.mxu0
        %v620 = vpop.f32.mrf.mxu0
        %v621 = vpop.f32.mrf.mxu0
        %622 = vdwg.mxu0
        %v623 = vpack.c.bf16 %v618, %v618
        %v625 = vsel %vm287, %v623, 0
        %627 = vmatprep.subr.bf16.mxu0 0
        %628 = vmatpush1.bf16.msra.mxu0 0
        %629 = vmatprep.subr.bf16.mxu0 0
        %630 = vmatpush1.bf16.msra.mxu0 0
        %631 = vmatprep.subr.bf16.mxu0 0
        %632 = vmatpush1.bf16.msra.mxu0 0
        %633 = vmatprep.subr.bf16.mxu0 0
        %634 = vmatpush1.bf16.msra.mxu0 0
        %635 = vmatprep.subr.bf16.mxu0 0
        %636 = vmatpush1.bf16.msra.mxu0 0
        %637 = vmatprep.subr.bf16.mxu0 0
        %638 = vmatpush1.bf16.msra.mxu0 0
        %639 = vmatprep.subr.bf16.mxu0 0
        %640 = vmatpush1.bf16.msra.mxu0 0
        %641 = vmatprep.subr.bf16.mxu0 0
        %642 = vmatpush1.bf16.msra.mxu0 %v625
        %643 = vmatprep.subr.bf16.mxu0 0
        %644 = vmatpush2.bf16.msra.mxu0 0
        %645 = vmatprep.subr.bf16.mxu0 0
        %646 = vmatpush2.bf16.msra.mxu0 0
        %647 = vmatprep.subr.bf16.mxu0 0
        %648 = vmatpush2.bf16.msra.mxu0 0
        %649 = vmatprep.subr.bf16.mxu0 0
        %650 = vmatpush2.bf16.msra.mxu0 0
        %651 = vmatprep.subr.bf16.mxu0 0
        %652 = vmatpush2.bf16.msra.mxu0 0
        %653 = vmatprep.subr.bf16.mxu0 0
        %654 = vmatpush2.bf16.msra.mxu0 0
        %655 = vmatprep.subr.bf16.mxu0 0
        %656 = vmatpush2.bf16.msra.mxu0 0
        %657 = vmatprep.subr.bf16.mxu0 0
        %658 = vmatpush2.bf16.msra.mxu0 0
        %659 = vmatprep.mubr.bf16.mxu0 0
        %660 = vmatmul.mubr.bf16.gmra.mxu0 %v333
        %v661 = vpop.f32.mrf.mxu0
        %v662 = vadd.f32 0.0, %v661
        %v663 = vpop.f32.mrf.mxu0
        %v664 = vpop.f32.mrf.mxu0
        %v665 = vpop.f32.mrf.mxu0
        %666 = vdwg.mxu0
        %667 = vmatprep.subr.bf16.mxu0 0
        %668 = vmatpush1.bf16.msra.mxu0 0
        %669 = vmatprep.subr.bf16.mxu0 0
        %670 = vmatpush1.bf16.msra.mxu0 0
        %671 = vmatprep.subr.bf16.mxu0 0
        %672 = vmatpush1.bf16.msra.mxu0 0
        %673 = vmatprep.subr.bf16.mxu0 0
        %674 = vmatpush1.bf16.msra.mxu0 0
        %675 = vmatprep.subr.bf16.mxu0 0
        %676 = vmatpush1.bf16.msra.mxu0 0
        %677 = vmatprep.subr.bf16.mxu0 0
        %678 = vmatpush1.bf16.msra.mxu0 0
        %679 = vmatprep.subr.bf16.mxu0 0
        %680 = vmatpush1.bf16.msra.mxu0 0
        %681 = vmatprep.subr.bf16.mxu0 0
        %682 = vmatpush1.bf16.msra.mxu0 %v625
        %683 = vmatprep.subr.bf16.mxu0 0
        %684 = vmatpush2.bf16.msra.mxu0 0
        %685 = vmatprep.subr.bf16.mxu0 0
        %686 = vmatpush2.bf16.msra.mxu0 0
        %687 = vmatprep.subr.bf16.mxu0 0
        %688 = vmatpush2.bf16.msra.mxu0 0
        %689 = vmatprep.subr.bf16.mxu0 0
        %690 = vmatpush2.bf16.msra.mxu0 0
        %691 = vmatprep.subr.bf16.mxu0 0
        %692 = vmatpush2.bf16.msra.mxu0 0
        %693 = vmatprep.subr.bf16.mxu0 0
        %694 = vmatpush2.bf16.msra.mxu0 0
        %695 = vmatprep.subr.bf16.mxu0 0
        %696 = vmatpush2.bf16.msra.mxu0 0
        %697 = vmatprep.subr.bf16.mxu0 0
        %698 = vmatpush2.bf16.msra.mxu0 0
        %699 = vmatprep.mubr.bf16.mxu0 0
        %700 = vmatmul.mubr.bf16.gmra.mxu0 %v379
        %v701 = vpop.f32.mrf.mxu0
        %v702 = vadd.f32 0.0, %v701
        %v703 = vpop.f32.mrf.mxu0
        %v704 = vpop.f32.mrf.mxu0
        %v705 = vpop.f32.mrf.mxu0
        %706 = vdwg.mxu0
        %708 = vrot.lane.b32.xlu0 %v702, 123
        %v709 = vpop.permute.xlu0 %708
        %v711 = vsub.f32 %v662, %v709
        %v712 = vpack.c.bf16 %v711, %v711
        %s713 = scalar_lea.vmem %s270, 8
        %714 = vst.msk [vmem:[%s713] sm:$0xf] %vm427, %v712
        %716 = vrot.lane.b32.xlu0 %v662, 123
        %v717 = vpop.permute.xlu0 %716
        %v719 = vadd.f32 %v702, %v717
        %v720 = vpack.c.bf16 %v719, %v719
        %s721 = scalar_lea.vmem %s270, 24
        %722 = vst.msk [vmem:[%s721] sm:$0xf] %vm427, %v720
        %v724 = vsel %vm283, %v282, 0
        %726 = vmatprep.subr.bf16.mxu0 0
        %727 = vmatpush1.bf16.msra.mxu0 0
        %728 = vmatprep.subr.bf16.mxu0 0
        %729 = vmatpush1.bf16.msra.mxu0 0
        %730 = vmatprep.subr.bf16.mxu0 0
        %731 = vmatpush1.bf16.msra.mxu0 0
        %732 = vmatprep.subr.bf16.mxu0 0
        %733 = vmatpush1.bf16.msra.mxu0 0
        %734 = vmatprep.subr.bf16.mxu0 0
        %735 = vmatpush1.bf16.msra.mxu0 0
        %736 = vmatprep.subr.bf16.mxu0 0
        %737 = vmatpush1.bf16.msra.mxu0 0
        %738 = vmatprep.subr.bf16.mxu0 0
        %739 = vmatpush1.bf16.msra.mxu0 0
        %740 = vmatprep.subr.bf16.mxu0 0
        %741 = vmatpush1.bf16.msra.mxu0 %v289
        %742 = vmatprep.subr.bf16.mxu0 0
        %743 = vmatpush2.bf16.msra.mxu0 0
        %744 = vmatprep.subr.bf16.mxu0 0
        %745 = vmatpush2.bf16.msra.mxu0 0
        %746 = vmatprep.subr.bf16.mxu0 0
        %747 = vmatpush2.bf16.msra.mxu0 0
        %748 = vmatprep.subr.bf16.mxu0 0
        %749 = vmatpush2.bf16.msra.mxu0 0
        %750 = vmatprep.subr.bf16.mxu0 0
        %751 = vmatpush2.bf16.msra.mxu0 0
        %752 = vmatprep.subr.bf16.mxu0 0
        %753 = vmatpush2.bf16.msra.mxu0 0
        %754 = vmatprep.subr.bf16.mxu0 0
        %755 = vmatpush2.bf16.msra.mxu0 0
        %756 = vmatprep.subr.bf16.mxu0 0
        %757 = vmatpush2.bf16.msra.mxu0 0
        %758 = vmatprep.mubr.bf16.mxu0 0
        %759 = vmatmul.mubr.bf16.gmra.mxu0 %v724
        %v760 = vpop.f32.mrf.mxu0
        %v761 = vadd.f32 0.0, %v760
        %v762 = vpop.f32.mrf.mxu0
        %v763 = vpop.f32.mrf.mxu0
        %v764 = vpop.f32.mrf.mxu0
        %765 = vdwg.mxu0
        %v766 = vpack.c.bf16 %v761, %v761
        %v768 = vsel %vm287, %v766, 0
        %770 = vmatprep.subr.bf16.mxu0 0
        %771 = vmatpush1.bf16.msra.mxu0 0
        %772 = vmatprep.subr.bf16.mxu0 0
        %773 = vmatpush1.bf16.msra.mxu0 0
        %774 = vmatprep.subr.bf16.mxu0 0
        %775 = vmatpush1.bf16.msra.mxu0 0
        %776 = vmatprep.subr.bf16.mxu0 0
        %777 = vmatpush1.bf16.msra.mxu0 0
        %778 = vmatprep.subr.bf16.mxu0 0
        %779 = vmatpush1.bf16.msra.mxu0 0
        %780 = vmatprep.subr.bf16.mxu0 0
        %781 = vmatpush1.bf16.msra.mxu0 0
        %782 = vmatprep.subr.bf16.mxu0 0
        %783 = vmatpush1.bf16.msra.mxu0 0
        %784 = vmatprep.subr.bf16.mxu0 0
        %785 = vmatpush1.bf16.msra.mxu0 %v768
        %786 = vmatprep.subr.bf16.mxu0 0
        %787 = vmatpush2.bf16.msra.mxu0 0
        %788 = vmatprep.subr.bf16.mxu0 0
        %789 = vmatpush2.bf16.msra.mxu0 0
        %790 = vmatprep.subr.bf16.mxu0 0
        %791 = vmatpush2.bf16.msra.mxu0 0
        %792 = vmatprep.subr.bf16.mxu0 0
        %793 = vmatpush2.bf16.msra.mxu0 0
        %794 = vmatprep.subr.bf16.mxu0 0
        %795 = vmatpush2.bf16.msra.mxu0 0
        %796 = vmatprep.subr.bf16.mxu0 0
        %797 = vmatpush2.bf16.msra.mxu0 0
        %798 = vmatprep.subr.bf16.mxu0 0
        %799 = vmatpush2.bf16.msra.mxu0 0
        %800 = vmatprep.subr.bf16.mxu0 0
        %801 = vmatpush2.bf16.msra.mxu0 0
        %802 = vmatprep.mubr.bf16.mxu0 0
        %803 = vmatmul.mubr.bf16.gmra.mxu0 %v333
        %v804 = vpop.f32.mrf.mxu0
        %v805 = vadd.f32 0.0, %v804
        %v806 = vpop.f32.mrf.mxu0
        %v807 = vpop.f32.mrf.mxu0
        %v808 = vpop.f32.mrf.mxu0
        %809 = vdwg.mxu0
        %810 = vmatprep.subr.bf16.mxu0 0
        %811 = vmatpush1.bf16.msra.mxu0 0
        %812 = vmatprep.subr.bf16.mxu0 0
        %813 = vmatpush1.bf16.msra.mxu0 0
        %814 = vmatprep.subr.bf16.mxu0 0
        %815 = vmatpush1.bf16.msra.mxu0 0
        %816 = vmatprep.subr.bf16.mxu0 0
        %817 = vmatpush1.bf16.msra.mxu0 0
        %818 = vmatprep.subr.bf16.mxu0 0
        %819 = vmatpush1.bf16.msra.mxu0 0
        %820 = vmatprep.subr.bf16.mxu0 0
        %821 = vmatpush1.bf16.msra.mxu0 0
        %822 = vmatprep.subr.bf16.mxu0 0
        %823 = vmatpush1.bf16.msra.mxu0 0
        %824 = vmatprep.subr.bf16.mxu0 0
        %825 = vmatpush1.bf16.msra.mxu0 %v768
        %826 = vmatprep.subr.bf16.mxu0 0
        %827 = vmatpush2.bf16.msra.mxu0 0
        %828 = vmatprep.subr.bf16.mxu0 0
        %829 = vmatpush2.bf16.msra.mxu0 0
        %830 = vmatprep.subr.bf16.mxu0 0
        %831 = vmatpush2.bf16.msra.mxu0 0
        %832 = vmatprep.subr.bf16.mxu0 0
        %833 = vmatpush2.bf16.msra.mxu0 0
        %834 = vmatprep.subr.bf16.mxu0 0
        %835 = vmatpush2.bf16.msra.mxu0 0
        %836 = vmatprep.subr.bf16.mxu0 0
        %837 = vmatpush2.bf16.msra.mxu0 0
        %838 = vmatprep.subr.bf16.mxu0 0
        %839 = vmatpush2.bf16.msra.mxu0 0
        %840 = vmatprep.subr.bf16.mxu0 0
        %841 = vmatpush2.bf16.msra.mxu0 0
        %842 = vmatprep.mubr.bf16.mxu0 0
        %843 = vmatmul.mubr.bf16.gmra.mxu0 %v379
        %v844 = vpop.f32.mrf.mxu0
        %v845 = vadd.f32 0.0, %v844
        %v846 = vpop.f32.mrf.mxu0
        %v847 = vpop.f32.mrf.mxu0
        %v848 = vpop.f32.mrf.mxu0
        %849 = vdwg.mxu0
        %851 = vrot.lane.b32.xlu0 %v845, 123
        %v852 = vpop.permute.xlu0 %851
        %v854 = vsub.f32 %v805, %v852
        %v855 = vpack.c.bf16 %v854, %v854
        %s856 = scalar_lea.vmem %s270, 12
        %857 = vst.msk [vmem:[%s856] sm:$0xf] %vm427, %v855
        %859 = vrot.lane.b32.xlu0 %v805, 123
        %v860 = vpop.permute.xlu0 %859
        %v862 = vadd.f32 %v845, %v860
        %v863 = vpack.c.bf16 %v862, %v862
        %s864 = scalar_lea.vmem %s270, 28
        %865 = vst.msk [vmem:[%s864] sm:$0xf] %vm427, %v863
        %p866 = scmp.lt.s32.totalorder %s19, 1
        %s867 = scalar_select %p866, %s19, 1
        %p868 = scmp.lt.s32.totalorder %s20, 3
        %s869 = scalar_select %p868, %s20, 3
        %s870 = smul.addr %s869, 8
        %s871 = smul.addr %s867, 32
        %s872 = sadd.s32 %s870, %s871
        %s873 = smul.addr %s872, 4
        %s874 = scalar_lea.vmem %s4, %s873
        // Predicated region
        $region75: #{ffc_bn_act.16} parent=69 // pred_check
          %p875 = pneg %p138
        $region76: #{ffc_bn_act.16} parent=69 // pred_check_branch
          %877 = sbr.rel (%p875) target = $region78
        $region77: #{ffc_bn_act.16} parent=69 // pred_region
          _
        $region78: #{ffc_bn_act.16} parent=69 // pred_fallthru
          _
      $region70: #{ffc_bn_act.16} parent=5 // pred_fallthru
        _
      %p878 = scmp.le.s32.totalorder 2, %s10
      // Predicated region
      $region79: #{ffc_bn_act.16} parent=5 // pred_check
        %p879 = pneg %p878
      $region80: #{ffc_bn_act.16} parent=5 // pred_check_branch
        %881 = sbr.rel (%p879) target = $region82
      $region81: #{ffc_bn_act.16} parent=5 // pred_region
        %s882 = ssub.s32 %s10, 2
        // Predicated region
        $region83: #{ffc_bn_act.16} parent=81 // pred_check
          %p883 = pneg %p144
        $region84: #{ffc_bn_act.16} parent=81 // pred_check_branch
          %885 = sbr.rel (%p883) target = $region86
        $region85: #{ffc_bn_act.16} parent=81 // pred_region
          %p886 = scmp.lt.s32.totalorder %s21, 1
          %s887 = scalar_select %p886, %s21, 1
          %p888 = scmp.lt.s32.totalorder %s22, 3
          %s889 = scalar_select %p888, %s22, 3
          %s890 = smul.addr %s889, 8
          %s891 = smul.addr %s887, 32
          %s892 = sadd.s32 %s890, %s891
          %s893 = smul.addr %s892, 4
          %s894 = scalar_lea.vmem %s4, %s893
        $region86: #{ffc_bn_act.16} parent=81 // pred_fallthru
          _
      $region82: #{ffc_bn_act.16} parent=5 // pred_fallthru
        _
    $region6: #{ffc_bn_act.16} parent=1 // loop_footer
      %s14 = sadd.s32 1, %s10
    $region7: #{ffc_bn_act.16} parent=1 // loop_footer_branch
      %9 = sbr.rel target = $region3
    $region8: #{ffc_bn_act.16} parent=1 // loop_exit
      _

// kernel: ffc_bn_act.19
$region0: #{ffc_bn_act.19}
  #allocation0 [shape = 'u32[]', space=smem, size = 0x4, offset = 0x4, fixed_abs, tag = 'smem constant byte address 0x4 - core index']
  #allocation1 [shape = 'u32[144,128]{1,0:T(1,128)}', space=vmem, size = 0x12000, scoped, tag = 'internal scratch']
  %s0 = inlined_call_operand.vmem [shape: f32[2,4,4,4,4], index: 0, kind: input, shape index: {}]
  %s1 = inlined_call_operand.vmem [shape: bf16[4,6], index: 1, kind: input, shape index: {}]
  %s2 = inlined_call_operand.vmem [shape: bf16[4,4], index: 2, kind: input, shape index: {}]
  %s3 = inlined_call_operand.vmem [shape: bf16[4,4], index: 3, kind: input, shape index: {}]
  %s4 = inlined_call_operand.vmem [shape: bf16[2,4,8,4,3], index: 4, kind: output, shape index: {}]
  %s5 = sld [smem:[#allocation0]]
  $region90: #{ffc_bn_act.19} parent=0
    _
  %s7 = ssub.s32 1, %s5
  %s8 = scalar_select 0, %s7, %s5
  $region1: #{ffc_bn_act.19} parent=0
    #allocation2 [shape = 'u8[16384]{0}', space=vmem, size = 0x4000, scoped, tag = 'input window, operand 0']
    loop: start=0, step=1, limit=10
    $region2: #{ffc_bn_act.19} parent=1 // loop_pre_header
      _
    $region3: #{ffc_bn_act.19} parent=1 // loop_header
      %s10 = sphi 0, %s14
      %p11 = scmp.ge.s32.totalorder %s10, 10
      %s17 = sphi 0, %s29
      %s18 = sphi 0, %s25
      %s19 = sphi 0, %s17
      %s20 = sphi 0, %s18
      %s21 = sphi 0, %s19
      %s22 = sphi 0, %s20
      %s34 = sphi 0, %s36
      %s37 = sphi 0, %s34
      %s38 = sphi 0, %s37
      %s54 = sphi 0, %s38
      %s58 = sphi 0, %s58
      %s60 = sphi 0, %s58
      %s61 = sphi 0, %s60
      %s75 = sphi 0, %s61
      %s79 = sphi 0, %s79
      %s81 = sphi 0, %s79
      %s82 = sphi 0, %s81
      %s96 = sphi 0, %s82
      %s100 = sphi 0, %s100
      %s102 = sphi 0, %s100
      %s103 = sphi 0, %s102
      %s117 = sphi 0, %s103
      %s125 = sphi 0, %s127
      %s128 = sphi 0, %s125
      %s129 = sphi 0, %s128
      %s145 = sphi 0, %s129
    $region4: #{ffc_bn_act.19} parent=1 // loop_header_branch
      %13 = sbr.rel (%p11) target = $region8
    $region5: #{ffc_bn_act.19} parent=1 // loop_body
      %s15 = ssub.s32 %s10, 1
      %s16 = ssub.s32 %s10, 2
      %s23 = sadd.s32 1, %s18
      %p24 = scmp.ge.s32.totalorder %s23, 4
      %s25 = scalar_select %p24, 0, %s23
      %s26 = sadd.s32 1, %s17
      %s27 = scalar_select %p24, %s26, %s17
      %p28 = scmp.ge.s32.totalorder %s27, 2
      %s29 = scalar_select %p28, 0, %s27
      %s30 = ssub.s32 %s17, %s29
      %s31 = ssub.s32 %s18, %s25
      %s32 = sor.u32 %s30, %s31
      %p33 = scmp.eq.s32.totalorder %s32, 0
      %s35 = sadd.s32 %s34, 1
      %s36 = scalar_select %p33, %s34, %s35
      %p39 = pneg %p33
      %p40 = scmp.eq.s32.totalorder %s10, 7
      %p41 = por %p39, %p40
      %p42 = scmp.ne.s32.totalorder %s34, %s37
      %p43 = scmp.eq.s32.totalorder %s10, 0
      %p44 = por %p42, %p43
      %p45 = scmp.ne.s32.totalorder %s34, %s37
      %p46 = scmp.eq.s32.totalorder %s15, 7
      %p47 = por %p45, %p46
      %p48 = scmp.ne.s32.totalorder %s37, %s38
      %p49 = scmp.eq.s32.totalorder %s15, 0
      %p50 = por %p48, %p49
      %p51 = scmp.ne.s32.totalorder %s37, %s38
      %p52 = scmp.eq.s32.totalorder %s16, 7
      %p53 = por %p51, %p52
      %p55 = scmp.ne.s32.totalorder %s38, %s54
      %p56 = scmp.eq.s32.totalorder %s16, 0
      %p57 = por %p55, %p56
      %s59 = sadd.s32 %s58, 1
      %p62 = scmp.eq.s32.totalorder %s10, 7
      %p63 = scmp.ne.s32.totalorder %s58, %s60
      %p64 = scmp.eq.s32.totalorder %s10, 0
      %p65 = por %p63, %p64
      %p66 = scmp.ne.s32.totalorder %s58, %s60
      %p67 = scmp.eq.s32.totalorder %s15, 7
      %p68 = por %p66, %p67
      %p69 = scmp.ne.s32.totalorder %s60, %s61
      %p70 = scmp.eq.s32.totalorder %s15, 0
      %p71 = por %p69, %p70
      %p72 = scmp.ne.s32.totalorder %s60, %s61
      %p73 = scmp.eq.s32.totalorder %s16, 7
      %p74 = por %p72, %p73
      %p76 = scmp.ne.s32.totalorder %s61, %s75
      %p77 = scmp.eq.s32.totalorder %s16, 0
      %p78 = por %p76, %p77
      %s80 = sadd.s32 %s79, 1
      %p83 = scmp.eq.s32.totalorder %s10, 7
      %p84 = scmp.ne.s32.totalorder %s79, %s81
      %p85 = scmp.eq.s32.totalorder %s10, 0
      %p86 = por %p84, %p85
      %p87 = scmp.ne.s32.totalorder %s79, %s81
      %p88 = scmp.eq.s32.totalorder %s15, 7
      %p89 = por %p87, %p88
      %p90 = scmp.ne.s32.totalorder %s81, %s82
      %p91 = scmp.eq.s32.totalorder %s15, 0
      %p92 = por %p90, %p91
      %p93 = scmp.ne.s32.totalorder %s81, %s82
      %p94 = scmp.eq.s32.totalorder %s16, 7
      %p95 = por %p93, %p94
      %p97 = scmp.ne.s32.totalorder %s82, %s96
      %p98 = scmp.eq.s32.totalorder %s16, 0
      %p99 = por %p97, %p98
      %s101 = sadd.s32 %s100, 1
      %p104 = scmp.eq.s32.totalorder %s10, 7
      %p105 = scmp.ne.s32.totalorder %s100, %s102
      %p106 = scmp.eq.s32.totalorder %s10, 0
      %p107 = por %p105, %p106
      %p108 = scmp.ne.s32.totalorder %s100, %s102
      %p109 = scmp.eq.s32.totalorder %s15, 7
      %p110 = por %p108, %p109
      %p111 = scmp.ne.s32.totalorder %s102, %s103
      %p112 = scmp.eq.s32.totalorder %s15, 0
      %p113 = por %p111, %p112
      %p114 = scmp.ne.s32.totalorder %s102, %s103
      %p115 = scmp.eq.s32.totalorder %s16, 7
      %p116 = por %p114, %p115
      %p118 = scmp.ne.s32.totalorder %s103, %s117
      %p119 = scmp.eq.s32.totalorder %s16, 0
      %p120 = por %p118, %p119
      %s121 = ssub.s32 %s17, %s29
      %s122 = ssub.s32 %s18, %s25
      %s123 = sor.u32 %s121, %s122
      %p124 = scmp.eq.s32.totalorder %s123, 0
      %s126 = sadd.s32 %s125, 1
      %s127 = scalar_select %p124, %s125, %s126
      %p130 = pneg %p124
      %p131 = scmp.eq.s32.totalorder %s10, 7
      %p132 = por %p130, %p131
      %p133 = scmp.ne.s32.totalorder %s125, %s128
      %p134 = scmp.eq.s32.totalorder %s10, 0
      %p135 = por %p133, %p134
      %p136 = scmp.ne.s32.totalorder %s125, %s128
      %p137 = scmp.eq.s32.totalorder %s15, 7
      %p138 = por %p136, %p137
      %p139 = scmp.ne.s32.totalorder %s128, %s129
      %p140 = scmp.eq.s32.totalorder %s15, 0
      %p141 = por %p139, %p140
      %p142 = scmp.ne.s32.totalorder %s128, %s129
      %p143 = scmp.eq.s32.totalorder %s16, 7
      %p144 = por %p142, %p143
      %p146 = scmp.ne.s32.totalorder %s129, %s145
      %p147 = scmp.eq.s32.totalorder %s16, 0
      %p148 = por %p146, %p147
      %p149 = scmp.le.s32.totalorder 1, %s10
      %p150 = scmp.lt.s32.totalorder %s10, 9
      %p151 = pnand %p149, %p150
      %p152 = pneg %p151
      // Predicated region
      $region9: #{ffc_bn_act.19} parent=5 // pred_check
        _
      $region10: #{ffc_bn_act.19} parent=5 // pred_check_branch
        %154 = sbr.rel (%p151) target = $region12
      $region11: #{ffc_bn_act.19} parent=5 // pred_region
        %s155 = ssub.s32 %s10, 1
        // Predicated region
        $region13: #{ffc_bn_act.19} parent=11 // pred_check
          %p156 = pneg %p71
        $region14: #{ffc_bn_act.19} parent=11 // pred_check_branch
          %158 = sbr.rel (%p156) target = $region16
        $region15: #{ffc_bn_act.19} parent=11 // pred_region
          _
        $region16: #{ffc_bn_act.19} parent=11 // pred_fallthru
          _
        // Predicated region
        $region17: #{ffc_bn_act.19} parent=11 // pred_check
          %p159 = pneg %p92
        $region18: #{ffc_bn_act.19} parent=11 // pred_check_branch
          %161 = sbr.rel (%p159) target = $region20
        $region19: #{ffc_bn_act.19} parent=11 // pred_region
          _
        $region20: #{ffc_bn_act.19} parent=11 // pred_fallthru
          _
        // Predicated region
        $region21: #{ffc_bn_act.19} parent=11 // pred_check
          %p162 = pneg %p113
        $region22: #{ffc_bn_act.19} parent=11 // pred_check_branch
          %164 = sbr.rel (%p162) target = $region24
        $region23: #{ffc_bn_act.19} parent=11 // pred_region
          _
        $region24: #{ffc_bn_act.19} parent=11 // pred_fallthru
          _
      $region12: #{ffc_bn_act.19} parent=5 // pred_fallthru
        _
      %p165 = scmp.lt.s32.totalorder %s10, 8
      // Predicated region
      $region25: #{ffc_bn_act.19} parent=5 // pred_check
        %p166 = pneg %p165
      $region26: #{ffc_bn_act.19} parent=5 // pred_check_branch
        %168 = sbr.rel (%p166) target = $region28
      $region27: #{ffc_bn_act.19} parent=5 // pred_region
        // Predicated region
        $region29: #{ffc_bn_act.19} parent=27 // pred_check
          %p169 = pneg %p44
        $region30: #{ffc_bn_act.19} parent=27 // pred_check_branch
          %171 = sbr.rel (%p169) target = $region32
        $region31: #{ffc_bn_act.19} parent=27 // pred_region
          %s172 = sand.u32 %s34, 1
          %s173 = sand.u32 %s34, 1
          %s174 = smul.addr %s173, 16
          %s175 = scalar_lea.vmem [#allocation2], %s174
          %s176 = smul.addr %s17, 16
          %s177 = sadd.s32 %s18, %s176
          %s178 = smul.addr %s177, 4
          %s179 = scalar_lea.vmem %s0, %s178
          // Predicated region
          $region33: #{ffc_bn_act.19} parent=31 // pred_check
            _
          $region34: #{ffc_bn_act.19} parent=31 // pred_check_branch
            %181 = sbr.rel (0) target = $region36
          $region35: #{ffc_bn_act.19} parent=31 // pred_region
            // Predicated region
            $region37: #{ffc_bn_act.19} parent=35 // pred_check
              _
            $region38: #{ffc_bn_act.19} parent=35 // pred_check_branch
              %183 = sbr.rel target = $region40
            $region39: #{ffc_bn_act.19} parent=35 // pred_region
              // Predicated region
              $region52: #{ffc_bn_act.19} parent=39 // pred_check
                _
              $region53: #{ffc_bn_act.19} parent=39 // pred_check_branch
                %205 = sbr.rel (0) target = $region55
              $region54: #{ffc_bn_act.19} parent=39 // pred_region
                loop: start=0, step=1, limit=1
                $region56: #{ffc_bn_act.19} parent=54 // loop_pre_header
                  _
                $region57: #{ffc_bn_act.19} parent=54 // loop_header
                  %s207 = sphi 0, %s211
                  %p208 = scmp.ge.s32.totalorder %s207, 1
                  %s212 = sphi %s179, %s179
                  %s213 = sphi %s175, %s175
                $region58: #{ffc_bn_act.19} parent=54 // loop_header_branch
                  %210 = sbr.rel (%p208) target = $region62
                $region59: #{ffc_bn_act.19} parent=54 // loop_body
                  _
                $region60: #{ffc_bn_act.19} parent=54 // loop_footer
                  %s211 = sadd.s32 1, %s207
                $region61: #{ffc_bn_act.19} parent=54 // loop_footer_branch
                  %206 = sbr.rel target = $region57
                $region62: #{ffc_bn_act.19} parent=54 // loop_exit
                  _
                %s215 = ssub.s32 16, 1
                loop: start=0, step=1, limit=1
                $region63: #{ffc_bn_act.19} parent=54 // loop_pre_header
                  _
                $region64: #{ffc_bn_act.19} parent=54 // loop_header
                  %s217 = sphi 0, %s221
                  %p218 = scmp.ge.s32.totalorder %s217, 1
                  %s222 = sphi %s179, %s179
                  %s223 = sphi %s175, %s175
                $region65: #{ffc_bn_act.19} parent=54 // loop_header_branch
                  %220 = sbr.rel (%p218) target = $region69
                $region66: #{ffc_bn_act.19} parent=54 // loop_body
                  %v224 = vld [vmem:[%s222] sm:%s215]
                  %225 = vst [vmem:[%s223] sm:%s215] %v224
                  %v226 = vld [vmem:[%s222 + $0x10] sm:%s215]
                  %227 = vst [vmem:[%s223 + $0x4] sm:%s215] %v226
                  %v228 = vld [vmem:[%s222 + $0x20] sm:%s215]
                  %229 = vst [vmem:[%s223 + $0x8] sm:%s215] %v228
                  %v230 = vld [vmem:[%s222 + $0x30] sm:%s215]
                  %231 = vst [vmem:[%s223 + $0xc] sm:%s215] %v230
                $region67: #{ffc_bn_act.19} parent=54 // loop_footer
                  %s221 = sadd.s32 1, %s217
                $region68: #{ffc_bn_act.19} parent=54 // loop_footer_branch
                  %216 = sbr.rel target = $region64
                $region69: #{ffc_bn_act.19} parent=54 // loop_exit
                  _
              $region55: #{ffc_bn_act.19} parent=39 // pred_fallthru
                _
            $region40: #{ffc_bn_act.19} parent=35 // pred_fallthru
              _
            // Predicated region
            $region41: #{ffc_bn_act.19} parent=35 // pred_check
              _
            $region42: #{ffc_bn_act.19} parent=35 // pred_check_branch
              %185 = sbr.rel (0) target = $region44
            $region43: #{ffc_bn_act.19} parent=35 // pred_region
              %s187 = ssub.s32 16, 1
              loop: start=0, step=1, limit=1
              $region45: #{ffc_bn_act.19} parent=43 // loop_pre_header
                _
              $region46: #{ffc_bn_act.19} parent=43 // loop_header
                %s189 = sphi 0, %s193
                %p190 = scmp.ge.s32.totalorder %s189, 1
                %s194 = sphi %s179, %s179
                %s195 = sphi %s175, %s175
              $region47: #{ffc_bn_act.19} parent=43 // loop_header_branch
                %192 = sbr.rel (%p190) target = $region51
              $region48: #{ffc_bn_act.19} parent=43 // loop_body
                %v196 = vld [vmem:[%s194] sm:%s187]
                %197 = vst [vmem:[%s195] sm:%s187] %v196
                %v198 = vld [vmem:[%s194 + $0x10] sm:%s187]
                %199 = vst [vmem:[%s195 + $0x4] sm:%s187] %v198
                %v200 = vld [vmem:[%s194 + $0x20] sm:%s187]
                %201 = vst [vmem:[%s195 + $0x8] sm:%s187] %v200
                %v202 = vld [vmem:[%s194 + $0x30] sm:%s187]
                %203 = vst [vmem:[%s195 + $0xc] sm:%s187] %v202
              $region49: #{ffc_bn_act.19} parent=43 // loop_footer
                %s193 = sadd.s32 1, %s189
              $region50: #{ffc_bn_act.19} parent=43 // loop_footer_branch
                %188 = sbr.rel target = $region46
              $region51: #{ffc_bn_act.19} parent=43 // loop_exit
                _
            $region44: #{ffc_bn_act.19} parent=35 // pred_fallthru
              _
          $region36: #{ffc_bn_act.19} parent=31 // pred_fallthru
            _
          %232 = vnop
        $region32: #{ffc_bn_act.19} parent=27 // pred_fallthru
          _
      $region28: #{ffc_bn_act.19} parent=5 // pred_fallthru
        _
      %p233 = scmp.le.s32.totalorder 1, %s10
      %p234 = scmp.lt.s32.totalorder %s10, 9
      %p235 = pnand %p233, %p234
      %p236 = pneg %p235
      // Predicated region
      $region70: #{ffc_bn_act.19} parent=5 // pred_check
        _
      $region71: #{ffc_bn_act.19} parent=5 // pred_check_branch
        %238 = sbr.rel (%p235) target = $region73
      $region72: #{ffc_bn_act.19} parent=5 // pred_region
        %s239 = ssub.s32 %s10, 1
        %s240 = sand.u32 %s37, 1
        %s241 = sand.u32 %s37, 1
        %s242 = smul.addr %s241, 16
        %s243 = scalar_lea.vmem [#allocation2], %s242
        // Predicated region
        $region74: #{ffc_bn_act.19} parent=72 // pred_check
          %p244 = pneg %p50
        $region75: #{ffc_bn_act.19} parent=72 // pred_check_branch
          %246 = sbr.rel (%p244) target = $region77
        $region76: #{ffc_bn_act.19} parent=72 // pred_region
          _
        $region77: #{ffc_bn_act.19} parent=72 // pred_fallthru
          _
        %s247 = sand.u32 %s37, 1
        %s248 = sand.u32 %s37, 1
        %s249 = smul.addr %s248, 16
        %s250 = scalar_lea.vmem [#allocation2], %s249
        %p251 = pneg %p50
        %p252 = pneg %p47
        %p253 = pneg %p71
        %p254 = pneg %p68
        %p255 = pneg %p92
        %p256 = pneg %p89
        %p257 = pneg %p113
        %p258 = pneg %p110
        %p259 = pneg %p141
        %p260 = pneg %p138
        %p261 = scmp.lt.s32.totalorder %s19, 1
        %s262 = scalar_select %p261, %s19, 1
        %p263 = scmp.lt.s32.totalorder %s20, 3
        %s264 = scalar_select %p263, %s20, 3
        %s265 = smul.addr %s264, 8
        %s266 = smul.addr %s262, 32
        %s267 = sadd.s32 %s265, %s266
        %s268 = smul.addr %s267, 2
        %s269 = scalar_lea.vmem %s4, %s268
        %p270 = scmp.lt.s32.totalorder %s19, 1
        %s271 = scalar_select %p270, %s19, 1
        %p272 = scmp.lt.s32.totalorder %s20, 3
        %s273 = scalar_select %p272, %s20, 3
        %s274 = smul.addr %s273, 8
        %s275 = smul.addr %s271, 32
        %s276 = sadd.s32 %s274, %s275
        %s277 = smul.addr %s276, 2
        %s278 = scalar_lea.vmem %s4, %s277
        %v280 = vld [vmem:[%s1] sm:$0x3]
        %v281 = vld [vmem:[%s2] sm:$0x3]
        %v282 = vld [vmem:[%s3] sm:$0x3]
        %v283 = vld [vmem:[%s243] sm:$0xf]
        %v284 = vld [vmem:[%s243 + $0x4] sm:$0xf]
        %v285 = vld [vmem:[%s243 + $0x8] sm:$0xf]
        %v286 = vld [vmem:[%s243 + $0xc] sm:$0xf]
        %v287 = vpack.c.bf16 %v283, %v283
        %v288 = vpack.c.bf16 %v284, %v284
        %v289 = vpack.c.bf16 %v285, %v285
        %v290 = vpack.c.bf16 %v286, %v286
        %vm291 = vcmask 31744
        %v293 = vsel %vm291, %v287, 0
        %vm295 = vcmask 1041408
        %v297 = vsel %vm295, %v280, 0
        %299 = vmatprep.subr.bf16.mxu0 0
        %300 = vmatpush1.bf16.msra.mxu0 0
        %301 = vmatprep.subr.bf16.mxu0 0
        %302 = vmatpush1.bf16.msra.mxu0 0
        %303 = vmatprep.subr.bf16.mxu0 0
        %304 = vmatpush1.bf16.msra.mxu0 0
        %305 = vmatprep.subr.bf16.mxu0 0
        %306 = vmatpush1.bf16.msra.mxu0 0
        %307 = vmatprep.subr.bf16.mxu0 0
        %308 = vmatpush1.bf16.msra.mxu0 0
        %309 = vmatprep.subr.bf16.mxu0 0
        %310 = vmatpush1.bf16.msra.mxu0 0
        %311 = vmatprep.subr.bf16.mxu0 0
        %312 = vmatpush1.bf16.msra.mxu0 0
        %313 = vmatprep.subr.bf16.mxu0 0
        %314 = vmatpush1.bf16.msra.mxu0 %v297
        %315 = vmatprep.subr.bf16.mxu0 0
        %316 = vmatpush2.bf16.msra.mxu0 0
        %317 = vmatprep.subr.bf16.mxu0 0
        %318 = vmatpush2.bf16.msra.mxu0 0
        %319 = vmatprep.subr.bf16.mxu0 0
        %320 = vmatpush2.bf16.msra.mxu0 0
        %321 = vmatprep.subr.bf16.mxu0 0
        %322 = vmatpush2.bf16.msra.mxu0 0
        %323 = vmatprep.subr.bf16.mxu0 0
        %324 = vmatpush2.bf16.msra.mxu0 0
        %325 = vmatprep.subr.bf16.mxu0 0
        %326 = vmatpush2.bf16.msra.mxu0 0
        %327 = vmatprep.subr.bf16.mxu0 0
        %328 = vmatpush2.bf16.msra.mxu0 0
        %329 = vmatprep.subr.bf16.mxu0 0
        %330 = vmatpush2.bf16.msra.mxu0 0
        %331 = vmatprep.mubr.bf16.mxu0 0
        %332 = vmatmul.mubr.bf16.gmra.mxu0 %v293
        %v333 = vpop.f32.mrf.mxu0
        %v334 = vadd.f32 0.0, %v333
        %v335 = vpop.f32.mrf.mxu0
        %v336 = vpop.f32.mrf.mxu0
        %v337 = vpop.f32.mrf.mxu0
        %338 = vdwg.mxu0
        %v339 = vpack.c.bf16 %v334, %v334
        %v341 = vsel %vm291, %v281, 0
        %v344 = vsel %vm295, %v339, 0
        %346 = vmatprep.subr.bf16.mxu0 0
        %347 = vmatpush1.bf16.msra.mxu0 0
        %348 = vmatprep.subr.bf16.mxu0 0
        %349 = vmatpush1.bf16.msra.mxu0 0
        %350 = vmatprep.subr.bf16.mxu0 0
        %351 = vmatpush1.bf16.msra.mxu0 0
        %352 = vmatprep.subr.bf16.mxu0 0
        %353 = vmatpush1.bf16.msra.mxu0 0
        %354 = vmatprep.subr.bf16.mxu0 0
        %355 = vmatpush1.bf16.msra.mxu0 0
        %356 = vmatprep.subr.bf16.mxu0 0
        %357 = vmatpush1.bf16.msra.mxu0 0
        %358 = vmatprep.subr.bf16.mxu0 0
        %359 = vmatpush1.bf16.msra.mxu0 0
        %360 = vmatprep.subr.bf16.mxu0 0
        %361 = vmatpush1.bf16.msra.mxu0 %v344
        %362 = vmatprep.subr.bf16.mxu0 0
        %363 = vmatpush2.bf16.msra.mxu0 0
        %364 = vmatprep.subr.bf16.mxu0 0
        %365 = vmatpush2.bf16.msra.mxu0 0
        %366 = vmatprep.subr.bf16.mxu0 0
        %367 = vmatpush2.bf16.msra.mxu0 0
        %368 = vmatprep.subr.bf16.mxu0 0
        %369 = vmatpush2.bf16.msra.mxu0 0
        %370 = vmatprep.subr.bf16.mxu0 0
        %371 = vmatpush2.bf16.msra.mxu0 0
        %372 = vmatprep.subr.bf16.mxu0 0
        %373 = vmatpush2.bf16.msra.mxu0 0
        %374 = vmatprep.subr.bf16.mxu0 0
        %375 = vmatpush2.bf16.msra.mxu0 0
        %376 = vmatprep.subr.bf16.mxu0 0
        %377 = vmatpush2.bf16.msra.mxu0 0
        %378 = vmatprep.mubr.bf16.mxu0 0
        %379 = vmatmul.mubr.bf16.gmra.mxu0 %v341
        %v380 = vpop.f32.mrf.mxu0
        %v381 = vadd.f32 0.0, %v380
        %v382 = vpop.f32.mrf.mxu0
        %v383 = vpop.f32.mrf.mxu0
        %v384 = vpop.f32.mrf.mxu0
        %385 = vdwg.mxu0
        %v387 = vsel %vm291, %v282, 0
        %389 = vmatprep.subr.bf16.mxu0 0
        %390 = vmatpush1.bf16.msra.mxu0 0
        %391 = vmatprep.subr.bf16.mxu0 0
        %392 = vmatpush1.bf16.msra.mxu0 0
        %393 = vmatprep.subr.bf16.mxu0 0
        %394 = vmatpush1.bf16.msra.mxu0 0
        %395 = vmatprep.subr.bf16.mxu0 0
        %396 = vmatpush1.bf16.msra.mxu0 0
        %397 = vmatprep.subr.bf16.mxu0 0
        %398 = vmatpush1.bf16.msra.mxu0 0
        %399 = vmatprep.subr.bf16.mxu0 0
        %400 = vmatpush1.bf16.msra.mxu0 0
        %401 = vmatprep.subr.bf16.mxu0 0
        %402 = vmatpush1.bf16.msra.mxu0 0
        %403 = vmatprep.subr.bf16.mxu0 0
        %404 = vmatpush1.bf16.msra.mxu0 %v344
        %405 = vmatprep.subr.bf16.mxu0 0
        %406 = vmatpush2.bf16.msra.mxu0 0
        %407 = vmatprep.subr.bf16.mxu0 0
        %408 = vmatpush2.bf16.msra.mxu0 0
        %409 = vmatprep.subr.bf16.mxu0 0
        %410 = vmatpush2.bf16.msra.mxu0 0
        %411 = vmatprep.subr.bf16.mxu0 0
        %412 = vmatpush2.bf16.msra.mxu0 0
        %413 = vmatprep.subr.bf16.mxu0 0
        %414 = vmatpush2.bf16.msra.mxu0 0
        %415 = vmatprep.subr.bf16.mxu0 0
        %416 = vmatpush2.bf16.msra.mxu0 0
        %417 = vmatprep.subr.bf16.mxu0 0
        %418 = vmatpush2.bf16.msra.mxu0 0
        %419 = vmatprep.subr.bf16.mxu0 0
        %420 = vmatpush2.bf16.msra.mxu0 0
        %421 = vmatprep.mubr.bf16.mxu0 0
        %422 = vmatmul.mubr.bf16.gmra.mxu0 %v387
        %v423 = vpop.f32.mrf.mxu0
        %v424 = vadd.f32 0.0, %v423
        %v425 = vpop.f32.mrf.mxu0
        %v426 = vpop.f32.mrf.mxu0
        %v427 = vpop.f32.mrf.mxu0
        %428 = vdwg.mxu0
        %430 = vrot.lane.b32.xlu0 %v424, 125
        %v431 = vpop.permute.xlu0 %430
        %v433 = vsub.f32 %v381, %v431
        %v434 = vpack.c.bf16 %v433, %v433
        %vm435 = vcmask 17408
        %436 = vst.msk [vmem:[%s278] sm:$0x3] %vm435, %v434
        %438 = vrot.lane.b32.xlu0 %v381, 125
        %v439 = vpop.permute.xlu0 %438
        %v441 = vadd.f32 %v424, %v439
        %v442 = vpack.c.bf16 %v441, %v441
        %s443 = scalar_lea.vmem %s278, 8
        %444 = vst.msk [vmem:[%s443] sm:$0x3] %vm435, %v442
        %v446 = vsel %vm291, %v288, 0
        %448 = vmatprep.subr.bf16.mxu0 0
        %449 = vmatpush1.bf16.msra.mxu0 0
        %450 = vmatprep.subr.bf16.mxu0 0
        %451 = vmatpush1.bf16.msra.mxu0 0
        %452 = vmatprep.subr.bf16.mxu0 0
        %453 = vmatpush1.bf16.msra.mxu0 0
        %454 = vmatprep.subr.bf16.mxu0 0
        %455 = vmatpush1.bf16.msra.mxu0 0
        %456 = vmatprep.subr.bf16.mxu0 0
        %457 = vmatpush1.bf16.msra.mxu0 0
        %458 = vmatprep.subr.bf16.mxu0 0
        %459 = vmatpush1.bf16.msra.mxu0 0
        %460 = vmatprep.subr.bf16.mxu0 0
        %461 = vmatpush1.bf16.msra.mxu0 0
        %462 = vmatprep.subr.bf16.mxu0 0
        %463 = vmatpush1.bf16.msra.mxu0 %v297
        %464 = vmatprep.subr.bf16.mxu0 0
        %465 = vmatpush2.bf16.msra.mxu0 0
        %466 = vmatprep.subr.bf16.mxu0 0
        %467 = vmatpush2.bf16.msra.mxu0 0
        %468 = vmatprep.subr.bf16.mxu0 0
        %469 = vmatpush2.bf16.msra.mxu0 0
        %470 = vmatprep.subr.bf16.mxu0 0
        %471 = vmatpush2.bf16.msra.mxu0 0
        %472 = vmatprep.subr.bf16.mxu0 0
        %473 = vmatpush2.bf16.msra.mxu0 0
        %474 = vmatprep.subr.bf16.mxu0 0
        %475 = vmatpush2.bf16.msra.mxu0 0
        %476 = vmatprep.subr.bf16.mxu0 0
        %477 = vmatpush2.bf16.msra.mxu0 0
        %478 = vmatprep.subr.bf16.mxu0 0
        %479 = vmatpush2.bf16.msra.mxu0 0
        %480 = vmatprep.mubr.bf16.mxu0 0
        %481 = vmatmul.mubr.bf16.gmra.mxu0 %v446
        %v482 = vpop.f32.mrf.mxu0
        %v483 = vadd.f32 0.0, %v482
        %v484 = vpop.f32.mrf.mxu0
        %v485 = vpop.f32.mrf.mxu0
        %v486 = vpop.f32.mrf.mxu0
        %487 = vdwg.mxu0
        %v488 = vpack.c.bf16 %v483, %v483
        %v490 = vsel %vm295, %v488, 0
        %492 = vmatprep.subr.bf16.mxu0 0
        %493 = vmatpush1.bf16.msra.mxu0 0
        %494 = vmatprep.subr.bf16.mxu0 0
        %495 = vmatpush1.bf16.msra.mxu0 0
        %496 = vmatprep.subr.bf16.mxu0 0
        %497 = vmatpush1.bf16.msra.mxu0 0
        %498 = vmatprep.subr.bf16.mxu0 0
        %499 = vmatpush1.bf16.msra.mxu0 0
        %500 = vmatprep.subr.bf16.mxu0 0
        %501 = vmatpush1.bf16.msra.mxu0 0
        %502 = vmatprep.subr.bf16.mxu0 0
        %503 = vmatpush1.bf16.msra.mxu0 0
        %504 = vmatprep.subr.bf16.mxu0 0
        %505 = vmatpush1.bf16.msra.mxu0 0
        %506 = vmatprep.subr.bf16.mxu0 0
        %507 = vmatpush1.bf16.msra.mxu0 %v490
        %508 = vmatprep.subr.bf16.mxu0 0
        %509 = vmatpush2.bf16.msra.mxu0 0
        %510 = vmatprep.subr.bf16.mxu0 0
        %511 = vmatpush2.bf16.msra.mxu0 0
        %512 = vmatprep.subr.bf16.mxu0 0
        %513 = vmatpush2.bf16.msra.mxu0 0
        %514 = vmatprep.subr.bf16.mxu0 0
        %515 = vmatpush2.bf16.msra.mxu0 0
        %516 = vmatprep.subr.bf16.mxu0 0
        %517 = vmatpush2.bf16.msra.mxu0 0
        %518 = vmatprep.subr.bf16.mxu0 0
        %519 = vmatpush2.bf16.msra.mxu0 0
        %520 = vmatprep.subr.bf16.mxu0 0
        %521 = vmatpush2.bf16.msra.mxu0 0
        %522 = vmatprep.subr.bf16.mxu0 0
        %523 = vmatpush2.bf16.msra.mxu0 0
        %524 = vmatprep.mubr.bf16.mxu0 0
        %525 = vmatmul.mubr.bf16.gmra.mxu0 %v341
        %v526 = vpop.f32.mrf.mxu0
        %v527 = vadd.f32 0.0, %v526
        %v528 = vpop.f32.mrf.mxu0
        %v529 = vpop.f32.mrf.mxu0
        %v530 = vpop.f32.mrf.mxu0
        %531 = vdwg.mxu0
        %532 = vmatprep.subr.bf16.mxu0 0
        %533 = vmatpush1.bf16.msra.mxu0 0
        %534 = vmatprep.subr.bf16.mxu0 0
        %535 = vmatpush1.bf16.msra.mxu0 0
        %536 = vmatprep.subr.bf16.mxu0 0
        %537 = vmatpush1.bf16.msra.mxu0 0
        %538 = vmatprep.subr.bf16.mxu0 0
        %539 = vmatpush1.bf16.msra.mxu0 0
        %540 = vmatprep.subr.bf16.mxu0 0
        %541 = vmatpush1.bf16.msra.mxu0 0
        %542 = vmatprep.subr.bf16.mxu0 0
        %543 = vmatpush1.bf16.msra.mxu0 0
        %544 = vmatprep.subr.bf16.mxu0 0
        %545 = vmatpush1.bf16.msra.mxu0 0
        %546 = vmatprep.subr.bf16.mxu0 0
        %547 = vmatpush1.bf16.msra.mxu0 %v490
        %548 = vmatprep.subr.bf16.mxu0 0
        %549 = vmatpush2.bf16.msra.mxu0 0
        %550 = vmatprep.subr.bf16.mxu0 0
        %551 = vmatpush2.bf16.msra.mxu0 0
        %552 = vmatprep.subr.bf16.mxu0 0
        %553 = vmatpush2.bf16.msra.mxu0 0
        %554 = vmatprep.subr.bf16.mxu0 0
        %555 = vmatpush2.bf16.msra.mxu0 0
        %556 = vmatprep.subr.bf16.mxu0 0
        %557 = vmatpush2.bf16.msra.mxu0 0
        %558 = vmatprep.subr.bf16.mxu0 0
        %559 = vmatpush2.bf16.msra.mxu0 0
        %560 = vmatprep.subr.bf16.mxu0 0
        %561 = vmatpush2.bf16.msra.mxu0 0
        %562 = vmatprep.subr.bf16.mxu0 0
        %563 = vmatpush2.bf16.msra.mxu0 0
        %564 = vmatprep.mubr.bf16.mxu0 0
        %565 = vmatmul.mubr.bf16.gmra.mxu0 %v387
        %v566 = vpop.f32.mrf.mxu0
        %v567 = vadd.f32 0.0, %v566
        %v568 = vpop.f32.mrf.mxu0
        %v569 = vpop.f32.mrf.mxu0
        %v570 = vpop.f32.mrf.mxu0
        %571 = vdwg.mxu0
        %573 = vrot.lane.b32.xlu0 %v567, 125
        %v574 = vpop.permute.xlu0 %573
        %v576 = vsub.f32 %v527, %v574
        %v577 = vpack.c.bf16 %v576, %v576
        %s578 = scalar_lea.vmem %s278, 2
        %579 = vst.msk [vmem:[%s578] sm:$0x3] %vm435, %v577
        %581 = vrot.lane.b32.xlu0 %v527, 125
        %v582 = vpop.permute.xlu0 %581
        %v584 = vadd.f32 %v567, %v582
        %v585 = vpack.c.bf16 %v584, %v584
        %s586 = scalar_lea.vmem %s278, 10
        %587 = vst.msk [vmem:[%s586] sm:$0x3] %vm435, %v585
        %v589 = vsel %vm291, %v289, 0
        %591 = vmatprep.subr.bf16.mxu0 0
        %592 = vmatpush1.bf16.msra.mxu0 0
        %593 = vmatprep.subr.bf16.mxu0 0
        %594 = vmatpush1.bf16.msra.mxu0 0
        %595 = vmatprep.subr.bf16.mxu0 0
        %596 = vmatpush1.bf16.msra.mxu0 0
        %597 = vmatprep.subr.bf16.mxu0 0
        %598 = vmatpush1.bf16.msra.mxu0 0
        %599 = vmatprep.subr.bf16.mxu0 0
        %600 = vmatpush1.bf16.msra.mxu0 0
        %601 = vmatprep.subr.bf16.mxu0 0
        %602 = vmatpush1.bf16.msra.mxu0 0
        %603 = vmatprep.subr.bf16.mxu0 0
        %604 = vmatpush1.bf16.msra.mxu0 0
        %605 = vmatprep.subr.bf16.mxu0 0
        %606 = vmatpush1.bf16.msra.mxu0 %v297
        %607 = vmatprep.subr.bf16.mxu0 0
        %608 = vmatpush2.bf16.msra.mxu0 0
        %609 = vmatprep.subr.bf16.mxu0 0
        %610 = vmatpush2.bf16.msra.mxu0 0
        %611 = vmatprep.subr.bf16.mxu0 0
        %612 = vmatpush2.bf16.msra.mxu0 0
        %613 = vmatprep.subr.bf16.mxu0 0
        %614 = vmatpush2.bf16.msra.mxu0 0
        %615 = vmatprep.subr.bf16.mxu0 0
        %616 = vmatpush2.bf16.msra.mxu0 0
        %617 = vmatprep.subr.bf16.mxu0 0
        %618 = vmatpush2.bf16.msra.mxu0 0
        %619 = vmatprep.subr.bf16.mxu0 0
        %620 = vmatpush2.bf16.msra.mxu0 0
        %621 = vmatprep.subr.bf16.mxu0 0
        %622 = vmatpush2.bf16.msra.mxu0 0
        %623 = vmatprep.mubr.bf16.mxu0 0
        %624 = vmatmul.mubr.bf16.gmra.mxu0 %v589
        %v625 = vpop.f32.mrf.mxu0
        %v626 = vadd.f32 0.0, %v625
        %v627 = vpop.f32.mrf.mxu0
        %v628 = vpop.f32.mrf.mxu0
        %v629 = vpop.f32.mrf.mxu0
        %630 = vdwg.mxu0
        %v631 = vpack.c.bf16 %v626, %v626
        %v633 = vsel %vm295, %v631, 0
        %635 = vmatprep.subr.bf16.mxu0 0
        %636 = vmatpush1.bf16.msra.mxu0 0
        %637 = vmatprep.subr.bf16.mxu0 0
        %638 = vmatpush1.bf16.msra.mxu0 0
        %639 = vmatprep.subr.bf16.mxu0 0
        %640 = vmatpush1.bf16.msra.mxu0 0
        %641 = vmatprep.subr.bf16.mxu0 0
        %642 = vmatpush1.bf16.msra.mxu0 0
        %643 = vmatprep.subr.bf16.mxu0 0
        %644 = vmatpush1.bf16.msra.mxu0 0
        %645 = vmatprep.subr.bf16.mxu0 0
        %646 = vmatpush1.bf16.msra.mxu0 0
        %647 = vmatprep.subr.bf16.mxu0 0
        %648 = vmatpush1.bf16.msra.mxu0 0
        %649 = vmatprep.subr.bf16.mxu0 0
        %650 = vmatpush1.bf16.msra.mxu0 %v633
        %651 = vmatprep.subr.bf16.mxu0 0
        %652 = vmatpush2.bf16.msra.mxu0 0
        %653 = vmatprep.subr.bf16.mxu0 0
        %654 = vmatpush2.bf16.msra.mxu0 0
        %655 = vmatprep.subr.bf16.mxu0 0
        %656 = vmatpush2.bf16.msra.mxu0 0
        %657 = vmatprep.subr.bf16.mxu0 0
        %658 = vmatpush2.bf16.msra.mxu0 0
        %659 = vmatprep.subr.bf16.mxu0 0
        %660 = vmatpush2.bf16.msra.mxu0 0
        %661 = vmatprep.subr.bf16.mxu0 0
        %662 = vmatpush2.bf16.msra.mxu0 0
        %663 = vmatprep.subr.bf16.mxu0 0
        %664 = vmatpush2.bf16.msra.mxu0 0
        %665 = vmatprep.subr.bf16.mxu0 0
        %666 = vmatpush2.bf16.msra.mxu0 0
        %667 = vmatprep.mubr.bf16.mxu0 0
        %668 = vmatmul.mubr.bf16.gmra.mxu0 %v341
        %v669 = vpop.f32.mrf.mxu0
        %v670 = vadd.f32 0.0, %v669
        %v671 = vpop.f32.mrf.mxu0
        %v672 = vpop.f32.mrf.mxu0
        %v673 = vpop.f32.mrf.mxu0
        %674 = vdwg.mxu0
        %675 = vmatprep.subr.bf16.mxu0 0
        %676 = vmatpush1.bf16.msra.mxu0 0
        %677 = vmatprep.subr.bf16.mxu0 0
        %678 = vmatpush1.bf16.msra.mxu0 0
        %679 = vmatprep.subr.bf16.mxu0 0
        %680 = vmatpush1.bf16.msra.mxu0 0
        %681 = vmatprep.subr.bf16.mxu0 0
        %682 = vmatpush1.bf16.msra.mxu0 0
        %683 = vmatprep.subr.bf16.mxu0 0
        %684 = vmatpush1.bf16.msra.mxu0 0
        %685 = vmatprep.subr.bf16.mxu0 0
        %686 = vmatpush1.bf16.msra.mxu0 0
        %687 = vmatprep.subr.bf16.mxu0 0
        %688 = vmatpush1.bf16.msra.mxu0 0
        %689 = vmatprep.subr.bf16.mxu0 0
        %690 = vmatpush1.bf16.msra.mxu0 %v633
        %691 = vmatprep.subr.bf16.mxu0 0
        %692 = vmatpush2.bf16.msra.mxu0 0
        %693 = vmatprep.subr.bf16.mxu0 0
        %694 = vmatpush2.bf16.msra.mxu0 0
        %695 = vmatprep.subr.bf16.mxu0 0
        %696 = vmatpush2.bf16.msra.mxu0 0
        %697 = vmatprep.subr.bf16.mxu0 0
        %698 = vmatpush2.bf16.msra.mxu0 0
        %699 = vmatprep.subr.bf16.mxu0 0
        %700 = vmatpush2.bf16.msra.mxu0 0
        %701 = vmatprep.subr.bf16.mxu0 0
        %702 = vmatpush2.bf16.msra.mxu0 0
        %703 = vmatprep.subr.bf16.mxu0 0
        %704 = vmatpush2.bf16.msra.mxu0 0
        %705 = vmatprep.subr.bf16.mxu0 0
        %706 = vmatpush2.bf16.msra.mxu0 0
        %707 = vmatprep.mubr.bf16.mxu0 0
        %708 = vmatmul.mubr.bf16.gmra.mxu0 %v387
        %v709 = vpop.f32.mrf.mxu0
        %v710 = vadd.f32 0.0, %v709
        %v711 = vpop.f32.mrf.mxu0
        %v712 = vpop.f32.mrf.mxu0
        %v713 = vpop.f32.mrf.mxu0
        %714 = vdwg.mxu0
        %716 = vrot.lane.b32.xlu0 %v710, 125
        %v717 = vpop.permute.xlu0 %716
        %v719 = vsub.f32 %v670, %v717
        %v720 = vpack.c.bf16 %v719, %v719
        %s721 = scalar_lea.vmem %s278, 4
        %722 = vst.msk [vmem:[%s721] sm:$0x3] %vm435, %v720
        %724 = vrot.lane.b32.xlu0 %v670, 125
        %v725 = vpop.permute.xlu0 %724
        %v727 = vadd.f32 %v710, %v725
        %v728 = vpack.c.bf16 %v727, %v727
        %s729 = scalar_lea.vmem %s278, 12
        %730 = vst.msk [vmem:[%s729] sm:$0x3] %vm435, %v728
        %v732 = vsel %vm291, %v290, 0
        %734 = vmatprep.subr.bf16.mxu0 0
        %735 = vmatpush1.bf16.msra.mxu0 0
        %736 = vmatprep.subr.bf16.mxu0 0
        %737 = vmatpush1.bf16.msra.mxu0 0
        %738 = vmatprep.subr.bf16.mxu0 0
        %739 = vmatpush1.bf16.msra.mxu0 0
        %740 = vmatprep.subr.bf16.mxu0 0
        %741 = vmatpush1.bf16.msra.mxu0 0
        %742 = vmatprep.subr.bf16.mxu0 0
        %743 = vmatpush1.bf16.msra.mxu0 0
        %744 = vmatprep.subr.bf16.mxu0 0
        %745 = vmatpush1.bf16.msra.mxu0 0
        %746 = vmatprep.subr.bf16.mxu0 0
        %747 = vmatpush1.bf16.msra.mxu0 0
        %748 = vmatprep.subr.bf16.mxu0 0
        %749 = vmatpush1.bf16.msra.mxu0 %v297
        %750 = vmatprep.subr.bf16.mxu0 0
        %751 = vmatpush2.bf16.msra.mxu0 0
        %752 = vmatprep.subr.bf16.mxu0 0
        %753 = vmatpush2.bf16.msra.mxu0 0
        %754 = vmatprep.subr.bf16.mxu0 0
        %755 = vmatpush2.bf16.msra.mxu0 0
        %756 = vmatprep.subr.bf16.mxu0 0
        %757 = vmatpush2.bf16.msra.mxu0 0
        %758 = vmatprep.subr.bf16.mxu0 0
        %759 = vmatpush2.bf16.msra.mxu0 0
        %760 = vmatprep.subr.bf16.mxu0 0
        %761 = vmatpush2.bf16.msra.mxu0 0
        %762 = vmatprep.subr.bf16.mxu0 0
        %763 = vmatpush2.bf16.msra.mxu0 0
        %764 = vmatprep.subr.bf16.mxu0 0
        %765 = vmatpush2.bf16.msra.mxu0 0
        %766 = vmatprep.mubr.bf16.mxu0 0
        %767 = vmatmul.mubr.bf16.gmra.mxu0 %v732
        %v768 = vpop.f32.mrf.mxu0
        %v769 = vadd.f32 0.0, %v768
        %v770 = vpop.f32.mrf.mxu0
        %v771 = vpop.f32.mrf.mxu0
        %v772 = vpop.f32.mrf.mxu0
        %773 = vdwg.mxu0
        %v774 = vpack.c.bf16 %v769, %v769
        %v776 = vsel %vm295, %v774, 0
        %778 = vmatprep.subr.bf16.mxu0 0
        %779 = vmatpush1.bf16.msra.mxu0 0
        %780 = vmatprep.subr.bf16.mxu0 0
        %781 = vmatpush1.bf16.msra.mxu0 0
        %782 = vmatprep.subr.bf16.mxu0 0
        %783 = vmatpush1.bf16.msra.mxu0 0
        %784 = vmatprep.subr.bf16.mxu0 0
        %785 = vmatpush1.bf16.msra.mxu0 0
        %786 = vmatprep.subr.bf16.mxu0 0
        %787 = vmatpush1.bf16.msra.mxu0 0
        %788 = vmatprep.subr.bf16.mxu0 0
        %789 = vmatpush1.bf16.msra.mxu0 0
        %790 = vmatprep.subr.bf16.mxu0 0
        %791 = vmatpush1.bf16.msra.mxu0 0
        %792 = vmatprep.subr.bf16.mxu0 0
        %793 = vmatpush1.bf16.msra.mxu0 %v776
        %794 = vmatprep.subr.bf16.mxu0 0
        %795 = vmatpush2.bf16.msra.mxu0 0
        %796 = vmatprep.subr.bf16.mxu0 0
        %797 = vmatpush2.bf16.msra.mxu0 0
        %798 = vmatprep.subr.bf16.mxu0 0
        %799 = vmatpush2.bf16.msra.mxu0 0
        %800 = vmatprep.subr.bf16.mxu0 0
        %801 = vmatpush2.bf16.msra.mxu0 0
        %802 = vmatprep.subr.bf16.mxu0 0
        %803 = vmatpush2.bf16.msra.mxu0 0
        %804 = vmatprep.subr.bf16.mxu0 0
        %805 = vmatpush2.bf16.msra.mxu0 0
        %806 = vmatprep.subr.bf16.mxu0 0
        %807 = vmatpush2.bf16.msra.mxu0 0
        %808 = vmatprep.subr.bf16.mxu0 0
        %809 = vmatpush2.bf16.msra.mxu0 0
        %810 = vmatprep.mubr.bf16.mxu0 0
        %811 = vmatmul.mubr.bf16.gmra.mxu0 %v341
        %v812 = vpop.f32.mrf.mxu0
        %v813 = vadd.f32 0.0, %v812
        %v814 = vpop.f32.mrf.mxu0
        %v815 = vpop.f32.mrf.mxu0
        %v816 = vpop.f32.mrf.mxu0
        %817 = vdwg.mxu0
        %818 = vmatprep.subr.bf16.mxu0 0
        %819 = vmatpush1.bf16.msra.mxu0 0
        %820 = vmatprep.subr.bf16.mxu0 0
        %821 = vmatpush1.bf16.msra.mxu0 0
        %822 = vmatprep.subr.bf16.mxu0 0
        %823 = vmatpush1.bf16.msra.mxu0 0
        %824 = vmatprep.subr.bf16.mxu0 0
        %825 = vmatpush1.bf16.msra.mxu0 0
        %826 = vmatprep.subr.bf16.mxu0 0
        %827 = vmatpush1.bf16.msra.mxu0 0
        %828 = vmatprep.subr.bf16.mxu0 0
        %829 = vmatpush1.bf16.msra.mxu0 0
        %830 = vmatprep.subr.bf16.mxu0 0
        %831 = vmatpush1.bf16.msra.mxu0 0
        %832 = vmatprep.subr.bf16.mxu0 0
        %833 = vmatpush1.bf16.msra.mxu0 %v776
        %834 = vmatprep.subr.bf16.mxu0 0
        %835 = vmatpush2.bf16.msra.mxu0 0
        %836 = vmatprep.subr.bf16.mxu0 0
        %837 = vmatpush2.bf16.msra.mxu0 0
        %838 = vmatprep.subr.bf16.mxu0 0
        %839 = vmatpush2.bf16.msra.mxu0 0
        %840 = vmatprep.subr.bf16.mxu0 0
        %841 = vmatpush2.bf16.msra.mxu0 0
        %842 = vmatprep.subr.bf16.mxu0 0
        %843 = vmatpush2.bf16.msra.mxu0 0
        %844 = vmatprep.subr.bf16.mxu0 0
        %845 = vmatpush2.bf16.msra.mxu0 0
        %846 = vmatprep.subr.bf16.mxu0 0
        %847 = vmatpush2.bf16.msra.mxu0 0
        %848 = vmatprep.subr.bf16.mxu0 0
        %849 = vmatpush2.bf16.msra.mxu0 0
        %850 = vmatprep.mubr.bf16.mxu0 0
        %851 = vmatmul.mubr.bf16.gmra.mxu0 %v387
        %v852 = vpop.f32.mrf.mxu0
        %v853 = vadd.f32 0.0, %v852
        %v854 = vpop.f32.mrf.mxu0
        %v855 = vpop.f32.mrf.mxu0
        %v856 = vpop.f32.mrf.mxu0
        %857 = vdwg.mxu0
        %859 = vrot.lane.b32.xlu0 %v853, 125
        %v860 = vpop.permute.xlu0 %859
        %v862 = vsub.f32 %v813, %v860
        %v863 = vpack.c.bf16 %v862, %v862
        %s864 = scalar_lea.vmem %s278, 6
        %865 = vst.msk [vmem:[%s864] sm:$0x3] %vm435, %v863
        %867 = vrot.lane.b32.xlu0 %v813, 125
        %v868 = vpop.permute.xlu0 %867
        %v870 = vadd.f32 %v853, %v868
        %v871 = vpack.c.bf16 %v870, %v870
        %s872 = scalar_lea.vmem %s278, 14
        %873 = vst.msk [vmem:[%s872] sm:$0x3] %vm435, %v871
        %p874 = scmp.lt.s32.totalorder %s19, 1
        %s875 = scalar_select %p874, %s19, 1
        %p876 = scmp.lt.s32.totalorder %s20, 3
        %s877 = scalar_select %p876, %s20, 3
        %s878 = smul.addr %s877, 8
        %s879 = smul.addr %s875, 32
        %s880 = sadd.s32 %s878, %s879
        %s881 = smul.addr %s880, 2
        %s882 = scalar_lea.vmem %s4, %s881
        // Predicated region
        $region78: #{ffc_bn_act.19} parent=72 // pred_check
          %p883 = pneg %p138
        $region79: #{ffc_bn_act.19} parent=72 // pred_check_branch
          %885 = sbr.rel (%p883) target = $region81
        $region80: #{ffc_bn_act.19} parent=72 // pred_region
          _
        $region81: #{ffc_bn_act.19} parent=72 // pred_fallthru
          _
      $region73: #{ffc_bn_act.19} parent=5 // pred_fallthru
        _
      %p886 = scmp.le.s32.totalorder 2, %s10
      // Predicated region
      $region82: #{ffc_bn_act.19} parent=5 // pred_check
        %p887 = pneg %p886
      $region83: #{ffc_bn_act.19} parent=5 // pred_check_branch
        %889 = sbr.rel (%p887) target = $region85
      $region84: #{ffc_bn_act.19} parent=5 // pred_region
        %s890 = ssub.s32 %s10, 2
        // Predicated region
        $region86: #{ffc_bn_act.19} parent=84 // pred_check
          %p891 = pneg %p144
        $region87: #{ffc_bn_act.19} parent=84 // pred_check_branch
          %893 = sbr.rel (%p891) target = $region89
        $region88: #{ffc_bn_act.19} parent=84 // pred_region
          %p894 = scmp.lt.s32.totalorder %s21, 1
          %s895 = scalar_select %p894, %s21, 1
          %p896 = scmp.lt.s32.totalorder %s22, 3
          %s897 = scalar_select %p896, %s22, 3
          %s898 = smul.addr %s897, 8
          %s899 = smul.addr %s895, 32
          %s900 = sadd.s32 %s898, %s899
          %s901 = smul.addr %s900, 2
          %s902 = scalar_lea.vmem %s4, %s901
        $region89: #{ffc_bn_act.19} parent=84 // pred_fallthru
          _
      $region85: #{ffc_bn_act.19} parent=5 // pred_fallthru
        _
    $region6: #{ffc_bn_act.19} parent=1 // loop_footer
      %s14 = sadd.s32 1, %s10
    $region7: #{ffc_bn_act.19} parent=1 // loop_footer_branch
      %9 = sbr.rel target = $region3
    $region8: #{ffc_bn_act.19} parent=1 // loop_exit
      _

// kernel: ffc_bn_act.20
$region0: #{ffc_bn_act.20}
  #allocation0 [shape = 'u32[]', space=smem, size = 0x4, offset = 0x4, fixed_abs, tag = 'smem constant byte address 0x4 - core index']
  #allocation1 [shape = 'u32[144,128]{1,0:T(1,128)}', space=vmem, size = 0x12000, scoped, tag = 'internal scratch']
  %s0 = inlined_call_operand.vmem [shape: bf16[8,8,12], index: 0, kind: input, shape index: {}]
  %s1 = inlined_call_operand.vmem [shape: bf16[8,8], index: 1, kind: input, shape index: {}]
  %s2 = inlined_call_operand.vmem [shape: bf16[8,8,12], index: 2, kind: output, shape index: {0}]
  %s3 = inlined_call_operand.vmem [shape: f32[8,1,8,2], index: 3, kind: output, shape index: {1}]
  %4 = xla_tuple %s2, %s3
  %s5 = sld [smem:[#allocation0]]
  $region49: #{ffc_bn_act.20} parent=0
    _
  %s7 = ssub.s32 1, %s5
  %s8 = scalar_select 0, %s7, %s5
  loop: start=0, step=1, limit=10
  $region2: #{ffc_bn_act.20} parent=0 // loop_pre_header
    _
  $region3: #{ffc_bn_act.20} parent=0 // loop_header
    %s10 = sphi 0, %s14
    %p11 = scmp.ge.s32.totalorder %s10, 10
    %s17 = sphi 0, %s29
    %s18 = sphi 0, %s25
    %s19 = sphi 0, %s17
    %s20 = sphi 0, %s18
    %s21 = sphi 0, %s19
    %s22 = sphi 0, %s20
    %s34 = sphi 0, %s36
    %s37 = sphi 0, %s34
    %s38 = sphi 0, %s37
    %s54 = sphi 0, %s38
    %s58 = sphi 0, %s58
    %s60 = sphi 0, %s58
    %s61 = sphi 0, %s60
    %s75 = sphi 0, %s61
    %s83 = sphi 0, %s85
    %s86 = sphi 0, %s83
    %s87 = sphi 0, %s86
    %s103 = sphi 0, %s87
    %s111 = sphi 0, %s113
    %s114 = sphi 0, %s111
    %s115 = sphi 0, %s114
    %s131 = sphi 0, %s115
  $region4: #{ffc_bn_act.20} parent=0 // loop_header_branch
    %13 = sbr.rel (%p11) target = $region8
  $region5: #{ffc_bn_act.20} parent=0 // loop_body
    %s15 = ssub.s32 %s10, 1
    %s16 = ssub.s32 %s10, 2
    %s23 = sadd.s32 1, %s18
    %p24 = scmp.ge.s32.totalorder %s23, 1
    %s25 = scalar_select %p24, 0, %s23
    %s26 = sadd.s32 1, %s17
    %s27 = scalar_select %p24, %s26, %s17
    %p28 = scmp.ge.s32.totalorder %s27, 8
    %s29 = scalar_select %p28, 0, %s27
    %s30 = ssub.s32 %s17, %s29
    %s31 = ssub.s32 %s18, %s25
    %s32 = sor.u32 %s30, %s31
    %p33 = scmp.eq.s32.totalorder %s32, 0
    %s35 = sadd.s32 %s34, 1
    %s36 = scalar_select %p33, %s34, %s35
    %p39 = pneg %p33
    %p40 = scmp.eq.s32.totalorder %s10, 7
    %p41 = por %p39, %p40
    %p42 = scmp.ne.s32.totalorder %s34, %s37
    %p43 = scmp.eq.s32.totalorder %s10, 0
    %p44 = por %p42, %p43
    %p45 = scmp.ne.s32.totalorder %s34, %s37
    %p46 = scmp.eq.s32.totalorder %s15, 7
    %p47 = por %p45, %p46
    %p48 = scmp.ne.s32.totalorder %s37, %s38
    %p49 = scmp.eq.s32.totalorder %s15, 0
    %p50 = por %p48, %p49
    %p51 = scmp.ne.s32.totalorder %s37, %s38
    %p52 = scmp.eq.s32.totalorder %s16, 7
    %p53 = por %p51, %p52
    %p55 = scmp.ne.s32.totalorder %s38, %s54
    %p56 = scmp.eq.s32.totalorder %s16, 0
    %p57 = por %p55, %p56
    %s59 = sadd.s32 %s58, 1
    %p62 = scmp.eq.s32.totalorder %s10, 7
    %p63 = scmp.ne.s32.totalorder %s58, %s60
    %p64 = scmp.eq.s32.totalorder %s10, 0
    %p65 = por %p63, %p64
    %p66 = scmp.ne.s32.totalorder %s58, %s60
    %p67 = scmp.eq.s32.totalorder %s15, 7
    %p68 = por %p66, %p67
    %p69 = scmp.ne.s32.totalorder %s60, %s61
    %p70 = scmp.eq.s32.totalorder %s15, 0
    %p71 = por %p69, %p70
    %p72 = scmp.ne.s32.totalorder %s60, %s61
    %p73 = scmp.eq.s32.totalorder %s16, 7
    %p74 = por %p72, %p73
    %p76 = scmp.ne.s32.totalorder %s61, %s75
    %p77 = scmp.eq.s32.totalorder %s16, 0
    %p78 = por %p76, %p77
    %s79 = ssub.s32 %s17, %s29
    %s80 = ssub.s32 %s18, %s25
    %s81 = sor.u32 %s79, %s80
    %p82 = scmp.eq.s32.totalorder %s81, 0
    %s84 = sadd.s32 %s83, 1
    %s85 = scalar_select %p82, %s83, %s84
    %p88 = pneg %p82
    %p89 = scmp.eq.s32.totalorder %s10, 7
    %p90 = por %p88, %p89
    %p91 = scmp.ne.s32.totalorder %s83, %s86
    %p92 = scmp.eq.s32.totalorder %s10, 0
    %p93 = por %p91, %p92
    %p94 = scmp.ne.s32.totalorder %s83, %s86
    %p95 = scmp.eq.s32.totalorder %s15, 7
    %p96 = por %p94, %p95
    %p97 = scmp.ne.s32.totalorder %s86, %s87
    %p98 = scmp.eq.s32.totalorder %s15, 0
    %p99 = por %p97, %p98
    %p100 = scmp.ne.s32.totalorder %s86, %s87
    %p101 = scmp.eq.s32.totalorder %s16, 7
    %p102 = por %p100, %p101
    %p104 = scmp.ne.s32.totalorder %s87, %s103
    %p105 = scmp.eq.s32.totalorder %s16, 0
    %p106 = por %p104, %p105
    %s107 = ssub.s32 %s17, %s29
    %s108 = ssub.s32 %s18, %s25
    %s109 = sor.u32 %s107, %s108
    %p110 = scmp.eq.s32.totalorder %s109, 0
    %s112 = sadd.s32 %s111, 1
    %s113 = scalar_select %p110, %s111, %s112
    %p116 = pneg %p110
    %p117 = scmp.eq.s32.totalorder %s10, 7
    %p118 = por %p116, %p117
    %p119 = scmp.ne.s32.totalorder %s111, %s114
    %p120 = scmp.eq.s32.totalorder %s10, 0
    %p121 = por %p119, %p120
    %p122 = scmp.ne.s32.totalorder %s111, %s114
    %p123 = scmp.eq.s32.totalorder %s15, 7
    %p124 = por %p122, %p123
    %p125 = scmp.ne.s32.totalorder %s114, %s115
    %p126 = scmp.eq.s32.totalorder %s15, 0
    %p127 = por %p125, %p126
    %p128 = scmp.ne.s32.totalorder %s114, %s115
    %p129 = scmp.eq.s32.totalorder %s16, 7
    %p130 = por %p128, %p129
    %p132 = scmp.ne.s32.totalorder %s115, %s131
    %p133 = scmp.eq.s32.totalorder %s16, 0
    %p134 = por %p132, %p133
    %p135 = scmp.le.s32.totalorder 1, %s10
    %p136 = scmp.lt.s32.totalorder %s10, 9
    %p137 = pnand %p135, %p136
    %p138 = pneg %p137
    // Predicated region
    $region9: #{ffc_bn_act.20} parent=5 // pred_check
      _
    $region10: #{ffc_bn_act.20} parent=5 // pred_check_branch
      %140 = sbr.rel (%p137) target = $region12
    $region11: #{ffc_bn_act.20} parent=5 // pred_region
      %s141 = ssub.s32 %s10, 1
      // Predicated region
      $region13: #{ffc_bn_act.20} parent=11 // pred_check
        %p142 = pneg %p71
      $region14: #{ffc_bn_act.20} parent=11 // pred_check_branch
        %144 = sbr.rel (%p142) target = $region16
      $region15: #{ffc_bn_act.20} parent=11 // pred_region
        _
      $region16: #{ffc_bn_act.20} parent=11 // pred_fallthru
        _
    $region12: #{ffc_bn_act.20} parent=5 // pred_fallthru
      _
    %p145 = scmp.lt.s32.totalorder %s10, 8
    // Predicated region
    $region17: #{ffc_bn_act.20} parent=5 // pred_check
      %p146 = pneg %p145
    $region18: #{ffc_bn_act.20} parent=5 // pred_check_branch
      %148 = sbr.rel (%p146) target = $region20
    $region19: #{ffc_bn_act.20} parent=5 // pred_region
      // Predicated region
      $region21: #{ffc_bn_act.20} parent=19 // pred_check
        %p149 = pneg %p44
      $region22: #{ffc_bn_act.20} parent=19 // pred_check_branch
        %151 = sbr.rel (%p149) target = $region24
      $region23: #{ffc_bn_act.20} parent=19 // pred_region
        %p152 = scmp.lt.s32.totalorder %s17, 7
        %s153 = scalar_select %p152, %s17, 7
        %p154 = scmp.lt.s32.totalorder %s18, 0
        %s155 = scalar_select %p154, %s18, 0
        %s156 = sadd.s32 %s155, %s153
        %s157 = smul.addr %s156, 4
        %s158 = scalar_lea.vmem %s0, %s157
      $region24: #{ffc_bn_act.20} parent=19 // pred_fallthru
        _
    $region20: #{ffc_bn_act.20} parent=5 // pred_fallthru
      _
    %p159 = scmp.le.s32.totalorder 1, %s10
    %p160 = scmp.lt.s32.totalorder %s10, 9
    %p161 = pnand %p159, %p160
    %p162 = pneg %p161
    // Predicated region
    $region25: #{ffc_bn_act.20} parent=5 // pred_check
      _
    $region26: #{ffc_bn_act.20} parent=5 // pred_check_branch
      %164 = sbr.rel (%p161) target = $region28
    $region27: #{ffc_bn_act.20} parent=5 // pred_region
      %s165 = ssub.s32 %s10, 1
      %p166 = scmp.lt.s32.totalorder %s19, 7
      %s167 = scalar_select %p166, %s19, 7
      %p168 = scmp.lt.s32.totalorder %s20, 0
      %s169 = scalar_select %p168, %s20, 0
      %s170 = sadd.s32 %s169, %s167
      %s171 = smul.addr %s170, 4
      %s172 = scalar_lea.vmem %s0, %s171
      %p173 = pneg %p50
      %p174 = pneg %p47
      %p175 = pneg %p71
      %p176 = pneg %p68
      %p177 = pneg %p99
      %p178 = pneg %p96
      %p179 = scmp.lt.s32.totalorder %s19, 7
      %s180 = scalar_select %p179, %s19, 7
      %p181 = scmp.lt.s32.totalorder %s20, 0
      %s182 = scalar_select %p181, %s20, 0
      %s183 = sadd.s32 %s182, %s180
      %s184 = smul.addr %s183, 4
      %s185 = scalar_lea.vmem %s2, %s184
      %p186 = pneg %p127
      %p187 = pneg %p124
      %p188 = scmp.lt.s32.totalorder %s19, 7
      %s189 = scalar_select %p188, %s19, 7
      %p190 = scmp.lt.s32.totalorder %s20, 0
      %s191 = scalar_select %p190, %s20, 0
      %s192 = sadd.s32 %s191, %s189
      %s193 = smul.addr %s192, 8
      %s194 = scalar_lea.vmem %s3, %s193
      %p195 = scmp.lt.s32.totalorder %s19, 7
      %s196 = scalar_select %p195, %s19, 7
      %p197 = scmp.lt.s32.totalorder %s20, 0
      %s198 = scalar_select %p197, %s20, 0
      %s199 = sadd.s32 %s198, %s196
      %s200 = smul.addr %s199, 4
      %s201 = scalar_lea.vmem %s0, %s200
      %p202 = scmp.lt.s32.totalorder %s19, 7
      %s203 = scalar_select %p202, %s19, 7
      %p204 = scmp.lt.s32.totalorder %s20, 0
      %s205 = scalar_select %p204, %s20, 0
      %s206 = sadd.s32 %s205, %s203
      %s207 = smul.addr %s206, 4
      %s208 = scalar_lea.vmem %s2, %s207
      %p209 = scmp.lt.s32.totalorder %s19, 7
      %s210 = scalar_select %p209, %s19, 7
      %p211 = scmp.lt.s32.totalorder %s20, 0
      %s212 = scalar_select %p211, %s20, 0
      %s213 = sadd.s32 %s212, %s210
      %s214 = smul.addr %s213, 8
      %s215 = scalar_lea.vmem %s3, %s214
      %v217 = vld [vmem:[%s1] sm:$0xf]
      %v218 = vld [vmem:[%s201] sm:$0xf]
      %vm219 = vcmask 64512
      %v221 = vsel %vm219, %v217, 0
      %vm223 = vcmask 1043456
      %v225 = vsel %vm223, %v218, 0
      %227 = vmatprep.subr.bf16.mxu0 0
      %228 = vmatpush1.bf16.msra.mxu0 0
      %229 = vmatprep.subr.bf16.mxu0 0
      %230 = vmatpush1.bf16.msra.mxu0 0
      %231 = vmatprep.subr.bf16.mxu0 0
      %232 = vmatpush1.bf16.msra.mxu0 0
      %233 = vmatprep.subr.bf16.mxu0 0
      %234 = vmatpush1.bf16.msra.mxu0 0
      %235 = vmatprep.subr.bf16.mxu0 0
      %236 = vmatpush1.bf16.msra.mxu0 0
      %237 = vmatprep.subr.bf16.mxu0 0
      %238 = vmatpush1.bf16.msra.mxu0 0
      %239 = vmatprep.subr.bf16.mxu0 0
      %240 = vmatpush1.bf16.msra.mxu0 0
      %241 = vmatprep.subr.bf16.mxu0 0
      %242 = vmatpush1.bf16.msra.mxu0 %v225
      %243 = vmatprep.subr.bf16.mxu0 0
      %244 = vmatpush2.bf16.msra.mxu0 0
      %245 = vmatprep.subr.bf16.mxu0 0
      %246 = vmatpush2.bf16.msra.mxu0 0
      %247 = vmatprep.subr.bf16.mxu0 0
      %248 = vmatpush2.bf16.msra.mxu0 0
      %249 = vmatprep.subr.bf16.mxu0 0
      %250 = vmatpush2.bf16.msra.mxu0 0
      %251 = vmatprep.subr.bf16.mxu0 0
      %252 = vmatpush2.bf16.msra.mxu0 0
      %253 = vmatprep.subr.bf16.mxu0 0
      %254 = vmatpush2.bf16.msra.mxu0 0
      %255 = vmatprep.subr.bf16.mxu0 0
      %256 = vmatpush2.bf16.msra.mxu0 0
      %257 = vmatprep.subr.bf16.mxu0 0
      %258 = vmatpush2.bf16.msra.mxu0 0
      %259 = vmatprep.mubr.bf16.mxu0 0
      %260 = vmatmul.mubr.bf16.gmra.mxu0 %v221
      %v261 = vpop.f32.mrf.mxu0
      %v262 = vadd.f32 0.0, %v261
      %v263 = vpop.f32.mrf.mxu0
      %v264 = vpop.f32.mrf.mxu0
      %v265 = vpop.f32.mrf.mxu0
      %266 = vdwg.mxu0
      %v267 = vpack.c.bf16 %v262, %v262
      %vm268 = vcmask 93184
      %269 = vst.msk [vmem:[%s208] sm:$0xf] %vm268, %v267
      %vm270 = vcmask 97280
      %v271 = vsel %vm270, %v262, 0.0
      %272 = vadd.xlane.f32.xlu0 %v271
      %v273 = vpop.xlane.xlu0 %272
      %v274 = vmul.f32 %v262, %v262
      %v275 = vsel %vm270, %v274, 0.0
      %276 = vadd.xlane.f32.xlu0 %v275
      %v277 = vpop.xlane.xlu0 %276
      %vm278 = vcmask 7168
      %v279 = vsel %vm278, %v273, %v277
      %vm280 = vcmask 15360
      %281 = vst.msk [vmem:[%s215] sm:$0xff] %vm280, %v279
      %p282 = scmp.lt.s32.totalorder %s19, 7
      %s283 = scalar_select %p282, %s19, 7
      %p284 = scmp.lt.s32.totalorder %s20, 0
      %s285 = scalar_select %p284, %s20, 0
      %s286 = sadd.s32 %s285, %s283
      %s287 = smul.addr %s286, 4
      %s288 = scalar_lea.vmem %s2, %s287
      %p289 = scmp.lt.s32.totalorder %s19, 7
      %s290 = scalar_select %p289, %s19, 7
      %p291 = scmp.lt.s32.totalorder %s20, 0
      %s292 = scalar_select %p291, %s20, 0
      %s293 = sadd.s32 %s292, %s290
      %s294 = smul.addr %s293, 8
      %s295 = scalar_lea.vmem %s3, %s294
      // Predicated region
      $region29: #{ffc_bn_act.20} parent=27 // pred_check
        %p296 = pneg %p96
      $region30: #{ffc_bn_act.20} parent=27 // pred_check_branch
        %298 = sbr.rel (%p296) target = $region32
      $region31: #{ffc_bn_act.20} parent=27 // pred_region
        _
      $region32: #{ffc_bn_act.20} parent=27 // pred_fallthru
        _
      // Predicated region
      $region33: #{ffc_bn_act.20} parent=27 // pred_check
        %p299 = pneg %p124
      $region34: #{ffc_bn_act.20} parent=27 // pred_check_branch
        %301 = sbr.rel (%p299) target = $region36
      $region35: #{ffc_bn_act.20} parent=27 // pred_region
        _
      $region36: #{ffc_bn_act.20} parent=27 // pred_fallthru
        _
    $region28: #{ffc_bn_act.20} parent=5 // pred_fallthru
      _
    %p302 = scmp.le.s32.totalorder 2, %s10
    // Predicated region
    $region37: #{ffc_bn_act.20} parent=5 // pred_check
      %p303 = pneg %p302
    $region38: #{ffc_bn_act.20} parent=5 // pred_check_branch
      %305 = sbr.rel (%p303) target = $region40
    $region39: #{ffc_bn_act.20} parent=5 // pred_region
      %s306 = ssub.s32 %s10, 2
      // Predicated region
      $region41: #{ffc_bn_act.20} parent=39 // pred_check
        %p307 = pneg %p102
      $region42: #{ffc_bn_act.20} parent=39 // pred_check_branch
        %309 = sbr.rel (%p307) target = $region44
      $region43: #{ffc_bn_act.20} parent=39 // pred_region
        %p310 = scmp.lt.s32.totalorder %s21, 7
        %s311 = scalar_select %p310, %s21, 7
        %p312 = scmp.lt.s32.totalorder %s22, 0
        %s313 = scalar_select %p312, %s22, 0
        %s314 = sadd.s32 %s313, %s311
        %s315 = smul.addr %s314, 4
        %s316 = scalar_lea.vmem %s2, %s315
      $region44: #{ffc_bn_act.20} parent=39 // pred_fallthru
        _
      // Predicated region
      $region45: #{ffc_bn_act.20} parent=39 // pred_check
        %p317 = pneg %p130
      $region46: #{ffc_bn_act.20} parent=39 // pred_check_branch
        %319 = sbr.rel (%p317) target = $region48
      $region47: #{ffc_bn_act.20} parent=39 // pred_region
        %p320 = scmp.lt.s32.totalorder %s21, 7
        %s321 = scalar_select %p320, %s21, 7
        %p322 = scmp.lt.s32.totalorder %s22, 0
        %s323 = scalar_select %p322, %s22, 0
        %s324 = sadd.s32 %s323, %s321
        %s325 = smul.addr %s324, 8
        %s326 = scalar_lea.vmem %s3, %s325
      $region48: #{ffc_bn_act.20} parent=39 // pred_fallthru
        _
    $region40: #{ffc_bn_act.20} parent=5 // pred_fallthru
      _
  $region6: #{ffc_bn_act.20} parent=0 // loop_footer
    %s14 = sadd.s32 1, %s10
  $region7: #{ffc_bn_act.20} parent=0 // loop_footer_branch
    %9 = sbr.rel target = $region3
  $region8: #{ffc_bn_act.20} parent=0 // loop_exit
    _

// kernel: ffc_bn_act.21
$region0: #{ffc_bn_act.21}
  #allocation0 [shape = 'u32[]', space=smem, size = 0x4, offset = 0x4, fixed_abs, tag = 'smem constant byte address 0x4 - core index']
  #allocation1 [shape = 'u32[144,128]{1,0:T(1,128)}', space=vmem, size = 0x12000, scoped, tag = 'internal scratch']
  %s0 = inlined_call_operand.vmem [shape: bf16[2,4,8,4,3], index: 0, kind: input, shape index: {}]
  %s1 = inlined_call_operand.vmem [shape: f32[8], index: 1, kind: input, shape index: {}]
  %s2 = inlined_call_operand.vmem [shape: f32[8], index: 2, kind: input, shape index: {}]
  %s3 = inlined_call_operand.vmem [shape: bf16[4,4], index: 3, kind: input, shape index: {}]
  %s4 = inlined_call_operand.vmem [shape: bf16[4,4], index: 4, kind: input, shape index: {}]
  %s5 = inlined_call_operand.vmem [shape: bf16[6,4], index: 5, kind: input, shape index: {}]
  %s6 = inlined_call_operand.vmem [shape: f32[2,4,4,8,8], index: 6, kind: output, shape index: {}]
  %s7 = sld [smem:[#allocation0]]
  $region99: #{ffc_bn_act.21} parent=0
    _
  %s9 = ssub.s32 1, %s7
  %s10 = scalar_select 0, %s9, %s7
  $region1: #{ffc_bn_act.21} parent=0
    #allocation2 [shape = 'u8[512]{0}', space=smem, size = 0x200, scoped, tag = 'input window, operand 1, single buffered']
    #allocation3 [shape = 's32[2]{0}', space=sflag, size = 0x8, scoped, tag = 'scoped memory for ffc_bn_act.21']
    #allocation4 [shape = 'u8[512]{0}', space=smem, size = 0x200, scoped, tag = 'input window, operand 2, single buffered']
    #allocation5 [shape = 's32[1]{0}', space=sflag, size = 0x4, scoped, tag = 'scoped memory for ffc_bn_act.21']
    #allocation6 [shape = 'u8[32768]{0}', space=vmem, size = 0x8000, scoped, tag = 'output window, operand 0']
    %11 = vsyncpa [#allocation3], 0
    %12 = vsyncpa [#allocation5], 0
    loop: start=0, step=1, limit=10
    $region2: #{ffc_bn_act.21} parent=1 // loop_pre_header
      _
    $region3: #{ffc_bn_act.21} parent=1 // loop_header
      %s14 = sphi 0, %s18
      %p15 = scmp.ge.s32.totalorder %s14, 10
      %s21 = sphi 0, %s33
      %s22 = sphi 0, %s29
      %s23 = sphi 0, %s21
      %s24 = sphi 0, %s22
      %s25 = sphi 0, %s23
      %s26 = sphi 0, %s24
      %s38 = sphi 0, %s40
      %s41 = sphi 0, %s38
      %s42 = sphi 0, %s41
      %s58 = sphi 0, %s42
      %s62 = sphi 0, %s62
      %s64 = sphi 0, %s62
      %s65 = sphi 0, %s64
      %s79 = sphi 0, %s65
      %s83 = sphi 0, %s83
      %s85 = sphi 0, %s83
      %s86 = sphi 0, %s85
      %s100 = sphi 0, %s86
      %s104 = sphi 0, %s104
      %s106 = sphi 0, %s104
      %s107 = sphi 0, %s106
      %s121 = sphi 0, %s107
      %s125 = sphi 0, %s125
      %s127 = sphi 0, %s125
      %s128 = sphi 0, %s127
      %s142 = sphi 0, %s128
      %s146 = sphi 0, %s146
      %s148 = sphi 0, %s146
      %s149 = sphi 0, %s148
      %s163 = sphi 0, %s149
      %s171 = sphi 0, %s173
      %s174 = sphi 0, %s171
      %s175 = sphi 0, %s174
      %s191 = sphi 0, %s175
    $region4: #{ffc_bn_act.21} parent=1 // loop_header_branch
      %17 = sbr.rel (%p15) target = $region8
    $region5: #{ffc_bn_act.21} parent=1 // loop_body
      %s19 = ssub.s32 %s14, 1
      %s20 = ssub.s32 %s14, 2
      %s27 = sadd.s32 1, %s22
      %p28 = scmp.ge.s32.totalorder %s27, 4
      %s29 = scalar_select %p28, 0, %s27
      %s30 = sadd.s32 1, %s21
      %s31 = scalar_select %p28, %s30, %s21
      %p32 = scmp.ge.s32.totalorder %s31, 2
      %s33 = scalar_select %p32, 0, %s31
      %s34 = ssub.s32 %s21, %s33
      %s35 = ssub.s32 %s22, %s29
      %s36 = sor.u32 %s34, %s35
      %p37 = scmp.eq.s32.totalorder %s36, 0
      %s39 = sadd.s32 %s38, 1
      %s40 = scalar_select %p37, %s38, %s39
      %p43 = pneg %p37
      %p44 = scmp.eq.s32.totalorder %s14, 7
      %p45 = por %p43, %p44
      %p46 = scmp.ne.s32.totalorder %s38, %s41
      %p47 = scmp.eq.s32.totalorder %s14, 0
      %p48 = por %p46, %p47
      %p49 = scmp.ne.s32.totalorder %s38, %s41
      %p50 = scmp.eq.s32.totalorder %s19, 7
      %p51 = por %p49, %p50
      %p52 = scmp.ne.s32.totalorder %s41, %s42
      %p53 = scmp.eq.s32.totalorder %s19, 0
      %p54 = por %p52, %p53
      %p55 = scmp.ne.s32.totalorder %s41, %s42
      %p56 = scmp.eq.s32.totalorder %s20, 7
      %p57 = por %p55, %p56
      %p59 = scmp.ne.s32.totalorder %s42, %s58
      %p60 = scmp.eq.s32.totalorder %s20, 0
      %p61 = por %p59, %p60
      %s63 = sadd.s32 %s62, 1
      %p66 = scmp.eq.s32.totalorder %s14, 7
      %p67 = scmp.ne.s32.totalorder %s62, %s64
      %p68 = scmp.eq.s32.totalorder %s14, 0
      %p69 = por %p67, %p68
      %p70 = scmp.ne.s32.totalorder %s62, %s64
      %p71 = scmp.eq.s32.totalorder %s19, 7
      %p72 = por %p70, %p71
      %p73 = scmp.ne.s32.totalorder %s64, %s65
      %p74 = scmp.eq.s32.totalorder %s19, 0
      %p75 = por %p73, %p74
      %p76 = scmp.ne.s32.totalorder %s64, %s65
      %p77 = scmp.eq.s32.totalorder %s20, 7
      %p78 = por %p76, %p77
      %p80 = scmp.ne.s32.totalorder %s65, %s79
      %p81 = scmp.eq.s32.totalorder %s20, 0
      %p82 = por %p80, %p81
      %s84 = sadd.s32 %s83, 1
      %p87 = scmp.eq.s32.totalorder %s14, 7
      %p88 = scmp.ne.s32.totalorder %s83, %s85
      %p89 = scmp.eq.s32.totalorder %s14, 0
      %p90 = por %p88, %p89
      %p91 = scmp.ne.s32.totalorder %s83, %s85
      %p92 = scmp.eq.s32.totalorder %s19, 7
      %p93 = por %p91, %p92
      %p94 = scmp.ne.s32.totalorder %s85, %s86
      %p95 = scmp.eq.s32.totalorder %s19, 0
      %p96 = por %p94, %p95
      %p97 = scmp.ne.s32.totalorder %s85, %s86
      %p98 = scmp.eq.s32.totalorder %s20, 7
      %p99 = por %p97, %p98
      %p101 = scmp.ne.s32.totalorder %s86, %s100
      %p102 = scmp.eq.s32.totalorder %s20, 0
      %p103 = por %p101, %p102
      %s105 = sadd.s32 %s104, 1
      %p108 = scmp.eq.s32.totalorder %s14, 7
      %p109 = scmp.ne.s32.totalorder %s104, %s106
      %p110 = scmp.eq.s32.totalorder %s14, 0
      %p111 = por %p109, %p110
      %p112 = scmp.ne.s32.totalorder %s104, %s106
      %p113 = scmp.eq.s32.totalorder %s19, 7
      %p114 = por %p112, %p113
      %p115 = scmp.ne.s32.totalorder %s106, %s107
      %p116 = scmp.eq.s32.totalorder %s19, 0
      %p117 = por %p115, %p116
      %p118 = scmp.ne.s32.totalorder %s106, %s107
      %p119 = scmp.eq.s32.totalorder %s20, 7
      %p120 = por %p118, %p119
      %p122 = scmp.ne.s32.totalorder %s107, %s121
      %p123 = scmp.eq.s32.totalorder %s20, 0
      %p124 = por %p122, %p123
      %s126 = sadd.s32 %s125, 1
      %p129 = scmp.eq.s32.totalorder %s14, 7
      %p130 = scmp.ne.s32.totalorder %s125, %s127
      %p131 = scmp.eq.s32.totalorder %s14, 0
      %p132 = por %p130, %p131
      %p133 = scmp.ne.s32.totalorder %s125, %s127
      %p134 = scmp.eq.s32.totalorder %s19, 7
      %p135 = por %p133, %p134
      %p136 = scmp.ne.s32.totalorder %s127, %s128
      %p137 = scmp.eq.s32.totalorder %s19, 0
      %p138 = por %p136, %p137
      %p139 = scmp.ne.s32.totalorder %s127, %s128
      %p140 = scmp.eq.s32.totalorder %s20, 7
      %p141 = por %p139, %p140
      %p143 = scmp.ne.s32.totalorder %s128, %s142
      %p144 = scmp.eq.s32.totalorder %s20, 0
      %p145 = por %p143, %p144
      %s147 = sadd.s32 %s146, 1
      %p150 = scmp.eq.s32.totalorder %s14, 7
      %p151 = scmp.ne.s32.totalorder %s146, %s148
      %p152 = scmp.eq.s32.totalorder %s14, 0
      %p153 = por %p151, %p152
      %p154 = scmp.ne.s32.totalorder %s146, %s148
      %p155 = scmp.eq.s32.totalorder %s19, 7
      %p156 = por %p154, %p155
      %p157 = scmp.ne.s32.totalorder %s148, %s149
      %p158 = scmp.eq.s32.totalorder %s19, 0
      %p159 = por %p157, %p158
      %p160 = scmp.ne.s32.totalorder %s148, %s149
      %p161 = scmp.eq.s32.totalorder %s20, 7
      %p162 = por %p160, %p161
      %p164 = scmp.ne.s32.totalorder %s149, %s163
      %p165 = scmp.eq.s32.totalorder %s20, 0
      %p166 = por %p164, %p165
      %s167 = ssub.s32 %s21, %s33
      %s168 = ssub.s32 %s22, %s29
      %s169 = sor.u32 %s167, %s168
      %p170 = scmp.eq.s32.totalorder %s169, 0
      %s172 = sadd.s32 %s171, 1
      %s173 = scalar_select %p170, %s171, %s172
      %p176 = pneg %p170
      %p177 = scmp.eq.s32.totalorder %s14, 7
      %p178 = por %p176, %p177
      %p179 = scmp.ne.s32.totalorder %s171, %s174
      %p180 = scmp.eq.s32.totalorder %s14, 0
      %p181 = por %p179, %p180
      %p182 = scmp.ne.s32.totalorder %s171, %s174
      %p183 = scmp.eq.s32.totalorder %s19, 7
      %p184 = por %p182, %p183
      %p185 = scmp.ne.s32.totalorder %s174, %s175
      %p186 = scmp.eq.s32.totalorder %s19, 0
      %p187 = por %p185, %p186
      %p188 = scmp.ne.s32.totalorder %s174, %s175
      %p189 = scmp.eq.s32.totalorder %s20, 7
      %p190 = por %p188, %p189
      %p192 = scmp.ne.s32.totalorder %s175, %s191
      %p193 = scmp.eq.s32.totalorder %s20, 0
      %p194 = por %p192, %p193
      %p195 = scmp.le.s32.totalorder 1, %s14
      %p196 = scmp.lt.s32.totalorder %s14, 9
      %p197 = pnand %p195, %p196
      %p198 = pneg %p197
      // Predicated region
      $region9: #{ffc_bn_act.21} parent=5 // pred_check
        _
      $region10: #{ffc_bn_act.21} parent=5 // pred_check_branch
        %200 = sbr.rel (%p197) target = $region12
      $region11: #{ffc_bn_act.21} parent=5 // pred_region
        %s201 = ssub.s32 %s14, 1
        // Predicated region
        $region13: #{ffc_bn_act.21} parent=11 // pred_check
          %p202 = pneg %p75
        $region14: #{ffc_bn_act.21} parent=11 // pred_check_branch
          %204 = sbr.rel (%p202) target = $region16
        $region15: #{ffc_bn_act.21} parent=11 // pred_region
          %s206 = ssub.s32 16, 16
          %207 = vsyncadd [#allocation3], %s206
          %s209 = sshll.u32 %s1, 4
          %s210 = int_to_ptr.vmem [resolvable:$true] %s209
          %212 = dma.vmem_to_smem %s210, 16, [#allocation2], [#allocation3]
        $region16: #{ffc_bn_act.21} parent=11 // pred_fallthru
          _
        // Predicated region
        $region17: #{ffc_bn_act.21} parent=11 // pred_check
          %p213 = pneg %p96
        $region18: #{ffc_bn_act.21} parent=11 // pred_check_branch
          %215 = sbr.rel (%p213) target = $region20
        $region19: #{ffc_bn_act.21} parent=11 // pred_region
          %s217 = ssub.s32 16, 16
          %218 = vsyncadd [#allocation5], %s217
          %s220 = sshll.u32 %s2, 4
          %s221 = int_to_ptr.vmem [resolvable:$true] %s220
          %223 = dma.vmem_to_smem %s221, 16, [#allocation4], [#allocation5]
        $region20: #{ffc_bn_act.21} parent=11 // pred_fallthru
          _
        // Predicated region
        $region21: #{ffc_bn_act.21} parent=11 // pred_check
          %p224 = pneg %p117
        $region22: #{ffc_bn_act.21} parent=11 // pred_check_branch
          %226 = sbr.rel (%p224) target = $region24
        $region23: #{ffc_bn_act.21} parent=11 // pred_region
          _
        $region24: #{ffc_bn_act.21} parent=11 // pred_fallthru
          _
        // Predicated region
        $region25: #{ffc_bn_act.21} parent=11 // pred_check
          %p227 = pneg %p138
        $region26: #{ffc_bn_act.21} parent=11 // pred_check_branch
          %229 = sbr.rel (%p227) target = $region28
        $region27: #{ffc_bn_act.21} parent=11 // pred_region
          _
        $region28: #{ffc_bn_act.21} parent=11 // pred_fallthru
          _
        // Predicated region
        $region29: #{ffc_bn_act.21} parent=11 // pred_check
          %p230 = pneg %p159
        $region30: #{ffc_bn_act.21} parent=11 // pred_check_branch
          %232 = sbr.rel (%p230) target = $region32
        $region31: #{ffc_bn_act.21} parent=11 // pred_region
          _
        $region32: #{ffc_bn_act.21} parent=11 // pred_fallthru
          _
      $region12: #{ffc_bn_act.21} parent=5 // pred_fallthru
        _
      %p233 = scmp.lt.s32.totalorder %s14, 8
      // Predicated region
      $region33: #{ffc_bn_act.21} parent=5 // pred_check
        %p234 = pneg %p233
      $region34: #{ffc_bn_act.21} parent=5 // pred_check_branch
        %236 = sbr.rel (%p234) target = $region36
      $region35: #{ffc_bn_act.21} parent=5 // pred_region
        // Predicated region
        $region37: #{ffc_bn_act.21} parent=35 // pred_check
          %p237 = pneg %p48
        $region38: #{ffc_bn_act.21} parent=35 // pred_check_branch
          %239 = sbr.rel (%p237) target = $region40
        $region39: #{ffc_bn_act.21} parent=35 // pred_region
          %p240 = scmp.lt.s32.totalorder %s21, 1
          %s241 = scalar_select %p240, %s21, 1
          %p242 = scmp.lt.s32.totalorder %s22, 3
          %s243 = scalar_select %p242, %s22, 3
          %s244 = smul.addr %s243, 8
          %s245 = smul.addr %s241, 32
          %s246 = sadd.s32 %s244, %s245
          %s247 = smul.addr %s246, 2
          %s248 = scalar_lea.vmem %s0, %s247
        $region40: #{ffc_bn_act.21} parent=35 // pred_fallthru
          _
      $region36: #{ffc_bn_act.21} parent=5 // pred_fallthru
        _
      %p249 = scmp.le.s32.totalorder 1, %s14
      %p250 = scmp.lt.s32.totalorder %s14, 9
      %p251 = pnand %p249, %p250
      %p252 = pneg %p251
      // Predicated region
      $region41: #{ffc_bn_act.21} parent=5 // pred_check
        _
      $region42: #{ffc_bn_act.21} parent=5 // pred_check_branch
        %254 = sbr.rel (%p251) target = $region44
      $region43: #{ffc_bn_act.21} parent=5 // pred_region
        %s255 = ssub.s32 %s14, 1
        // Predicated region
        $region45: #{ffc_bn_act.21} parent=43 // pred_check
          %p256 = pneg %p75
        $region46: #{ffc_bn_act.21} parent=43 // pred_check_branch
          %258 = sbr.rel (%p256) target = $region48
        $region47: #{ffc_bn_act.21} parent=43 // pred_region
          %259 = dma.done [#allocation3], 16
        $region48: #{ffc_bn_act.21} parent=43 // pred_fallthru
          _
        // Predicated region
        $region49: #{ffc_bn_act.21} parent=43 // pred_check
          %p260 = pneg %p96
        $region50: #{ffc_bn_act.21} parent=43 // pred_check_branch
          %262 = sbr.rel (%p260) target = $region52
        $region51: #{ffc_bn_act.21} parent=43 // pred_region
          %263 = dma.done [#allocation5], 16
        $region52: #{ffc_bn_act.21} parent=43 // pred_fallthru
          _
        %264 = sfence
        %p265 = scmp.lt.s32.totalorder %s23, 1
        %s266 = scalar_select %p265, %s23, 1
        %p267 = scmp.lt.s32.totalorder %s24, 3
        %s268 = scalar_select %p267, %s24, 3
        %s269 = smul.addr %s268, 8
        %s270 = smul.addr %s266, 32
        %s271 = sadd.s32 %s269, %s270
        %s272 = smul.addr %s271, 2
        %s273 = scalar_lea.vmem %s0, %s272
        %p274 = pneg %p54
        %p275 = pneg %p51
        %p276 = pneg %p75
        %p277 = pneg %p72
        %p278 = pneg %p96
        %p279 = pneg %p93
        %p280 = pneg %p117
        %p281 = pneg %p114
        %p282 = pneg %p138
        %p283 = pneg %p135
        %p284 = pneg %p159
        %p285 = pneg %p156
        %p286 = pneg %p187
        %p287 = pneg %p184
        %s288 = sand.u32 %s174, 1
        %s289 = sand.u32 %s174, 1
        %s290 = smul.addr %s289, 32
        %s291 = scalar_lea.vmem [#allocation6], %s290
        %p292 = scmp.lt.s32.totalorder %s23, 1
        %s293 = scalar_select %p292, %s23, 1
        %p294 = scmp.lt.s32.totalorder %s24, 3
        %s295 = scalar_select %p294, %s24, 3
        %s296 = smul.addr %s295, 8
        %s297 = smul.addr %s293, 32
        %s298 = sadd.s32 %s296, %s297
        %s299 = smul.addr %s298, 2
        %s300 = scalar_lea.vmem %s0, %s299
        %v302 = vld [vmem:[%s300] sm:$0x3]
        %v303 = vld [vmem:[%s300 + $0x2] sm:$0x3]
        %v304 = vld [vmem:[%s300 + $0x4] sm:$0x3]
        %v305 = vld [vmem:[%s300 + $0x6] sm:$0x3]
        %v306 = vld [vmem:[%s300 + $0x8] sm:$0x3]
        %v307 = vld [vmem:[%s300 + $0xa] sm:$0x3]
        %v308 = vld [vmem:[%s300 + $0xc] sm:$0x3]
        %v309 = vld [vmem:[%s300 + $0xe] sm:$0x3]
        %v310 = vld [vmem:[%s3] sm:$0x3]
        %v311 = vld [vmem:[%s4] sm:$0x3]
        %v312 = vld [vmem:[%s5] sm:$0x7]
        %v313 = vunpack.c.l.bf16 %v302
        %s314 = sld [smem:[#allocation2]]
        %v315 = vstv %s314
        %v316 = vmul.f32 %v313, %v315
        %s317 = sld [smem:[#allocation4]]
        %v318 = vstv %s317
        %v319 = vadd.f32 %v316, %v318
        %v320 = vmax.f32 %v319, 0.0
        %v321 = vunpack.c.l.bf16 %v306
        %s322 = sld [smem:[#allocation2 + $0x4]]
        %v323 = vstv %s322
        %v324 = vmul.f32 %v321, %v323
        %s325 = sld [smem:[#allocation4 + $0x4]]
        %v326 = vstv %s325
        %v327 = vadd.f32 %v324, %v326
        %v328 = vmax.f32 %v327, 0.0
        %330 = vrot.lane.b32.xlu0 %v328, 3
        %v331 = vpop.permute.xlu0 %330
        %vm333 = vcmask 23552
        %v334 = vsel %vm333, %v320, %v331
        %v335 = vpack.c.bf16 %v334, %v334
        %vm336 = vcmask 31744
        %v338 = vsel %vm336, %v310, 0
        %vm340 = vcmask 1041408
        %v342 = vsel %vm340, %v335, 0
        %344 = vmatprep.subr.bf16.mxu0 0
        %345 = vmatpush1.bf16.msra.mxu0 0
        %346 = vmatprep.subr.bf16.mxu0 0
        %347 = vmatpush1.bf16.msra.mxu0 0
        %348 = vmatprep.subr.bf16.mxu0 0
        %349 = vmatpush1.bf16.msra.mxu0 0
        %350 = vmatprep.subr.bf16.mxu0 0
        %351 = vmatpush1.bf16.msra.mxu0 0
        %352 = vmatprep.subr.bf16.mxu0 0
        %353 = vmatpush1.bf16.msra.mxu0 0
        %354 = vmatprep.subr.bf16.mxu0 0
        %355 = vmatpush1.bf16.msra.mxu0 0
        %356 = vmatprep.subr.bf16.mxu0 0
        %357 = vmatpush1.bf16.msra.mxu0 0
        %358 = vmatprep.subr.bf16.mxu0 0
        %359 = vmatpush1.bf16.msra.mxu0 %v342
        %360 = vmatprep.subr.bf16.mxu0 0
        %361 = vmatpush2.bf16.msra.mxu0 0
        %362 = vmatprep.subr.bf16.mxu0 0
        %363 = vmatpush2.bf16.msra.mxu0 0
        %364 = vmatprep.subr.bf16.mxu0 0
        %365 = vmatpush2.bf16.msra.mxu0 0
        %366 = vmatprep.subr.bf16.mxu0 0
        %367 = vmatpush2.bf16.msra.mxu0 0
        %368 = vmatprep.subr.bf16.mxu0 0
        %369 = vmatpush2.bf16.msra.mxu0 0
        %370 = vmatprep.subr.bf16.mxu0 0
        %371 = vmatpush2.bf16.msra.mxu0 0
        %372 = vmatprep.subr.bf16.mxu0 0
        %373 = vmatpush2.bf16.msra.mxu0 0
        %374 = vmatprep.subr.bf16.mxu0 0
        %375 = vmatpush2.bf16.msra.mxu0 0
        %376 = vmatprep.mubr.bf16.mxu0 0
        %377 = vmatmul.mubr.bf16.gmra.mxu0 %v338
        %v378 = vpop.f32.mrf.mxu0
        %v379 = vadd.f32 0.0, %v378
        %v380 = vpop.f32.mrf.mxu0
        %v381 = vpop.f32.mrf.mxu0
        %v382 = vpop.f32.mrf.mxu0
        %383 = vdwg.mxu0
        %v385 = vsel %vm336, %v311, 0
        %387 = vmatprep.subr.bf16.mxu0 0
        %388 = vmatpush1.bf16.msra.mxu0 0
        %389 = vmatprep.subr.bf16.mxu0 0
        %390 = vmatpush1.bf16.msra.mxu0 0
        %391 = vmatprep.subr.bf16.mxu0 0
        %392 = vmatpush1.bf16.msra.mxu0 0
        %393 = vmatprep.subr.bf16.mxu0 0
        %394 = vmatpush1.bf16.msra.mxu0 0
        %395 = vmatprep.subr.bf16.mxu0 0
        %396 = vmatpush1.bf16.msra.mxu0 0
        %397 = vmatprep.subr.bf16.mxu0 0
        %398 = vmatpush1.bf16.msra.mxu0 0
        %399 = vmatprep.subr.bf16.mxu0 0
        %400 = vmatpush1.bf16.msra.mxu0 0
        %401 = vmatprep.subr.bf16.mxu0 0
        %402 = vmatpush1.bf16.msra.mxu0 %v342
        %403 = vmatprep.subr.bf16.mxu0 0
        %404 = vmatpush2.bf16.msra.mxu0 0
        %405 = vmatprep.subr.bf16.mxu0 0
        %406 = vmatpush2.bf16.msra.mxu0 0
        %407 = vmatprep.subr.bf16.mxu0 0
        %408 = vmatpush2.bf16.msra.mxu0 0
        %409 = vmatprep.subr.bf16.mxu0 0
        %410 = vmatpush2.bf16.msra.mxu0 0
        %411 = vmatprep.subr.bf16.mxu0 0
        %412 = vmatpush2.bf16.msra.mxu0 0
        %413 = vmatprep.subr.bf16.mxu0 0
        %414 = vmatpush2.bf16.msra.mxu0 0
        %415 = vmatprep.subr.bf16.mxu0 0
        %416 = vmatpush2.bf16.msra.mxu0 0
        %417 = vmatprep.subr.bf16.mxu0 0
        %418 = vmatpush2.bf16.msra.mxu0 0
        %419 = vmatprep.mubr.bf16.mxu0 0
        %420 = vmatmul.mubr.bf16.gmra.mxu0 %v385
        %v421 = vpop.f32.mrf.mxu0
        %v422 = vadd.f32 0.0, %v421
        %v423 = vpop.f32.mrf.mxu0
        %v424 = vpop.f32.mrf.mxu0
        %v425 = vpop.f32.mrf.mxu0
        %426 = vdwg.mxu0
        %428 = vrot.lane.b32.xlu0 %v422, 125
        %v429 = vpop.permute.xlu0 %428
        %v431 = vsub.f32 %v379, %v429
        %433 = vrot.lane.b32.xlu0 %v379, 125
        %v434 = vpop.permute.xlu0 %433
        %v436 = vadd.f32 %v422, %v434
        %438 = vrot.lane.b32.xlu0 %v436, 3
        %v439 = vpop.permute.xlu0 %438
        %v441 = vsel %vm333, %v431, %v439
        %v442 = vpack.c.bf16 %v441, %v441
        %vm443 = vcmask 48128
        %v445 = vsel %vm443, %v442, 0
        %vm447 = vcmask 1042432
        %v449 = vsel %vm447, %v312, 0
        %451 = vmatprep.subr.bf16.mxu0 0
        %452 = vmatpush1.bf16.msra.mxu0 0
        %453 = vmatprep.subr.bf16.mxu0 0
        %454 = vmatpush1.bf16.msra.mxu0 0
        %455 = vmatprep.subr.bf16.mxu0 0
        %456 = vmatpush1.bf16.msra.mxu0 0
        %457 = vmatprep.subr.bf16.mxu0 0
        %458 = vmatpush1.bf16.msra.mxu0 0
        %459 = vmatprep.subr.bf16.mxu0 0
        %460 = vmatpush1.bf16.msra.mxu0 0
        %461 = vmatprep.subr.bf16.mxu0 0
        %462 = vmatpush1.bf16.msra.mxu0 0
        %463 = vmatprep.subr.bf16.mxu0 0
        %464 = vmatpush1.bf16.msra.mxu0 0
        %465 = vmatprep.subr.bf16.mxu0 0
        %466 = vmatpush1.bf16.msra.mxu0 %v449
        %467 = vmatprep.subr.bf16.mxu0 0
        %468 = vmatpush2.bf16.msra.mxu0 0
        %469 = vmatprep.subr.bf16.mxu0 0
        %470 = vmatpush2.bf16.msra.mxu0 0
        %471 = vmatprep.subr.bf16.mxu0 0
        %472 = vmatpush2.bf16.msra.mxu0 0
        %473 = vmatprep.subr.bf16.mxu0 0
        %474 = vmatpush2.bf16.msra.mxu0 0
        %475 = vmatprep.subr.bf16.mxu0 0
        %476 = vmatpush2.bf16.msra.mxu0 0
        %477 = vmatprep.subr.bf16.mxu0 0
        %478 = vmatpush2.bf16.msra.mxu0 0
        %479 = vmatprep.subr.bf16.mxu0 0
        %480 = vmatpush2.bf16.msra.mxu0 0
        %481 = vmatprep.subr.bf16.mxu0 0
        %482 = vmatpush2.bf16.msra.mxu0 0
        %483 = vmatprep.mubr.bf16.mxu0 0
        %484 = vmatmul.mubr.bf16.gmra.mxu0 %v445
        %v485 = vpop.f32.mrf.mxu0
        %v486 = vadd.f32 0.0, %v485
        %v487 = vpop.f32.mrf.mxu0
        %v488 = vpop.f32.mrf.mxu0
        %v489 = vpop.f32.mrf.mxu0
        %490 = vdwg.mxu0
        %v492 = vrot.slane %v486, 4
        %vm494 = vcmask 1043456
        %v495 = vsel %vm494, %v486, %v492
        %497 = vrot.lane.b32.xlu0 %v495, 4
        %v498 = vpop.permute.xlu0 %497
        %v500 = vsel %vm336, %v495, %v498
        %vm501 = vcmask 64512
        %502 = vst.msk [vmem:[%s291] sm:$0xff] %vm501, %v500
        %v503 = vunpack.c.l.bf16 %v303
        %s504 = sld [smem:[#allocation2 + $0x1]]
        %v505 = vstv %s504
        %v506 = vmul.f32 %v503, %v505
        %s507 = sld [smem:[#allocation4 + $0x1]]
        %v508 = vstv %s507
        %v509 = vadd.f32 %v506, %v508
        %v510 = vmax.f32 %v509, 0.0
        %v511 = vunpack.c.l.bf16 %v307
        %s512 = sld [smem:[#allocation2 + $0x5]]
        %v513 = vstv %s512
        %v514 = vmul.f32 %v511, %v513
        %s515 = sld [smem:[#allocation4 + $0x5]]
        %v516 = vstv %s515
        %v517 = vadd.f32 %v514, %v516
        %v518 = vmax.f32 %v517, 0.0
        %520 = vrot.lane.b32.xlu0 %v518, 3
        %v521 = vpop.permute.xlu0 %520
        %v523 = vsel %vm333, %v510, %v521
        %v524 = vpack.c.bf16 %v523, %v523
        %v526 = vsel %vm340, %v524, 0
        %528 = vmatprep.subr.bf16.mxu0 0
        %529 = vmatpush1.bf16.msra.mxu0 0
        %530 = vmatprep.subr.bf16.mxu0 0
        %531 = vmatpush1.bf16.msra.mxu0 0
        %532 = vmatprep.subr.bf16.mxu0 0
        %533 = vmatpush1.bf16.msra.mxu0 0
        %534 = vmatprep.subr.bf16.mxu0 0
        %535 = vmatpush1.bf16.msra.mxu0 0
        %536 = vmatprep.subr.bf16.mxu0 0
        %537 = vmatpush1.bf16.msra.mxu0 0
        %538 = vmatprep.subr.bf16.mxu0 0
        %539 = vmatpush1.bf16.msra.mxu0 0
        %540 = vmatprep.subr.bf16.mxu0 0
        %541 = vmatpush1.bf16.msra.mxu0 0
        %542 = vmatprep.subr.bf16.mxu0 0
        %543 = vmatpush1.bf16.msra.mxu0 %v526
        %544 = vmatprep.subr.bf16.mxu0 0
        %545 = vmatpush2.bf16.msra.mxu0 0
        %546 = vmatprep.subr.bf16.mxu0 0
        %547 = vmatpush2.bf16.msra.mxu0 0
        %548 = vmatprep.subr.bf16.mxu0 0
        %549 = vmatpush2.bf16.msra.mxu0 0
        %550 = vmatprep.subr.bf16.mxu0 0
        %551 = vmatpush2.bf16.msra.mxu0 0
        %552 = vmatprep.subr.bf16.mxu0 0
        %553 = vmatpush2.bf16.msra.mxu0 0
        %554 = vmatprep.subr.bf16.mxu0 0
        %555 = vmatpush2.bf16.msra.mxu0 0
        %556 = vmatprep.subr.bf16.mxu0 0
        %557 = vmatpush2.bf16.msra.mxu0 0
        %558 = vmatprep.subr.bf16.mxu0 0
        %559 = vmatpush2.bf16.msra.mxu0 0
        %560 = vmatprep.mubr.bf16.mxu0 0
        %561 = vmatmul.mubr.bf16.gmra.mxu0 %v338
        %v562 = vpop.f32.mrf.mxu0
        %v563 = vadd.f32 0.0, %v562
        %v564 = vpop.f32.mrf.mxu0
        %v565 = vpop.f32.mrf.mxu0
        %v566 = vpop.f32.mrf.mxu0
        %567 = vdwg.mxu0
        %568 = vmatprep.subr.bf16.mxu0 0
        %569 = vmatpush1.bf16.msra.mxu0 0
        %570 = vmatprep.subr.bf16.mxu0 0
        %571 = vmatpush1.bf16.msra.mxu0 0
        %572 = vmatprep.subr.bf16.mxu0 0
        %573 = vmatpush1.bf16.msra.mxu0 0
        %574 = vmatprep.subr.bf16.mxu0 0
        %575 = vmatpush1.bf16.msra.mxu0 0
        %576 = vmatprep.subr.bf16.mxu0 0
        %577 = vmatpush1.bf16.msra.mxu0 0
        %578 = vmatprep.subr.bf16.mxu0 0
        %579 = vmatpush1.bf16.msra.mxu0 0
        %580 = vmatprep.subr.bf16.mxu0 0
        %581 = vmatpush1.bf16.msra.mxu0 0
        %582 = vmatprep.subr.bf16.mxu0 0
        %583 = vmatpush1.bf16.msra.mxu0 %v526
        %584 = vmatprep.subr.bf16.mxu0 0
        %585 = vmatpush2.bf16.msra.mxu0 0
        %586 = vmatprep.subr.bf16.mxu0 0
        %587 = vmatpush2.bf16.msra.mxu0 0
        %588 = vmatprep.subr.bf16.mxu0 0
        %589 = vmatpush2.bf16.msra.mxu0 0
        %590 = vmatprep.subr.bf16.mxu0 0
        %591 = vmatpush2.bf16.msra.mxu0 0
        %592 = vmatprep.subr.bf16.mxu0 0
        %593 = vmatpush2.bf16.msra.mxu0 0
        %594 = vmatprep.subr.bf16.mxu0 0
        %595 = vmatpush2.bf16.msra.mxu0 0
        %596 = vmatprep.subr.bf16.mxu0 0
        %597 = vmatpush2.bf16.msra.mxu0 0
        %598 = vmatprep.subr.bf16.mxu0 0
        %599 = vmatpush2.bf16.msra.mxu0 0
        %600 = vmatprep.mubr.bf16.mxu0 0
        %601 = vmatmul.mubr.bf16.gmra.mxu0 %v385
        %v602 = vpop.f32.mrf.mxu0
        %v603 = vadd.f32 0.0, %v602
        %v604 = vpop.f32.mrf.mxu0
        %v605 = vpop.f32.mrf.mxu0
        %v606 = vpop.f32.mrf.mxu0
        %607 = vdwg.mxu0
        %609 = vrot.lane.b32.xlu0 %v603, 125
        %v610 = vpop.permute.xlu0 %609
        %v612 = vsub.f32 %v563, %v610
        %614 = vrot.lane.b32.xlu0 %v563, 125
        %v615 = vpop.permute.xlu0 %614
        %v617 = vadd.f32 %v603, %v615
        %619 = vrot.lane.b32.xlu0 %v617, 3
        %v620 = vpop.permute.xlu0 %619
        %v622 = vsel %vm333, %v612, %v620
        %v623 = vpack.c.bf16 %v622, %v622
        %v625 = vsel %vm443, %v623, 0
        %627 = vmatprep.subr.bf16.mxu0 0
        %628 = vmatpush1.bf16.msra.mxu0 0
        %629 = vmatprep.subr.bf16.mxu0 0
        %630 = vmatpush1.bf16.msra.mxu0 0
        %631 = vmatprep.subr.bf16.mxu0 0
        %632 = vmatpush1.bf16.msra.mxu0 0
        %633 = vmatprep.subr.bf16.mxu0 0
        %634 = vmatpush1.bf16.msra.mxu0 0
        %635 = vmatprep.subr.bf16.mxu0 0
        %636 = vmatpush1.bf16.msra.mxu0 0
        %637 = vmatprep.subr.bf16.mxu0 0
        %638 = vmatpush1.bf16.msra.mxu0 0
        %639 = vmatprep.subr.bf16.mxu0 0
        %640 = vmatpush1.bf16.msra.mxu0 0
        %641 = vmatprep.subr.bf16.mxu0 0
        %642 = vmatpush1.bf16.msra.mxu0 %v449
        %643 = vmatprep.subr.bf16.mxu0 0
        %644 = vmatpush2.bf16.msra.mxu0 0
        %645 = vmatprep.subr.bf16.mxu0 0
        %646 = vmatpush2.bf16.msra.mxu0 0
        %647 = vmatprep.subr.bf16.mxu0 0
        %648 = vmatpush2.bf16.msra.mxu0 0
        %649 = vmatprep.subr.bf16.mxu0 0
        %650 = vmatpush2.bf16.msra.mxu0 0
        %651 = vmatprep.subr.bf16.mxu0 0
        %652 = vmatpush2.bf16.msra.mxu0 0
        %653 = vmatprep.subr.bf16.mxu0 0
        %654 = vmatpush2.bf16.msra.mxu0 0
        %655 = vmatprep.subr.bf16.mxu0 0
        %656 = vmatpush2.bf16.msra.mxu0 0
        %657 = vmatprep.subr.bf16.mxu0 0
        %658 = vmatpush2.bf16.msra.mxu0 0
        %659 = vmatprep.mubr.bf16.mxu0 0
        %660 = vmatmul.mubr.bf16.gmra.mxu0 %v625
        %v661 = vpop.f32.mrf.mxu0
        %v662 = vadd.f32 0.0, %v661
        %v663 = vpop.f32.mrf.mxu0
        %v664 = vpop.f32.mrf.mxu0
        %v665 = vpop.f32.mrf.mxu0
        %666 = vdwg.mxu0
        %v668 = vrot.slane %v662, 4
        %v670 = vsel %vm494, %v662, %v668
        %672 = vrot.lane.b32.xlu0 %v670, 4
        %v673 = vpop.permute.xlu0 %672
        %v675 = vsel %vm336, %v670, %v673
        %s676 = scalar_lea.vmem %s291, 8 [#allocation6]
        %677 = vst.msk [vmem:[%s676] sm:$0xff] %vm501, %v675
        %v678 = vunpack.c.l.bf16 %v304
        %s679 = sld [smem:[#allocation2 + $0x2]]
        %v680 = vstv %s679
        %v681 = vmul.f32 %v678, %v680
        %s682 = sld [smem:[#allocation4 + $0x2]]
        %v683 = vstv %s682
        %v684 = vadd.f32 %v681, %v683
        %v685 = vmax.f32 %v684, 0.0
        %v686 = vunpack.c.l.bf16 %v308
        %s687 = sld [smem:[#allocation2 + $0x6]]
        %v688 = vstv %s687
        %v689 = vmul.f32 %v686, %v688
        %s690 = sld [smem:[#allocation4 + $0x6]]
        %v691 = vstv %s690
        %v692 = vadd.f32 %v689, %v691
        %v693 = vmax.f32 %v692, 0.0
        %695 = vrot.lane.b32.xlu0 %v693, 3
        %v696 = vpop.permute.xlu0 %695
        %v698 = vsel %vm333, %v685, %v696
        %v699 = vpack.c.bf16 %v698, %v698
        %v701 = vsel %vm340, %v699, 0
        %703 = vmatprep.subr.bf16.mxu0 0
        %704 = vmatpush1.bf16.msra.mxu0 0
        %705 = vmatprep.subr.bf16.mxu0 0
        %706 = vmatpush1.bf16.msra.mxu0 0
        %707 = vmatprep.subr.bf16.mxu0 0
        %708 = vmatpush1.bf16.msra.mxu0 0
        %709 = vmatprep.subr.bf16.mxu0 0
        %710 = vmatpush1.bf16.msra.mxu0 0
        %711 = vmatprep.subr.bf16.mxu0 0
        %712 = vmatpush1.bf16.msra.mxu0 0
        %713 = vmatprep.subr.bf16.mxu0 0
        %714 = vmatpush1.bf16.msra.mxu0 0
        %715 = vmatprep.subr.bf16.mxu0 0
        %716 = vmatpush1.bf16.msra.mxu0 0
        %717 = vmatprep.subr.bf16.mxu0 0
        %718 = vmatpush1.bf16.msra.mxu0 %v701
        %719 = vmatprep.subr.bf16.mxu0 0
        %720 = vmatpush2.bf16.msra.mxu0 0
        %721 = vmatprep.subr.bf16.mxu0 0
        %722 = vmatpush2.bf16.msra.mxu0 0
        %723 = vmatprep.subr.bf16.mxu0 0
        %724 = vmatpush2.bf16.msra.mxu0 0
        %725 = vmatprep.subr.bf16.mxu0 0
        %726 = vmatpush2.bf16.msra.mxu0 0
        %727 = vmatprep.subr.bf16.mxu0 0
        %728 = vmatpush2.bf16.msra.mxu0 0
        %729 = vmatprep.subr.bf16.mxu0 0
        %730 = vmatpush2.bf16.msra.mxu0 0
        %731 = vmatprep.subr.bf16.mxu0 0
        %732 = vmatpush2.bf16.msra.mxu0 0
        %733 = vmatprep.subr.bf16.mxu0 0
        %734 = vmatpush2.bf16.msra.mxu0 0
        %735 = vmatprep.mubr.bf16.mxu0 0
        %736 = vmatmul.mubr.bf16.gmra.mxu0 %v338
        %v737 = vpop.f32.mrf.mxu0
        %v738 = vadd.f32 0.0, %v737
        %v739 = vpop.f32.mrf.mxu0
        %v740 = vpop.f32.mrf.mxu0
        %v741 = vpop.f32.mrf.mxu0
        %742 = vdwg.mxu0
        %743 = vmatprep.subr.bf16.mxu0 0
        %744 = vmatpush1.bf16.msra.mxu0 0
        %745 = vmatprep.subr.bf16.mxu0 0
        %746 = vmatpush1.bf16.msra.mxu0 0
        %747 = vmatprep.subr.bf16.mxu0 0
        %748 = vmatpush1.bf16.msra.mxu0 0
        %749 = vmatprep.subr.bf16.mxu0 0
        %750 = vmatpush1.bf16.msra.mxu0 0
        %751 = vmatprep.subr.bf16.mxu0 0
        %752 = vmatpush1.bf16.msra.mxu0 0
        %753 = vmatprep.subr.bf16.mxu0 0
        %754 = vmatpush1.bf16.msra.mxu0 0
        %755 = vmatprep.subr.bf16.mxu0 0
        %756 = vmatpush1.bf16.msra.mxu0 0
        %757 = vmatprep.subr.bf16.mxu0 0
        %758 = vmatpush1.bf16.msra.mxu0 %v701
        %759 = vmatprep.subr.bf16.mxu0 0
        %760 = vmatpush2.bf16.msra.mxu0 0
        %761 = vmatprep.subr.bf16.mxu0 0
        %762 = vmatpush2.bf16.msra.mxu0 0
        %763 = vmatprep.subr.bf16.mxu0 0
        %764 = vmatpush2.bf16.msra.mxu0 0
        %765 = vmatprep.subr.bf16.mxu0 0
        %766 = vmatpush2.bf16.msra.mxu0 0
        %767 = vmatprep.subr.bf16.mxu0 0
        %768 = vmatpush2.bf16.msra.mxu0 0
        %769 = vmatprep.subr.bf16.mxu0 0
        %770 = vmatpush2.bf16.msra.mxu0 0
        %771 = vmatprep.subr.bf16.mxu0 0
        %772 = vmatpush2.bf16.msra.mxu0 0
        %773 = vmatprep.subr.bf16.mxu0 0
        %774 = vmatpush2.bf16.msra.mxu0 0
        %775 = vmatprep.mubr.bf16.mxu0 0
        %776 = vmatmul.mubr.bf16.gmra.mxu0 %v385
        %v777 = vpop.f32.mrf.mxu0
        %v778 = vadd.f32 0.0, %v777
        %v779 = vpop.f32.mrf.mxu0
        %v780 = vpop.f32.mrf.mxu0
        %v781 = vpop.f32.mrf.mxu0
        %782 = vdwg.mxu0
        %784 = vrot.lane.b32.xlu0 %v778, 125
        %v785 = vpop.permute.xlu0 %784
        %v787 = vsub.f32 %v738, %v785
        %789 = vrot.lane.b32.xlu0 %v738, 125
        %v790 = vpop.permute.xlu0 %789
        %v792 = vadd.f32 %v778, %v790
        %794 = vrot.lane.b32.xlu0 %v792, 3
        %v795 = vpop.permute.xlu0 %794
        %v797 = vsel %vm333, %v787, %v795
        %v798 = vpack.c.bf16 %v797, %v797
        %v800 = vsel %vm443, %v798, 0
        %802 = vmatprep.subr.bf16.mxu0 0
        %803 = vmatpush1.bf16.msra.mxu0 0
        %804 = vmatprep.subr.bf16.mxu0 0
        %805 = vmatpush1.bf16.msra.mxu0 0
        %806 = vmatprep.subr.bf16.mxu0 0
        %807 = vmatpush1.bf16.msra.mxu0 0
        %808 = vmatprep.subr.bf16.mxu0 0
        %809 = vmatpush1.bf16.msra.mxu0 0
        %810 = vmatprep.subr.bf16.mxu0 0
        %811 = vmatpush1.bf16.msra.mxu0 0
        %812 = vmatprep.subr.bf16.mxu0 0
        %813 = vmatpush1.bf16.msra.mxu0 0
        %814 = vmatprep.subr.bf16.mxu0 0
        %815 = vmatpush1.bf16.msra.mxu0 0
        %816 = vmatprep.subr.bf16.mxu0 0
        %817 = vmatpush1.bf16.msra.mxu0 %v449
        %818 = vmatprep.subr.bf16.mxu0 0
        %819 = vmatpush2.bf16.msra.mxu0 0
        %820 = vmatprep.subr.bf16.mxu0 0
        %821 = vmatpush2.bf16.msra.mxu0 0
        %822 = vmatprep.subr.bf16.mxu0 0
        %823 = vmatpush2.bf16.msra.mxu0 0
        %824 = vmatprep.subr.bf16.mxu0 0
        %825 = vmatpush2.bf16.msra.mxu0 0
        %826 = vmatprep.subr.bf16.mxu0 0
        %827 = vmatpush2.bf16.msra.mxu0 0
        %828 = vmatprep.subr.bf16.mxu0 0
        %829 = vmatpush2.bf16.msra.mxu0 0
        %830 = vmatprep.subr.bf16.mxu0 0
        %831 = vmatpush2.bf16.msra.mxu0 0
        %832 = vmatprep.subr.bf16.mxu0 0
        %833 = vmatpush2.bf16.msra.mxu0 0
        %834 = vmatprep.mubr.bf16.mxu0 0
        %835 = vmatmul.mubr.bf16.gmra.mxu0 %v800
        %v836 = vpop.f32.mrf.mxu0
        %v837 = vadd.f32 0.0, %v836
        %v838 = vpop.f32.mrf.mxu0
        %v839 = vpop.f32.mrf.mxu0
        %v840 = vpop.f32.mrf.mxu0
        %841 = vdwg.mxu0
        %v843 = vrot.slane %v837, 4
        %v845 = vsel %vm494, %v837, %v843
        %847 = vrot.lane.b32.xlu0 %v845, 4
        %v848 = vpop.permute.xlu0 %847
        %v850 = vsel %vm336, %v845, %v848
        %s851 = scalar_lea.vmem %s291, 16 [#allocation6]
        %852 = vst.msk [vmem:[%s851] sm:$0xff] %vm501, %v850
        %v853 = vunpack.c.l.bf16 %v305
        %s854 = sld [smem:[#allocation2 + $0x3]]
        %v855 = vstv %s854
        %v856 = vmul.f32 %v853, %v855
        %s857 = sld [smem:[#allocation4 + $0x3]]
        %v858 = vstv %s857
        %v859 = vadd.f32 %v856, %v858
        %v860 = vmax.f32 %v859, 0.0
        %v861 = vunpack.c.l.bf16 %v309
        %s862 = sld [smem:[#allocation2 + $0x7]]
        %v863 = vstv %s862
        %v864 = vmul.f32 %v861, %v863
        %s865 = sld [smem:[#allocation4 + $0x7]]
        %v866 = vstv %s865
        %v867 = vadd.f32 %v864, %v866
        %v868 = vmax.f32 %v867, 0.0
        %870 = vrot.lane.b32.xlu0 %v868, 3
        %v871 = vpop.permute.xlu0 %870
        %v873 = vsel %vm333, %v860, %v871
        %v874 = vpack.c.bf16 %v873, %v873
        %v876 = vsel %vm340, %v874, 0
        %878 = vmatprep.subr.bf16.mxu0 0
        %879 = vmatpush1.bf16.msra.mxu0 0
        %880 = vmatprep.subr.bf16.mxu0 0
        %881 = vmatpush1.bf16.msra.mxu0 0
        %882 = vmatprep.subr.bf16.mxu0 0
        %883 = vmatpush1.bf16.msra.mxu0 0
        %884 = vmatprep.subr.bf16.mxu0 0
        %885 = vmatpush1.bf16.msra.mxu0 0
        %886 = vmatprep.subr.bf16.mxu0 0
        %887 = vmatpush1.bf16.msra.mxu0 0
        %888 = vmatprep.subr.bf16.mxu0 0
        %889 = vmatpush1.bf16.msra.mxu0 0
        %890 = vmatprep.subr.bf16.mxu0 0
        %891 = vmatpush1.bf16.msra.mxu0 0
        %892 = vmatprep.subr.bf16.mxu0 0
        %893 = vmatpush1.bf16.msra.mxu0 %v876
        %894 = vmatprep.subr.bf16.mxu0 0
        %895 = vmatpush2.bf16.msra.mxu0 0
        %896 = vmatprep.subr.bf16.mxu0 0
        %897 = vmatpush2.bf16.msra.mxu0 0
        %898 = vmatprep.subr.bf16.mxu0 0
        %899 = vmatpush2.bf16.msra.mxu0 0
        %900 = vmatprep.subr.bf16.mxu0 0
        %901 = vmatpush2.bf16.msra.mxu0 0
        %902 = vmatprep.subr.bf16.mxu0 0
        %903 = vmatpush2.bf16.msra.mxu0 0
        %904 = vmatprep.subr.bf16.mxu0 0
        %905 = vmatpush2.bf16.msra.mxu0 0
        %906 = vmatprep.subr.bf16.mxu0 0
        %907 = vmatpush2.bf16.msra.mxu0 0
        %908 = vmatprep.subr.bf16.mxu0 0
        %909 = vmatpush2.bf16.msra.mxu0 0
        %910 = vmatprep.mubr.bf16.mxu0 0
        %911 = vmatmul.mubr.bf16.gmra.mxu0 %v338
        %v912 = vpop.f32.mrf.mxu0
        %v913 = vadd.f32 0.0, %v912
        %v914 = vpop.f32.mrf.mxu0
        %v915 = vpop.f32.mrf.mxu0
        %v916 = vpop.f32.mrf.mxu0
        %917 = vdwg.mxu0
        %918 = vmatprep.subr.bf16.mxu0 0
        %919 = vmatpush1.bf16.msra.mxu0 0
        %920 = vmatprep.subr.bf16.mxu0 0
        %921 = vmatpush1.bf16.msra.mxu0 0
        %922 = vmatprep.subr.bf16.mxu0 0
        %923 = vmatpush1.bf16.msra.mxu0 0
        %924 = vmatprep.subr.bf16.mxu0 0
        %925 = vmatpush1.bf16.msra.mxu0 0
        %926 = vmatprep.subr.bf16.mxu0 0
        %927 = vmatpush1.bf16.msra.mxu0 0
        %928 = vmatprep.subr.bf16.mxu0 0
        %929 = vmatpush1.bf16.msra.mxu0 0
        %930 = vmatprep.subr.bf16.mxu0 0
        %931 = vmatpush1.bf16.msra.mxu0 0
        %932 = vmatprep.subr.bf16.mxu0 0
        %933 = vmatpush1.bf16.msra.mxu0 %v876
        %934 = vmatprep.subr.bf16.mxu0 0
        %935 = vmatpush2.bf16.msra.mxu0 0
        %936 = vmatprep.subr.bf16.mxu0 0
        %937 = vmatpush2.bf16.msra.mxu0 0
        %938 = vmatprep.subr.bf16.mxu0 0
        %939 = vmatpush2.bf16.msra.mxu0 0
        %940 = vmatprep.subr.bf16.mxu0 0
        %941 = vmatpush2.bf16.msra.mxu0 0
        %942 = vmatprep.subr.bf16.mxu0 0
        %943 = vmatpush2.bf16.msra.mxu0 0
        %944 = vmatprep.subr.bf16.mxu0 0
        %945 = vmatpush2.bf16.msra.mxu0 0
        %946 = vmatprep.subr.bf16.mxu0 0
        %947 = vmatpush2.bf16.msra.mxu0 0
        %948 = vmatprep.subr.bf16.mxu0 0
        %949 = vmatpush2.bf16.msra.mxu0 0
        %950 = vmatprep.mubr.bf16.mxu0 0
        %951 = vmatmul.mubr.bf16.gmra.mxu0 %v385
        %v952 = vpop.f32.mrf.mxu0
        %v953 = vadd.f32 0.0, %v952
        %v954 = vpop.f32.mrf.mxu0
        %v955 = vpop.f32.mrf.mxu0
        %v956 = vpop.f32.mrf.mxu0
        %957 = vdwg.mxu0
        %959 = vrot.lane.b32.xlu0 %v953, 125
        %v960 = vpop.permute.xlu0 %959
        %v962 = vsub.f32 %v913, %v960
        %964 = vrot.lane.b32.xlu0 %v913, 125
        %v965 = vpop.permute.xlu0 %964
        %v967 = vadd.f32 %v953, %v965
        %969 = vrot.lane.b32.xlu0 %v967, 3
        %v970 = vpop.permute.xlu0 %969
        %v972 = vsel %vm333, %v962, %v970
        %v973 = vpack.c.bf16 %v972, %v972
        %v975 = vsel %vm443, %v973, 0
        %977 = vmatprep.subr.bf16.mxu0 0
        %978 = vmatpush1.bf16.msra.mxu0 0
        %979 = vmatprep.subr.bf16.mxu0 0
        %980 = vmatpush1.bf16.msra.mxu0 0
        %981 = vmatprep.subr.bf16.mxu0 0
        %982 = vmatpush1.bf16.msra.mxu0 0
        %983 = vmatprep.subr.bf16.mxu0 0
        %984 = vmatpush1.bf16.msra.mxu0 0
        %985 = vmatprep.subr.bf16.mxu0 0
        %986 = vmatpush1.bf16.msra.mxu0 0
        %987 = vmatprep.subr.bf16.mxu0 0
        %988 = vmatpush1.bf16.msra.mxu0 0
        %989 = vmatprep.subr.bf16.mxu0 0
        %990 = vmatpush1.bf16.msra.mxu0 0
        %991 = vmatprep.subr.bf16.mxu0 0
        %992 = vmatpush1.bf16.msra.mxu0 %v449
        %993 = vmatprep.subr.bf16.mxu0 0
        %994 = vmatpush2.bf16.msra.mxu0 0
        %995 = vmatprep.subr.bf16.mxu0 0
        %996 = vmatpush2.bf16.msra.mxu0 0
        %997 = vmatprep.subr.bf16.mxu0 0
        %998 = vmatpush2.bf16.msra.mxu0 0
        %999 = vmatprep.subr.bf16.mxu0 0
        %1000 = vmatpush2.bf16.msra.mxu0 0
        %1001 = vmatprep.subr.bf16.mxu0 0
        %1002 = vmatpush2.bf16.msra.mxu0 0
        %1003 = vmatprep.subr.bf16.mxu0 0
        %1004 = vmatpush2.bf16.msra.mxu0 0
        %1005 = vmatprep.subr.bf16.mxu0 0
        %1006 = vmatpush2.bf16.msra.mxu0 0
        %1007 = vmatprep.subr.bf16.mxu0 0
        %1008 = vmatpush2.bf16.msra.mxu0 0
        %1009 = vmatprep.mubr.bf16.mxu0 0
        %1010 = vmatmul.mubr.bf16.gmra.mxu0 %v975
        %v1011 = vpop.f32.mrf.mxu0
        %v1012 = vadd.f32 0.0, %v1011
        %v1013 = vpop.f32.mrf.mxu0
        %v1014 = vpop.f32.mrf.mxu0
        %v1015 = vpop.f32.mrf.mxu0
        %1016 = vdwg.mxu0
        %v1018 = vrot.slane %v1012, 4
        %v1020 = vsel %vm494, %v1012, %v1018
        %1022 = vrot.lane.b32.xlu0 %v1020, 4
        %v1023 = vpop.permute.xlu0 %1022
        %v1025 = vsel %vm336, %v1020, %v1023
        %s1026 = scalar_lea.vmem %s291, 24 [#allocation6]
        %1027 = vst.msk [vmem:[%s1026] sm:$0xff] %vm501, %v1025
        %s1028 = sand.u32 %s174, 1
        %s1029 = sand.u32 %s174, 1
        %s1030 = smul.addr %s1029, 32
        %s1031 = scalar_lea.vmem [#allocation6], %s1030
        // Predicated region
        $region53: #{ffc_bn_act.21} parent=43 // pred_check
          %p1032 = pneg %p184
        $region54: #{ffc_bn_act.21} parent=43 // pred_check_branch
          %1034 = sbr.rel (%p1032) target = $region56
        $region55: #{ffc_bn_act.21} parent=43 // pred_region
          %s1035 = smul.addr %s23, 16
          %s1036 = sadd.s32 %s24, %s1035
          %s1037 = smul.addr %s1036, 8
          %s1038 = scalar_lea.vmem %s6, %s1037
          // Predicated region
          $region57: #{ffc_bn_act.21} parent=55 // pred_check
            _
          $region58: #{ffc_bn_act.21} parent=55 // pred_check_branch
            %1040 = sbr.rel (0) target = $region60
          $region59: #{ffc_bn_act.21} parent=55 // pred_region
            // Predicated region
            $region61: #{ffc_bn_act.21} parent=59 // pred_check
              _
            $region62: #{ffc_bn_act.21} parent=59 // pred_check_branch
              %1042 = sbr.rel (0) target = $region64
            $region63: #{ffc_bn_act.21} parent=59 // pred_region
              // Predicated region
              $region76: #{ffc_bn_act.21} parent=63 // pred_check
                _
              $region77: #{ffc_bn_act.21} parent=63 // pred_check_branch
                %1064 = sbr.rel (0) target = $region79
              $region78: #{ffc_bn_act.21} parent=63 // pred_region
                loop: start=0, step=1, limit=1
                $region80: #{ffc_bn_act.21} parent=78 // loop_pre_header
                  _
                $region81: #{ffc_bn_act.21} parent=78 // loop_header
                  %s1066 = sphi 0, %s1070
                  %p1067 = scmp.ge.s32.totalorder %s1066, 1
                  %s1071 = sphi %s1031, %s1031
                  %s1072 = sphi %s1038, %s1038
                $region82: #{ffc_bn_act.21} parent=78 // loop_header_branch
                  %1069 = sbr.rel (%p1067) target = $region86
                $region83: #{ffc_bn_act.21} parent=78 // loop_body
                  %v1073 = vld [vmem:[%s1071] sm:$0xff]
                  %1074 = vst [vmem:[%s1072] sm:$0xff] %v1073
                  %v1075 = vld [vmem:[%s1071 + $0x8] sm:$0xff]
                  %1076 = vst [vmem:[%s1072 + $0x20] sm:$0xff] %v1075
                  %v1077 = vld [vmem:[%s1071 + $0x10] sm:$0xff]
                  %1078 = vst [vmem:[%s1072 + $0x40] sm:$0xff] %v1077
                  %v1079 = vld [vmem:[%s1071 + $0x18] sm:$0xff]
                  %1080 = vst [vmem:[%s1072 + $0x60] sm:$0xff] %v1079
                $region84: #{ffc_bn_act.21} parent=78 // loop_footer
                  %s1070 = sadd.s32 1, %s1066
                $region85: #{ffc_bn_act.21} parent=78 // loop_footer_branch
                  %1065 = sbr.rel target = $region81
                $region86: #{ffc_bn_act.21} parent=78 // loop_exit
                  _
              $region79: #{ffc_bn_act.21} parent=63 // pred_fallthru
                _
              // Predicated region
              $region87: #{ffc_bn_act.21} parent=63 // pred_check
                _
              $region88: #{ffc_bn_act.21} parent=63 // pred_check_branch
                %1082 = sbr.rel target = $region90
              $region89: #{ffc_bn_act.21} parent=63 // pred_region
                _
              $region90: #{ffc_bn_act.21} parent=63 // pred_fallthru
                _
            $region64: #{ffc_bn_act.21} parent=59 // pred_fallthru
              _
            // Predicated region
            $region65: #{ffc_bn_act.21} parent=59 // pred_check
              _
            $region66: #{ffc_bn_act.21} parent=59 // pred_check_branch
              %1044 = sbr.rel target = $region68
            $region67: #{ffc_bn_act.21} parent=59 // pred_region
              %s1046 = ssub.s32 256, 1
              loop: start=0, step=1, limit=1
              $region69: #{ffc_bn_act.21} parent=67 // loop_pre_header
                _
              $region70: #{ffc_bn_act.21} parent=67 // loop_header
                %s1048 = sphi 0, %s1052
                %p1049 = scmp.ge.s32.totalorder %s1048, 1
                %s1053 = sphi %s1031, %s1031
                %s1054 = sphi %s1038, %s1038
              $region71: #{ffc_bn_act.21} parent=67 // loop_header_branch
                %1051 = sbr.rel (%p1049) target = $region75
              $region72: #{ffc_bn_act.21} parent=67 // loop_body
                %v1055 = vld [vmem:[%s1053] sm:%s1046]
                %1056 = vst [vmem:[%s1054] sm:%s1046] %v1055
                %v1057 = vld [vmem:[%s1053 + $0x8] sm:%s1046]
                %1058 = vst [vmem:[%s1054 + $0x20] sm:%s1046] %v1057
                %v1059 = vld [vmem:[%s1053 + $0x10] sm:%s1046]
                %1060 = vst [vmem:[%s1054 + $0x40] sm:%s1046] %v1059
                %v1061 = vld [vmem:[%s1053 + $0x18] sm:%s1046]
                %1062 = vst [vmem:[%s1054 + $0x60] sm:%s1046] %v1061
              $region73: #{ffc_bn_act.21} parent=67 // loop_footer
                %s1052 = sadd.s32 1, %s1048
              $region74: #{ffc_bn_act.21} parent=67 // loop_footer_branch
                %1047 = sbr.rel target = $region70
              $region75: #{ffc_bn_act.21} parent=67 // loop_exit
                _
            $region68: #{ffc_bn_act.21} parent=59 // pred_fallthru
              _
          $region60: #{ffc_bn_act.21} parent=55 // pred_fallthru
            _
          %1083 = vnop
        $region56: #{ffc_bn_act.21} parent=43 // pred_fallthru
          _
      $region44: #{ffc_bn_act.21} parent=5 // pred_fallthru
        _
      %p1084 = scmp.le.s32.totalorder 2, %s14
      // Predicated region
      $region91: #{ffc_bn_act.21} parent=5 // pred_check
        %p1085 = pneg %p1084
      $region92: #{ffc_bn_act.21} parent=5 // pred_check_branch
        %1087 = sbr.rel (%p1085) target = $region94
      $region93: #{ffc_bn_act.21} parent=5 // pred_region
        %s1088 = ssub.s32 %s14, 2
        // Predicated region
        $region95: #{ffc_bn_act.21} parent=93 // pred_check
          %p1089 = pneg %p190
        $region96: #{ffc_bn_act.21} parent=93 // pred_check_branch
          %1091 = sbr.rel (%p1089) target = $region98
        $region97: #{ffc_bn_act.21} parent=93 // pred_region
          %s1092 = sand.u32 %s175, 1
          %s1093 = sand.u32 %s175, 1
          %s1094 = smul.addr %s1093, 32
          %s1095 = scalar_lea.vmem [#allocation6], %s1094
        $region98: #{ffc_bn_act.21} parent=93 // pred_fallthru
          _
      $region94: #{ffc_bn_act.21} parent=5 // pred_fallthru
        _
    $region6: #{ffc_bn_act.21} parent=1 // loop_footer
      %s18 = sadd.s32 1, %s14
    $region7: #{ffc_bn_act.21} parent=1 // loop_footer_branch
      %13 = sbr.rel target = $region3
    $region8: #{ffc_bn_act.21} parent=1 // loop_exit
      _
    %1096 = vsyncpa [#allocation3], 1
    %s1097 = scalar_lea.sflag [#allocation3], 1
    %1098 = vsyncpa %s1097, 1
    %1099 = vsyncpa [#allocation5], 1

// kernel: ffc_bn_act.22
$region0: #{ffc_bn_act.22}
  #allocation0 [shape = 'u32[]', space=smem, size = 0x4, offset = 0x4, fixed_abs, tag = 'smem constant byte address 0x4 - core index']
  #allocation1 [shape = 'u32[144,128]{1,0:T(1,128)}', space=vmem, size = 0x12000, scoped, tag = 'internal scratch']
  %s0 = inlined_call_operand.vmem [shape: f32[2,4,256], index: 0, kind: input, shape index: {}]
  %s1 = inlined_call_operand.vmem [shape: f32[2,4,256], index: 1, kind: input, shape index: {}]
  %s2 = inlined_call_operand.vmem [shape: f32[2,4,256], index: 2, kind: input, shape index: {}]
  %s3 = inlined_call_operand.vmem [shape: f32[2,4,256], index: 3, kind: input, shape index: {}]
  %s4 = inlined_call_operand.vmem [shape: f32[8,4], index: 4, kind: input, shape index: {}]
  %s5 = inlined_call_operand.vmem [shape: f32[8,4], index: 5, kind: input, shape index: {}]
  %s6 = inlined_call_operand.vmem [shape: f32[2,8,256], index: 6, kind: output, shape index: {0}]
  %s7 = inlined_call_operand.vmem [shape: f32[2,1,8,2], index: 7, kind: output, shape index: {1}]
  %8 = xla_tuple %s6, %s7
  %s9 = sld [smem:[#allocation0]]
  $region65: #{ffc_bn_act.22} parent=0
    _
  %s11 = ssub.s32 1, %s9
  %s12 = scalar_select 0, %s11, %s9
  loop: start=0, step=1, limit=4
  $region2: #{ffc_bn_act.22} parent=0 // loop_pre_header
    _
  $region3: #{ffc_bn_act.22} parent=0 // loop_header
    %s14 = sphi 0, %s18
    %p15 = scmp.ge.s32.totalorder %s14, 4
    %s21 = sphi 0, %s33
    %s22 = sphi 0, %s29
    %s23 = sphi 0, %s21
    %s24 = sphi 0, %s22
    %s25 = sphi 0, %s23
    %s26 = sphi 0, %s24
    %s38 = sphi 0, %s40
    %s41 = sphi 0, %s38
    %s42 = sphi 0, %s41
    %s58 = sphi 0, %s42
    %s66 = sphi 0, %s68
    %s69 = sphi 0, %s66
    %s70 = sphi 0, %s69
    %s86 = sphi 0, %s70
    %s94 = sphi 0, %s96
    %s97 = sphi 0, %s94
    %s98 = sphi 0, %s97
    %s114 = sphi 0, %s98
    %s122 = sphi 0, %s124
    %s125 = sphi 0, %s122
    %s126 = sphi 0, %s125
    %s142 = sphi 0, %s126
    %s146 = sphi 0, %s146
    %s148 = sphi 0, %s146
    %s149 = sphi 0, %s148
    %s163 = sphi 0, %s149
    %s167 = sphi 0, %s167
    %s169 = sphi 0, %s167
    %s170 = sphi 0, %s169
    %s184 = sphi 0, %s170
    %s192 = sphi 0, %s194
    %s195 = sphi 0, %s192
    %s196 = sphi 0, %s195
    %s212 = sphi 0, %s196
    %s220 = sphi 0, %s222
    %s223 = sphi 0, %s220
    %s224 = sphi 0, %s223
    %s240 = sphi 0, %s224
  $region4: #{ffc_bn_act.22} parent=0 // loop_header_branch
    %17 = sbr.rel (%p15) target = $region8
  $region5: #{ffc_bn_act.22} parent=0 // loop_body
    %s19 = ssub.s32 %s14, 1
    %s20 = ssub.s32 %s14, 2
    %s27 = sadd.s32 1, %s22
    %p28 = scmp.ge.s32.totalorder %s27, 1
    %s29 = scalar_select %p28, 0, %s27
    %s30 = sadd.s32 1, %s21
    %s31 = scalar_select %p28, %s30, %s21
    %p32 = scmp.ge.s32.totalorder %s31, 2
    %s33 = scalar_select %p32, 0, %s31
    %s34 = ssub.s32 %s21, %s33
    %s35 = ssub.s32 %s22, %s29
    %s36 = sor.u32 %s34, %s35
    %p37 = scmp.eq.s32.totalorder %s36, 0
    %s39 = sadd.s32 %s38, 1
    %s40 = scalar_select %p37, %s38, %s39
    %p43 = pneg %p37
    %p44 = scmp.eq.s32.totalorder %s14, 1
    %p45 = por %p43, %p44
    %p46 = scmp.ne.s32.totalorder %s38, %s41
    %p47 = scmp.eq.s32.totalorder %s14, 0
    %p48 = por %p46, %p47
    %p49 = scmp.ne.s32.totalorder %s38, %s41
    %p50 = scmp.eq.s32.totalorder %s19, 1
    %p51 = por %p49, %p50
    %p52 = scmp.ne.s32.totalorder %s41, %s42
    %p53 = scmp.eq.s32.totalorder %s19, 0
    %p54 = por %p52, %p53
    %p55 = scmp.ne.s32.totalorder %s41, %s42
    %p56 = scmp.eq.s32.totalorder %s20, 1
    %p57 = por %p55, %p56
    %p59 = scmp.ne.s32.totalorder %s42, %s58
    %p60 = scmp.eq.s32.totalorder %s20, 0
    %p61 = por %p59, %p60
    %s62 = ssub.s32 %s21, %s33
    %s63 = ssub.s32 %s22, %s29
    %s64 = sor.u32 %s62, %s63
    %p65 = scmp.eq.s32.totalorder %s64, 0
    %s67 = sadd.s32 %s66, 1
    %s68 = scalar_select %p65, %s66, %s67
    %p71 = pneg %p65
    %p72 = scmp.eq.s32.totalorder %s14, 1
    %p73 = por %p71, %p72
    %p74 = scmp.ne.s32.totalorder %s66, %s69
    %p75 = scmp.eq.s32.totalorder %s14, 0
    %p76 = por %p74, %p75
    %p77 = scmp.ne.s32.totalorder %s66, %s69
    %p78 = scmp.eq.s32.totalorder %s19, 1
    %p79 = por %p77, %p78
    %p80 = scmp.ne.s32.totalorder %s69, %s70
    %p81 = scmp.eq.s32.totalorder %s19, 0
    %p82 = por %p80, %p81
    %p83 = scmp.ne.s32.totalorder %s69, %s70
    %p84 = scmp.eq.s32.totalorder %s20, 1
    %p85 = por %p83, %p84
    %p87 = scmp.ne.s32.totalorder %s70, %s86
    %p88 = scmp.eq.s32.totalorder %s20, 0
    %p89 = por %p87, %p88
    %s90 = ssub.s32 %s21, %s33
    %s91 = ssub.s32 %s22, %s29
    %s92 = sor.u32 %s90, %s91
    %p93 = scmp.eq.s32.totalorder %s92, 0
    %s95 = sadd.s32 %s94, 1
    %s96 = scalar_select %p93, %s94, %s95
    %p99 = pneg %p93
    %p100 = scmp.eq.s32.totalorder %s14, 1
    %p101 = por %p99, %p100
    %p102 = scmp.ne.s32.totalorder %s94, %s97
    %p103 = scmp.eq.s32.totalorder %s14, 0
    %p104 = por %p102, %p103
    %p105 = scmp.ne.s32.totalorder %s94, %s97
    %p106 = scmp.eq.s32.totalorder %s19, 1
    %p107 = por %p105, %p106
    %p108 = scmp.ne.s32.totalorder %s97, %s98
    %p109 = scmp.eq.s32.totalorder %s19, 0
    %p110 = por %p108, %p109
    %p111 = scmp.ne.s32.totalorder %s97, %s98
    %p112 = scmp.eq.s32.totalorder %s20, 1
    %p113 = por %p111, %p112
    %p115 = scmp.ne.s32.totalorder %s98, %s114
    %p116 = scmp.eq.s32.totalorder %s20, 0
    %p117 = por %p115, %p116
    %s118 = ssub.s32 %s21, %s33
    %s119 = ssub.s32 %s22, %s29
    %s120 = sor.u32 %s118, %s119
    %p121 = scmp.eq.s32.totalorder %s120, 0
    %s123 = sadd.s32 %s122, 1
    %s124 = scalar_select %p121, %s122, %s123
    %p127 = pneg %p121
    %p128 = scmp.eq.s32.totalorder %s14, 1
    %p129 = por %p127, %p128
    %p130 = scmp.ne.s32.totalorder %s122, %s125
    %p131 = scmp.eq.s32.totalorder %s14, 0
    %p132 = por %p130, %p131
    %p133 = scmp.ne.s32.totalorder %s122, %s125
    %p134 = scmp.eq.s32.totalorder %s19, 1
    %p135 = por %p133, %p134
    %p136 = scmp.ne.s32.totalorder %s125, %s126
    %p137 = scmp.eq.s32.totalorder %s19, 0
    %p138 = por %p136, %p137
    %p139 = scmp.ne.s32.totalorder %s125, %s126
    %p140 = scmp.eq.s32.totalorder %s20, 1
    %p141 = por %p139, %p140
    %p143 = scmp.ne.s32.totalorder %s126, %s142
    %p144 = scmp.eq.s32.totalorder %s20, 0
    %p145 = por %p143, %p144
    %s147 = sadd.s32 %s146, 1
    %p150 = scmp.eq.s32.totalorder %s14, 1
    %p151 = scmp.ne.s32.totalorder %s146, %s148
    %p152 = scmp.eq.s32.totalorder %s14, 0
    %p153 = por %p151, %p152
    %p154 = scmp.ne.s32.totalorder %s146, %s148
    %p155 = scmp.eq.s32.totalorder %s19, 1
    %p156 = por %p154, %p155
    %p157 = scmp.ne.s32.totalorder %s148, %s149
    %p158 = scmp.eq.s32.totalorder %s19, 0
    %p159 = por %p157, %p158
    %p160 = scmp.ne.s32.totalorder %s148, %s149
    %p161 = scmp.eq.s32.totalorder %s20, 1
    %p162 = por %p160, %p161
    %p164 = scmp.ne.s32.totalorder %s149, %s163
    %p165 = scmp.eq.s32.totalorder %s20, 0
    %p166 = por %p164, %p165
    %s168 = sadd.s32 %s167, 1
    %p171 = scmp.eq.s32.totalorder %s14, 1
    %p172 = scmp.ne.s32.totalorder %s167, %s169
    %p173 = scmp.eq.s32.totalorder %s14, 0
    %p174 = por %p172, %p173
    %p175 = scmp.ne.s32.totalorder %s167, %s169
    %p176 = scmp.eq.s32.totalorder %s19, 1
    %p177 = por %p175, %p176
    %p178 = scmp.ne.s32.totalorder %s169, %s170
    %p179 = scmp.eq.s32.totalorder %s19, 0
    %p180 = por %p178, %p179
    %p181 = scmp.ne.s32.totalorder %s169, %s170
    %p182 = scmp.eq.s32.totalorder %s20, 1
    %p183 = por %p181, %p182
    %p185 = scmp.ne.s32.totalorder %s170, %s184
    %p186 = scmp.eq.s32.totalorder %s20, 0
    %p187 = por %p185, %p186
    %s188 = ssub.s32 %s21, %s33
    %s189 = ssub.s32 %s22, %s29
    %s190 = sor.u32 %s188, %s189
    %p191 = scmp.eq.s32.totalorder %s190, 0
    %s193 = sadd.s32 %s192, 1
    %s194 = scalar_select %p191, %s192, %s193
    %p197 = pneg %p191
    %p198 = scmp.eq.s32.totalorder %s14, 1
    %p199 = por %p197, %p198
    %p200 = scmp.ne.s32.totalorder %s192, %s195
    %p201 = scmp.eq.s32.totalorder %s14, 0
    %p202 = por %p200, %p201
    %p203 = scmp.ne.s32.totalorder %s192, %s195
    %p204 = scmp.eq.s32.totalorder %s19, 1
    %p205 = por %p203, %p204
    %p206 = scmp.ne.s32.totalorder %s195, %s196
    %p207 = scmp.eq.s32.totalorder %s19, 0
    %p208 = por %p206, %p207
    %p209 = scmp.ne.s32.totalorder %s195, %s196
    %p210 = scmp.eq.s32.totalorder %s20, 1
    %p211 = por %p209, %p210
    %p213 = scmp.ne.s32.totalorder %s196, %s212
    %p214 = scmp.eq.s32.totalorder %s20, 0
    %p215 = por %p213, %p214
    %s216 = ssub.s32 %s21, %s33
    %s217 = ssub.s32 %s22, %s29
    %s218 = sor.u32 %s216, %s217
    %p219 = scmp.eq.s32.totalorder %s218, 0
    %s221 = sadd.s32 %s220, 1
    %s222 = scalar_select %p219, %s220, %s221
    %p225 = pneg %p219
    %p226 = scmp.eq.s32.totalorder %s14, 1
    %p227 = por %p225, %p226
    %p228 = scmp.ne.s32.totalorder %s220, %s223
    %p229 = scmp.eq.s32.totalorder %s14, 0
    %p230 = por %p228, %p229
    %p231 = scmp.ne.s32.totalorder %s220, %s223
    %p232 = scmp.eq.s32.totalorder %s19, 1
    %p233 = por %p231, %p232
    %p234 = scmp.ne.s32.totalorder %s223, %s224
    %p235 = scmp.eq.s32.totalorder %s19, 0
    %p236 = por %p234, %p235
    %p237 = scmp.ne.s32.totalorder %s223, %s224
    %p238 = scmp.eq.s32.totalorder %s20, 1
    %p239 = por %p237, %p238
    %p241 = scmp.ne.s32.totalorder %s224, %s240
    %p242 = scmp.eq.s32.totalorder %s20, 0
    %p243 = por %p241, %p242
    %p244 = scmp.le.s32.totalorder 1, %s14
    %p245 = scmp.lt.s32.totalorder %s14, 3
    %p246 = pnand %p244, %p245
    %p247 = pneg %p246
    // Predicated region
    $region9: #{ffc_bn_act.22} parent=5 // pred_check
      _
    $region10: #{ffc_bn_act.22} parent=5 // pred_check_branch
      %249 = sbr.rel (%p246) target = $region12
    $region11: #{ffc_bn_act.22} parent=5 // pred_region
      %s250 = ssub.s32 %s14, 1
      // Predicated region
      $region13: #{ffc_bn_act.22} parent=11 // pred_check
        %p251 = pneg %p159
      $region14: #{ffc_bn_act.22} parent=11 // pred_check_branch
        %253 = sbr.rel (%p251) target = $region16
      $region15: #{ffc_bn_act.22} parent=11 // pred_region
        _
      $region16: #{ffc_bn_act.22} parent=11 // pred_fallthru
        _
      // Predicated region
      $region17: #{ffc_bn_act.22} parent=11 // pred_check
        %p254 = pneg %p180
      $region18: #{ffc_bn_act.22} parent=11 // pred_check_branch
        %256 = sbr.rel (%p254) target = $region20
      $region19: #{ffc_bn_act.22} parent=11 // pred_region
        _
      $region20: #{ffc_bn_act.22} parent=11 // pred_fallthru
        _
    $region12: #{ffc_bn_act.22} parent=5 // pred_fallthru
      _
    %p257 = scmp.lt.s32.totalorder %s14, 2
    // Predicated region
    $region21: #{ffc_bn_act.22} parent=5 // pred_check
      %p258 = pneg %p257
    $region22: #{ffc_bn_act.22} parent=5 // pred_check_branch
      %260 = sbr.rel (%p258) target = $region24
    $region23: #{ffc_bn_act.22} parent=5 // pred_region
      // Predicated region
      $region25: #{ffc_bn_act.22} parent=23 // pred_check
        %p261 = pneg %p48
      $region26: #{ffc_bn_act.22} parent=23 // pred_check_branch
        %263 = sbr.rel (%p261) target = $region28
      $region27: #{ffc_bn_act.22} parent=23 // pred_region
        %s264 = smul.u32 2, %s22
        %p265 = scmp.lt.s32.totalorder %s21, 1
        %s266 = scalar_select %p265, %s21, 1
        %p267 = scmp.lt.s32.totalorder %s264, 1
        %s268 = scalar_select %p267, %s264, 1
        %s269 = smul.addr %s266, 2
        %s270 = sadd.s32 %s268, %s269
        %s271 = smul.addr %s270, 4
        %s272 = scalar_lea.vmem %s0, %s271
        %s273 = smul.u32 2, %s22
      $region28: #{ffc_bn_act.22} parent=23 // pred_fallthru
        _
      // Predicated region
      $region29: #{ffc_bn_act.22} parent=23 // pred_check
        %p274 = pneg %p76
      $region30: #{ffc_bn_act.22} parent=23 // pred_check_branch
        %276 = sbr.rel (%p274) target = $region32
      $region31: #{ffc_bn_act.22} parent=23 // pred_region
        %s277 = smul.u32 2, %s22
        %p278 = scmp.lt.s32.totalorder %s21, 1
        %s279 = scalar_select %p278, %s21, 1
        %p280 = scmp.lt.s32.totalorder %s277, 1
        %s281 = scalar_select %p280, %s277, 1
        %s282 = smul.addr %s279, 2
        %s283 = sadd.s32 %s281, %s282
        %s284 = smul.addr %s283, 4
        %s285 = scalar_lea.vmem %s1, %s284
        %s286 = smul.u32 2, %s22
      $region32: #{ffc_bn_act.22} parent=23 // pred_fallthru
        _
      // Predicated region
      $region33: #{ffc_bn_act.22} parent=23 // pred_check
        %p287 = pneg %p104
      $region34: #{ffc_bn_act.22} parent=23 // pred_check_branch
        %289 = sbr.rel (%p287) target = $region36
      $region35: #{ffc_bn_act.22} parent=23 // pred_region
        %s290 = smul.u32 2, %s22
        %p291 = scmp.lt.s32.totalorder %s21, 1
        %s292 = scalar_select %p291, %s21, 1
        %p293 = scmp.lt.s32.totalorder %s290, 1
        %s294 = scalar_select %p293, %s290, 1
        %s295 = smul.addr %s292, 2
        %s296 = sadd.s32 %s294, %s295
        %s297 = smul.addr %s296, 4
        %s298 = scalar_lea.vmem %s2, %s297
        %s299 = smul.u32 2, %s22
      $region36: #{ffc_bn_act.22} parent=23 // pred_fallthru
        _
      // Predicated region
      $region37: #{ffc_bn_act.22} parent=23 // pred_check
        %p300 = pneg %p132
      $region38: #{ffc_bn_act.22} parent=23 // pred_check_branch
        %302 = sbr.rel (%p300) target = $region40
      $region39: #{ffc_bn_act.22} parent=23 // pred_region
        %s303 = smul.u32 2, %s22
        %p304 = scmp.lt.s32.totalorder %s21, 1
        %s305 = scalar_select %p304, %s21, 1
        %p306 = scmp.lt.s32.totalorder %s303, 1
        %s307 = scalar_select %p306, %s303, 1
        %s308 = smul.addr %s305, 2
        %s309 = sadd.s32 %s307, %s308
        %s310 = smul.addr %s309, 4
        %s311 = scalar_lea.vmem %s3, %s310
        %s312 = smul.u32 2, %s22
      $region40: #{ffc_bn_act.22} parent=23 // pred_fallthru
        _
    $region24: #{ffc_bn_act.22} parent=5 // pred_fallthru
      _
    %p313 = scmp.le.s32.totalorder 1, %s14
    %p314 = scmp.lt.s32.totalorder %s14, 3
    %p315 = pnand %p313, %p314
    %p316 = pneg %p315
    // Predicated region
    $region41: #{ffc_bn_act.22} parent=5 // pred_check
      _
    $region42: #{ffc_bn_act.22} parent=5 // pred_check_branch
      %318 = sbr.rel (%p315) target = $region44
    $region43: #{ffc_bn_act.22} parent=5 // pred_region
      %s319 = ssub.s32 %s14, 1
      %s320 = smul.u32 2, %s24
      %p321 = scmp.lt.s32.totalorder %s23, 1
      %s322 = scalar_select %p321, %s23, 1
      %p323 = scmp.lt.s32.totalorder %s320, 1
      %s324 = scalar_select %p323, %s320, 1
      %s325 = smul.addr %s322, 2
      %s326 = sadd.s32 %s324, %s325
      %s327 = smul.addr %s326, 4
      %s328 = scalar_lea.vmem %s0, %s327
      %p329 = pneg %p54
      %p330 = pneg %p51
      %s331 = smul.u32 2, %s24
      %p332 = scmp.lt.s32.totalorder %s23, 1
      %s333 = scalar_select %p332, %s23, 1
      %p334 = scmp.lt.s32.totalorder %s331, 1
      %s335 = scalar_select %p334, %s331, 1
      %s336 = smul.addr %s333, 2
      %s337 = sadd.s32 %s335, %s336
      %s338 = smul.addr %s337, 4
      %s339 = scalar_lea.vmem %s1, %s338
      %p340 = pneg %p82
      %p341 = pneg %p79
      %s342 = smul.u32 2, %s24
      %p343 = scmp.lt.s32.totalorder %s23, 1
      %s344 = scalar_select %p343, %s23, 1
      %p345 = scmp.lt.s32.totalorder %s342, 1
      %s346 = scalar_select %p345, %s342, 1
      %s347 = smul.addr %s344, 2
      %s348 = sadd.s32 %s346, %s347
      %s349 = smul.addr %s348, 4
      %s350 = scalar_lea.vmem %s2, %s349
      %p351 = pneg %p110
      %p352 = pneg %p107
      %s353 = smul.u32 2, %s24
      %p354 = scmp.lt.s32.totalorder %s23, 1
      %s355 = scalar_select %p354, %s23, 1
      %p356 = scmp.lt.s32.totalorder %s353, 1
      %s357 = scalar_select %p356, %s353, 1
      %s358 = smul.addr %s355, 2
      %s359 = sadd.s32 %s357, %s358
      %s360 = smul.addr %s359, 4
      %s361 = scalar_lea.vmem %s3, %s360
      %p362 = pneg %p138
      %p363 = pneg %p135
      %p364 = pneg %p159
      %p365 = pneg %p156
      %p366 = pneg %p180
      %p367 = pneg %p177
      %p368 = pneg %p208
      %p369 = pneg %p205
      %s370 = smul.u32 2, %s24
      %p371 = scmp.lt.s32.totalorder %s23, 1
      %s372 = scalar_select %p371, %s23, 1
      %p373 = scmp.lt.s32.totalorder %s370, 1
      %s374 = scalar_select %p373, %s370, 1
      %s375 = smul.addr %s372, 2
      %s376 = sadd.s32 %s374, %s375
      %s377 = smul.addr %s376, 8
      %s378 = scalar_lea.vmem %s6, %s377
      %p379 = pneg %p236
      %p380 = pneg %p233
      %p381 = scmp.lt.s32.totalorder %s23, 1
      %s382 = scalar_select %p381, %s23, 1
      %p383 = scmp.lt.s32.totalorder %s24, 0
      %s384 = scalar_select %p383, %s24, 0
      %s385 = sadd.s32 %s384, %s382
      %s386 = smul.addr %s385, 8
      %s387 = scalar_lea.vmem %s7, %s386
      %s388 = smul.u32 2, %s24
      %p389 = scmp.lt.s32.totalorder %s23, 1
      %s390 = scalar_select %p389, %s23, 1
      %p391 = scmp.lt.s32.totalorder %s388, 1
      %s392 = scalar_select %p391, %s388, 1
      %s393 = smul.addr %s390, 2
      %s394 = sadd.s32 %s392, %s393
      %s395 = smul.addr %s394, 4
      %s396 = scalar_lea.vmem %s0, %s395
      %s397 = smul.u32 2, %s24
      %s398 = smul.u32 2, %s24
      %p399 = scmp.lt.s32.totalorder %s23, 1
      %s400 = scalar_select %p399, %s23, 1
      %p401 = scmp.lt.s32.totalorder %s398, 1
      %s402 = scalar_select %p401, %s398, 1
      %s403 = smul.addr %s400, 2
      %s404 = sadd.s32 %s402, %s403
      %s405 = smul.addr %s404, 4
      %s406 = scalar_lea.vmem %s1, %s405
      %s407 = smul.u32 2, %s24
      %s408 = smul.u32 2, %s24
      %p409 = scmp.lt.s32.totalorder %s23, 1
      %s410 = scalar_select %p409, %s23, 1
      %p411 = scmp.lt.s32.totalorder %s408, 1
      %s412 = scalar_select %p411, %s408, 1
      %s413 = smul.addr %s410, 2
      %s414 = sadd.s32 %s412, %s413
      %s415 = smul.addr %s414, 4
      %s416 = scalar_lea.vmem %s2, %s415
      %s417 = smul.u32 2, %s24
      %s418 = smul.u32 2, %s24
      %p419 = scmp.lt.s32.totalorder %s23, 1
      %s420 = scalar_select %p419, %s23, 1
      %p421 = scmp.lt.s32.totalorder %s418, 1
      %s422 = scalar_select %p421, %s418, 1
      %s423 = smul.addr %s420, 2
      %s424 = sadd.s32 %s422, %s423
      %s425 = smul.addr %s424, 4
      %s426 = scalar_lea.vmem %s3, %s425
      %s427 = smul.u32 2, %s24
      %s428 = smul.u32 2, %s24
      %p429 = scmp.lt.s32.totalorder %s23, 1
      %s430 = scalar_select %p429, %s23, 1
      %p431 = scmp.lt.s32.totalorder %s428, 1
      %s432 = scalar_select %p431, %s428, 1
      %s433 = smul.addr %s430, 2
      %s434 = sadd.s32 %s432, %s433
      %s435 = smul.addr %s434, 8
      %s436 = scalar_lea.vmem %s6, %s435
      %s437 = smul.u32 2, %s24
      %p438 = scmp.lt.s32.totalorder %s23, 1
      %s439 = scalar_select %p438, %s23, 1
      %p440 = scmp.lt.s32.totalorder %s24, 0
      %s441 = scalar_select %p440, %s24, 0
      %s442 = sadd.s32 %s441, %s439
      %s443 = smul.addr %s442, 8
      %s444 = scalar_lea.vmem %s7, %s443
      %v445 = vld [vmem:[%s4] sm:$0xff]
      %v446 = vld [vmem:[%s396] sm:$0xff]
      %v447 = vld [vmem:[%s406] sm:$0xff]
      %v448 = vadd.f32 %v446, %v447
      %v449 = vld [vmem:[%s416] sm:$0xff]
      %v450 = vadd.f32 %v448, %v449
      %v451 = vld [vmem:[%s5] sm:$0xff]
      %v452 = vld [vmem:[%s426] sm:$0xff]
      %v454 = vcombine.high %v452, %v452
      %vm455 = vcmask 31744
      %v457 = vsel %vm455, %v451, 0
      %vm459 = vcmask 1043456
      %v460 = vsel %vm459, %v452, 0
      %v462 = vsel %vm459, %v454, 0
      %464 = vmatprep.subr.mxu0 0.0
      %465 = vmatpush1.msra.mxu0 0.0
      %466 = vmatprep.subr.mxu0 0.0
      %467 = vmatpush1.msra.mxu0 0.0
      %468 = vmatprep.subr.mxu0 0.0
      %469 = vmatpush1.msra.mxu0 0.0
      %470 = vmatprep.subr.mxu0 0.0
      %471 = vmatpush1.msra.mxu0 0.0
      %472 = vmatprep.subr.mxu0 0.0
      %473 = vmatpush1.msra.mxu0 0.0
      %474 = vmatprep.subr.mxu0 0.0
      %475 = vmatpush1.msra.mxu0 0.0
      %476 = vmatprep.subr.mxu0 0.0
      %477 = vmatpush1.msra.mxu0 0.0
      %478 = vmatprep.subr.mxu0 0.0
      %479 = vmatpush1.msra.mxu0 0.0
      %480 = vmatprep.subr.mxu0 0.0
      %481 = vmatpush1.msra.mxu0 0.0
      %482 = vmatprep.subr.mxu0 0.0
      %483 = vmatpush1.msra.mxu0 0.0
      %484 = vmatprep.subr.mxu0 0.0
      %485 = vmatpush1.msra.mxu0 0.0
      %486 = vmatprep.subr.mxu0 0.0
      %487 = vmatpush1.msra.mxu0 0.0
      %488 = vmatprep.subr.mxu0 0.0
      %489 = vmatpush1.msra.mxu0 0.0
      %490 = vmatprep.subr.mxu0 0.0
      %491 = vmatpush1.msra.mxu0 0.0
      %492 = vmatprep.subr.mxu0 0.0
      %493 = vmatpush1.msra.mxu0 0.0
      %494 = vmatprep.subr.mxu0 %v462
      %495 = vmatpush1.msra.mxu0 %v460
      %496 = vmatprep.subr.mxu0 0.0
      %497 = vmatpush2.msra.mxu0 0.0
      %498 = vmatprep.subr.mxu0 0.0
      %499 = vmatpush2.msra.mxu0 0.0
      %500 = vmatprep.subr.mxu0 0.0
      %501 = vmatpush2.msra.mxu0 0.0
      %502 = vmatprep.subr.mxu0 0.0
      %503 = vmatpush2.msra.mxu0 0.0
      %504 = vmatprep.subr.mxu0 0.0
      %505 = vmatpush2.msra.mxu0 0.0
      %506 = vmatprep.subr.mxu0 0.0
      %507 = vmatpush2.msra.mxu0 0.0
      %508 = vmatprep.subr.mxu0 0.0
      %509 = vmatpush2.msra.mxu0 0.0
      %510 = vmatprep.subr.mxu0 0.0
      %511 = vmatpush2.msra.mxu0 0.0
      %512 = vmatprep.subr.mxu0 0.0
      %513 = vmatpush2.msra.mxu0 0.0
      %514 = vmatprep.subr.mxu0 0.0
      %515 = vmatpush2.msra.mxu0 0.0
      %516 = vmatprep.subr.mxu0 0.0
      %517 = vmatpush2.msra.mxu0 0.0
      %518 = vmatprep.subr.mxu0 0.0
      %519 = vmatpush2.msra.mxu0 0.0
      %520 = vmatprep.subr.mxu0 0.0
      %521 = vmatpush2.msra.mxu0 0.0
      %522 = vmatprep.subr.mxu0 0.0
      %523 = vmatpush2.msra.mxu0 0.0
      %524 = vmatprep.subr.mxu0 0.0
      %525 = vmatpush2.msra.mxu0 0.0
      %526 = vmatprep.subr.mxu0 0.0
      %527 = vmatpush2.msra.mxu0 0.0
      %528 = vmatprep.mubr.f32.mxu0 0.0
      %529 = vmatmul.mubr.f32.gmra.mxu0 %v457
      %v530 = vpop.f32.mrf.mxu0
      %v531 = vadd.f32 0.0, %v530
      %v532 = vpop.f32.mrf.mxu0
      %v533 = vadd.f32 0.0, %v532
      %534 = vdwg.mxu0
      %v536 = vcombine.high %v450, %v450
      %v538 = vsel %vm455, %v445, 0
      %v540 = vsel %vm459, %v450, 0
      %v542 = vsel %vm459, %v536, 0
      %544 = vmatprep.subr.mxu0 0.0
      %545 = vmatpush1.msra.mxu0 0.0
      %546 = vmatprep.subr.mxu0 0.0
      %547 = vmatpush1.msra.mxu0 0.0
      %548 = vmatprep.subr.mxu0 0.0
      %549 = vmatpush1.msra.mxu0 0.0
      %550 = vmatprep.subr.mxu0 0.0
      %551 = vmatpush1.msra.mxu0 0.0
      %552 = vmatprep.subr.mxu0 0.0
      %553 = vmatpush1.msra.mxu0 0.0
      %554 = vmatprep.subr.mxu0 0.0
      %555 = vmatpush1.msra.mxu0 0.0
      %556 = vmatprep.subr.mxu0 0.0
      %557 = vmatpush1.msra.mxu0 0.0
      %558 = vmatprep.subr.mxu0 0.0
      %559 = vmatpush1.msra.mxu0 0.0
      %560 = vmatprep.subr.mxu0 0.0
      %561 = vmatpush1.msra.mxu0 0.0
      %562 = vmatprep.subr.mxu0 0.0
      %563 = vmatpush1.msra.mxu0 0.0
      %564 = vmatprep.subr.mxu0 0.0
      %565 = vmatpush1.msra.mxu0 0.0
      %566 = vmatprep.subr.mxu0 0.0
      %567 = vmatpush1.msra.mxu0 0.0
      %568 = vmatprep.subr.mxu0 0.0
      %569 = vmatpush1.msra.mxu0 0.0
      %570 = vmatprep.subr.mxu0 0.0
      %571 = vmatpush1.msra.mxu0 0.0
      %572 = vmatprep.subr.mxu0 0.0
      %573 = vmatpush1.msra.mxu0 0.0
      %574 = vmatprep.subr.mxu0 %v542
      %575 = vmatpush1.msra.mxu0 %v540
      %576 = vmatprep.subr.mxu0 0.0
      %577 = vmatpush2.msra.mxu0 0.0
      %578 = vmatprep.subr.mxu0 0.0
      %579 = vmatpush2.msra.mxu0 0.0
      %580 = vmatprep.subr.mxu0 0.0
      %581 = vmatpush2.msra.mxu0 0.0
      %582 = vmatprep.subr.mxu0 0.0
      %583 = vmatpush2.msra.mxu0 0.0
      %584 = vmatprep.subr.mxu0 0.0
      %585 = vmatpush2.msra.mxu0 0.0
      %586 = vmatprep.subr.mxu0 0.0
      %587 = vmatpush2.msra.mxu0 0.0
      %588 = vmatprep.subr.mxu0 0.0
      %589 = vmatpush2.msra.mxu0 0.0
      %590 = vmatprep.subr.mxu0 0.0
      %591 = vmatpush2.msra.mxu0 0.0
      %592 = vmatprep.subr.mxu0 0.0
      %593 = vmatpush2.msra.mxu0 0.0
      %594 = vmatprep.subr.mxu0 0.0
      %595 = vmatpush2.msra.mxu0 0.0
      %596 = vmatprep.subr.mxu0 0.0
      %597 = vmatpush2.msra.mxu0 0.0
      %598 = vmatprep.subr.mxu0 0.0
      %599 = vmatpush2.msra.mxu0 0.0
      %600 = vmatprep.subr.mxu0 0.0
      %601 = vmatpush2.msra.mxu0 0.0
      %602 = vmatprep.subr.mxu0 0.0
      %603 = vmatpush2.msra.mxu0 0.0
      %604 = vmatprep.subr.mxu0 0.0
      %605 = vmatpush2.msra.mxu0 0.0
      %606 = vmatprep.subr.mxu0 0.0
      %607 = vmatpush2.msra.mxu0 0.0
      %608 = vmatprep.mubr.f32.mxu0 0.0
      %609 = vmatmul.mubr.f32.gmra.mxu0 %v538
      %v610 = vpop.f32.mrf.mxu0
      %v611 = vadd.f32 %v531, %v610
      %v612 = vpop.f32.mrf.mxu0
      %v613 = vadd.f32 %v533, %v612
      %614 = vdwg.mxu0
      %615 = vst [vmem:[%s436] sm:$0xff] %v611
      %616 = vst [vmem:[%s436 + $0x8] sm:$0xff] %v613
      %v617 = vadd.f32 %v611, %v613
      %618 = vadd.xlane.f32.xlu0 %v617
      %v619 = vpop.xlane.xlu0 %618
      %v620 = vmul.f32 %v611, %v611
      %v621 = vmul.f32 %v613, %v613
      %v622 = vadd.f32 %v620, %v621
      %623 = vadd.xlane.f32.xlu0 %v622
      %v624 = vpop.xlane.xlu0 %623
      %vm625 = vcmask 7168
      %v626 = vsel %vm625, %v619, %v624
      %vm627 = vcmask 15360
      %628 = vst.msk [vmem:[%s444] sm:$0xff] %vm627, %v626
      %s629 = smul.u32 2, %s24
      %p630 = scmp.lt.s32.totalorder %s23, 1
      %s631 = scalar_select %p630, %s23, 1
      %p632 = scmp.lt.s32.totalorder %s629, 1
      %s633 = scalar_select %p632, %s629, 1
      %s634 = smul.addr %s631, 2
      %s635 = sadd.s32 %s633, %s634
      %s636 = smul.addr %s635, 8
      %s637 = scalar_lea.vmem %s6, %s636
      %p638 = scmp.lt.s32.totalorder %s23, 1
      %s639 = scalar_select %p638, %s23, 1
      %p640 = scmp.lt.s32.totalorder %s24, 0
      %s641 = scalar_select %p640, %s24, 0
      %s642 = sadd.s32 %s641, %s639
      %s643 = smul.addr %s642, 8
      %s644 = scalar_lea.vmem %s7, %s643
      // Predicated region
      $region45: #{ffc_bn_act.22} parent=43 // pred_check
        %p645 = pneg %p205
      $region46: #{ffc_bn_act.22} parent=43 // pred_check_branch
        %647 = sbr.rel (%p645) target = $region48
      $region47: #{ffc_bn_act.22} parent=43 // pred_region
        %s648 = smul.u32 2, %s24
      $region48: #{ffc_bn_act.22} parent=43 // pred_fallthru
        _
      // Predicated region
      $region49: #{ffc_bn_act.22} parent=43 // pred_check
        %p649 = pneg %p233
      $region50: #{ffc_bn_act.22} parent=43 // pred_check_branch
        %651 = sbr.rel (%p649) target = $region52
      $region51: #{ffc_bn_act.22} parent=43 // pred_region
        _
      $region52: #{ffc_bn_act.22} parent=43 // pred_fallthru
        _
    $region44: #{ffc_bn_act.22} parent=5 // pred_fallthru
      _
    %p652 = scmp.le.s32.totalorder 2, %s14
    // Predicated region
    $region53: #{ffc_bn_act.22} parent=5 // pred_check
      %p653 = pneg %p652
    $region54: #{ffc_bn_act.22} parent=5 // pred_check_branch
      %655 = sbr.rel (%p653) target = $region56
    $region55: #{ffc_bn_act.22} parent=5 // pred_region
      %s656 = ssub.s32 %s14, 2
      // Predicated region
      $region57: #{ffc_bn_act.22} parent=55 // pred_check
        %p657 = pneg %p211
      $region58: #{ffc_bn_act.22} parent=55 // pred_check_branch
        %659 = sbr.rel (%p657) target = $region60
      $region59: #{ffc_bn_act.22} parent=55 // pred_region
        %s660 = smul.u32 2, %s26
        %p661 = scmp.lt.s32.totalorder %s25, 1
        %s662 = scalar_select %p661, %s25, 1
        %p663 = scmp.lt.s32.totalorder %s660, 1
        %s664 = scalar_select %p663, %s660, 1
        %s665 = smul.addr %s662, 2
        %s666 = sadd.s32 %s664, %s665
        %s667 = smul.addr %s666, 8
        %s668 = scalar_lea.vmem %s6, %s667
      $region60: #{ffc_bn_act.22} parent=55 // pred_fallthru
        _
      // Predicated region
      $region61: #{ffc_bn_act.22} parent=55 // pred_check
        %p669 = pneg %p239
      $region62: #{ffc_bn_act.22} parent=55 // pred_check_branch
        %671 = sbr.rel (%p669) target = $region64
      $region63: #{ffc_bn_act.22} parent=55 // pred_region
        %p672 = scmp.lt.s32.totalorder %s25, 1
        %s673 = scalar_select %p672, %s25, 1
        %p674 = scmp.lt.s32.totalorder %s26, 0
        %s675 = scalar_select %p674, %s26, 0
        %s676 = sadd.s32 %s675, %s673
        %s677 = smul.addr %s676, 8
        %s678 = scalar_lea.vmem %s7, %s677
      $region64: #{ffc_bn_act.22} parent=55 // pred_fallthru
        _
    $region56: #{ffc_bn_act.22} parent=5 // pred_fallthru
      _
  $region6: #{ffc_bn_act.22} parent=0 // loop_footer
    %s18 = sadd.s32 1, %s14
  $region7: #{ffc_bn_act.22} parent=0 // loop_footer_branch
    %13 = sbr.rel target = $region3
  $region8: #{ffc_bn_act.22} parent=0 // loop_exit
    _

// kernel: ffc_bn_act.18
$region0: #{ffc_bn_act.18}
  #allocation0 [shape = 'u32[]', space=smem, size = 0x4, offset = 0x4, fixed_abs, tag = 'smem constant byte address 0x4 - core index']
  #allocation1 [shape = 'u32[144,128]{1,0:T(1,128)}', space=vmem, size = 0x12000, scoped, tag = 'internal scratch']
  %s0 = inlined_call_operand.vmem [shape: bf16[2,4,8,8,5], index: 0, kind: input, shape index: {}]
  %s1 = inlined_call_operand.vmem [shape: f32[8], index: 1, kind: input, shape index: {}]
  %s2 = inlined_call_operand.vmem [shape: f32[8], index: 2, kind: input, shape index: {}]
  %s3 = inlined_call_operand.vmem [shape: bf16[8,8], index: 3, kind: input, shape index: {}]
  %s4 = inlined_call_operand.vmem [shape: bf16[8,8], index: 4, kind: input, shape index: {}]
  %s5 = inlined_call_operand.vmem [shape: bf16[10,8], index: 5, kind: input, shape index: {}]
  %s6 = inlined_call_operand.vmem [shape: f32[2,4,4,8,8], index: 6, kind: output, shape index: {}]
  %s7 = sld [smem:[#allocation0]]
  $region99: #{ffc_bn_act.18} parent=0
    _
  %s9 = ssub.s32 1, %s7
  %s10 = scalar_select 0, %s9, %s7
  $region1: #{ffc_bn_act.18} parent=0
    #allocation2 [shape = 'u8[512]{0}', space=smem, size = 0x200, scoped, tag = 'input window, operand 1, single buffered']
    #allocation3 [shape = 's32[2]{0}', space=sflag, size = 0x8, scoped, tag = 'scoped memory for ffc_bn_act.18']
    #allocation4 [shape = 'u8[512]{0}', space=smem, size = 0x200, scoped, tag = 'input window, operand 2, single buffered']
    #allocation5 [shape = 's32[1]{0}', space=sflag, size = 0x4, scoped, tag = 'scoped memory for ffc_bn_act.18']
    #allocation6 [shape = 'u8[32768]{0}', space=vmem, size = 0x8000, scoped, tag = 'output window, operand 0']
    %11 = vsyncpa [#allocation3], 0
    %12 = vsyncpa [#allocation5], 0
    loop: start=0, step=1, limit=10
    $region2: #{ffc_bn_act.18} parent=1 // loop_pre_header
      _
    $region3: #{ffc_bn_act.18} parent=1 // loop_header
      %s14 = sphi 0, %s18
      %p15 = scmp.ge.s32.totalorder %s14, 10
      %s21 = sphi 0, %s33
      %s22 = sphi 0, %s29
      %s23 = sphi 0, %s21
      %s24 = sphi 0, %s22
      %s25 = sphi 0, %s23
      %s26 = sphi 0, %s24
      %s38 = sphi 0, %s40
      %s41 = sphi 0, %s38
      %s42 = sphi 0, %s41
      %s58 = sphi 0, %s42
      %s62 = sphi 0, %s62
      %s64 = sphi 0, %s62
      %s65 = sphi 0, %s64
      %s79 = sphi 0, %s65
      %s83 = sphi 0, %s83
      %s85 = sphi 0, %s83
      %s86 = sphi 0, %s85
      %s100 = sphi 0, %s86
      %s104 = sphi 0, %s104
      %s106 = sphi 0, %s104
      %s107 = sphi 0, %s106
      %s121 = sphi 0, %s107
      %s125 = sphi 0, %s125
      %s127 = sphi 0, %s125
      %s128 = sphi 0, %s127
      %s142 = sphi 0, %s128
      %s146 = sphi 0, %s146
      %s148 = sphi 0, %s146
      %s149 = sphi 0, %s148
      %s163 = sphi 0, %s149
      %s171 = sphi 0, %s173
      %s174 = sphi 0, %s171
      %s175 = sphi 0, %s174
      %s191 = sphi 0, %s175
    $region4: #{ffc_bn_act.18} parent=1 // loop_header_branch
      %17 = sbr.rel (%p15) target = $region8
    $region5: #{ffc_bn_act.18} parent=1 // loop_body
      %s19 = ssub.s32 %s14, 1
      %s20 = ssub.s32 %s14, 2
      %s27 = sadd.s32 1, %s22
      %p28 = scmp.ge.s32.totalorder %s27, 4
      %s29 = scalar_select %p28, 0, %s27
      %s30 = sadd.s32 1, %s21
      %s31 = scalar_select %p28, %s30, %s21
      %p32 = scmp.ge.s32.totalorder %s31, 2
      %s33 = scalar_select %p32, 0, %s31
      %s34 = ssub.s32 %s21, %s33
      %s35 = ssub.s32 %s22, %s29
      %s36 = sor.u32 %s34, %s35
      %p37 = scmp.eq.s32.totalorder %s36, 0
      %s39 = sadd.s32 %s38, 1
      %s40 = scalar_select %p37, %s38, %s39
      %p43 = pneg %p37
      %p44 = scmp.eq.s32.totalorder %s14, 7
      %p45 = por %p43, %p44
      %p46 = scmp.ne.s32.totalorder %s38, %s41
      %p47 = scmp.eq.s32.totalorder %s14, 0
      %p48 = por %p46, %p47
      %p49 = scmp.ne.s32.totalorder %s38, %s41
      %p50 = scmp.eq.s32.totalorder %s19, 7
      %p51 = por %p49, %p50
      %p52 = scmp.ne.s32.totalorder %s41, %s42
      %p53 = scmp.eq.s32.totalorder %s19, 0
      %p54 = por %p52, %p53
      %p55 = scmp.ne.s32.totalorder %s41, %s42
      %p56 = scmp.eq.s32.totalorder %s20, 7
      %p57 = por %p55, %p56
      %p59 = scmp.ne.s32.totalorder %s42, %s58
      %p60 = scmp.eq.s32.totalorder %s20, 0
      %p61 = por %p59, %p60
      %s63 = sadd.s32 %s62, 1
      %p66 = scmp.eq.s32.totalorder %s14, 7
      %p67 = scmp.ne.s32.totalorder %s62, %s64
      %p68 = scmp.eq.s32.totalorder %s14, 0
      %p69 = por %p67, %p68
      %p70 = scmp.ne.s32.totalorder %s62, %s64
      %p71 = scmp.eq.s32.totalorder %s19, 7
      %p72 = por %p70, %p71
      %p73 = scmp.ne.s32.totalorder %s64, %s65
      %p74 = scmp.eq.s32.totalorder %s19, 0
      %p75 = por %p73, %p74
      %p76 = scmp.ne.s32.totalorder %s64, %s65
      %p77 = scmp.eq.s32.totalorder %s20, 7
      %p78 = por %p76, %p77
      %p80 = scmp.ne.s32.totalorder %s65, %s79
      %p81 = scmp.eq.s32.totalorder %s20, 0
      %p82 = por %p80, %p81
      %s84 = sadd.s32 %s83, 1
      %p87 = scmp.eq.s32.totalorder %s14, 7
      %p88 = scmp.ne.s32.totalorder %s83, %s85
      %p89 = scmp.eq.s32.totalorder %s14, 0
      %p90 = por %p88, %p89
      %p91 = scmp.ne.s32.totalorder %s83, %s85
      %p92 = scmp.eq.s32.totalorder %s19, 7
      %p93 = por %p91, %p92
      %p94 = scmp.ne.s32.totalorder %s85, %s86
      %p95 = scmp.eq.s32.totalorder %s19, 0
      %p96 = por %p94, %p95
      %p97 = scmp.ne.s32.totalorder %s85, %s86
      %p98 = scmp.eq.s32.totalorder %s20, 7
      %p99 = por %p97, %p98
      %p101 = scmp.ne.s32.totalorder %s86, %s100
      %p102 = scmp.eq.s32.totalorder %s20, 0
      %p103 = por %p101, %p102
      %s105 = sadd.s32 %s104, 1
      %p108 = scmp.eq.s32.totalorder %s14, 7
      %p109 = scmp.ne.s32.totalorder %s104, %s106
      %p110 = scmp.eq.s32.totalorder %s14, 0
      %p111 = por %p109, %p110
      %p112 = scmp.ne.s32.totalorder %s104, %s106
      %p113 = scmp.eq.s32.totalorder %s19, 7
      %p114 = por %p112, %p113
      %p115 = scmp.ne.s32.totalorder %s106, %s107
      %p116 = scmp.eq.s32.totalorder %s19, 0
      %p117 = por %p115, %p116
      %p118 = scmp.ne.s32.totalorder %s106, %s107
      %p119 = scmp.eq.s32.totalorder %s20, 7
      %p120 = por %p118, %p119
      %p122 = scmp.ne.s32.totalorder %s107, %s121
      %p123 = scmp.eq.s32.totalorder %s20, 0
      %p124 = por %p122, %p123
      %s126 = sadd.s32 %s125, 1
      %p129 = scmp.eq.s32.totalorder %s14, 7
      %p130 = scmp.ne.s32.totalorder %s125, %s127
      %p131 = scmp.eq.s32.totalorder %s14, 0
      %p132 = por %p130, %p131
      %p133 = scmp.ne.s32.totalorder %s125, %s127
      %p134 = scmp.eq.s32.totalorder %s19, 7
      %p135 = por %p133, %p134
      %p136 = scmp.ne.s32.totalorder %s127, %s128
      %p137 = scmp.eq.s32.totalorder %s19, 0
      %p138 = por %p136, %p137
      %p139 = scmp.ne.s32.totalorder %s127, %s128
      %p140 = scmp.eq.s32.totalorder %s20, 7
      %p141 = por %p139, %p140
      %p143 = scmp.ne.s32.totalorder %s128, %s142
      %p144 = scmp.eq.s32.totalorder %s20, 0
      %p145 = por %p143, %p144
      %s147 = sadd.s32 %s146, 1
      %p150 = scmp.eq.s32.totalorder %s14, 7
      %p151 = scmp.ne.s32.totalorder %s146, %s148
      %p152 = scmp.eq.s32.totalorder %s14, 0
      %p153 = por %p151, %p152
      %p154 = scmp.ne.s32.totalorder %s146, %s148
      %p155 = scmp.eq.s32.totalorder %s19, 7
      %p156 = por %p154, %p155
      %p157 = scmp.ne.s32.totalorder %s148, %s149
      %p158 = scmp.eq.s32.totalorder %s19, 0
      %p159 = por %p157, %p158
      %p160 = scmp.ne.s32.totalorder %s148, %s149
      %p161 = scmp.eq.s32.totalorder %s20, 7
      %p162 = por %p160, %p161
      %p164 = scmp.ne.s32.totalorder %s149, %s163
      %p165 = scmp.eq.s32.totalorder %s20, 0
      %p166 = por %p164, %p165
      %s167 = ssub.s32 %s21, %s33
      %s168 = ssub.s32 %s22, %s29
      %s169 = sor.u32 %s167, %s168
      %p170 = scmp.eq.s32.totalorder %s169, 0
      %s172 = sadd.s32 %s171, 1
      %s173 = scalar_select %p170, %s171, %s172
      %p176 = pneg %p170
      %p177 = scmp.eq.s32.totalorder %s14, 7
      %p178 = por %p176, %p177
      %p179 = scmp.ne.s32.totalorder %s171, %s174
      %p180 = scmp.eq.s32.totalorder %s14, 0
      %p181 = por %p179, %p180
      %p182 = scmp.ne.s32.totalorder %s171, %s174
      %p183 = scmp.eq.s32.totalorder %s19, 7
      %p184 = por %p182, %p183
      %p185 = scmp.ne.s32.totalorder %s174, %s175
      %p186 = scmp.eq.s32.totalorder %s19, 0
      %p187 = por %p185, %p186
      %p188 = scmp.ne.s32.totalorder %s174, %s175
      %p189 = scmp.eq.s32.totalorder %s20, 7
      %p190 = por %p188, %p189
      %p192 = scmp.ne.s32.totalorder %s175, %s191
      %p193 = scmp.eq.s32.totalorder %s20, 0
      %p194 = por %p192, %p193
      %p195 = scmp.le.s32.totalorder 1, %s14
      %p196 = scmp.lt.s32.totalorder %s14, 9
      %p197 = pnand %p195, %p196
      %p198 = pneg %p197
      // Predicated region
      $region9: #{ffc_bn_act.18} parent=5 // pred_check
        _
      $region10: #{ffc_bn_act.18} parent=5 // pred_check_branch
        %200 = sbr.rel (%p197) target = $region12
      $region11: #{ffc_bn_act.18} parent=5 // pred_region
        %s201 = ssub.s32 %s14, 1
        // Predicated region
        $region13: #{ffc_bn_act.18} parent=11 // pred_check
          %p202 = pneg %p75
        $region14: #{ffc_bn_act.18} parent=11 // pred_check_branch
          %204 = sbr.rel (%p202) target = $region16
        $region15: #{ffc_bn_act.18} parent=11 // pred_region
          %s206 = ssub.s32 16, 16
          %207 = vsyncadd [#allocation3], %s206
          %s209 = sshll.u32 %s1, 4
          %s210 = int_to_ptr.vmem [resolvable:$true] %s209
          %212 = dma.vmem_to_smem %s210, 16, [#allocation2], [#allocation3]
        $region16: #{ffc_bn_act.18} parent=11 // pred_fallthru
          _
        // Predicated region
        $region17: #{ffc_bn_act.18} parent=11 // pred_check
          %p213 = pneg %p96
        $region18: #{ffc_bn_act.18} parent=11 // pred_check_branch
          %215 = sbr.rel (%p213) target = $region20
        $region19: #{ffc_bn_act.18} parent=11 // pred_region
          %s217 = ssub.s32 16, 16
          %218 = vsyncadd [#allocation5], %s217
          %s220 = sshll.u32 %s2, 4
          %s221 = int_to_ptr.vmem [resolvable:$true] %s220
          %223 = dma.vmem_to_smem %s221, 16, [#allocation4], [#allocation5]
        $region20: #{ffc_bn_act.18} parent=11 // pred_fallthru
          _
        // Predicated region
        $region21: #{ffc_bn_act.18} parent=11 // pred_check
          %p224 = pneg %p117
        $region22: #{ffc_bn_act.18} parent=11 // pred_check_branch
          %226 = sbr.rel (%p224) target = $region24
        $region23: #{ffc_bn_act.18} parent=11 // pred_region
          _
        $region24: #{ffc_bn_act.18} parent=11 // pred_fallthru
          _
        // Predicated region
        $region25: #{ffc_bn_act.18} parent=11 // pred_check
          %p227 = pneg %p138
        $region26: #{ffc_bn_act.18} parent=11 // pred_check_branch
          %229 = sbr.rel (%p227) target = $region28
        $region27: #{ffc_bn_act.18} parent=11 // pred_region
          _
        $region28: #{ffc_bn_act.18} parent=11 // pred_fallthru
          _
        // Predicated region
        $region29: #{ffc_bn_act.18} parent=11 // pred_check
          %p230 = pneg %p159
        $region30: #{ffc_bn_act.18} parent=11 // pred_check_branch
          %232 = sbr.rel (%p230) target = $region32
        $region31: #{ffc_bn_act.18} parent=11 // pred_region
          _
        $region32: #{ffc_bn_act.18} parent=11 // pred_fallthru
          _
      $region12: #{ffc_bn_act.18} parent=5 // pred_fallthru
        _
      %p233 = scmp.lt.s32.totalorder %s14, 8
      // Predicated region
      $region33: #{ffc_bn_act.18} parent=5 // pred_check
        %p234 = pneg %p233
      $region34: #{ffc_bn_act.18} parent=5 // pred_check_branch
        %236 = sbr.rel (%p234) target = $region36
      $region35: #{ffc_bn_act.18} parent=5 // pred_region
        // Predicated region
        $region37: #{ffc_bn_act.18} parent=35 // pred_check
          %p237 = pneg %p48
        $region38: #{ffc_bn_act.18} parent=35 // pred_check_branch
          %239 = sbr.rel (%p237) target = $region40
        $region39: #{ffc_bn_act.18} parent=35 // pred_region
          %p240 = scmp.lt.s32.totalorder %s21, 1
          %s241 = scalar_select %p240, %s21, 1
          %p242 = scmp.lt.s32.totalorder %s22, 3
          %s243 = scalar_select %p242, %s22, 3
          %s244 = smul.addr %s243, 8
          %s245 = smul.addr %s241, 32
          %s246 = sadd.s32 %s244, %s245
          %s247 = smul.addr %s246, 4
          %s248 = scalar_lea.vmem %s0, %s247
        $region40: #{ffc_bn_act.18} parent=35 // pred_fallthru
          _
      $region36: #{ffc_bn_act.18} parent=5 // pred_fallthru
        _
      %p249 = scmp.le.s32.totalorder 1, %s14
      %p250 = scmp.lt.s32.totalorder %s14, 9
      %p251 = pnand %p249, %p250
      %p252 = pneg %p251
      // Predicated region
      $region41: #{ffc_bn_act.18} parent=5 // pred_check
        _
      $region42: #{ffc_bn_act.18} parent=5 // pred_check_branch
        %254 = sbr.rel (%p251) target = $region44
      $region43: #{ffc_bn_act.18} parent=5 // pred_region
        %s255 = ssub.s32 %s14, 1
        // Predicated region
        $region45: #{ffc_bn_act.18} parent=43 // pred_check
          %p256 = pneg %p75
        $region46: #{ffc_bn_act.18} parent=43 // pred_check_branch
          %258 = sbr.rel (%p256) target = $region48
        $region47: #{ffc_bn_act.18} parent=43 // pred_region
          %259 = dma.done [#allocation3], 16
        $region48: #{ffc_bn_act.18} parent=43 // pred_fallthru
          _
        // Predicated region
        $region49: #{ffc_bn_act.18} parent=43 // pred_check
          %p260 = pneg %p96
        $region50: #{ffc_bn_act.18} parent=43 // pred_check_branch
          %262 = sbr.rel (%p260) target = $region52
        $region51: #{ffc_bn_act.18} parent=43 // pred_region
          %263 = dma.done [#allocation5], 16
        $region52: #{ffc_bn_act.18} parent=43 // pred_fallthru
          _
        %264 = sfence
        %p265 = scmp.lt.s32.totalorder %s23, 1
        %s266 = scalar_select %p265, %s23, 1
        %p267 = scmp.lt.s32.totalorder %s24, 3
        %s268 = scalar_select %p267, %s24, 3
        %s269 = smul.addr %s268, 8
        %s270 = smul.addr %s266, 32
        %s271 = sadd.s32 %s269, %s270
        %s272 = smul.addr %s271, 4
        %s273 = scalar_lea.vmem %s0, %s272
        %p274 = pneg %p54
        %p275 = pneg %p51
        %p276 = pneg %p75
        %p277 = pneg %p72
        %p278 = pneg %p96
        %p279 = pneg %p93
        %p280 = pneg %p117
        %p281 = pneg %p114
        %p282 = pneg %p138
        %p283 = pneg %p135
        %p284 = pneg %p159
        %p285 = pneg %p156
        %p286 = pneg %p187
        %p287 = pneg %p184
        %s288 = sand.u32 %s174, 1
        %s289 = sand.u32 %s174, 1
        %s290 = smul.addr %s289, 32
        %s291 = scalar_lea.vmem [#allocation6], %s290
        %p292 = scmp.lt.s32.totalorder %s23, 1
        %s293 = scalar_select %p292, %s23, 1
        %p294 = scmp.lt.s32.totalorder %s24, 3
        %s295 = scalar_select %p294, %s24, 3
        %s296 = smul.addr %s295, 8
        %s297 = smul.addr %s293, 32
        %s298 = sadd.s32 %s296, %s297
        %s299 = smul.addr %s298, 4
        %s300 = scalar_lea.vmem %s0, %s299
        %v302 = vld [vmem:[%s300] sm:$0xf]
        %v303 = vld [vmem:[%s300 + $0x4] sm:$0xf]
        %v304 = vld [vmem:[%s300 + $0x8] sm:$0xf]
        %v305 = vld [vmem:[%s300 + $0xc] sm:$0xf]
        %v306 = vld [vmem:[%s300 + $0x10] sm:$0xf]
        %v307 = vld [vmem:[%s300 + $0x14] sm:$0xf]
        %v308 = vld [vmem:[%s300 + $0x18] sm:$0xf]
        %v309 = vld [vmem:[%s300 + $0x1c] sm:$0xf]
        %v310 = vld [vmem:[%s3] sm:$0xf]
        %v311 = vld [vmem:[%s4] sm:$0xf]
        %v312 = vld [vmem:[%s5] sm:$0xf]
        %v313 = vld [vmem:[%s5 + $0x4] sm:$0x1]
        %v314 = vunpack.c.l.bf16 %v302
        %s315 = sld [smem:[#allocation2]]
        %v316 = vstv %s315
        %v317 = vmul.f32 %v314, %v316
        %s318 = sld [smem:[#allocation4]]
        %v319 = vstv %s318
        %v320 = vadd.f32 %v317, %v319
        %v321 = vmax.f32 %v320, 0.0
        %v322 = vunpack.c.l.bf16 %v306
        %s323 = sld [smem:[#allocation2 + $0x4]]
        %v324 = vstv %s323
        %v325 = vmul.f32 %v322, %v324
        %s326 = sld [smem:[#allocation4 + $0x4]]
        %v327 = vstv %s326
        %v328 = vadd.f32 %v325, %v327
        %v329 = vmax.f32 %v328, 0.0
        %331 = vrot.lane.b32.xlu0 %v329, 5
        %v332 = vpop.permute.xlu0 %331
        %vm334 = vcmask 39936
        %v335 = vsel %vm334, %v321, %v332
        %v336 = vpack.c.bf16 %v335, %v335
        %vm337 = vcmask 64512
        %v339 = vsel %vm337, %v310, 0
        %vm341 = vcmask 1043456
        %v343 = vsel %vm341, %v336, 0
        %345 = vmatprep.subr.bf16.mxu0 0
        %346 = vmatpush1.bf16.msra.mxu0 0
        %347 = vmatprep.subr.bf16.mxu0 0
        %348 = vmatpush1.bf16.msra.mxu0 0
        %349 = vmatprep.subr.bf16.mxu0 0
        %350 = vmatpush1.bf16.msra.mxu0 0
        %351 = vmatprep.subr.bf16.mxu0 0
        %352 = vmatpush1.bf16.msra.mxu0 0
        %353 = vmatprep.subr.bf16.mxu0 0
        %354 = vmatpush1.bf16.msra.mxu0 0
        %355 = vmatprep.subr.bf16.mxu0 0
        %356 = vmatpush1.bf16.msra.mxu0 0
        %357 = vmatprep.subr.bf16.mxu0 0
        %358 = vmatpush1.bf16.msra.mxu0 0
        %359 = vmatprep.subr.bf16.mxu0 0
        %360 = vmatpush1.bf16.msra.mxu0 %v343
        %361 = vmatprep.subr.bf16.mxu0 0
        %362 = vmatpush2.bf16.msra.mxu0 0
        %363 = vmatprep.subr.bf16.mxu0 0
        %364 = vmatpush2.bf16.msra.mxu0 0
        %365 = vmatprep.subr.bf16.mxu0 0
        %366 = vmatpush2.bf16.msra.mxu0 0
        %367 = vmatprep.subr.bf16.mxu0 0
        %368 = vmatpush2.bf16.msra.mxu0 0
        %369 = vmatprep.subr.bf16.mxu0 0
        %370 = vmatpush2.bf16.msra.mxu0 0
        %371 = vmatprep.subr.bf16.mxu0 0
        %372 = vmatpush2.bf16.msra.mxu0 0
        %373 = vmatprep.subr.bf16.mxu0 0
        %374 = vmatpush2.bf16.msra.mxu0 0
        %375 = vmatprep.subr.bf16.mxu0 0
        %376 = vmatpush2.bf16.msra.mxu0 0
        %377 = vmatprep.mubr.bf16.mxu0 0
        %378 = vmatmul.mubr.bf16.gmra.mxu0 %v339
        %v379 = vpop.f32.mrf.mxu0
        %v380 = vadd.f32 0.0, %v379
        %v381 = vpop.f32.mrf.mxu0
        %v382 = vpop.f32.mrf.mxu0
        %v383 = vpop.f32.mrf.mxu0
        %384 = vdwg.mxu0
        %v386 = vsel %vm337, %v311, 0
        %388 = vmatprep.subr.bf16.mxu0 0
        %389 = vmatpush1.bf16.msra.mxu0 0
        %390 = vmatprep.subr.bf16.mxu0 0
        %391 = vmatpush1.bf16.msra.mxu0 0
        %392 = vmatprep.subr.bf16.mxu0 0
        %393 = vmatpush1.bf16.msra.mxu0 0
        %394 = vmatprep.subr.bf16.mxu0 0
        %395 = vmatpush1.bf16.msra.mxu0 0
        %396 = vmatprep.subr.bf16.mxu0 0
        %397 = vmatpush1.bf16.msra.mxu0 0
        %398 = vmatprep.subr.bf16.mxu0 0
        %399 = vmatpush1.bf16.msra.mxu0 0
        %400 = vmatprep.subr.bf16.mxu0 0
        %401 = vmatpush1.bf16.msra.mxu0 0
        %402 = vmatprep.subr.bf16.mxu0 0
        %403 = vmatpush1.bf16.msra.mxu0 %v343
        %404 = vmatprep.subr.bf16.mxu0 0
        %405 = vmatpush2.bf16.msra.mxu0 0
        %406 = vmatprep.subr.bf16.mxu0 0
        %407 = vmatpush2.bf16.msra.mxu0 0
        %408 = vmatprep.subr.bf16.mxu0 0
        %409 = vmatpush2.bf16.msra.mxu0 0
        %410 = vmatprep.subr.bf16.mxu0 0
        %411 = vmatpush2.bf16.msra.mxu0 0
        %412 = vmatprep.subr.bf16.mxu0 0
        %413 = vmatpush2.bf16.msra.mxu0 0
        %414 = vmatprep.subr.bf16.mxu0 0
        %415 = vmatpush2.bf16.msra.mxu0 0
        %416 = vmatprep.subr.bf16.mxu0 0
        %417 = vmatpush2.bf16.msra.mxu0 0
        %418 = vmatprep.subr.bf16.mxu0 0
        %419 = vmatpush2.bf16.msra.mxu0 0
        %420 = vmatprep.mubr.bf16.mxu0 0
        %421 = vmatmul.mubr.bf16.gmra.mxu0 %v386
        %v422 = vpop.f32.mrf.mxu0
        %v423 = vadd.f32 0.0, %v422
        %v424 = vpop.f32.mrf.mxu0
        %v425 = vpop.f32.mrf.mxu0
        %v426 = vpop.f32.mrf.mxu0
        %427 = vdwg.mxu0
        %429 = vrot.lane.b32.xlu0 %v423, 123
        %v430 = vpop.permute.xlu0 %429
        %v432 = vsub.f32 %v380, %v430
        %434 = vrot.lane.b32.xlu0 %v380, 123
        %v435 = vpop.permute.xlu0 %434
        %v437 = vadd.f32 %v423, %v435
        %439 = vrot.lane.b32.xlu0 %v437, 5
        %v440 = vpop.permute.xlu0 %439
        %v442 = vsel %vm334, %v432, %v440
        %v443 = vpack.c.bf16 %v442, %v442
        %v446 = vunpack.c.l.b16 %v312
        %v447 = vunpack.c.l.b16 %v313
        %v448 = vpack.c.b16 %v447, %v446
        %vm449 = vcmask 80896
        %v451 = vsel %vm449, %v443, 0
        %vm453 = vcmask 1044480
        %v455 = vsel %vm453, %v448, 0
        %457 = vmatprep.subr.bf16.mxu0 0
        %458 = vmatpush1.bf16.msra.mxu0 0
        %459 = vmatprep.subr.bf16.mxu0 0
        %460 = vmatpush1.bf16.msra.mxu0 0
        %461 = vmatprep.subr.bf16.mxu0 0
        %462 = vmatpush1.bf16.msra.mxu0 0
        %463 = vmatprep.subr.bf16.mxu0 0
        %464 = vmatpush1.bf16.msra.mxu0 0
        %465 = vmatprep.subr.bf16.mxu0 0
        %466 = vmatpush1.bf16.msra.mxu0 0
        %467 = vmatprep.subr.bf16.mxu0 0
        %468 = vmatpush1.bf16.msra.mxu0 0
        %469 = vmatprep.subr.bf16.mxu0 0
        %470 = vmatpush1.bf16.msra.mxu0 0
        %471 = vmatprep.subr.bf16.mxu0 0
        %472 = vmatpush1.bf16.msra.mxu0 %v455
        %473 = vmatprep.subr.bf16.mxu0 0
        %474 = vmatpush2.bf16.msra.mxu0 0
        %475 = vmatprep.subr.bf16.mxu0 0
        %476 = vmatpush2.bf16.msra.mxu0 0
        %477 = vmatprep.subr.bf16.mxu0 0
        %478 = vmatpush2.bf16.msra.mxu0 0
        %479 = vmatprep.subr.bf16.mxu0 0
        %480 = vmatpush2.bf16.msra.mxu0 0
        %481 = vmatprep.subr.bf16.mxu0 0
        %482 = vmatpush2.bf16.msra.mxu0 0
        %483 = vmatprep.subr.bf16.mxu0 0
        %484 = vmatpush2.bf16.msra.mxu0 0
        %485 = vmatprep.subr.bf16.mxu0 0
        %486 = vmatpush2.bf16.msra.mxu0 0
        %487 = vmatprep.subr.bf16.mxu0 0
        %488 = vmatpush2.bf16.msra.mxu0 0
        %489 = vmatprep.mubr.bf16.mxu0 0
        %490 = vmatmul.mubr.bf16.gmra.mxu0 %v451
        %v491 = vpop.f32.mrf.mxu0
        %v492 = vadd.f32 0.0, %v491
        %v493 = vpop.f32.mrf.mxu0
        %v494 = vpop.f32.mrf.mxu0
        %v495 = vpop.f32.mrf.mxu0
        %496 = vdwg.mxu0
        %497 = vst.msk [vmem:[%s291] sm:$0xff] %vm337, %v492
        %v498 = vunpack.c.l.bf16 %v303
        %s499 = sld [smem:[#allocation2 + $0x1]]
        %v500 = vstv %s499
        %v501 = vmul.f32 %v498, %v500
        %s502 = sld [smem:[#allocation4 + $0x1]]
        %v503 = vstv %s502
        %v504 = vadd.f32 %v501, %v503
        %v505 = vmax.f32 %v504, 0.0
        %v506 = vunpack.c.l.bf16 %v307
        %s507 = sld [smem:[#allocation2 + $0x5]]
        %v508 = vstv %s507
        %v509 = vmul.f32 %v506, %v508
        %s510 = sld [smem:[#allocation4 + $0x5]]
        %v511 = vstv %s510
        %v512 = vadd.f32 %v509, %v511
        %v513 = vmax.f32 %v512, 0.0
        %515 = vrot.lane.b32.xlu0 %v513, 5
        %v516 = vpop.permute.xlu0 %515
        %v518 = vsel %vm334, %v505, %v516
        %v519 = vpack.c.bf16 %v518, %v518
        %v521 = vsel %vm341, %v519, 0
        %523 = vmatprep.subr.bf16.mxu0 0
        %524 = vmatpush1.bf16.msra.mxu0 0
        %525 = vmatprep.subr.bf16.mxu0 0
        %526 = vmatpush1.bf16.msra.mxu0 0
        %527 = vmatprep.subr.bf16.mxu0 0
        %528 = vmatpush1.bf16.msra.mxu0 0
        %529 = vmatprep.subr.bf16.mxu0 0
        %530 = vmatpush1.bf16.msra.mxu0 0
        %531 = vmatprep.subr.bf16.mxu0 0
        %532 = vmatpush1.bf16.msra.mxu0 0
        %533 = vmatprep.subr.bf16.mxu0 0
        %534 = vmatpush1.bf16.msra.mxu0 0
        %535 = vmatprep.subr.bf16.mxu0 0
        %536 = vmatpush1.bf16.msra.mxu0 0
        %537 = vmatprep.subr.bf16.mxu0 0
        %538 = vmatpush1.bf16.msra.mxu0 %v521
        %539 = vmatprep.subr.bf16.mxu0 0
        %540 = vmatpush2.bf16.msra.mxu0 0
        %541 = vmatprep.subr.bf16.mxu0 0
        %542 = vmatpush2.bf16.msra.mxu0 0
        %543 = vmatprep.subr.bf16.mxu0 0
        %544 = vmatpush2.bf16.msra.mxu0 0
        %545 = vmatprep.subr.bf16.mxu0 0
        %546 = vmatpush2.bf16.msra.mxu0 0
        %547 = vmatprep.subr.bf16.mxu0 0
        %548 = vmatpush2.bf16.msra.mxu0 0
        %549 = vmatprep.subr.bf16.mxu0 0
        %550 = vmatpush2.bf16.msra.mxu0 0
        %551 = vmatprep.subr.bf16.mxu0 0
        %552 = vmatpush2.bf16.msra.mxu0 0
        %553 = vmatprep.subr.bf16.mxu0 0
        %554 = vmatpush2.bf16.msra.mxu0 0
        %555 = vmatprep.mubr.bf16.mxu0 0
        %556 = vmatmul.mubr.bf16.gmra.mxu0 %v339
        %v557 = vpop.f32.mrf.mxu0
        %v558 = vadd.f32 0.0, %v557
        %v559 = vpop.f32.mrf.mxu0
        %v560 = vpop.f32.mrf.mxu0
        %v561 = vpop.f32.mrf.mxu0
        %562 = vdwg.mxu0
        %563 = vmatprep.subr.bf16.mxu0 0
        %564 = vmatpush1.bf16.msra.mxu0 0
        %565 = vmatprep.subr.bf16.mxu0 0
        %566 = vmatpush1.bf16.msra.mxu0 0
        %567 = vmatprep.subr.bf16.mxu0 0
        %568 = vmatpush1.bf16.msra.mxu0 0
        %569 = vmatprep.subr.bf16.mxu0 0
        %570 = vmatpush1.bf16.msra.mxu0 0
        %571 = vmatprep.subr.bf16.mxu0 0
        %572 = vmatpush1.bf16.msra.mxu0 0
        %573 = vmatprep.subr.bf16.mxu0 0
        %574 = vmatpush1.bf16.msra.mxu0 0
        %575 = vmatprep.subr.bf16.mxu0 0
        %576 = vmatpush1.bf16.msra.mxu0 0
        %577 = vmatprep.subr.bf16.mxu0 0
        %578 = vmatpush1.bf16.msra.mxu0 %v521
        %579 = vmatprep.subr.bf16.mxu0 0
        %580 = vmatpush2.bf16.msra.mxu0 0
        %581 = vmatprep.subr.bf16.mxu0 0
        %582 = vmatpush2.bf16.msra.mxu0 0
        %583 = vmatprep.subr.bf16.mxu0 0
        %584 = vmatpush2.bf16.msra.mxu0 0
        %585 = vmatprep.subr.bf16.mxu0 0
        %586 = vmatpush2.bf16.msra.mxu0 0
        %587 = vmatprep.subr.bf16.mxu0 0
        %588 = vmatpush2.bf16.msra.mxu0 0
        %589 = vmatprep.subr.bf16.mxu0 0
        %590 = vmatpush2.bf16.msra.mxu0 0
        %591 = vmatprep.subr.bf16.mxu0 0
        %592 = vmatpush2.bf16.msra.mxu0 0
        %593 = vmatprep.subr.bf16.mxu0 0
        %594 = vmatpush2.bf16.msra.mxu0 0
        %595 = vmatprep.mubr.bf16.mxu0 0
        %596 = vmatmul.mubr.bf16.gmra.mxu0 %v386
        %v597 = vpop.f32.mrf.mxu0
        %v598 = vadd.f32 0.0, %v597
        %v599 = vpop.f32.mrf.mxu0
        %v600 = vpop.f32.mrf.mxu0
        %v601 = vpop.f32.mrf.mxu0
        %602 = vdwg.mxu0
        %604 = vrot.lane.b32.xlu0 %v598, 123
        %v605 = vpop.permute.xlu0 %604
        %v607 = vsub.f32 %v558, %v605
        %609 = vrot.lane.b32.xlu0 %v558, 123
        %v610 = vpop.permute.xlu0 %609
        %v612 = vadd.f32 %v598, %v610
        %614 = vrot.lane.b32.xlu0 %v612, 5
        %v615 = vpop.permute.xlu0 %614
        %v617 = vsel %vm334, %v607, %v615
        %v618 = vpack.c.bf16 %v617, %v617
        %v620 = vsel %vm449, %v618, 0
        %622 = vmatprep.subr.bf16.mxu0 0
        %623 = vmatpush1.bf16.msra.mxu0 0
        %624 = vmatprep.subr.bf16.mxu0 0
        %625 = vmatpush1.bf16.msra.mxu0 0
        %626 = vmatprep.subr.bf16.mxu0 0
        %627 = vmatpush1.bf16.msra.mxu0 0
        %628 = vmatprep.subr.bf16.mxu0 0
        %629 = vmatpush1.bf16.msra.mxu0 0
        %630 = vmatprep.subr.bf16.mxu0 0
        %631 = vmatpush1.bf16.msra.mxu0 0
        %632 = vmatprep.subr.bf16.mxu0 0
        %633 = vmatpush1.bf16.msra.mxu0 0
        %634 = vmatprep.subr.bf16.mxu0 0
        %635 = vmatpush1.bf16.msra.mxu0 0
        %636 = vmatprep.subr.bf16.mxu0 0
        %637 = vmatpush1.bf16.msra.mxu0 %v455
        %638 = vmatprep.subr.bf16.mxu0 0
        %639 = vmatpush2.bf16.msra.mxu0 0
        %640 = vmatprep.subr.bf16.mxu0 0
        %641 = vmatpush2.bf16.msra.mxu0 0
        %642 = vmatprep.subr.bf16.mxu0 0
        %643 = vmatpush2.bf16.msra.mxu0 0
        %644 = vmatprep.subr.bf16.mxu0 0
        %645 = vmatpush2.bf16.msra.mxu0 0
        %646 = vmatprep.subr.bf16.mxu0 0
        %647 = vmatpush2.bf16.msra.mxu0 0
        %648 = vmatprep.subr.bf16.mxu0 0
        %649 = vmatpush2.bf16.msra.mxu0 0
        %650 = vmatprep.subr.bf16.mxu0 0
        %651 = vmatpush2.bf16.msra.mxu0 0
        %652 = vmatprep.subr.bf16.mxu0 0
        %653 = vmatpush2.bf16.msra.mxu0 0
        %654 = vmatprep.mubr.bf16.mxu0 0
        %655 = vmatmul.mubr.bf16.gmra.mxu0 %v620
        %v656 = vpop.f32.mrf.mxu0
        %v657 = vadd.f32 0.0, %v656
        %v658 = vpop.f32.mrf.mxu0
        %v659 = vpop.f32.mrf.mxu0
        %v660 = vpop.f32.mrf.mxu0
        %661 = vdwg.mxu0
        %s662 = scalar_lea.vmem %s291, 8 [#allocation6]
        %663 = vst.msk [vmem:[%s662] sm:$0xff] %vm337, %v657
        %v664 = vunpack.c.l.bf16 %v304
        %s665 = sld [smem:[#allocation2 + $0x2]]
        %v666 = vstv %s665
        %v667 = vmul.f32 %v664, %v666
        %s668 = sld [smem:[#allocation4 + $0x2]]
        %v669 = vstv %s668
        %v670 = vadd.f32 %v667, %v669
        %v671 = vmax.f32 %v670, 0.0
        %v672 = vunpack.c.l.bf16 %v308
        %s673 = sld [smem:[#allocation2 + $0x6]]
        %v674 = vstv %s673
        %v675 = vmul.f32 %v672, %v674
        %s676 = sld [smem:[#allocation4 + $0x6]]
        %v677 = vstv %s676
        %v678 = vadd.f32 %v675, %v677
        %v679 = vmax.f32 %v678, 0.0
        %681 = vrot.lane.b32.xlu0 %v679, 5
        %v682 = vpop.permute.xlu0 %681
        %v684 = vsel %vm334, %v671, %v682
        %v685 = vpack.c.bf16 %v684, %v684
        %v687 = vsel %vm341, %v685, 0
        %689 = vmatprep.subr.bf16.mxu0 0
        %690 = vmatpush1.bf16.msra.mxu0 0
        %691 = vmatprep.subr.bf16.mxu0 0
        %692 = vmatpush1.bf16.msra.mxu0 0
        %693 = vmatprep.subr.bf16.mxu0 0
        %694 = vmatpush1.bf16.msra.mxu0 0
        %695 = vmatprep.subr.bf16.mxu0 0
        %696 = vmatpush1.bf16.msra.mxu0 0
        %697 = vmatprep.subr.bf16.mxu0 0
        %698 = vmatpush1.bf16.msra.mxu0 0
        %699 = vmatprep.subr.bf16.mxu0 0
        %700 = vmatpush1.bf16.msra.mxu0 0
        %701 = vmatprep.subr.bf16.mxu0 0
        %702 = vmatpush1.bf16.msra.mxu0 0
        %703 = vmatprep.subr.bf16.mxu0 0
        %704 = vmatpush1.bf16.msra.mxu0 %v687
        %705 = vmatprep.subr.bf16.mxu0 0
        %706 = vmatpush2.bf16.msra.mxu0 0
        %707 = vmatprep.subr.bf16.mxu0 0
        %708 = vmatpush2.bf16.msra.mxu0 0
        %709 = vmatprep.subr.bf16.mxu0 0
        %710 = vmatpush2.bf16.msra.mxu0 0
        %711 = vmatprep.subr.bf16.mxu0 0
        %712 = vmatpush2.bf16.msra.mxu0 0
        %713 = vmatprep.subr.bf16.mxu0 0
        %714 = vmatpush2.bf16.msra.mxu0 0
        %715 = vmatprep.subr.bf16.mxu0 0
        %716 = vmatpush2.bf16.msra.mxu0 0
        %717 = vmatprep.subr.bf16.mxu0 0
        %718 = vmatpush2.bf16.msra.mxu0 0
        %719 = vmatprep.subr.bf16.mxu0 0
        %720 = vmatpush2.bf16.msra.mxu0 0
        %721 = vmatprep.mubr.bf16.mxu0 0
        %722 = vmatmul.mubr.bf16.gmra.mxu0 %v339
        %v723 = vpop.f32.mrf.mxu0
        %v724 = vadd.f32 0.0, %v723
        %v725 = vpop.f32.mrf.mxu0
        %v726 = vpop.f32.mrf.mxu0
        %v727 = vpop.f32.mrf.mxu0
        %728 = vdwg.mxu0
        %729 = vmatprep.subr.bf16.mxu0 0
        %730 = vmatpush1.bf16.msra.mxu0 0
        %731 = vmatprep.subr.bf16.mxu0 0
        %732 = vmatpush1.bf16.msra.mxu0 0
        %733 = vmatprep.subr.bf16.mxu0 0
        %734 = vmatpush1.bf16.msra.mxu0 0
        %735 = vmatprep.subr.bf16.mxu0 0
        %736 = vmatpush1.bf16.msra.mxu0 0
        %737 = vmatprep.subr.bf16.mxu0 0
        %738 = vmatpush1.bf16.msra.mxu0 0
        %739 = vmatprep.subr.bf16.mxu0 0
        %740 = vmatpush1.bf16.msra.mxu0 0
        %741 = vmatprep.subr.bf16.mxu0 0
        %742 = vmatpush1.bf16.msra.mxu0 0
        %743 = vmatprep.subr.bf16.mxu0 0
        %744 = vmatpush1.bf16.msra.mxu0 %v687
        %745 = vmatprep.subr.bf16.mxu0 0
        %746 = vmatpush2.bf16.msra.mxu0 0
        %747 = vmatprep.subr.bf16.mxu0 0
        %748 = vmatpush2.bf16.msra.mxu0 0
        %749 = vmatprep.subr.bf16.mxu0 0
        %750 = vmatpush2.bf16.msra.mxu0 0
        %751 = vmatprep.subr.bf16.mxu0 0
        %752 = vmatpush2.bf16.msra.mxu0 0
        %753 = vmatprep.subr.bf16.mxu0 0
        %754 = vmatpush2.bf16.msra.mxu0 0
        %755 = vmatprep.subr.bf16.mxu0 0
        %756 = vmatpush2.bf16.msra.mxu0 0
        %757 = vmatprep.subr.bf16.mxu0 0
        %758 = vmatpush2.bf16.msra.mxu0 0
        %759 = vmatprep.subr.bf16.mxu0 0
        %760 = vmatpush2.bf16.msra.mxu0 0
        %761 = vmatprep.mubr.bf16.mxu0 0
        %762 = vmatmul.mubr.bf16.gmra.mxu0 %v386
        %v763 = vpop.f32.mrf.mxu0
        %v764 = vadd.f32 0.0, %v763
        %v765 = vpop.f32.mrf.mxu0
        %v766 = vpop.f32.mrf.mxu0
        %v767 = vpop.f32.mrf.mxu0
        %768 = vdwg.mxu0
        %770 = vrot.lane.b32.xlu0 %v764, 123
        %v771 = vpop.permute.xlu0 %770
        %v773 = vsub.f32 %v724, %v771
        %775 = vrot.lane.b32.xlu0 %v724, 123
        %v776 = vpop.permute.xlu0 %775
        %v778 = vadd.f32 %v764, %v776
        %780 = vrot.lane.b32.xlu0 %v778, 5
        %v781 = vpop.permute.xlu0 %780
        %v783 = vsel %vm334, %v773, %v781
        %v784 = vpack.c.bf16 %v783, %v783
        %v786 = vsel %vm449, %v784, 0
        %788 = vmatprep.subr.bf16.mxu0 0
        %789 = vmatpush1.bf16.msra.mxu0 0
        %790 = vmatprep.subr.bf16.mxu0 0
        %791 = vmatpush1.bf16.msra.mxu0 0
        %792 = vmatprep.subr.bf16.mxu0 0
        %793 = vmatpush1.bf16.msra.mxu0 0
        %794 = vmatprep.subr.bf16.mxu0 0
        %795 = vmatpush1.bf16.msra.mxu0 0
        %796 = vmatprep.subr.bf16.mxu0 0
        %797 = vmatpush1.bf16.msra.mxu0 0
        %798 = vmatprep.subr.bf16.mxu0 0
        %799 = vmatpush1.bf16.msra.mxu0 0
        %800 = vmatprep.subr.bf16.mxu0 0
        %801 = vmatpush1.bf16.msra.mxu0 0
        %802 = vmatprep.subr.bf16.mxu0 0
        %803 = vmatpush1.bf16.msra.mxu0 %v455
        %804 = vmatprep.subr.bf16.mxu0 0
        %805 = vmatpush2.bf16.msra.mxu0 0
        %806 = vmatprep.subr.bf16.mxu0 0
        %807 = vmatpush2.bf16.msra.mxu0 0
        %808 = vmatprep.subr.bf16.mxu0 0
        %809 = vmatpush2.bf16.msra.mxu0 0
        %810 = vmatprep.subr.bf16.mxu0 0
        %811 = vmatpush2.bf16.msra.mxu0 0
        %812 = vmatprep.subr.bf16.mxu0 0
        %813 = vmatpush2.bf16.msra.mxu0 0
        %814 = vmatprep.subr.bf16.mxu0 0
        %815 = vmatpush2.bf16.msra.mxu0 0
        %816 = vmatprep.subr.bf16.mxu0 0
        %817 = vmatpush2.bf16.msra.mxu0 0
        %818 = vmatprep.subr.bf16.mxu0 0
        %819 = vmatpush2.bf16.msra.mxu0 0
        %820 = vmatprep.mubr.bf16.mxu0 0
        %821 = vmatmul.mubr.bf16.gmra.mxu0 %v786
        %v822 = vpop.f32.mrf.mxu0
        %v823 = vadd.f32 0.0, %v822
        %v824 = vpop.f32.mrf.mxu0
        %v825 = vpop.f32.mrf.mxu0
        %v826 = vpop.f32.mrf.mxu0
        %827 = vdwg.mxu0
        %s828 = scalar_lea.vmem %s291, 16 [#allocation6]
        %829 = vst.msk [vmem:[%s828] sm:$0xff] %vm337, %v823
        %v830 = vunpack.c.l.bf16 %v305
        %s831 = sld [smem:[#allocation2 + $0x3]]
        %v832 = vstv %s831
        %v833 = vmul.f32 %v830, %v832
        %s834 = sld [smem:[#allocation4 + $0x3]]
        %v835 = vstv %s834
        %v836 = vadd.f32 %v833, %v835
        %v837 = vmax.f32 %v836, 0.0
        %v838 = vunpack.c.l.bf16 %v309
        %s839 = sld [smem:[#allocation2 + $0x7]]
        %v840 = vstv %s839
        %v841 = vmul.f32 %v838, %v840
        %s842 = sld [smem:[#allocation4 + $0x7]]
        %v843 = vstv %s842
        %v844 = vadd.f32 %v841, %v843
        %v845 = vmax.f32 %v844, 0.0
        %847 = vrot.lane.b32.xlu0 %v845, 5
        %v848 = vpop.permute.xlu0 %847
        %v850 = vsel %vm334, %v837, %v848
        %v851 = vpack.c.bf16 %v850, %v850
        %v853 = vsel %vm341, %v851, 0
        %855 = vmatprep.subr.bf16.mxu0 0
        %856 = vmatpush1.bf16.msra.mxu0 0
        %857 = vmatprep.subr.bf16.mxu0 0
        %858 = vmatpush1.bf16.msra.mxu0 0
        %859 = vmatprep.subr.bf16.mxu0 0
        %860 = vmatpush1.bf16.msra.mxu0 0
        %861 = vmatprep.subr.bf16.mxu0 0
        %862 = vmatpush1.bf16.msra.mxu0 0
        %863 = vmatprep.subr.bf16.mxu0 0
        %864 = vmatpush1.bf16.msra.mxu0 0
        %865 = vmatprep.subr.bf16.mxu0 0
        %866 = vmatpush1.bf16.msra.mxu0 0
        %867 = vmatprep.subr.bf16.mxu0 0
        %868 = vmatpush1.bf16.msra.mxu0 0
        %869 = vmatprep.subr.bf16.mxu0 0
        %870 = vmatpush1.bf16.msra.mxu0 %v853
        %871 = vmatprep.subr.bf16.mxu0 0
        %872 = vmatpush2.bf16.msra.mxu0 0
        %873 = vmatprep.subr.bf16.mxu0 0
        %874 = vmatpush2.bf16.msra.mxu0 0
        %875 = vmatprep.subr.bf16.mxu0 0
        %876 = vmatpush2.bf16.msra.mxu0 0
        %877 = vmatprep.subr.bf16.mxu0 0
        %878 = vmatpush2.bf16.msra.mxu0 0
        %879 = vmatprep.subr.bf16.mxu0 0
        %880 = vmatpush2.bf16.msra.mxu0 0
        %881 = vmatprep.subr.bf16.mxu0 0
        %882 = vmatpush2.bf16.msra.mxu0 0
        %883 = vmatprep.subr.bf16.mxu0 0
        %884 = vmatpush2.bf16.msra.mxu0 0
        %885 = vmatprep.subr.bf16.mxu0 0
        %886 = vmatpush2.bf16.msra.mxu0 0
        %887 = vmatprep.mubr.bf16.mxu0 0
        %888 = vmatmul.mubr.bf16.gmra.mxu0 %v339
        %v889 = vpop.f32.mrf.mxu0
        %v890 = vadd.f32 0.0, %v889
        %v891 = vpop.f32.mrf.mxu0
        %v892 = vpop.f32.mrf.mxu0
        %v893 = vpop.f32.mrf.mxu0
        %894 = vdwg.mxu0
        %895 = vmatprep.subr.bf16.mxu0 0
        %896 = vmatpush1.bf16.msra.mxu0 0
        %897 = vmatprep.subr.bf16.mxu0 0
        %898 = vmatpush1.bf16.msra.mxu0 0
        %899 = vmatprep.subr.bf16.mxu0 0
        %900 = vmatpush1.bf16.msra.mxu0 0
        %901 = vmatprep.subr.bf16.mxu0 0
        %902 = vmatpush1.bf16.msra.mxu0 0
        %903 = vmatprep.subr.bf16.mxu0 0
        %904 = vmatpush1.bf16.msra.mxu0 0
        %905 = vmatprep.subr.bf16.mxu0 0
        %906 = vmatpush1.bf16.msra.mxu0 0
        %907 = vmatprep.subr.bf16.mxu0 0
        %908 = vmatpush1.bf16.msra.mxu0 0
        %909 = vmatprep.subr.bf16.mxu0 0
        %910 = vmatpush1.bf16.msra.mxu0 %v853
        %911 = vmatprep.subr.bf16.mxu0 0
        %912 = vmatpush2.bf16.msra.mxu0 0
        %913 = vmatprep.subr.bf16.mxu0 0
        %914 = vmatpush2.bf16.msra.mxu0 0
        %915 = vmatprep.subr.bf16.mxu0 0
        %916 = vmatpush2.bf16.msra.mxu0 0
        %917 = vmatprep.subr.bf16.mxu0 0
        %918 = vmatpush2.bf16.msra.mxu0 0
        %919 = vmatprep.subr.bf16.mxu0 0
        %920 = vmatpush2.bf16.msra.mxu0 0
        %921 = vmatprep.subr.bf16.mxu0 0
        %922 = vmatpush2.bf16.msra.mxu0 0
        %923 = vmatprep.subr.bf16.mxu0 0
        %924 = vmatpush2.bf16.msra.mxu0 0
        %925 = vmatprep.subr.bf16.mxu0 0
        %926 = vmatpush2.bf16.msra.mxu0 0
        %927 = vmatprep.mubr.bf16.mxu0 0
        %928 = vmatmul.mubr.bf16.gmra.mxu0 %v386
        %v929 = vpop.f32.mrf.mxu0
        %v930 = vadd.f32 0.0, %v929
        %v931 = vpop.f32.mrf.mxu0
        %v932 = vpop.f32.mrf.mxu0
        %v933 = vpop.f32.mrf.mxu0
        %934 = vdwg.mxu0
        %936 = vrot.lane.b32.xlu0 %v930, 123
        %v937 = vpop.permute.xlu0 %936
        %v939 = vsub.f32 %v890, %v937
        %941 = vrot.lane.b32.xlu0 %v890, 123
        %v942 = vpop.permute.xlu0 %941
        %v944 = vadd.f32 %v930, %v942
        %946 = vrot.lane.b32.xlu0 %v944, 5
        %v947 = vpop.permute.xlu0 %946
        %v949 = vsel %vm334, %v939, %v947
        %v950 = vpack.c.bf16 %v949, %v949
        %v952 = vsel %vm449, %v950, 0
        %954 = vmatprep.subr.bf16.mxu0 0
        %955 = vmatpush1.bf16.msra.mxu0 0
        %956 = vmatprep.subr.bf16.mxu0 0
        %957 = vmatpush1.bf16.msra.mxu0 0
        %958 = vmatprep.subr.bf16.mxu0 0
        %959 = vmatpush1.bf16.msra.mxu0 0
        %960 = vmatprep.subr.bf16.mxu0 0
        %961 = vmatpush1.bf16.msra.mxu0 0
        %962 = vmatprep.subr.bf16.mxu0 0
        %963 = vmatpush1.bf16.msra.mxu0 0
        %964 = vmatprep.subr.bf16.mxu0 0
        %965 = vmatpush1.bf16.msra.mxu0 0
        %966 = vmatprep.subr.bf16.mxu0 0
        %967 = vmatpush1.bf16.msra.mxu0 0
        %968 = vmatprep.subr.bf16.mxu0 0
        %969 = vmatpush1.bf16.msra.mxu0 %v455
        %970 = vmatprep.subr.bf16.mxu0 0
        %971 = vmatpush2.bf16.msra.mxu0 0
        %972 = vmatprep.subr.bf16.mxu0 0
        %973 = vmatpush2.bf16.msra.mxu0 0
        %974 = vmatprep.subr.bf16.mxu0 0
        %975 = vmatpush2.bf16.msra.mxu0 0
        %976 = vmatprep.subr.bf16.mxu0 0
        %977 = vmatpush2.bf16.msra.mxu0 0
        %978 = vmatprep.subr.bf16.mxu0 0
        %979 = vmatpush2.bf16.msra.mxu0 0
        %980 = vmatprep.subr.bf16.mxu0 0
        %981 = vmatpush2.bf16.msra.mxu0 0
        %982 = vmatprep.subr.bf16.mxu0 0
        %983 = vmatpush2.bf16.msra.mxu0 0
        %984 = vmatprep.subr.bf16.mxu0 0
        %985 = vmatpush2.bf16.msra.mxu0 0
        %986 = vmatprep.mubr.bf16.mxu0 0
        %987 = vmatmul.mubr.bf16.gmra.mxu0 %v952
        %v988 = vpop.f32.mrf.mxu0
        %v989 = vadd.f32 0.0, %v988
        %v990 = vpop.f32.mrf.mxu0
        %v991 = vpop.f32.mrf.mxu0
        %v992 = vpop.f32.mrf.mxu0
        %993 = vdwg.mxu0
        %s994 = scalar_lea.vmem %s291, 24 [#allocation6]
        %995 = vst.msk [vmem:[%s994] sm:$0xff] %vm337, %v989
        %s996 = sand.u32 %s174, 1
        %s997 = sand.u32 %s174, 1
        %s998 = smul.addr %s997, 32
        %s999 = scalar_lea.vmem [#allocation6], %s998
        // Predicated region
        $region53: #{ffc_bn_act.18} parent=43 // pred_check
          %p1000 = pneg %p184
        $region54: #{ffc_bn_act.18} parent=43 // pred_check_branch
          %1002 = sbr.rel (%p1000) target = $region56
        $region55: #{ffc_bn_act.18} parent=43 // pred_region
          %s1003 = smul.addr %s23, 16
          %s1004 = sadd.s32 %s24, %s1003
          %s1005 = smul.addr %s1004, 8
          %s1006 = scalar_lea.vmem %s6, %s1005
          // Predicated region
          $region57: #{ffc_bn_act.18} parent=55 // pred_check
            _
          $region58: #{ffc_bn_act.18} parent=55 // pred_check_branch
            %1008 = sbr.rel (0) target = $region60
          $region59: #{ffc_bn_act.18} parent=55 // pred_region
            // Predicated region
            $region61: #{ffc_bn_act.18} parent=59 // pred_check
              _
            $region62: #{ffc_bn_act.18} parent=59 // pred_check_branch
              %1010 = sbr.rel (0) target = $region64
            $region63: #{ffc_bn_act.18} parent=59 // pred_region
              // Predicated region
              $region76: #{ffc_bn_act.18} parent=63 // pred_check
                _
              $region77: #{ffc_bn_act.18} parent=63 // pred_check_branch
                %1032 = sbr.rel (0) target = $region79
              $region78: #{ffc_bn_act.18} parent=63 // pred_region
                loop: start=0, step=1, limit=1
                $region80: #{ffc_bn_act.18} parent=78 // loop_pre_header
                  _
                $region81: #{ffc_bn_act.18} parent=78 // loop_header
                  %s1034 = sphi 0, %s1038
                  %p1035 = scmp.ge.s32.totalorder %s1034, 1
                  %s1039 = sphi %s999, %s999
                  %s1040 = sphi %s1006, %s1006
                $region82: #{ffc_bn_act.18} parent=78 // loop_header_branch
                  %1037 = sbr.rel (%p1035) target = $region86
                $region83: #{ffc_bn_act.18} parent=78 // loop_body
                  %v1041 = vld [vmem:[%s1039] sm:$0xff]
                  %1042 = vst [vmem:[%s1040] sm:$0xff] %v1041
                  %v1043 = vld [vmem:[%s1039 + $0x8] sm:$0xff]
                  %1044 = vst [vmem:[%s1040 + $0x20] sm:$0xff] %v1043
                  %v1045 = vld [vmem:[%s1039 + $0x10] sm:$0xff]
                  %1046 = vst [vmem:[%s1040 + $0x40] sm:$0xff] %v1045
                  %v1047 = vld [vmem:[%s1039 + $0x18] sm:$0xff]
                  %1048 = vst [vmem:[%s1040 + $0x60] sm:$0xff] %v1047
                $region84: #{ffc_bn_act.18} parent=78 // loop_footer
                  %s1038 = sadd.s32 1, %s1034
                $region85: #{ffc_bn_act.18} parent=78 // loop_footer_branch
                  %1033 = sbr.rel target = $region81
                $region86: #{ffc_bn_act.18} parent=78 // loop_exit
                  _
              $region79: #{ffc_bn_act.18} parent=63 // pred_fallthru
                _
              // Predicated region
              $region87: #{ffc_bn_act.18} parent=63 // pred_check
                _
              $region88: #{ffc_bn_act.18} parent=63 // pred_check_branch
                %1050 = sbr.rel target = $region90
              $region89: #{ffc_bn_act.18} parent=63 // pred_region
                _
              $region90: #{ffc_bn_act.18} parent=63 // pred_fallthru
                _
            $region64: #{ffc_bn_act.18} parent=59 // pred_fallthru
              _
            // Predicated region
            $region65: #{ffc_bn_act.18} parent=59 // pred_check
              _
            $region66: #{ffc_bn_act.18} parent=59 // pred_check_branch
              %1012 = sbr.rel target = $region68
            $region67: #{ffc_bn_act.18} parent=59 // pred_region
              %s1014 = ssub.s32 256, 1
              loop: start=0, step=1, limit=1
              $region69: #{ffc_bn_act.18} parent=67 // loop_pre_header
                _
              $region70: #{ffc_bn_act.18} parent=67 // loop_header
                %s1016 = sphi 0, %s1020
                %p1017 = scmp.ge.s32.totalorder %s1016, 1
                %s1021 = sphi %s999, %s999
                %s1022 = sphi %s1006, %s1006
              $region71: #{ffc_bn_act.18} parent=67 // loop_header_branch
                %1019 = sbr.rel (%p1017) target = $region75
              $region72: #{ffc_bn_act.18} parent=67 // loop_body
                %v1023 = vld [vmem:[%s1021] sm:%s1014]
                %1024 = vst [vmem:[%s1022] sm:%s1014] %v1023
                %v1025 = vld [vmem:[%s1021 + $0x8] sm:%s1014]
                %1026 = vst [vmem:[%s1022 + $0x20] sm:%s1014] %v1025
                %v1027 = vld [vmem:[%s1021 + $0x10] sm:%s1014]
                %1028 = vst [vmem:[%s1022 + $0x40] sm:%s1014] %v1027
                %v1029 = vld [vmem:[%s1021 + $0x18] sm:%s1014]
                %1030 = vst [vmem:[%s1022 + $0x60] sm:%s1014] %v1029
              $region73: #{ffc_bn_act.18} parent=67 // loop_footer
                %s1020 = sadd.s32 1, %s1016
              $region74: #{ffc_bn_act.18} parent=67 // loop_footer_branch
                %1015 = sbr.rel target = $region70
              $region75: #{ffc_bn_act.18} parent=67 // loop_exit
                _
            $region68: #{ffc_bn_act.18} parent=59 // pred_fallthru
              _
          $region60: #{ffc_bn_act.18} parent=55 // pred_fallthru
            _
          %1051 = vnop
        $region56: #{ffc_bn_act.18} parent=43 // pred_fallthru
          _
      $region44: #{ffc_bn_act.18} parent=5 // pred_fallthru
        _
      %p1052 = scmp.le.s32.totalorder 2, %s14
      // Predicated region
      $region91: #{ffc_bn_act.18} parent=5 // pred_check
        %p1053 = pneg %p1052
      $region92: #{ffc_bn_act.18} parent=5 // pred_check_branch
        %1055 = sbr.rel (%p1053) target = $region94
      $region93: #{ffc_bn_act.18} parent=5 // pred_region
        %s1056 = ssub.s32 %s14, 2
        // Predicated region
        $region95: #{ffc_bn_act.18} parent=93 // pred_check
          %p1057 = pneg %p190
        $region96: #{ffc_bn_act.18} parent=93 // pred_check_branch
          %1059 = sbr.rel (%p1057) target = $region98
        $region97: #{ffc_bn_act.18} parent=93 // pred_region
          %s1060 = sand.u32 %s175, 1
          %s1061 = sand.u32 %s175, 1
          %s1062 = smul.addr %s1061, 32
          %s1063 = scalar_lea.vmem [#allocation6], %s1062
        $region98: #{ffc_bn_act.18} parent=93 // pred_fallthru
          _
      $region94: #{ffc_bn_act.18} parent=5 // pred_fallthru
        _
    $region6: #{ffc_bn_act.18} parent=1 // loop_footer
      %s18 = sadd.s32 1, %s14
    $region7: #{ffc_bn_act.18} parent=1 // loop_footer_branch
      %13 = sbr.rel target = $region3
    $region8: #{ffc_bn_act.18} parent=1 // loop_exit
      _
    %1064 = vsyncpa [#allocation3], 1
    %s1065 = scalar_lea.sflag [#allocation3], 1
    %1066 = vsyncpa %s1065, 1
    %1067 = vsyncpa [#allocation5], 1

</llo_original>
